<compile_context>
chip_gen: v7x
topology: tpu7x:2x2x1
jax: 0.10.0
libtpu: 0.0.40
codegen_flags: <defaults>
</compile_context>

<pallas_src>
import functools
import math

import jax
import jax.numpy as jnp
import numpy as np
from jax import lax
from jax.experimental import pallas as pl
from jax.experimental.pallas import tpu as pltpu


def _round_up(x: int, m: int) -> int:
    return ((x + m - 1) // m) * m


def _permute_gates(a):
    """Reorder PyTorch LSTM gate columns [i, f, g, o] -> [i, f, o, g]."""
    i, f, g, o = jnp.split(a, 4, axis=-1)
    return jnp.concatenate([i, f, o, g], axis=-1)


# --------------------------------------------------------------------------
# Fused recurrent kernel: stacked LSTM steps -> (at last t) fc2 + state out
# --------------------------------------------------------------------------
def _recurrent_kernel(g_ref, w_cat_ref, b_lstm_ref, w_fc2_ref, b_fc2_ref,
                      h0_ref, c0_ref,
                      logits_ref, hidden_ref, cell_ref,
                      xh_scr, c_scr,
                      *, num_layers, hidden, t_chunk, t_total):
    H = hidden
    L = num_layers
    t_blk = pl.program_id(1)

    # Load initial recurrent state into resident scratch once per batch tile
    # (time axis is innermost, so it restarts at 0 for every batch tile).
    @pl.when(t_blk == 0)
    def _init():
        for l in range(L):
            xh_scr[l, :, pl.ds(H, H)] = h0_ref[l]      # h carry (bf16)
            c_scr[l] = c0_ref[l]                       # c carry (f32)

    def lstm_step(s):
        # Streamed layer-0 gate pre-activation (fc1 + x@W_ih0 hoisted outside).
        z0 = g_ref[s].astype(jnp.float32)              # (TB, 4H)
        x_bf = None
        for l in range(L):
            if l == 0:
                # Only h @ W_hh remains in the hot loop for layer 0.
                z = z0 + jnp.dot(xh_scr[0, :, pl.ds(H, H)],
                                 w_cat_ref[0, pl.ds(H, H), :],
                                 preferred_element_type=jnp.float32)
            else:
                # [x, h] adjacent in scratch -> single fused K=2H matmul.
                xh_scr[l, :, pl.ds(0, H)] = x_bf
                z = jnp.dot(xh_scr[l], w_cat_ref[l],
                            preferred_element_type=jnp.float32)
            z = z + b_lstm_ref[l]                      # (TB, 4H) f32
            # Gate order [i, f, o, g]: one sigmoid slab + one tanh.
            sg = pl.reciprocal(1.0 + jnp.exp(-z[:, :3 * H]), approx=True)
            gg = jnp.tanh(z[:, 3 * H:])
            c_new = sg[:, H:2 * H] * c_scr[l] + sg[:, :H] * gg
            h_new = sg[:, 2 * H:3 * H] * jnp.tanh(c_new)
            c_scr[l] = c_new
            x_bf = h_new.astype(jnp.bfloat16)
            xh_scr[l, :, pl.ds(H, H)] = x_bf           # h carry for layer l

    if t_total % t_chunk == 0:
        def body(s, carry):
            lstm_step(s)
            return carry
    else:
        def body(s, carry):
            pl.when(t_blk * t_chunk + s < t_total)(lambda: lstm_step(s))
            return carry

    lax.fori_loop(0, t_chunk, body, None, unroll=True)

    # Only the final time block produces logits / writes the state outputs.
    @pl.when(t_blk == pl.num_programs(1) - 1)
    def _finalize():
        x_last = xh_scr[L - 1, :, pl.ds(H, H)]         # (TB, H) bf16
        logits_ref[...] = (jnp.dot(x_last, w_fc2_ref[...],
                                   preferred_element_type=jnp.float32)
                           + b_fc2_ref[...])
        for l in range(L):
            hidden_ref[l] = xh_scr[l, :, pl.ds(H, H)].astype(jnp.float32)
            cell_ref[l] = c_scr[l]


# --------------------------------------------------------------------------
# Wrapper: hoisted matmuls, padding / layout plumbing + pallas_call
# --------------------------------------------------------------------------
def recurrent_forward_pallas(params, obs, state=None):
    obs = jnp.asarray(obs, jnp.float32)
    if obs.ndim == 2:                        # eval mode: (B, D) -> (B, 1, D)
        obs = obs[:, None, :]
    B, T, D = obs.shape

    w_fc1, b_fc1 = params["w_fc1"], params["b_fc1"]
    w_ih, w_hh, b_lstm = params["w_ih"], params["w_hh"], params["b_lstm"]
    w_fc2, b_fc2 = params["w_fc2"], params["b_fc2"]
    H = w_fc1.shape[1]
    L = w_ih.shape[0]
    A = w_fc2.shape[1]

    # Gate-column permutation [i,f,g,o] -> [i,f,o,g] (done once on weights).
    w_ih_p = _permute_gates(w_ih)            # (L, H, 4H)
    w_hh_p = _permute_gates(w_hh)            # (L, H, 4H)
    b_p = _permute_gates(b_lstm)             # (L, 4H)

    # Hoisted non-recurrent path: fc1 and the layer-0 x@W_ih contraction run
    # once over all B*T rows; the kernel streams gate pre-activations instead.
    x1 = jnp.dot(obs.reshape(B * T, D).astype(jnp.bfloat16),
                 w_fc1.astype(jnp.bfloat16),
                 preferred_element_type=jnp.float32) + b_fc1
    g0 = jnp.dot(x1.astype(jnp.bfloat16), w_ih_p[0].astype(jnp.bfloat16),
                 preferred_element_type=jnp.float32).reshape(B, T, 4 * H)

    # Tile selection: >= 2 batch tiles when possible (v7x megacore), capped
    # at 256 rows; Tc time steps per grid step amortize per-step overhead.
    B8 = _round_up(B, 8)
    TB = B8 if B8 < 16 else min(256, _round_up((B8 + 1) // 2, 8))
    B_pad = _round_up(B8, TB)
    Tc = min(16, T)
    T_pad = _round_up(T, Tc)
    A_pad = _round_up(A, 128)                # lane-dense logits slab

    # Time-major, padded, bf16 gate pre-activation stream.
    g0_tm = (jnp.zeros((T_pad, B_pad, 4 * H), jnp.float32)
             .at[:T, :B].set(jnp.transpose(g0, (1, 0, 2)))
             .astype(jnp.bfloat16))

    # Fused per-layer [W_ih; W_hh] weights (layer 0 uses only the W_hh half).
    w_cat = jnp.concatenate([w_ih_p, w_hh_p], axis=1).astype(jnp.bfloat16)
    b_cat = b_p.reshape(L, 1, 4 * H).astype(jnp.float32)

    # Initial recurrent state (zeros when state is None, matching torch).
    if state is None:
        h0 = jnp.zeros((L, B_pad, H), jnp.bfloat16)
        c0 = jnp.zeros((L, B_pad, H), jnp.float32)
    else:
        h_in = jnp.transpose(jnp.asarray(state["hidden"], jnp.float32), (1, 0, 2))
        c_in = jnp.transpose(jnp.asarray(state["cell"], jnp.float32), (1, 0, 2))
        h0 = (jnp.zeros((L, B_pad, H), jnp.float32)
              .at[:, :B].set(h_in).astype(jnp.bfloat16))
        c0 = jnp.zeros((L, B_pad, H), jnp.float32).at[:, :B].set(c_in)

    # Lane-pad fc2 so the logits store is a full-width unmasked vst.
    w_fc2_p = (jnp.zeros((H, A_pad), jnp.float32).at[:, :A].set(w_fc2)
               .astype(jnp.bfloat16))
    b_fc2_p = jnp.zeros((1, A_pad), jnp.float32).at[:, :A].set(b_fc2.reshape(1, A))

    kernel = functools.partial(_recurrent_kernel, num_layers=L, hidden=H,
                               t_chunk=Tc, t_total=T)
    grid = (B_pad // TB, T_pad // Tc)

    logits_p, hidden, cell = pl.pallas_call(
        kernel,
        out_shape=(
            jax.ShapeDtypeStruct((B_pad, A_pad), jnp.float32),
            jax.ShapeDtypeStruct((L, B_pad, H), jnp.float32),
            jax.ShapeDtypeStruct((L, B_pad, H), jnp.float32),
        ),
        grid_spec=pltpu.PrefetchScalarGridSpec(
            num_scalar_prefetch=0,
            grid=grid,
            in_specs=[
                # Layer-0 gate pre-activations stream with the (batch, time) grid.
                pl.BlockSpec((Tc, TB, 4 * H), lambda b, t: (t, b, 0)),
                # Weights / biases: constant index_map -> DMA'd once, VMEM-resident.
                # TODO(synk): add pipeline_mode=pl.Buffered(1) on weight specs if
                # H is scaled up enough for double-buffered weights to pressure
                # v7x's smaller VMEM.
                pl.BlockSpec((L, 2 * H, 4 * H), lambda b, t: (0, 0, 0)),
                pl.BlockSpec((L, 1, 4 * H), lambda b, t: (0, 0, 0)),
                pl.BlockSpec((H, A_pad), lambda b, t: (0, 0)),
                pl.BlockSpec((1, A_pad), lambda b, t: (0, 0)),
                # Initial state: varies with batch tile only.
                pl.BlockSpec((L, TB, H), lambda b, t: (0, b, 0)),
                pl.BlockSpec((L, TB, H), lambda b, t: (0, b, 0)),
            ],
            out_specs=[
                pl.BlockSpec((TB, A_pad), lambda b, t: (b, 0)),
                pl.BlockSpec((L, TB, H), lambda b, t: (0, b, 0)),
                pl.BlockSpec((L, TB, H), lambda b, t: (0, b, 0)),
            ],
            scratch_shapes=[
                pltpu.VMEM((L, TB, 2 * H), jnp.bfloat16),   # [x, h] per layer
                pltpu.VMEM((L, TB, H), jnp.float32),        # c carry
            ],
        ),
        compiler_params=pltpu.CompilerParams(
            dimension_semantics=("parallel", "arbitrary")),
    )(g0_tm, w_cat, b_cat, w_fc2_p, b_fc2_p, h0, c0)

    logits = logits_p[:B, :A]
    hidden_out = jnp.transpose(hidden, (1, 0, 2))[:B]   # (B, L, H), torch-style
    cell_out = jnp.transpose(cell, (1, 0, 2))[:B]
    return logits, {"hidden": hidden_out, "cell": cell_out}


# --------------------------------------------------------------------------
# Pure-JAX f32 reference (mirrors torch.nn.LSTM math, gate order i,f,g,o)
# --------------------------------------------------------------------------
def reference_forward(params, obs, state=None):
    obs = jnp.asarray(obs, jnp.float32)
    if obs.ndim == 2:
        obs = obs[:, None, :]
    B, T, _ = obs.shape
    H = params["w_fc1"].shape[1]
    L = params["w_ih"].shape[0]

    def sigmoid(z):
        return 1.0 / (1.0 + jnp.exp(-z))

    if state is None:
        h = [jnp.zeros((B, H), jnp.float32) for _ in range(L)]
        c = [jnp.zeros((B, H), jnp.float32) for _ in range(L)]
    else:
        h = [state["hidden"][:, l] for l in range(L)]
        c = [state["cell"][:, l] for l in range(L)]
    x_last = None
    for t in range(T):
        x = obs[:, t] @ params["w_fc1"] + params["b_fc1"]
        for l in range(L):
            gates = (x @ params["w_ih"][l] + h[l] @ params["w_hh"][l]
                     + params["b_lstm"][l])
            i_g = sigmoid(gates[:, 0 * H:1 * H])
            f_g = sigmoid(gates[:, 1 * H:2 * H])
            g_g = jnp.tanh(gates[:, 2 * H:3 * H])
            o_g = sigmoid(gates[:, 3 * H:4 * H])
            c[l] = f_g * c[l] + i_g * g_g
            h[l] = o_g * jnp.tanh(c[l])
            x = h[l]
        x_last = x
    logits = x_last @ params["w_fc2"] + params["b_fc2"]
    return logits, {"hidden": jnp.stack(h, axis=1), "cell": jnp.stack(c, axis=1)}


def init_params(key, layer_num, state_dim, action_dim, hidden):
    """Torch-style uniform(-1/sqrt(fan_in), 1/sqrt(fan_in)) init, pre-transposed."""
    def lin(k, fan_in, fan_out):
        bound = 1.0 / math.sqrt(fan_in)
        kw, kb = jax.random.split(k)
        w = jax.random.uniform(kw, (fan_in, fan_out), jnp.float32, -bound, bound)
        b = jax.random.uniform(kb, (fan_out,), jnp.float32, -bound, bound)
        return w, b

    ks = jax.random.split(key, 2 + 2 * layer_num)
    w_fc1, b_fc1 = lin(ks[0], state_dim, hidden)
    w_fc2, b_fc2 = lin(ks[1], hidden, action_dim)
    w_ih, w_hh, b_lstm = [], [], []
    for l in range(layer_num):
        wi, bi = lin(ks[2 + 2 * l], hidden, 4 * hidden)
        wh, bh = lin(ks[3 + 2 * l], hidden, 4 * hidden)
        w_ih.append(wi)
        w_hh.append(wh)
        b_lstm.append(bi + bh)          # PyTorch adds b_ih + b_hh
    return {
        "w_fc1": w_fc1, "b_fc1": b_fc1,
        "w_ih": jnp.stack(w_ih), "w_hh": jnp.stack(w_hh),
        "b_lstm": jnp.stack(b_lstm),
        "w_fc2": w_fc2, "b_fc2": b_fc2,
    }


if __name__ == "__main__":
    # Config consistent with Recurrent(layer_num=2, state_shape=64,
    # action_shape=8, hidden_layer_size=128).
    layer_num, state_dim, action_dim, hidden = 2, 64, 8, 128
    B, T = 2, 8

    key = jax.random.PRNGKey(0)
    k_param, k_obs, k_obs2 = jax.random.split(key, 3)
    params = init_params(k_param, layer_num, state_dim, action_dim, hidden)
    obs = jax.random.normal(k_obs, (B, T, state_dim), jnp.float32)

    # Training-mode pass (obs: (B, T, D), state=None).
    logits, new_state = recurrent_forward_pallas(params, obs, state=None)
    jax.block_until_ready((logits, new_state))

    ref_logits, ref_state = reference_forward(params, obs, state=None)
    np.testing.assert_allclose(np.asarray(logits), np.asarray(ref_logits),
                               rtol=5e-2, atol=5e-2)
    np.testing.assert_allclose(np.asarray(new_state["hidden"]),
                               np.asarray(ref_state["hidden"]),
                               rtol=5e-2, atol=5e-2)
    np.testing.assert_allclose(np.asarray(new_state["cell"]),
                               np.asarray(ref_state["cell"]),
                               rtol=5e-2, atol=5e-2)

    # Eval-mode pass (obs: (B, D)) with a carried-in state.
    obs2 = jax.random.normal(k_obs2, (B, state_dim), jnp.float32)
    logits2, state2 = recurrent_forward_pallas(params, obs2, state=ref_state)
    jax.block_until_ready((logits2, state2))
    ref_logits2, ref_state2 = reference_forward(params, obs2, state=ref_state)
    np.testing.assert_allclose(np.asarray(logits2), np.asarray(ref_logits2),
                               rtol=5e-2, atol=5e-2)
    np.testing.assert_allclose(np.asarray(state2["hidden"]),
                               np.asarray(ref_state2["hidden"]),
                               rtol=5e-2, atol=5e-2)
    np.testing.assert_allclose(np.asarray(state2["cell"]),
                               np.asarray(ref_state2["cell"]),
                               rtol=5e-2, atol=5e-2)
    print("KERNEL_OK")
</pallas_src>

<mosaic_0001>
module attributes {stable_mosaic.version = 11 : i64} {
  func.func @_recurrent_kernel(%arg0: i32, %arg1: i32, %arg2: memref<8x8x512xbf16, #tpu.memory_space<vmem>>, %arg3: memref<2x256x512xbf16, #tpu.memory_space<vmem>>, %arg4: memref<2x1x512xf32, #tpu.memory_space<vmem>>, %arg5: memref<128x128xbf16, #tpu.memory_space<vmem>>, %arg6: memref<1x128xf32, #tpu.memory_space<vmem>>, %arg7: memref<2x8x128xbf16, #tpu.memory_space<vmem>>, %arg8: memref<2x8x128xf32, #tpu.memory_space<vmem>>, %arg9: memref<8x128xf32, #tpu.memory_space<vmem>>, %arg10: memref<2x8x128xf32, #tpu.memory_space<vmem>>, %arg11: memref<2x8x128xf32, #tpu.memory_space<vmem>>, %arg12: memref<2x8x256xbf16, #tpu.memory_space<vmem>>, %arg13: memref<2x8x128xf32, #tpu.memory_space<vmem>>) attributes {dimension_semantics = [#tpu.dimension_semantics<parallel>, #tpu.dimension_semantics<arbitrary>], iteration_bounds = array<i64: 1, 1>, scalar_prefetch = 0 : i64, scratch_operands = 2 : i64, tpu.core_type = #tpu.core_type<tc>, window_params = [{transform_indices = @transform_0, window_bounds = array<i64: 8, 8, 512>}, {pipeline_mode = #tpu.pipeline_mode<synchronous>, transform_indices = @transform_1, window_bounds = array<i64: 2, 256, 512>}, {pipeline_mode = #tpu.pipeline_mode<synchronous>, transform_indices = @transform_2, window_bounds = array<i64: 2, 1, 512>}, {pipeline_mode = #tpu.pipeline_mode<synchronous>, transform_indices = @transform_3, window_bounds = array<i64: 128, 128>}, {pipeline_mode = #tpu.pipeline_mode<synchronous>, transform_indices = @transform_4, window_bounds = array<i64: 1, 128>}, {transform_indices = @transform_5, window_bounds = array<i64: 2, 8, 128>}, {transform_indices = @transform_6, window_bounds = array<i64: 2, 8, 128>}, {transform_indices = @transform_7, window_bounds = array<i64: 8, 128>}, {transform_indices = @transform_8, window_bounds = array<i64: 2, 8, 128>}, {transform_indices = @transform_9, window_bounds = array<i64: 2, 8, 128>}]} {
    %c0_i32 = arith.constant 0 : i32
    %0 = arith.cmpi eq, %arg1, %c0_i32 : i32
    %1 = arith.extui %0 : i1 to i32
    %c0_i32_0 = arith.constant 0 : i32
    %2 = arith.cmpi ne, %1, %c0_i32_0 : i32
    scf.if %2 {
      %c0_376 = arith.constant 0 : index
      %c0_377 = arith.constant 0 : index
      %c0_378 = arith.constant 0 : index
      %630 = vector.load %arg7[%c0_376, %c0_377, %c0_378] : memref<2x8x128xbf16, #tpu.memory_space<vmem>>, vector<1x8x128xbf16>
      %631 = vector.shape_cast %630 : vector<1x8x128xbf16> to vector<8x128xbf16>
      %c0_379 = arith.constant 0 : index
      %c0_380 = arith.constant 0 : index
      %c128_381 = arith.constant 128 : index
      %632 = vector.load %arg12[%c0_379, %c0_380, %c128_381] : memref<2x8x256xbf16, #tpu.memory_space<vmem>>, vector<1x8x128xbf16>
      %633 = vector.shape_cast %632 : vector<1x8x128xbf16> to vector<8x128xbf16>
      %634 = vector.shape_cast %631 : vector<8x128xbf16> to vector<1x8x128xbf16>
      tpu.vector_store %arg12[%c0_379, %c0_380, %c128_381], %634 {strides = array<i32>} : memref<2x8x256xbf16, #tpu.memory_space<vmem>>, vector<1x8x128xbf16>,
      %c0_382 = arith.constant 0 : index
      %c0_383 = arith.constant 0 : index
      %c0_384 = arith.constant 0 : index
      %635 = vector.load %arg8[%c0_382, %c0_383, %c0_384] : memref<2x8x128xf32, #tpu.memory_space<vmem>>, vector<1x8x128xf32>
      %636 = vector.shape_cast %635 : vector<1x8x128xf32> to vector<8x128xf32>
      %c0_385 = arith.constant 0 : index
      %c0_386 = arith.constant 0 : index
      %c0_387 = arith.constant 0 : index
      %637 = vector.load %arg13[%c0_385, %c0_386, %c0_387] : memref<2x8x128xf32, #tpu.memory_space<vmem>>, vector<1x8x128xf32>
      %638 = vector.shape_cast %637 : vector<1x8x128xf32> to vector<8x128xf32>
      %639 = vector.shape_cast %636 : vector<8x128xf32> to vector<1x8x128xf32>
      tpu.vector_store %arg13[%c0_385, %c0_386, %c0_387], %639 {strides = array<i32>} : memref<2x8x128xf32, #tpu.memory_space<vmem>>, vector<1x8x128xf32>,
      %c1_388 = arith.constant 1 : index
      %c0_389 = arith.constant 0 : index
      %c0_390 = arith.constant 0 : index
      %640 = vector.load %arg7[%c1_388, %c0_389, %c0_390] : memref<2x8x128xbf16, #tpu.memory_space<vmem>>, vector<1x8x128xbf16>
      %641 = vector.shape_cast %640 : vector<1x8x128xbf16> to vector<8x128xbf16>
      %c1_391 = arith.constant 1 : index
      %c0_392 = arith.constant 0 : index
      %c128_393 = arith.constant 128 : index
      %642 = vector.load %arg12[%c1_391, %c0_392, %c128_393] : memref<2x8x256xbf16, #tpu.memory_space<vmem>>, vector<1x8x128xbf16>
      %643 = vector.shape_cast %642 : vector<1x8x128xbf16> to vector<8x128xbf16>
      %644 = vector.shape_cast %641 : vector<8x128xbf16> to vector<1x8x128xbf16>
      tpu.vector_store %arg12[%c1_391, %c0_392, %c128_393], %644 {strides = array<i32>} : memref<2x8x256xbf16, #tpu.memory_space<vmem>>, vector<1x8x128xbf16>,
      %c1_394 = arith.constant 1 : index
      %c0_395 = arith.constant 0 : index
      %c0_396 = arith.constant 0 : index
      %645 = vector.load %arg8[%c1_394, %c0_395, %c0_396] : memref<2x8x128xf32, #tpu.memory_space<vmem>>, vector<1x8x128xf32>
      %646 = vector.shape_cast %645 : vector<1x8x128xf32> to vector<8x128xf32>
      %c1_397 = arith.constant 1 : index
      %c0_398 = arith.constant 0 : index
      %c0_399 = arith.constant 0 : index
      %647 = vector.load %arg13[%c1_397, %c0_398, %c0_399] : memref<2x8x128xf32, #tpu.memory_space<vmem>>, vector<1x8x128xf32>
      %648 = vector.shape_cast %647 : vector<1x8x128xf32> to vector<8x128xf32>
      %649 = vector.shape_cast %646 : vector<8x128xf32> to vector<1x8x128xf32>
      tpu.vector_store %arg13[%c1_397, %c0_398, %c0_399], %649 {strides = array<i32>} : memref<2x8x128xf32, #tpu.memory_space<vmem>>, vector<1x8x128xf32>,
    } else {
    }
    %c0_i32_1 = arith.constant 0 : i32
    %3 = arith.index_cast %c0_i32_1 : i32 to index
    %c0 = arith.constant 0 : index
    %c0_2 = arith.constant 0 : index
    %4 = vector.load %arg2[%3, %c0, %c0_2] : memref<8x8x512xbf16, #tpu.memory_space<vmem>>, vector<1x8x512xbf16>
    %5 = vector.shape_cast %4 : vector<1x8x512xbf16> to vector<8x512xbf16>
    %6 = arith.extf %5 : vector<8x512xbf16> to vector<8x512xf32>
    %c0_3 = arith.constant 0 : index
    %c0_4 = arith.constant 0 : index
    %c128 = arith.constant 128 : index
    %7 = vector.load %arg12[%c0_3, %c0_4, %c128] : memref<2x8x256xbf16, #tpu.memory_space<vmem>>, vector<1x8x128xbf16>
    %8 = vector.shape_cast %7 : vector<1x8x128xbf16> to vector<8x128xbf16>
    %c0_5 = arith.constant 0 : index
    %c128_6 = arith.constant 128 : index
    %c0_7 = arith.constant 0 : index
    %9 = vector.load %arg3[%c0_5, %c128_6, %c0_7] : memref<2x256x512xbf16, #tpu.memory_space<vmem>>, vector<1x128x512xbf16>
    %10 = vector.shape_cast %9 : vector<1x128x512xbf16> to vector<128x512xbf16>
    %cst = arith.constant dense<0.000000e+00> : vector<8x512xf32>
    %11 = tpu.matmul %8, %10, %cst {dimension_numbers = #tpu.dot_dimension_numbers<[1], [0], [0], [1], [0, 0, 1, 1], [], []>} : vector<8x128xbf16>, vector<128x512xbf16>, vector<8x512xf32> -> vector<8x512xf32>
    %12 = arith.addf %6, %11 : vector<8x512xf32>
    %c0_8 = arith.constant 0 : index
    %c0_9 = arith.constant 0 : index
    %c0_10 = arith.constant 0 : index
    %13 = vector.load %arg4[%c0_8, %c0_9, %c0_10] : memref<2x1x512xf32, #tpu.memory_space<vmem>>, vector<1x1x512xf32>
    %14 = vector.shape_cast %13 : vector<1x1x512xf32> to vector<1x512xf32>
    %15 = vector.broadcast %14 : vector<1x512xf32> to vector<8x512xf32>
    %16 = arith.addf %12, %15 : vector<8x512xf32>
    %17 = vector.extract_strided_slice %16 {offsets = [0, 0], sizes = [8, 384], strides = [1, 1]} : vector<8x512xf32> to vector<8x384xf32>
    %cst_11 = arith.constant 0.000000e+00 : f32
    %18 = vector.broadcast %cst_11 : f32 to vector<8x384xf32>
    %19 = arith.subf %18, %17 : vector<8x384xf32>
    %20 = math.exp %19 : vector<8x384xf32>
    %cst_12 = arith.constant 1.000000e+00 : f32
    %21 = vector.broadcast %cst_12 : f32 to vector<8x384xf32>
    %22 = arith.addf %21, %20 : vector<8x384xf32>
    %23 = tpu.reciprocal %22 {approx = true} : vector<8x384xf32> -> vector<8x384xf32>
    %24 = vector.extract_strided_slice %16 {offsets = [0, 384], sizes = [8, 128], strides = [1, 1]} : vector<8x512xf32> to vector<8x128xf32>
    %25 = math.tanh %24 : vector<8x128xf32>
    %26 = vector.extract_strided_slice %23 {offsets = [0, 128], sizes = [8, 128], strides = [1, 1]} : vector<8x384xf32> to vector<8x128xf32>
    %c0_13 = arith.constant 0 : index
    %c0_14 = arith.constant 0 : index
    %c0_15 = arith.constant 0 : index
    %27 = vector.load %arg13[%c0_13, %c0_14, %c0_15] : memref<2x8x128xf32, #tpu.memory_space<vmem>>, vector<1x8x128xf32>
    %28 = vector.shape_cast %27 : vector<1x8x128xf32> to vector<8x128xf32>
    %29 = arith.mulf %26, %28 : vector<8x128xf32>
    %30 = vector.extract_strided_slice %23 {offsets = [0, 0], sizes = [8, 128], strides = [1, 1]} : vector<8x384xf32> to vector<8x128xf32>
    %31 = arith.mulf %30, %25 : vector<8x128xf32>
    %32 = arith.addf %29, %31 : vector<8x128xf32>
    %33 = vector.extract_strided_slice %23 {offsets = [0, 256], sizes = [8, 128], strides = [1, 1]} : vector<8x384xf32> to vector<8x128xf32>
    %34 = math.tanh %32 : vector<8x128xf32>
    %35 = arith.mulf %33, %34 : vector<8x128xf32>
    %c0_16 = arith.constant 0 : index
    %c0_17 = arith.constant 0 : index
    %c0_18 = arith.constant 0 : index
    %36 = vector.load %arg13[%c0_16, %c0_17, %c0_18] : memref<2x8x128xf32, #tpu.memory_space<vmem>>, vector<1x8x128xf32>
    %37 = vector.shape_cast %36 : vector<1x8x128xf32> to vector<8x128xf32>
    %38 = vector.shape_cast %32 : vector<8x128xf32> to vector<1x8x128xf32>
    tpu.vector_store %arg13[%c0_16, %c0_17, %c0_18], %38 {strides = array<i32>} : memref<2x8x128xf32, #tpu.memory_space<vmem>>, vector<1x8x128xf32>,
    %39 = arith.truncf %35 : vector<8x128xf32> to vector<8x128xbf16>
    %c0_19 = arith.constant 0 : index
    %c0_20 = arith.constant 0 : index
    %c128_21 = arith.constant 128 : index
    %40 = vector.load %arg12[%c0_19, %c0_20, %c128_21] : memref<2x8x256xbf16, #tpu.memory_space<vmem>>, vector<1x8x128xbf16>
    %41 = vector.shape_cast %40 : vector<1x8x128xbf16> to vector<8x128xbf16>
    %42 = vector.shape_cast %39 : vector<8x128xbf16> to vector<1x8x128xbf16>
    tpu.vector_store %arg12[%c0_19, %c0_20, %c128_21], %42 {strides = array<i32>} : memref<2x8x256xbf16, #tpu.memory_space<vmem>>, vector<1x8x128xbf16>,
    %c1 = arith.constant 1 : index
    %c0_22 = arith.constant 0 : index
    %c0_23 = arith.constant 0 : index
    %43 = vector.load %arg12[%c1, %c0_22, %c0_23] : memref<2x8x256xbf16, #tpu.memory_space<vmem>>, vector<1x8x128xbf16>
    %44 = vector.shape_cast %43 : vector<1x8x128xbf16> to vector<8x128xbf16>
    %45 = vector.shape_cast %39 : vector<8x128xbf16> to vector<1x8x128xbf16>
    tpu.vector_store %arg12[%c1, %c0_22, %c0_23], %45 {strides = array<i32>} : memref<2x8x256xbf16, #tpu.memory_space<vmem>>, vector<1x8x128xbf16>,
    %c1_24 = arith.constant 1 : index
    %c0_25 = arith.constant 0 : index
    %c0_26 = arith.constant 0 : index
    %46 = vector.load %arg12[%c1_24, %c0_25, %c0_26] : memref<2x8x256xbf16, #tpu.memory_space<vmem>>, vector<1x8x256xbf16>
    %47 = vector.shape_cast %46 : vector<1x8x256xbf16> to vector<8x256xbf16>
    %c1_27 = arith.constant 1 : index
    %c0_28 = arith.constant 0 : index
    %c0_29 = arith.constant 0 : index
    %48 = vector.load %arg3[%c1_27, %c0_28, %c0_29] : memref<2x256x512xbf16, #tpu.memory_space<vmem>>, vector<1x256x512xbf16>
    %49 = vector.shape_cast %48 : vector<1x256x512xbf16> to vector<256x512xbf16>
    %cst_30 = arith.constant dense<0.000000e+00> : vector<8x512xf32>
    %50 = tpu.matmul %47, %49, %cst_30 {dimension_numbers = #tpu.dot_dimension_numbers<[1], [0], [0], [1], [0, 0, 1, 1], [], []>} : vector<8x256xbf16>, vector<256x512xbf16>, vector<8x512xf32> -> vector<8x512xf32>
    %c1_31 = arith.constant 1 : index
    %c0_32 = arith.constant 0 : index
    %c0_33 = arith.constant 0 : index
    %51 = vector.load %arg4[%c1_31, %c0_32, %c0_33] : memref<2x1x512xf32, #tpu.memory_space<vmem>>, vector<1x1x512xf32>
    %52 = vector.shape_cast %51 : vector<1x1x512xf32> to vector<1x512xf32>
    %53 = vector.broadcast %52 : vector<1x512xf32> to vector<8x512xf32>
    %54 = arith.addf %50, %53 : vector<8x512xf32>
    %55 = vector.extract_strided_slice %54 {offsets = [0, 0], sizes = [8, 384], strides = [1, 1]} : vector<8x512xf32> to vector<8x384xf32>
    %cst_34 = arith.constant 0.000000e+00 : f32
    %56 = vector.broadcast %cst_34 : f32 to vector<8x384xf32>
    %57 = arith.subf %56, %55 : vector<8x384xf32>
    %58 = math.exp %57 : vector<8x384xf32>
    %cst_35 = arith.constant 1.000000e+00 : f32
    %59 = vector.broadcast %cst_35 : f32 to vector<8x384xf32>
    %60 = arith.addf %59, %58 : vector<8x384xf32>
    %61 = tpu.reciprocal %60 {approx = true} : vector<8x384xf32> -> vector<8x384xf32>
    %62 = vector.extract_strided_slice %54 {offsets = [0, 384], sizes = [8, 128], strides = [1, 1]} : vector<8x512xf32> to vector<8x128xf32>
    %63 = math.tanh %62 : vector<8x128xf32>
    %64 = vector.extract_strided_slice %61 {offsets = [0, 128], sizes = [8, 128], strides = [1, 1]} : vector<8x384xf32> to vector<8x128xf32>
    %c1_36 = arith.constant 1 : index
    %c0_37 = arith.constant 0 : index
    %c0_38 = arith.constant 0 : index
    %65 = vector.load %arg13[%c1_36, %c0_37, %c0_38] : memref<2x8x128xf32, #tpu.memory_space<vmem>>, vector<1x8x128xf32>
    %66 = vector.shape_cast %65 : vector<1x8x128xf32> to vector<8x128xf32>
    %67 = arith.mulf %64, %66 : vector<8x128xf32>
    %68 = vector.extract_strided_slice %61 {offsets = [0, 0], sizes = [8, 128], strides = [1, 1]} : vector<8x384xf32> to vector<8x128xf32>
    %69 = arith.mulf %68, %63 : vector<8x128xf32>
    %70 = arith.addf %67, %69 : vector<8x128xf32>
    %71 = vector.extract_strided_slice %61 {offsets = [0, 256], sizes = [8, 128], strides = [1, 1]} : vector<8x384xf32> to vector<8x128xf32>
    %72 = math.tanh %70 : vector<8x128xf32>
    %73 = arith.mulf %71, %72 : vector<8x128xf32>
    %c1_39 = arith.constant 1 : index
    %c0_40 = arith.constant 0 : index
    %c0_41 = arith.constant 0 : index
    %74 = vector.load %arg13[%c1_39, %c0_40, %c0_41] : memref<2x8x128xf32, #tpu.memory_space<vmem>>, vector<1x8x128xf32>
    %75 = vector.shape_cast %74 : vector<1x8x128xf32> to vector<8x128xf32>
    %76 = vector.shape_cast %70 : vector<8x128xf32> to vector<1x8x128xf32>
    tpu.vector_store %arg13[%c1_39, %c0_40, %c0_41], %76 {strides = array<i32>} : memref<2x8x128xf32, #tpu.memory_space<vmem>>, vector<1x8x128xf32>,
    %77 = arith.truncf %73 : vector<8x128xf32> to vector<8x128xbf16>
    %c1_42 = arith.constant 1 : index
    %c0_43 = arith.constant 0 : index
    %c128_44 = arith.constant 128 : index
    %78 = vector.load %arg12[%c1_42, %c0_43, %c128_44] : memref<2x8x256xbf16, #tpu.memory_space<vmem>>, vector<1x8x128xbf16>
    %79 = vector.shape_cast %78 : vector<1x8x128xbf16> to vector<8x128xbf16>
    %80 = vector.shape_cast %77 : vector<8x128xbf16> to vector<1x8x128xbf16>
    tpu.vector_store %arg12[%c1_42, %c0_43, %c128_44], %80 {strides = array<i32>} : memref<2x8x256xbf16, #tpu.memory_space<vmem>>, vector<1x8x128xbf16>,
    %c1_i32 = arith.constant 1 : i32
    %81 = arith.index_cast %c1_i32 : i32 to index
    %c0_45 = arith.constant 0 : index
    %c0_46 = arith.constant 0 : index
    %82 = vector.load %arg2[%81, %c0_45, %c0_46] : memref<8x8x512xbf16, #tpu.memory_space<vmem>>, vector<1x8x512xbf16>
    %83 = vector.shape_cast %82 : vector<1x8x512xbf16> to vector<8x512xbf16>
    %84 = arith.extf %83 : vector<8x512xbf16> to vector<8x512xf32>
    %c0_47 = arith.constant 0 : index
    %c0_48 = arith.constant 0 : index
    %c128_49 = arith.constant 128 : index
    %85 = vector.load %arg12[%c0_47, %c0_48, %c128_49] : memref<2x8x256xbf16, #tpu.memory_space<vmem>>, vector<1x8x128xbf16>
    %86 = vector.shape_cast %85 : vector<1x8x128xbf16> to vector<8x128xbf16>
    %c0_50 = arith.constant 0 : index
    %c128_51 = arith.constant 128 : index
    %c0_52 = arith.constant 0 : index
    %87 = vector.load %arg3[%c0_50, %c128_51, %c0_52] : memref<2x256x512xbf16, #tpu.memory_space<vmem>>, vector<1x128x512xbf16>
    %88 = vector.shape_cast %87 : vector<1x128x512xbf16> to vector<128x512xbf16>
    %cst_53 = arith.constant dense<0.000000e+00> : vector<8x512xf32>
    %89 = tpu.matmul %86, %88, %cst_53 {dimension_numbers = #tpu.dot_dimension_numbers<[1], [0], [0], [1], [0, 0, 1, 1], [], []>} : vector<8x128xbf16>, vector<128x512xbf16>, vector<8x512xf32> -> vector<8x512xf32>
    %90 = arith.addf %84, %89 : vector<8x512xf32>
    %c0_54 = arith.constant 0 : index
    %c0_55 = arith.constant 0 : index
    %c0_56 = arith.constant 0 : index
    %91 = vector.load %arg4[%c0_54, %c0_55, %c0_56] : memref<2x1x512xf32, #tpu.memory_space<vmem>>, vector<1x1x512xf32>
    %92 = vector.shape_cast %91 : vector<1x1x512xf32> to vector<1x512xf32>
    %93 = vector.broadcast %92 : vector<1x512xf32> to vector<8x512xf32>
    %94 = arith.addf %90, %93 : vector<8x512xf32>
    %95 = vector.extract_strided_slice %94 {offsets = [0, 0], sizes = [8, 384], strides = [1, 1]} : vector<8x512xf32> to vector<8x384xf32>
    %cst_57 = arith.constant 0.000000e+00 : f32
    %96 = vector.broadcast %cst_57 : f32 to vector<8x384xf32>
    %97 = arith.subf %96, %95 : vector<8x384xf32>
    %98 = math.exp %97 : vector<8x384xf32>
    %cst_58 = arith.constant 1.000000e+00 : f32
    %99 = vector.broadcast %cst_58 : f32 to vector<8x384xf32>
    %100 = arith.addf %99, %98 : vector<8x384xf32>
    %101 = tpu.reciprocal %100 {approx = true} : vector<8x384xf32> -> vector<8x384xf32>
    %102 = vector.extract_strided_slice %94 {offsets = [0, 384], sizes = [8, 128], strides = [1, 1]} : vector<8x512xf32> to vector<8x128xf32>
    %103 = math.tanh %102 : vector<8x128xf32>
    %104 = vector.extract_strided_slice %101 {offsets = [0, 128], sizes = [8, 128], strides = [1, 1]} : vector<8x384xf32> to vector<8x128xf32>
    %c0_59 = arith.constant 0 : index
    %c0_60 = arith.constant 0 : index
    %c0_61 = arith.constant 0 : index
    %105 = vector.load %arg13[%c0_59, %c0_60, %c0_61] : memref<2x8x128xf32, #tpu.memory_space<vmem>>, vector<1x8x128xf32>
    %106 = vector.shape_cast %105 : vector<1x8x128xf32> to vector<8x128xf32>
    %107 = arith.mulf %104, %106 : vector<8x128xf32>
    %108 = vector.extract_strided_slice %101 {offsets = [0, 0], sizes = [8, 128], strides = [1, 1]} : vector<8x384xf32> to vector<8x128xf32>
    %109 = arith.mulf %108, %103 : vector<8x128xf32>
    %110 = arith.addf %107, %109 : vector<8x128xf32>
    %111 = vector.extract_strided_slice %101 {offsets = [0, 256], sizes = [8, 128], strides = [1, 1]} : vector<8x384xf32> to vector<8x128xf32>
    %112 = math.tanh %110 : vector<8x128xf32>
    %113 = arith.mulf %111, %112 : vector<8x128xf32>
    %c0_62 = arith.constant 0 : index
    %c0_63 = arith.constant 0 : index
    %c0_64 = arith.constant 0 : index
    %114 = vector.load %arg13[%c0_62, %c0_63, %c0_64] : memref<2x8x128xf32, #tpu.memory_space<vmem>>, vector<1x8x128xf32>
    %115 = vector.shape_cast %114 : vector<1x8x128xf32> to vector<8x128xf32>
    %116 = vector.shape_cast %110 : vector<8x128xf32> to vector<1x8x128xf32>
    tpu.vector_store %arg13[%c0_62, %c0_63, %c0_64], %116 {strides = array<i32>} : memref<2x8x128xf32, #tpu.memory_space<vmem>>, vector<1x8x128xf32>,
    %117 = arith.truncf %113 : vector<8x128xf32> to vector<8x128xbf16>
    %c0_65 = arith.constant 0 : index
    %c0_66 = arith.constant 0 : index
    %c128_67 = arith.constant 128 : index
    %118 = vector.load %arg12[%c0_65, %c0_66, %c128_67] : memref<2x8x256xbf16, #tpu.memory_space<vmem>>, vector<1x8x128xbf16>
    %119 = vector.shape_cast %118 : vector<1x8x128xbf16> to vector<8x128xbf16>
    %120 = vector.shape_cast %117 : vector<8x128xbf16> to vector<1x8x128xbf16>
    tpu.vector_store %arg12[%c0_65, %c0_66, %c128_67], %120 {strides = array<i32>} : memref<2x8x256xbf16, #tpu.memory_space<vmem>>, vector<1x8x128xbf16>,
    %c1_68 = arith.constant 1 : index
    %c0_69 = arith.constant 0 : index
    %c0_70 = arith.constant 0 : index
    %121 = vector.load %arg12[%c1_68, %c0_69, %c0_70] : memref<2x8x256xbf16, #tpu.memory_space<vmem>>, vector<1x8x128xbf16>
    %122 = vector.shape_cast %121 : vector<1x8x128xbf16> to vector<8x128xbf16>
    %123 = vector.shape_cast %117 : vector<8x128xbf16> to vector<1x8x128xbf16>
    tpu.vector_store %arg12[%c1_68, %c0_69, %c0_70], %123 {strides = array<i32>} : memref<2x8x256xbf16, #tpu.memory_space<vmem>>, vector<1x8x128xbf16>,
    %c1_71 = arith.constant 1 : index
    %c0_72 = arith.constant 0 : index
    %c0_73 = arith.constant 0 : index
    %124 = vector.load %arg12[%c1_71, %c0_72, %c0_73] : memref<2x8x256xbf16, #tpu.memory_space<vmem>>, vector<1x8x256xbf16>
    %125 = vector.shape_cast %124 : vector<1x8x256xbf16> to vector<8x256xbf16>
    %c1_74 = arith.constant 1 : index
    %c0_75 = arith.constant 0 : index
    %c0_76 = arith.constant 0 : index
    %126 = vector.load %arg3[%c1_74, %c0_75, %c0_76] : memref<2x256x512xbf16, #tpu.memory_space<vmem>>, vector<1x256x512xbf16>
    %127 = vector.shape_cast %126 : vector<1x256x512xbf16> to vector<256x512xbf16>
    %cst_77 = arith.constant dense<0.000000e+00> : vector<8x512xf32>
    %128 = tpu.matmul %125, %127, %cst_77 {dimension_numbers = #tpu.dot_dimension_numbers<[1], [0], [0], [1], [0, 0, 1, 1], [], []>} : vector<8x256xbf16>, vector<256x512xbf16>, vector<8x512xf32> -> vector<8x512xf32>
    %c1_78 = arith.constant 1 : index
    %c0_79 = arith.constant 0 : index
    %c0_80 = arith.constant 0 : index
    %129 = vector.load %arg4[%c1_78, %c0_79, %c0_80] : memref<2x1x512xf32, #tpu.memory_space<vmem>>, vector<1x1x512xf32>
    %130 = vector.shape_cast %129 : vector<1x1x512xf32> to vector<1x512xf32>
    %131 = vector.broadcast %130 : vector<1x512xf32> to vector<8x512xf32>
    %132 = arith.addf %128, %131 : vector<8x512xf32>
    %133 = vector.extract_strided_slice %132 {offsets = [0, 0], sizes = [8, 384], strides = [1, 1]} : vector<8x512xf32> to vector<8x384xf32>
    %cst_81 = arith.constant 0.000000e+00 : f32
    %134 = vector.broadcast %cst_81 : f32 to vector<8x384xf32>
    %135 = arith.subf %134, %133 : vector<8x384xf32>
    %136 = math.exp %135 : vector<8x384xf32>
    %cst_82 = arith.constant 1.000000e+00 : f32
    %137 = vector.broadcast %cst_82 : f32 to vector<8x384xf32>
    %138 = arith.addf %137, %136 : vector<8x384xf32>
    %139 = tpu.reciprocal %138 {approx = true} : vector<8x384xf32> -> vector<8x384xf32>
    %140 = vector.extract_strided_slice %132 {offsets = [0, 384], sizes = [8, 128], strides = [1, 1]} : vector<8x512xf32> to vector<8x128xf32>
    %141 = math.tanh %140 : vector<8x128xf32>
    %142 = vector.extract_strided_slice %139 {offsets = [0, 128], sizes = [8, 128], strides = [1, 1]} : vector<8x384xf32> to vector<8x128xf32>
    %c1_83 = arith.constant 1 : index
    %c0_84 = arith.constant 0 : index
    %c0_85 = arith.constant 0 : index
    %143 = vector.load %arg13[%c1_83, %c0_84, %c0_85] : memref<2x8x128xf32, #tpu.memory_space<vmem>>, vector<1x8x128xf32>
    %144 = vector.shape_cast %143 : vector<1x8x128xf32> to vector<8x128xf32>
    %145 = arith.mulf %142, %144 : vector<8x128xf32>
    %146 = vector.extract_strided_slice %139 {offsets = [0, 0], sizes = [8, 128], strides = [1, 1]} : vector<8x384xf32> to vector<8x128xf32>
    %147 = arith.mulf %146, %141 : vector<8x128xf32>
    %148 = arith.addf %145, %147 : vector<8x128xf32>
    %149 = vector.extract_strided_slice %139 {offsets = [0, 256], sizes = [8, 128], strides = [1, 1]} : vector<8x384xf32> to vector<8x128xf32>
    %150 = math.tanh %148 : vector<8x128xf32>
    %151 = arith.mulf %149, %150 : vector<8x128xf32>
    %c1_86 = arith.constant 1 : index
    %c0_87 = arith.constant 0 : index
    %c0_88 = arith.constant 0 : index
    %152 = vector.load %arg13[%c1_86, %c0_87, %c0_88] : memref<2x8x128xf32, #tpu.memory_space<vmem>>, vector<1x8x128xf32>
    %153 = vector.shape_cast %152 : vector<1x8x128xf32> to vector<8x128xf32>
    %154 = vector.shape_cast %148 : vector<8x128xf32> to vector<1x8x128xf32>
    tpu.vector_store %arg13[%c1_86, %c0_87, %c0_88], %154 {strides = array<i32>} : memref<2x8x128xf32, #tpu.memory_space<vmem>>, vector<1x8x128xf32>,
    %155 = arith.truncf %151 : vector<8x128xf32> to vector<8x128xbf16>
    %c1_89 = arith.constant 1 : index
    %c0_90 = arith.constant 0 : index
    %c128_91 = arith.constant 128 : index
    %156 = vector.load %arg12[%c1_89, %c0_90, %c128_91] : memref<2x8x256xbf16, #tpu.memory_space<vmem>>, vector<1x8x128xbf16>
    %157 = vector.shape_cast %156 : vector<1x8x128xbf16> to vector<8x128xbf16>
    %158 = vector.shape_cast %155 : vector<8x128xbf16> to vector<1x8x128xbf16>
    tpu.vector_store %arg12[%c1_89, %c0_90, %c128_91], %158 {strides = array<i32>} : memref<2x8x256xbf16, #tpu.memory_space<vmem>>, vector<1x8x128xbf16>,
    %c2_i32 = arith.constant 2 : i32
    %159 = arith.index_cast %c2_i32 : i32 to index
    %c0_92 = arith.constant 0 : index
    %c0_93 = arith.constant 0 : index
    %160 = vector.load %arg2[%159, %c0_92, %c0_93] : memref<8x8x512xbf16, #tpu.memory_space<vmem>>, vector<1x8x512xbf16>
    %161 = vector.shape_cast %160 : vector<1x8x512xbf16> to vector<8x512xbf16>
    %162 = arith.extf %161 : vector<8x512xbf16> to vector<8x512xf32>
    %c0_94 = arith.constant 0 : index
    %c0_95 = arith.constant 0 : index
    %c128_96 = arith.constant 128 : index
    %163 = vector.load %arg12[%c0_94, %c0_95, %c128_96] : memref<2x8x256xbf16, #tpu.memory_space<vmem>>, vector<1x8x128xbf16>
    %164 = vector.shape_cast %163 : vector<1x8x128xbf16> to vector<8x128xbf16>
    %c0_97 = arith.constant 0 : index
    %c128_98 = arith.constant 128 : index
    %c0_99 = arith.constant 0 : index
    %165 = vector.load %arg3[%c0_97, %c128_98, %c0_99] : memref<2x256x512xbf16, #tpu.memory_space<vmem>>, vector<1x128x512xbf16>
    %166 = vector.shape_cast %165 : vector<1x128x512xbf16> to vector<128x512xbf16>
    %cst_100 = arith.constant dense<0.000000e+00> : vector<8x512xf32>
    %167 = tpu.matmul %164, %166, %cst_100 {dimension_numbers = #tpu.dot_dimension_numbers<[1], [0], [0], [1], [0, 0, 1, 1], [], []>} : vector<8x128xbf16>, vector<128x512xbf16>, vector<8x512xf32> -> vector<8x512xf32>
    %168 = arith.addf %162, %167 : vector<8x512xf32>
    %c0_101 = arith.constant 0 : index
    %c0_102 = arith.constant 0 : index
    %c0_103 = arith.constant 0 : index
    %169 = vector.load %arg4[%c0_101, %c0_102, %c0_103] : memref<2x1x512xf32, #tpu.memory_space<vmem>>, vector<1x1x512xf32>
    %170 = vector.shape_cast %169 : vector<1x1x512xf32> to vector<1x512xf32>
    %171 = vector.broadcast %170 : vector<1x512xf32> to vector<8x512xf32>
    %172 = arith.addf %168, %171 : vector<8x512xf32>
    %173 = vector.extract_strided_slice %172 {offsets = [0, 0], sizes = [8, 384], strides = [1, 1]} : vector<8x512xf32> to vector<8x384xf32>
    %cst_104 = arith.constant 0.000000e+00 : f32
    %174 = vector.broadcast %cst_104 : f32 to vector<8x384xf32>
    %175 = arith.subf %174, %173 : vector<8x384xf32>
    %176 = math.exp %175 : vector<8x384xf32>
    %cst_105 = arith.constant 1.000000e+00 : f32
    %177 = vector.broadcast %cst_105 : f32 to vector<8x384xf32>
    %178 = arith.addf %177, %176 : vector<8x384xf32>
    %179 = tpu.reciprocal %178 {approx = true} : vector<8x384xf32> -> vector<8x384xf32>
    %180 = vector.extract_strided_slice %172 {offsets = [0, 384], sizes = [8, 128], strides = [1, 1]} : vector<8x512xf32> to vector<8x128xf32>
    %181 = math.tanh %180 : vector<8x128xf32>
    %182 = vector.extract_strided_slice %179 {offsets = [0, 128], sizes = [8, 128], strides = [1, 1]} : vector<8x384xf32> to vector<8x128xf32>
    %c0_106 = arith.constant 0 : index
    %c0_107 = arith.constant 0 : index
    %c0_108 = arith.constant 0 : index
    %183 = vector.load %arg13[%c0_106, %c0_107, %c0_108] : memref<2x8x128xf32, #tpu.memory_space<vmem>>, vector<1x8x128xf32>
    %184 = vector.shape_cast %183 : vector<1x8x128xf32> to vector<8x128xf32>
    %185 = arith.mulf %182, %184 : vector<8x128xf32>
    %186 = vector.extract_strided_slice %179 {offsets = [0, 0], sizes = [8, 128], strides = [1, 1]} : vector<8x384xf32> to vector<8x128xf32>
    %187 = arith.mulf %186, %181 : vector<8x128xf32>
    %188 = arith.addf %185, %187 : vector<8x128xf32>
    %189 = vector.extract_strided_slice %179 {offsets = [0, 256], sizes = [8, 128], strides = [1, 1]} : vector<8x384xf32> to vector<8x128xf32>
    %190 = math.tanh %188 : vector<8x128xf32>
    %191 = arith.mulf %189, %190 : vector<8x128xf32>
    %c0_109 = arith.constant 0 : index
    %c0_110 = arith.constant 0 : index
    %c0_111 = arith.constant 0 : index
    %192 = vector.load %arg13[%c0_109, %c0_110, %c0_111] : memref<2x8x128xf32, #tpu.memory_space<vmem>>, vector<1x8x128xf32>
    %193 = vector.shape_cast %192 : vector<1x8x128xf32> to vector<8x128xf32>
    %194 = vector.shape_cast %188 : vector<8x128xf32> to vector<1x8x128xf32>
    tpu.vector_store %arg13[%c0_109, %c0_110, %c0_111], %194 {strides = array<i32>} : memref<2x8x128xf32, #tpu.memory_space<vmem>>, vector<1x8x128xf32>,
    %195 = arith.truncf %191 : vector<8x128xf32> to vector<8x128xbf16>
    %c0_112 = arith.constant 0 : index
    %c0_113 = arith.constant 0 : index
    %c128_114 = arith.constant 128 : index
    %196 = vector.load %arg12[%c0_112, %c0_113, %c128_114] : memref<2x8x256xbf16, #tpu.memory_space<vmem>>, vector<1x8x128xbf16>
    %197 = vector.shape_cast %196 : vector<1x8x128xbf16> to vector<8x128xbf16>
    %198 = vector.shape_cast %195 : vector<8x128xbf16> to vector<1x8x128xbf16>
    tpu.vector_store %arg12[%c0_112, %c0_113, %c128_114], %198 {strides = array<i32>} : memref<2x8x256xbf16, #tpu.memory_space<vmem>>, vector<1x8x128xbf16>,
    %c1_115 = arith.constant 1 : index
    %c0_116 = arith.constant 0 : index
    %c0_117 = arith.constant 0 : index
    %199 = vector.load %arg12[%c1_115, %c0_116, %c0_117] : memref<2x8x256xbf16, #tpu.memory_space<vmem>>, vector<1x8x128xbf16>
    %200 = vector.shape_cast %199 : vector<1x8x128xbf16> to vector<8x128xbf16>
    %201 = vector.shape_cast %195 : vector<8x128xbf16> to vector<1x8x128xbf16>
    tpu.vector_store %arg12[%c1_115, %c0_116, %c0_117], %201 {strides = array<i32>} : memref<2x8x256xbf16, #tpu.memory_space<vmem>>, vector<1x8x128xbf16>,
    %c1_118 = arith.constant 1 : index
    %c0_119 = arith.constant 0 : index
    %c0_120 = arith.constant 0 : index
    %202 = vector.load %arg12[%c1_118, %c0_119, %c0_120] : memref<2x8x256xbf16, #tpu.memory_space<vmem>>, vector<1x8x256xbf16>
    %203 = vector.shape_cast %202 : vector<1x8x256xbf16> to vector<8x256xbf16>
    %c1_121 = arith.constant 1 : index
    %c0_122 = arith.constant 0 : index
    %c0_123 = arith.constant 0 : index
    %204 = vector.load %arg3[%c1_121, %c0_122, %c0_123] : memref<2x256x512xbf16, #tpu.memory_space<vmem>>, vector<1x256x512xbf16>
    %205 = vector.shape_cast %204 : vector<1x256x512xbf16> to vector<256x512xbf16>
    %cst_124 = arith.constant dense<0.000000e+00> : vector<8x512xf32>
    %206 = tpu.matmul %203, %205, %cst_124 {dimension_numbers = #tpu.dot_dimension_numbers<[1], [0], [0], [1], [0, 0, 1, 1], [], []>} : vector<8x256xbf16>, vector<256x512xbf16>, vector<8x512xf32> -> vector<8x512xf32>
    %c1_125 = arith.constant 1 : index
    %c0_126 = arith.constant 0 : index
    %c0_127 = arith.constant 0 : index
    %207 = vector.load %arg4[%c1_125, %c0_126, %c0_127] : memref<2x1x512xf32, #tpu.memory_space<vmem>>, vector<1x1x512xf32>
    %208 = vector.shape_cast %207 : vector<1x1x512xf32> to vector<1x512xf32>
    %209 = vector.broadcast %208 : vector<1x512xf32> to vector<8x512xf32>
    %210 = arith.addf %206, %209 : vector<8x512xf32>
    %211 = vector.extract_strided_slice %210 {offsets = [0, 0], sizes = [8, 384], strides = [1, 1]} : vector<8x512xf32> to vector<8x384xf32>
    %cst_128 = arith.constant 0.000000e+00 : f32
    %212 = vector.broadcast %cst_128 : f32 to vector<8x384xf32>
    %213 = arith.subf %212, %211 : vector<8x384xf32>
    %214 = math.exp %213 : vector<8x384xf32>
    %cst_129 = arith.constant 1.000000e+00 : f32
    %215 = vector.broadcast %cst_129 : f32 to vector<8x384xf32>
    %216 = arith.addf %215, %214 : vector<8x384xf32>
    %217 = tpu.reciprocal %216 {approx = true} : vector<8x384xf32> -> vector<8x384xf32>
    %218 = vector.extract_strided_slice %210 {offsets = [0, 384], sizes = [8, 128], strides = [1, 1]} : vector<8x512xf32> to vector<8x128xf32>
    %219 = math.tanh %218 : vector<8x128xf32>
    %220 = vector.extract_strided_slice %217 {offsets = [0, 128], sizes = [8, 128], strides = [1, 1]} : vector<8x384xf32> to vector<8x128xf32>
    %c1_130 = arith.constant 1 : index
    %c0_131 = arith.constant 0 : index
    %c0_132 = arith.constant 0 : index
    %221 = vector.load %arg13[%c1_130, %c0_131, %c0_132] : memref<2x8x128xf32, #tpu.memory_space<vmem>>, vector<1x8x128xf32>
    %222 = vector.shape_cast %221 : vector<1x8x128xf32> to vector<8x128xf32>
    %223 = arith.mulf %220, %222 : vector<8x128xf32>
    %224 = vector.extract_strided_slice %217 {offsets = [0, 0], sizes = [8, 128], strides = [1, 1]} : vector<8x384xf32> to vector<8x128xf32>
    %225 = arith.mulf %224, %219 : vector<8x128xf32>
    %226 = arith.addf %223, %225 : vector<8x128xf32>
    %227 = vector.extract_strided_slice %217 {offsets = [0, 256], sizes = [8, 128], strides = [1, 1]} : vector<8x384xf32> to vector<8x128xf32>
    %228 = math.tanh %226 : vector<8x128xf32>
    %229 = arith.mulf %227, %228 : vector<8x128xf32>
    %c1_133 = arith.constant 1 : index
    %c0_134 = arith.constant 0 : index
    %c0_135 = arith.constant 0 : index
    %230 = vector.load %arg13[%c1_133, %c0_134, %c0_135] : memref<2x8x128xf32, #tpu.memory_space<vmem>>, vector<1x8x128xf32>
    %231 = vector.shape_cast %230 : vector<1x8x128xf32> to vector<8x128xf32>
    %232 = vector.shape_cast %226 : vector<8x128xf32> to vector<1x8x128xf32>
    tpu.vector_store %arg13[%c1_133, %c0_134, %c0_135], %232 {strides = array<i32>} : memref<2x8x128xf32, #tpu.memory_space<vmem>>, vector<1x8x128xf32>,
    %233 = arith.truncf %229 : vector<8x128xf32> to vector<8x128xbf16>
    %c1_136 = arith.constant 1 : index
    %c0_137 = arith.constant 0 : index
    %c128_138 = arith.constant 128 : index
    %234 = vector.load %arg12[%c1_136, %c0_137, %c128_138] : memref<2x8x256xbf16, #tpu.memory_space<vmem>>, vector<1x8x128xbf16>
    %235 = vector.shape_cast %234 : vector<1x8x128xbf16> to vector<8x128xbf16>
    %236 = vector.shape_cast %233 : vector<8x128xbf16> to vector<1x8x128xbf16>
    tpu.vector_store %arg12[%c1_136, %c0_137, %c128_138], %236 {strides = array<i32>} : memref<2x8x256xbf16, #tpu.memory_space<vmem>>, vector<1x8x128xbf16>,
    %c3_i32 = arith.constant 3 : i32
    %237 = arith.index_cast %c3_i32 : i32 to index
    %c0_139 = arith.constant 0 : index
    %c0_140 = arith.constant 0 : index
    %238 = vector.load %arg2[%237, %c0_139, %c0_140] : memref<8x8x512xbf16, #tpu.memory_space<vmem>>, vector<1x8x512xbf16>
    %239 = vector.shape_cast %238 : vector<1x8x512xbf16> to vector<8x512xbf16>
    %240 = arith.extf %239 : vector<8x512xbf16> to vector<8x512xf32>
    %c0_141 = arith.constant 0 : index
    %c0_142 = arith.constant 0 : index
    %c128_143 = arith.constant 128 : index
    %241 = vector.load %arg12[%c0_141, %c0_142, %c128_143] : memref<2x8x256xbf16, #tpu.memory_space<vmem>>, vector<1x8x128xbf16>
    %242 = vector.shape_cast %241 : vector<1x8x128xbf16> to vector<8x128xbf16>
    %c0_144 = arith.constant 0 : index
    %c128_145 = arith.constant 128 : index
    %c0_146 = arith.constant 0 : index
    %243 = vector.load %arg3[%c0_144, %c128_145, %c0_146] : memref<2x256x512xbf16, #tpu.memory_space<vmem>>, vector<1x128x512xbf16>
    %244 = vector.shape_cast %243 : vector<1x128x512xbf16> to vector<128x512xbf16>
    %cst_147 = arith.constant dense<0.000000e+00> : vector<8x512xf32>
    %245 = tpu.matmul %242, %244, %cst_147 {dimension_numbers = #tpu.dot_dimension_numbers<[1], [0], [0], [1], [0, 0, 1, 1], [], []>} : vector<8x128xbf16>, vector<128x512xbf16>, vector<8x512xf32> -> vector<8x512xf32>
    %246 = arith.addf %240, %245 : vector<8x512xf32>
    %c0_148 = arith.constant 0 : index
    %c0_149 = arith.constant 0 : index
    %c0_150 = arith.constant 0 : index
    %247 = vector.load %arg4[%c0_148, %c0_149, %c0_150] : memref<2x1x512xf32, #tpu.memory_space<vmem>>, vector<1x1x512xf32>
    %248 = vector.shape_cast %247 : vector<1x1x512xf32> to vector<1x512xf32>
    %249 = vector.broadcast %248 : vector<1x512xf32> to vector<8x512xf32>
    %250 = arith.addf %246, %249 : vector<8x512xf32>
    %251 = vector.extract_strided_slice %250 {offsets = [0, 0], sizes = [8, 384], strides = [1, 1]} : vector<8x512xf32> to vector<8x384xf32>
    %cst_151 = arith.constant 0.000000e+00 : f32
    %252 = vector.broadcast %cst_151 : f32 to vector<8x384xf32>
    %253 = arith.subf %252, %251 : vector<8x384xf32>
    %254 = math.exp %253 : vector<8x384xf32>
    %cst_152 = arith.constant 1.000000e+00 : f32
    %255 = vector.broadcast %cst_152 : f32 to vector<8x384xf32>
    %256 = arith.addf %255, %254 : vector<8x384xf32>
    %257 = tpu.reciprocal %256 {approx = true} : vector<8x384xf32> -> vector<8x384xf32>
    %258 = vector.extract_strided_slice %250 {offsets = [0, 384], sizes = [8, 128], strides = [1, 1]} : vector<8x512xf32> to vector<8x128xf32>
    %259 = math.tanh %258 : vector<8x128xf32>
    %260 = vector.extract_strided_slice %257 {offsets = [0, 128], sizes = [8, 128], strides = [1, 1]} : vector<8x384xf32> to vector<8x128xf32>
    %c0_153 = arith.constant 0 : index
    %c0_154 = arith.constant 0 : index
    %c0_155 = arith.constant 0 : index
    %261 = vector.load %arg13[%c0_153, %c0_154, %c0_155] : memref<2x8x128xf32, #tpu.memory_space<vmem>>, vector<1x8x128xf32>
    %262 = vector.shape_cast %261 : vector<1x8x128xf32> to vector<8x128xf32>
    %263 = arith.mulf %260, %262 : vector<8x128xf32>
    %264 = vector.extract_strided_slice %257 {offsets = [0, 0], sizes = [8, 128], strides = [1, 1]} : vector<8x384xf32> to vector<8x128xf32>
    %265 = arith.mulf %264, %259 : vector<8x128xf32>
    %266 = arith.addf %263, %265 : vector<8x128xf32>
    %267 = vector.extract_strided_slice %257 {offsets = [0, 256], sizes = [8, 128], strides = [1, 1]} : vector<8x384xf32> to vector<8x128xf32>
    %268 = math.tanh %266 : vector<8x128xf32>
    %269 = arith.mulf %267, %268 : vector<8x128xf32>
    %c0_156 = arith.constant 0 : index
    %c0_157 = arith.constant 0 : index
    %c0_158 = arith.constant 0 : index
    %270 = vector.load %arg13[%c0_156, %c0_157, %c0_158] : memref<2x8x128xf32, #tpu.memory_space<vmem>>, vector<1x8x128xf32>
    %271 = vector.shape_cast %270 : vector<1x8x128xf32> to vector<8x128xf32>
    %272 = vector.shape_cast %266 : vector<8x128xf32> to vector<1x8x128xf32>
    tpu.vector_store %arg13[%c0_156, %c0_157, %c0_158], %272 {strides = array<i32>} : memref<2x8x128xf32, #tpu.memory_space<vmem>>, vector<1x8x128xf32>,
    %273 = arith.truncf %269 : vector<8x128xf32> to vector<8x128xbf16>
    %c0_159 = arith.constant 0 : index
    %c0_160 = arith.constant 0 : index
    %c128_161 = arith.constant 128 : index
    %274 = vector.load %arg12[%c0_159, %c0_160, %c128_161] : memref<2x8x256xbf16, #tpu.memory_space<vmem>>, vector<1x8x128xbf16>
    %275 = vector.shape_cast %274 : vector<1x8x128xbf16> to vector<8x128xbf16>
    %276 = vector.shape_cast %273 : vector<8x128xbf16> to vector<1x8x128xbf16>
    tpu.vector_store %arg12[%c0_159, %c0_160, %c128_161], %276 {strides = array<i32>} : memref<2x8x256xbf16, #tpu.memory_space<vmem>>, vector<1x8x128xbf16>,
    %c1_162 = arith.constant 1 : index
    %c0_163 = arith.constant 0 : index
    %c0_164 = arith.constant 0 : index
    %277 = vector.load %arg12[%c1_162, %c0_163, %c0_164] : memref<2x8x256xbf16, #tpu.memory_space<vmem>>, vector<1x8x128xbf16>
    %278 = vector.shape_cast %277 : vector<1x8x128xbf16> to vector<8x128xbf16>
    %279 = vector.shape_cast %273 : vector<8x128xbf16> to vector<1x8x128xbf16>
    tpu.vector_store %arg12[%c1_162, %c0_163, %c0_164], %279 {strides = array<i32>} : memref<2x8x256xbf16, #tpu.memory_space<vmem>>, vector<1x8x128xbf16>,
    %c1_165 = arith.constant 1 : index
    %c0_166 = arith.constant 0 : index
    %c0_167 = arith.constant 0 : index
    %280 = vector.load %arg12[%c1_165, %c0_166, %c0_167] : memref<2x8x256xbf16, #tpu.memory_space<vmem>>, vector<1x8x256xbf16>
    %281 = vector.shape_cast %280 : vector<1x8x256xbf16> to vector<8x256xbf16>
    %c1_168 = arith.constant 1 : index
    %c0_169 = arith.constant 0 : index
    %c0_170 = arith.constant 0 : index
    %282 = vector.load %arg3[%c1_168, %c0_169, %c0_170] : memref<2x256x512xbf16, #tpu.memory_space<vmem>>, vector<1x256x512xbf16>
    %283 = vector.shape_cast %282 : vector<1x256x512xbf16> to vector<256x512xbf16>
    %cst_171 = arith.constant dense<0.000000e+00> : vector<8x512xf32>
    %284 = tpu.matmul %281, %283, %cst_171 {dimension_numbers = #tpu.dot_dimension_numbers<[1], [0], [0], [1], [0, 0, 1, 1], [], []>} : vector<8x256xbf16>, vector<256x512xbf16>, vector<8x512xf32> -> vector<8x512xf32>
    %c1_172 = arith.constant 1 : index
    %c0_173 = arith.constant 0 : index
    %c0_174 = arith.constant 0 : index
    %285 = vector.load %arg4[%c1_172, %c0_173, %c0_174] : memref<2x1x512xf32, #tpu.memory_space<vmem>>, vector<1x1x512xf32>
    %286 = vector.shape_cast %285 : vector<1x1x512xf32> to vector<1x512xf32>
    %287 = vector.broadcast %286 : vector<1x512xf32> to vector<8x512xf32>
    %288 = arith.addf %284, %287 : vector<8x512xf32>
    %289 = vector.extract_strided_slice %288 {offsets = [0, 0], sizes = [8, 384], strides = [1, 1]} : vector<8x512xf32> to vector<8x384xf32>
    %cst_175 = arith.constant 0.000000e+00 : f32
    %290 = vector.broadcast %cst_175 : f32 to vector<8x384xf32>
    %291 = arith.subf %290, %289 : vector<8x384xf32>
    %292 = math.exp %291 : vector<8x384xf32>
    %cst_176 = arith.constant 1.000000e+00 : f32
    %293 = vector.broadcast %cst_176 : f32 to vector<8x384xf32>
    %294 = arith.addf %293, %292 : vector<8x384xf32>
    %295 = tpu.reciprocal %294 {approx = true} : vector<8x384xf32> -> vector<8x384xf32>
    %296 = vector.extract_strided_slice %288 {offsets = [0, 384], sizes = [8, 128], strides = [1, 1]} : vector<8x512xf32> to vector<8x128xf32>
    %297 = math.tanh %296 : vector<8x128xf32>
    %298 = vector.extract_strided_slice %295 {offsets = [0, 128], sizes = [8, 128], strides = [1, 1]} : vector<8x384xf32> to vector<8x128xf32>
    %c1_177 = arith.constant 1 : index
    %c0_178 = arith.constant 0 : index
    %c0_179 = arith.constant 0 : index
    %299 = vector.load %arg13[%c1_177, %c0_178, %c0_179] : memref<2x8x128xf32, #tpu.memory_space<vmem>>, vector<1x8x128xf32>
    %300 = vector.shape_cast %299 : vector<1x8x128xf32> to vector<8x128xf32>
    %301 = arith.mulf %298, %300 : vector<8x128xf32>
    %302 = vector.extract_strided_slice %295 {offsets = [0, 0], sizes = [8, 128], strides = [1, 1]} : vector<8x384xf32> to vector<8x128xf32>
    %303 = arith.mulf %302, %297 : vector<8x128xf32>
    %304 = arith.addf %301, %303 : vector<8x128xf32>
    %305 = vector.extract_strided_slice %295 {offsets = [0, 256], sizes = [8, 128], strides = [1, 1]} : vector<8x384xf32> to vector<8x128xf32>
    %306 = math.tanh %304 : vector<8x128xf32>
    %307 = arith.mulf %305, %306 : vector<8x128xf32>
    %c1_180 = arith.constant 1 : index
    %c0_181 = arith.constant 0 : index
    %c0_182 = arith.constant 0 : index
    %308 = vector.load %arg13[%c1_180, %c0_181, %c0_182] : memref<2x8x128xf32, #tpu.memory_space<vmem>>, vector<1x8x128xf32>
    %309 = vector.shape_cast %308 : vector<1x8x128xf32> to vector<8x128xf32>
    %310 = vector.shape_cast %304 : vector<8x128xf32> to vector<1x8x128xf32>
    tpu.vector_store %arg13[%c1_180, %c0_181, %c0_182], %310 {strides = array<i32>} : memref<2x8x128xf32, #tpu.memory_space<vmem>>, vector<1x8x128xf32>,
    %311 = arith.truncf %307 : vector<8x128xf32> to vector<8x128xbf16>
    %c1_183 = arith.constant 1 : index
    %c0_184 = arith.constant 0 : index
    %c128_185 = arith.constant 128 : index
    %312 = vector.load %arg12[%c1_183, %c0_184, %c128_185] : memref<2x8x256xbf16, #tpu.memory_space<vmem>>, vector<1x8x128xbf16>
    %313 = vector.shape_cast %312 : vector<1x8x128xbf16> to vector<8x128xbf16>
    %314 = vector.shape_cast %311 : vector<8x128xbf16> to vector<1x8x128xbf16>
    tpu.vector_store %arg12[%c1_183, %c0_184, %c128_185], %314 {strides = array<i32>} : memref<2x8x256xbf16, #tpu.memory_space<vmem>>, vector<1x8x128xbf16>,
    %c4_i32 = arith.constant 4 : i32
    %315 = arith.index_cast %c4_i32 : i32 to index
    %c0_186 = arith.constant 0 : index
    %c0_187 = arith.constant 0 : index
    %316 = vector.load %arg2[%315, %c0_186, %c0_187] : memref<8x8x512xbf16, #tpu.memory_space<vmem>>, vector<1x8x512xbf16>
    %317 = vector.shape_cast %316 : vector<1x8x512xbf16> to vector<8x512xbf16>
    %318 = arith.extf %317 : vector<8x512xbf16> to vector<8x512xf32>
    %c0_188 = arith.constant 0 : index
    %c0_189 = arith.constant 0 : index
    %c128_190 = arith.constant 128 : index
    %319 = vector.load %arg12[%c0_188, %c0_189, %c128_190] : memref<2x8x256xbf16, #tpu.memory_space<vmem>>, vector<1x8x128xbf16>
    %320 = vector.shape_cast %319 : vector<1x8x128xbf16> to vector<8x128xbf16>
    %c0_191 = arith.constant 0 : index
    %c128_192 = arith.constant 128 : index
    %c0_193 = arith.constant 0 : index
    %321 = vector.load %arg3[%c0_191, %c128_192, %c0_193] : memref<2x256x512xbf16, #tpu.memory_space<vmem>>, vector<1x128x512xbf16>
    %322 = vector.shape_cast %321 : vector<1x128x512xbf16> to vector<128x512xbf16>
    %cst_194 = arith.constant dense<0.000000e+00> : vector<8x512xf32>
    %323 = tpu.matmul %320, %322, %cst_194 {dimension_numbers = #tpu.dot_dimension_numbers<[1], [0], [0], [1], [0, 0, 1, 1], [], []>} : vector<8x128xbf16>, vector<128x512xbf16>, vector<8x512xf32> -> vector<8x512xf32>
    %324 = arith.addf %318, %323 : vector<8x512xf32>
    %c0_195 = arith.constant 0 : index
    %c0_196 = arith.constant 0 : index
    %c0_197 = arith.constant 0 : index
    %325 = vector.load %arg4[%c0_195, %c0_196, %c0_197] : memref<2x1x512xf32, #tpu.memory_space<vmem>>, vector<1x1x512xf32>
    %326 = vector.shape_cast %325 : vector<1x1x512xf32> to vector<1x512xf32>
    %327 = vector.broadcast %326 : vector<1x512xf32> to vector<8x512xf32>
    %328 = arith.addf %324, %327 : vector<8x512xf32>
    %329 = vector.extract_strided_slice %328 {offsets = [0, 0], sizes = [8, 384], strides = [1, 1]} : vector<8x512xf32> to vector<8x384xf32>
    %cst_198 = arith.constant 0.000000e+00 : f32
    %330 = vector.broadcast %cst_198 : f32 to vector<8x384xf32>
    %331 = arith.subf %330, %329 : vector<8x384xf32>
    %332 = math.exp %331 : vector<8x384xf32>
    %cst_199 = arith.constant 1.000000e+00 : f32
    %333 = vector.broadcast %cst_199 : f32 to vector<8x384xf32>
    %334 = arith.addf %333, %332 : vector<8x384xf32>
    %335 = tpu.reciprocal %334 {approx = true} : vector<8x384xf32> -> vector<8x384xf32>
    %336 = vector.extract_strided_slice %328 {offsets = [0, 384], sizes = [8, 128], strides = [1, 1]} : vector<8x512xf32> to vector<8x128xf32>
    %337 = math.tanh %336 : vector<8x128xf32>
    %338 = vector.extract_strided_slice %335 {offsets = [0, 128], sizes = [8, 128], strides = [1, 1]} : vector<8x384xf32> to vector<8x128xf32>
    %c0_200 = arith.constant 0 : index
    %c0_201 = arith.constant 0 : index
    %c0_202 = arith.constant 0 : index
    %339 = vector.load %arg13[%c0_200, %c0_201, %c0_202] : memref<2x8x128xf32, #tpu.memory_space<vmem>>, vector<1x8x128xf32>
    %340 = vector.shape_cast %339 : vector<1x8x128xf32> to vector<8x128xf32>
    %341 = arith.mulf %338, %340 : vector<8x128xf32>
    %342 = vector.extract_strided_slice %335 {offsets = [0, 0], sizes = [8, 128], strides = [1, 1]} : vector<8x384xf32> to vector<8x128xf32>
    %343 = arith.mulf %342, %337 : vector<8x128xf32>
    %344 = arith.addf %341, %343 : vector<8x128xf32>
    %345 = vector.extract_strided_slice %335 {offsets = [0, 256], sizes = [8, 128], strides = [1, 1]} : vector<8x384xf32> to vector<8x128xf32>
    %346 = math.tanh %344 : vector<8x128xf32>
    %347 = arith.mulf %345, %346 : vector<8x128xf32>
    %c0_203 = arith.constant 0 : index
    %c0_204 = arith.constant 0 : index
    %c0_205 = arith.constant 0 : index
    %348 = vector.load %arg13[%c0_203, %c0_204, %c0_205] : memref<2x8x128xf32, #tpu.memory_space<vmem>>, vector<1x8x128xf32>
    %349 = vector.shape_cast %348 : vector<1x8x128xf32> to vector<8x128xf32>
    %350 = vector.shape_cast %344 : vector<8x128xf32> to vector<1x8x128xf32>
    tpu.vector_store %arg13[%c0_203, %c0_204, %c0_205], %350 {strides = array<i32>} : memref<2x8x128xf32, #tpu.memory_space<vmem>>, vector<1x8x128xf32>,
    %351 = arith.truncf %347 : vector<8x128xf32> to vector<8x128xbf16>
    %c0_206 = arith.constant 0 : index
    %c0_207 = arith.constant 0 : index
    %c128_208 = arith.constant 128 : index
    %352 = vector.load %arg12[%c0_206, %c0_207, %c128_208] : memref<2x8x256xbf16, #tpu.memory_space<vmem>>, vector<1x8x128xbf16>
    %353 = vector.shape_cast %352 : vector<1x8x128xbf16> to vector<8x128xbf16>
    %354 = vector.shape_cast %351 : vector<8x128xbf16> to vector<1x8x128xbf16>
    tpu.vector_store %arg12[%c0_206, %c0_207, %c128_208], %354 {strides = array<i32>} : memref<2x8x256xbf16, #tpu.memory_space<vmem>>, vector<1x8x128xbf16>,
    %c1_209 = arith.constant 1 : index
    %c0_210 = arith.constant 0 : index
    %c0_211 = arith.constant 0 : index
    %355 = vector.load %arg12[%c1_209, %c0_210, %c0_211] : memref<2x8x256xbf16, #tpu.memory_space<vmem>>, vector<1x8x128xbf16>
    %356 = vector.shape_cast %355 : vector<1x8x128xbf16> to vector<8x128xbf16>
    %357 = vector.shape_cast %351 : vector<8x128xbf16> to vector<1x8x128xbf16>
    tpu.vector_store %arg12[%c1_209, %c0_210, %c0_211], %357 {strides = array<i32>} : memref<2x8x256xbf16, #tpu.memory_space<vmem>>, vector<1x8x128xbf16>,
    %c1_212 = arith.constant 1 : index
    %c0_213 = arith.constant 0 : index
    %c0_214 = arith.constant 0 : index
    %358 = vector.load %arg12[%c1_212, %c0_213, %c0_214] : memref<2x8x256xbf16, #tpu.memory_space<vmem>>, vector<1x8x256xbf16>
    %359 = vector.shape_cast %358 : vector<1x8x256xbf16> to vector<8x256xbf16>
    %c1_215 = arith.constant 1 : index
    %c0_216 = arith.constant 0 : index
    %c0_217 = arith.constant 0 : index
    %360 = vector.load %arg3[%c1_215, %c0_216, %c0_217] : memref<2x256x512xbf16, #tpu.memory_space<vmem>>, vector<1x256x512xbf16>
    %361 = vector.shape_cast %360 : vector<1x256x512xbf16> to vector<256x512xbf16>
    %cst_218 = arith.constant dense<0.000000e+00> : vector<8x512xf32>
    %362 = tpu.matmul %359, %361, %cst_218 {dimension_numbers = #tpu.dot_dimension_numbers<[1], [0], [0], [1], [0, 0, 1, 1], [], []>} : vector<8x256xbf16>, vector<256x512xbf16>, vector<8x512xf32> -> vector<8x512xf32>
    %c1_219 = arith.constant 1 : index
    %c0_220 = arith.constant 0 : index
    %c0_221 = arith.constant 0 : index
    %363 = vector.load %arg4[%c1_219, %c0_220, %c0_221] : memref<2x1x512xf32, #tpu.memory_space<vmem>>, vector<1x1x512xf32>
    %364 = vector.shape_cast %363 : vector<1x1x512xf32> to vector<1x512xf32>
    %365 = vector.broadcast %364 : vector<1x512xf32> to vector<8x512xf32>
    %366 = arith.addf %362, %365 : vector<8x512xf32>
    %367 = vector.extract_strided_slice %366 {offsets = [0, 0], sizes = [8, 384], strides = [1, 1]} : vector<8x512xf32> to vector<8x384xf32>
    %cst_222 = arith.constant 0.000000e+00 : f32
    %368 = vector.broadcast %cst_222 : f32 to vector<8x384xf32>
    %369 = arith.subf %368, %367 : vector<8x384xf32>
    %370 = math.exp %369 : vector<8x384xf32>
    %cst_223 = arith.constant 1.000000e+00 : f32
    %371 = vector.broadcast %cst_223 : f32 to vector<8x384xf32>
    %372 = arith.addf %371, %370 : vector<8x384xf32>
    %373 = tpu.reciprocal %372 {approx = true} : vector<8x384xf32> -> vector<8x384xf32>
    %374 = vector.extract_strided_slice %366 {offsets = [0, 384], sizes = [8, 128], strides = [1, 1]} : vector<8x512xf32> to vector<8x128xf32>
    %375 = math.tanh %374 : vector<8x128xf32>
    %376 = vector.extract_strided_slice %373 {offsets = [0, 128], sizes = [8, 128], strides = [1, 1]} : vector<8x384xf32> to vector<8x128xf32>
    %c1_224 = arith.constant 1 : index
    %c0_225 = arith.constant 0 : index
    %c0_226 = arith.constant 0 : index
    %377 = vector.load %arg13[%c1_224, %c0_225, %c0_226] : memref<2x8x128xf32, #tpu.memory_space<vmem>>, vector<1x8x128xf32>
    %378 = vector.shape_cast %377 : vector<1x8x128xf32> to vector<8x128xf32>
    %379 = arith.mulf %376, %378 : vector<8x128xf32>
    %380 = vector.extract_strided_slice %373 {offsets = [0, 0], sizes = [8, 128], strides = [1, 1]} : vector<8x384xf32> to vector<8x128xf32>
    %381 = arith.mulf %380, %375 : vector<8x128xf32>
    %382 = arith.addf %379, %381 : vector<8x128xf32>
    %383 = vector.extract_strided_slice %373 {offsets = [0, 256], sizes = [8, 128], strides = [1, 1]} : vector<8x384xf32> to vector<8x128xf32>
    %384 = math.tanh %382 : vector<8x128xf32>
    %385 = arith.mulf %383, %384 : vector<8x128xf32>
    %c1_227 = arith.constant 1 : index
    %c0_228 = arith.constant 0 : index
    %c0_229 = arith.constant 0 : index
    %386 = vector.load %arg13[%c1_227, %c0_228, %c0_229] : memref<2x8x128xf32, #tpu.memory_space<vmem>>, vector<1x8x128xf32>
    %387 = vector.shape_cast %386 : vector<1x8x128xf32> to vector<8x128xf32>
    %388 = vector.shape_cast %382 : vector<8x128xf32> to vector<1x8x128xf32>
    tpu.vector_store %arg13[%c1_227, %c0_228, %c0_229], %388 {strides = array<i32>} : memref<2x8x128xf32, #tpu.memory_space<vmem>>, vector<1x8x128xf32>,
    %389 = arith.truncf %385 : vector<8x128xf32> to vector<8x128xbf16>
    %c1_230 = arith.constant 1 : index
    %c0_231 = arith.constant 0 : index
    %c128_232 = arith.constant 128 : index
    %390 = vector.load %arg12[%c1_230, %c0_231, %c128_232] : memref<2x8x256xbf16, #tpu.memory_space<vmem>>, vector<1x8x128xbf16>
    %391 = vector.shape_cast %390 : vector<1x8x128xbf16> to vector<8x128xbf16>
    %392 = vector.shape_cast %389 : vector<8x128xbf16> to vector<1x8x128xbf16>
    tpu.vector_store %arg12[%c1_230, %c0_231, %c128_232], %392 {strides = array<i32>} : memref<2x8x256xbf16, #tpu.memory_space<vmem>>, vector<1x8x128xbf16>,
    %c5_i32 = arith.constant 5 : i32
    %393 = arith.index_cast %c5_i32 : i32 to index
    %c0_233 = arith.constant 0 : index
    %c0_234 = arith.constant 0 : index
    %394 = vector.load %arg2[%393, %c0_233, %c0_234] : memref<8x8x512xbf16, #tpu.memory_space<vmem>>, vector<1x8x512xbf16>
    %395 = vector.shape_cast %394 : vector<1x8x512xbf16> to vector<8x512xbf16>
    %396 = arith.extf %395 : vector<8x512xbf16> to vector<8x512xf32>
    %c0_235 = arith.constant 0 : index
    %c0_236 = arith.constant 0 : index
    %c128_237 = arith.constant 128 : index
    %397 = vector.load %arg12[%c0_235, %c0_236, %c128_237] : memref<2x8x256xbf16, #tpu.memory_space<vmem>>, vector<1x8x128xbf16>
    %398 = vector.shape_cast %397 : vector<1x8x128xbf16> to vector<8x128xbf16>
    %c0_238 = arith.constant 0 : index
    %c128_239 = arith.constant 128 : index
    %c0_240 = arith.constant 0 : index
    %399 = vector.load %arg3[%c0_238, %c128_239, %c0_240] : memref<2x256x512xbf16, #tpu.memory_space<vmem>>, vector<1x128x512xbf16>
    %400 = vector.shape_cast %399 : vector<1x128x512xbf16> to vector<128x512xbf16>
    %cst_241 = arith.constant dense<0.000000e+00> : vector<8x512xf32>
    %401 = tpu.matmul %398, %400, %cst_241 {dimension_numbers = #tpu.dot_dimension_numbers<[1], [0], [0], [1], [0, 0, 1, 1], [], []>} : vector<8x128xbf16>, vector<128x512xbf16>, vector<8x512xf32> -> vector<8x512xf32>
    %402 = arith.addf %396, %401 : vector<8x512xf32>
    %c0_242 = arith.constant 0 : index
    %c0_243 = arith.constant 0 : index
    %c0_244 = arith.constant 0 : index
    %403 = vector.load %arg4[%c0_242, %c0_243, %c0_244] : memref<2x1x512xf32, #tpu.memory_space<vmem>>, vector<1x1x512xf32>
    %404 = vector.shape_cast %403 : vector<1x1x512xf32> to vector<1x512xf32>
    %405 = vector.broadcast %404 : vector<1x512xf32> to vector<8x512xf32>
    %406 = arith.addf %402, %405 : vector<8x512xf32>
    %407 = vector.extract_strided_slice %406 {offsets = [0, 0], sizes = [8, 384], strides = [1, 1]} : vector<8x512xf32> to vector<8x384xf32>
    %cst_245 = arith.constant 0.000000e+00 : f32
    %408 = vector.broadcast %cst_245 : f32 to vector<8x384xf32>
    %409 = arith.subf %408, %407 : vector<8x384xf32>
    %410 = math.exp %409 : vector<8x384xf32>
    %cst_246 = arith.constant 1.000000e+00 : f32
    %411 = vector.broadcast %cst_246 : f32 to vector<8x384xf32>
    %412 = arith.addf %411, %410 : vector<8x384xf32>
    %413 = tpu.reciprocal %412 {approx = true} : vector<8x384xf32> -> vector<8x384xf32>
    %414 = vector.extract_strided_slice %406 {offsets = [0, 384], sizes = [8, 128], strides = [1, 1]} : vector<8x512xf32> to vector<8x128xf32>
    %415 = math.tanh %414 : vector<8x128xf32>
    %416 = vector.extract_strided_slice %413 {offsets = [0, 128], sizes = [8, 128], strides = [1, 1]} : vector<8x384xf32> to vector<8x128xf32>
    %c0_247 = arith.constant 0 : index
    %c0_248 = arith.constant 0 : index
    %c0_249 = arith.constant 0 : index
    %417 = vector.load %arg13[%c0_247, %c0_248, %c0_249] : memref<2x8x128xf32, #tpu.memory_space<vmem>>, vector<1x8x128xf32>
    %418 = vector.shape_cast %417 : vector<1x8x128xf32> to vector<8x128xf32>
    %419 = arith.mulf %416, %418 : vector<8x128xf32>
    %420 = vector.extract_strided_slice %413 {offsets = [0, 0], sizes = [8, 128], strides = [1, 1]} : vector<8x384xf32> to vector<8x128xf32>
    %421 = arith.mulf %420, %415 : vector<8x128xf32>
    %422 = arith.addf %419, %421 : vector<8x128xf32>
    %423 = vector.extract_strided_slice %413 {offsets = [0, 256], sizes = [8, 128], strides = [1, 1]} : vector<8x384xf32> to vector<8x128xf32>
    %424 = math.tanh %422 : vector<8x128xf32>
    %425 = arith.mulf %423, %424 : vector<8x128xf32>
    %c0_250 = arith.constant 0 : index
    %c0_251 = arith.constant 0 : index
    %c0_252 = arith.constant 0 : index
    %426 = vector.load %arg13[%c0_250, %c0_251, %c0_252] : memref<2x8x128xf32, #tpu.memory_space<vmem>>, vector<1x8x128xf32>
    %427 = vector.shape_cast %426 : vector<1x8x128xf32> to vector<8x128xf32>
    %428 = vector.shape_cast %422 : vector<8x128xf32> to vector<1x8x128xf32>
    tpu.vector_store %arg13[%c0_250, %c0_251, %c0_252], %428 {strides = array<i32>} : memref<2x8x128xf32, #tpu.memory_space<vmem>>, vector<1x8x128xf32>,
    %429 = arith.truncf %425 : vector<8x128xf32> to vector<8x128xbf16>
    %c0_253 = arith.constant 0 : index
    %c0_254 = arith.constant 0 : index
    %c128_255 = arith.constant 128 : index
    %430 = vector.load %arg12[%c0_253, %c0_254, %c128_255] : memref<2x8x256xbf16, #tpu.memory_space<vmem>>, vector<1x8x128xbf16>
    %431 = vector.shape_cast %430 : vector<1x8x128xbf16> to vector<8x128xbf16>
    %432 = vector.shape_cast %429 : vector<8x128xbf16> to vector<1x8x128xbf16>
    tpu.vector_store %arg12[%c0_253, %c0_254, %c128_255], %432 {strides = array<i32>} : memref<2x8x256xbf16, #tpu.memory_space<vmem>>, vector<1x8x128xbf16>,
    %c1_256 = arith.constant 1 : index
    %c0_257 = arith.constant 0 : index
    %c0_258 = arith.constant 0 : index
    %433 = vector.load %arg12[%c1_256, %c0_257, %c0_258] : memref<2x8x256xbf16, #tpu.memory_space<vmem>>, vector<1x8x128xbf16>
    %434 = vector.shape_cast %433 : vector<1x8x128xbf16> to vector<8x128xbf16>
    %435 = vector.shape_cast %429 : vector<8x128xbf16> to vector<1x8x128xbf16>
    tpu.vector_store %arg12[%c1_256, %c0_257, %c0_258], %435 {strides = array<i32>} : memref<2x8x256xbf16, #tpu.memory_space<vmem>>, vector<1x8x128xbf16>,
    %c1_259 = arith.constant 1 : index
    %c0_260 = arith.constant 0 : index
    %c0_261 = arith.constant 0 : index
    %436 = vector.load %arg12[%c1_259, %c0_260, %c0_261] : memref<2x8x256xbf16, #tpu.memory_space<vmem>>, vector<1x8x256xbf16>
    %437 = vector.shape_cast %436 : vector<1x8x256xbf16> to vector<8x256xbf16>
    %c1_262 = arith.constant 1 : index
    %c0_263 = arith.constant 0 : index
    %c0_264 = arith.constant 0 : index
    %438 = vector.load %arg3[%c1_262, %c0_263, %c0_264] : memref<2x256x512xbf16, #tpu.memory_space<vmem>>, vector<1x256x512xbf16>
    %439 = vector.shape_cast %438 : vector<1x256x512xbf16> to vector<256x512xbf16>
    %cst_265 = arith.constant dense<0.000000e+00> : vector<8x512xf32>
    %440 = tpu.matmul %437, %439, %cst_265 {dimension_numbers = #tpu.dot_dimension_numbers<[1], [0], [0], [1], [0, 0, 1, 1], [], []>} : vector<8x256xbf16>, vector<256x512xbf16>, vector<8x512xf32> -> vector<8x512xf32>
    %c1_266 = arith.constant 1 : index
    %c0_267 = arith.constant 0 : index
    %c0_268 = arith.constant 0 : index
    %441 = vector.load %arg4[%c1_266, %c0_267, %c0_268] : memref<2x1x512xf32, #tpu.memory_space<vmem>>, vector<1x1x512xf32>
    %442 = vector.shape_cast %441 : vector<1x1x512xf32> to vector<1x512xf32>
    %443 = vector.broadcast %442 : vector<1x512xf32> to vector<8x512xf32>
    %444 = arith.addf %440, %443 : vector<8x512xf32>
    %445 = vector.extract_strided_slice %444 {offsets = [0, 0], sizes = [8, 384], strides = [1, 1]} : vector<8x512xf32> to vector<8x384xf32>
    %cst_269 = arith.constant 0.000000e+00 : f32
    %446 = vector.broadcast %cst_269 : f32 to vector<8x384xf32>
    %447 = arith.subf %446, %445 : vector<8x384xf32>
    %448 = math.exp %447 : vector<8x384xf32>
    %cst_270 = arith.constant 1.000000e+00 : f32
    %449 = vector.broadcast %cst_270 : f32 to vector<8x384xf32>
    %450 = arith.addf %449, %448 : vector<8x384xf32>
    %451 = tpu.reciprocal %450 {approx = true} : vector<8x384xf32> -> vector<8x384xf32>
    %452 = vector.extract_strided_slice %444 {offsets = [0, 384], sizes = [8, 128], strides = [1, 1]} : vector<8x512xf32> to vector<8x128xf32>
    %453 = math.tanh %452 : vector<8x128xf32>
    %454 = vector.extract_strided_slice %451 {offsets = [0, 128], sizes = [8, 128], strides = [1, 1]} : vector<8x384xf32> to vector<8x128xf32>
    %c1_271 = arith.constant 1 : index
    %c0_272 = arith.constant 0 : index
    %c0_273 = arith.constant 0 : index
    %455 = vector.load %arg13[%c1_271, %c0_272, %c0_273] : memref<2x8x128xf32, #tpu.memory_space<vmem>>, vector<1x8x128xf32>
    %456 = vector.shape_cast %455 : vector<1x8x128xf32> to vector<8x128xf32>
    %457 = arith.mulf %454, %456 : vector<8x128xf32>
    %458 = vector.extract_strided_slice %451 {offsets = [0, 0], sizes = [8, 128], strides = [1, 1]} : vector<8x384xf32> to vector<8x128xf32>
    %459 = arith.mulf %458, %453 : vector<8x128xf32>
    %460 = arith.addf %457, %459 : vector<8x128xf32>
    %461 = vector.extract_strided_slice %451 {offsets = [0, 256], sizes = [8, 128], strides = [1, 1]} : vector<8x384xf32> to vector<8x128xf32>
    %462 = math.tanh %460 : vector<8x128xf32>
    %463 = arith.mulf %461, %462 : vector<8x128xf32>
    %c1_274 = arith.constant 1 : index
    %c0_275 = arith.constant 0 : index
    %c0_276 = arith.constant 0 : index
    %464 = vector.load %arg13[%c1_274, %c0_275, %c0_276] : memref<2x8x128xf32, #tpu.memory_space<vmem>>, vector<1x8x128xf32>
    %465 = vector.shape_cast %464 : vector<1x8x128xf32> to vector<8x128xf32>
    %466 = vector.shape_cast %460 : vector<8x128xf32> to vector<1x8x128xf32>
    tpu.vector_store %arg13[%c1_274, %c0_275, %c0_276], %466 {strides = array<i32>} : memref<2x8x128xf32, #tpu.memory_space<vmem>>, vector<1x8x128xf32>,
    %467 = arith.truncf %463 : vector<8x128xf32> to vector<8x128xbf16>
    %c1_277 = arith.constant 1 : index
    %c0_278 = arith.constant 0 : index
    %c128_279 = arith.constant 128 : index
    %468 = vector.load %arg12[%c1_277, %c0_278, %c128_279] : memref<2x8x256xbf16, #tpu.memory_space<vmem>>, vector<1x8x128xbf16>
    %469 = vector.shape_cast %468 : vector<1x8x128xbf16> to vector<8x128xbf16>
    %470 = vector.shape_cast %467 : vector<8x128xbf16> to vector<1x8x128xbf16>
    tpu.vector_store %arg12[%c1_277, %c0_278, %c128_279], %470 {strides = array<i32>} : memref<2x8x256xbf16, #tpu.memory_space<vmem>>, vector<1x8x128xbf16>,
    %c6_i32 = arith.constant 6 : i32
    %471 = arith.index_cast %c6_i32 : i32 to index
    %c0_280 = arith.constant 0 : index
    %c0_281 = arith.constant 0 : index
    %472 = vector.load %arg2[%471, %c0_280, %c0_281] : memref<8x8x512xbf16, #tpu.memory_space<vmem>>, vector<1x8x512xbf16>
    %473 = vector.shape_cast %472 : vector<1x8x512xbf16> to vector<8x512xbf16>
    %474 = arith.extf %473 : vector<8x512xbf16> to vector<8x512xf32>
    %c0_282 = arith.constant 0 : index
    %c0_283 = arith.constant 0 : index
    %c128_284 = arith.constant 128 : index
    %475 = vector.load %arg12[%c0_282, %c0_283, %c128_284] : memref<2x8x256xbf16, #tpu.memory_space<vmem>>, vector<1x8x128xbf16>
    %476 = vector.shape_cast %475 : vector<1x8x128xbf16> to vector<8x128xbf16>
    %c0_285 = arith.constant 0 : index
    %c128_286 = arith.constant 128 : index
    %c0_287 = arith.constant 0 : index
    %477 = vector.load %arg3[%c0_285, %c128_286, %c0_287] : memref<2x256x512xbf16, #tpu.memory_space<vmem>>, vector<1x128x512xbf16>
    %478 = vector.shape_cast %477 : vector<1x128x512xbf16> to vector<128x512xbf16>
    %cst_288 = arith.constant dense<0.000000e+00> : vector<8x512xf32>
    %479 = tpu.matmul %476, %478, %cst_288 {dimension_numbers = #tpu.dot_dimension_numbers<[1], [0], [0], [1], [0, 0, 1, 1], [], []>} : vector<8x128xbf16>, vector<128x512xbf16>, vector<8x512xf32> -> vector<8x512xf32>
    %480 = arith.addf %474, %479 : vector<8x512xf32>
    %c0_289 = arith.constant 0 : index
    %c0_290 = arith.constant 0 : index
    %c0_291 = arith.constant 0 : index
    %481 = vector.load %arg4[%c0_289, %c0_290, %c0_291] : memref<2x1x512xf32, #tpu.memory_space<vmem>>, vector<1x1x512xf32>
    %482 = vector.shape_cast %481 : vector<1x1x512xf32> to vector<1x512xf32>
    %483 = vector.broadcast %482 : vector<1x512xf32> to vector<8x512xf32>
    %484 = arith.addf %480, %483 : vector<8x512xf32>
    %485 = vector.extract_strided_slice %484 {offsets = [0, 0], sizes = [8, 384], strides = [1, 1]} : vector<8x512xf32> to vector<8x384xf32>
    %cst_292 = arith.constant 0.000000e+00 : f32
    %486 = vector.broadcast %cst_292 : f32 to vector<8x384xf32>
    %487 = arith.subf %486, %485 : vector<8x384xf32>
    %488 = math.exp %487 : vector<8x384xf32>
    %cst_293 = arith.constant 1.000000e+00 : f32
    %489 = vector.broadcast %cst_293 : f32 to vector<8x384xf32>
    %490 = arith.addf %489, %488 : vector<8x384xf32>
    %491 = tpu.reciprocal %490 {approx = true} : vector<8x384xf32> -> vector<8x384xf32>
    %492 = vector.extract_strided_slice %484 {offsets = [0, 384], sizes = [8, 128], strides = [1, 1]} : vector<8x512xf32> to vector<8x128xf32>
    %493 = math.tanh %492 : vector<8x128xf32>
    %494 = vector.extract_strided_slice %491 {offsets = [0, 128], sizes = [8, 128], strides = [1, 1]} : vector<8x384xf32> to vector<8x128xf32>
    %c0_294 = arith.constant 0 : index
    %c0_295 = arith.constant 0 : index
    %c0_296 = arith.constant 0 : index
    %495 = vector.load %arg13[%c0_294, %c0_295, %c0_296] : memref<2x8x128xf32, #tpu.memory_space<vmem>>, vector<1x8x128xf32>
    %496 = vector.shape_cast %495 : vector<1x8x128xf32> to vector<8x128xf32>
    %497 = arith.mulf %494, %496 : vector<8x128xf32>
    %498 = vector.extract_strided_slice %491 {offsets = [0, 0], sizes = [8, 128], strides = [1, 1]} : vector<8x384xf32> to vector<8x128xf32>
    %499 = arith.mulf %498, %493 : vector<8x128xf32>
    %500 = arith.addf %497, %499 : vector<8x128xf32>
    %501 = vector.extract_strided_slice %491 {offsets = [0, 256], sizes = [8, 128], strides = [1, 1]} : vector<8x384xf32> to vector<8x128xf32>
    %502 = math.tanh %500 : vector<8x128xf32>
    %503 = arith.mulf %501, %502 : vector<8x128xf32>
    %c0_297 = arith.constant 0 : index
    %c0_298 = arith.constant 0 : index
    %c0_299 = arith.constant 0 : index
    %504 = vector.load %arg13[%c0_297, %c0_298, %c0_299] : memref<2x8x128xf32, #tpu.memory_space<vmem>>, vector<1x8x128xf32>
    %505 = vector.shape_cast %504 : vector<1x8x128xf32> to vector<8x128xf32>
    %506 = vector.shape_cast %500 : vector<8x128xf32> to vector<1x8x128xf32>
    tpu.vector_store %arg13[%c0_297, %c0_298, %c0_299], %506 {strides = array<i32>} : memref<2x8x128xf32, #tpu.memory_space<vmem>>, vector<1x8x128xf32>,
    %507 = arith.truncf %503 : vector<8x128xf32> to vector<8x128xbf16>
    %c0_300 = arith.constant 0 : index
    %c0_301 = arith.constant 0 : index
    %c128_302 = arith.constant 128 : index
    %508 = vector.load %arg12[%c0_300, %c0_301, %c128_302] : memref<2x8x256xbf16, #tpu.memory_space<vmem>>, vector<1x8x128xbf16>
    %509 = vector.shape_cast %508 : vector<1x8x128xbf16> to vector<8x128xbf16>
    %510 = vector.shape_cast %507 : vector<8x128xbf16> to vector<1x8x128xbf16>
    tpu.vector_store %arg12[%c0_300, %c0_301, %c128_302], %510 {strides = array<i32>} : memref<2x8x256xbf16, #tpu.memory_space<vmem>>, vector<1x8x128xbf16>,
    %c1_303 = arith.constant 1 : index
    %c0_304 = arith.constant 0 : index
    %c0_305 = arith.constant 0 : index
    %511 = vector.load %arg12[%c1_303, %c0_304, %c0_305] : memref<2x8x256xbf16, #tpu.memory_space<vmem>>, vector<1x8x128xbf16>
    %512 = vector.shape_cast %511 : vector<1x8x128xbf16> to vector<8x128xbf16>
    %513 = vector.shape_cast %507 : vector<8x128xbf16> to vector<1x8x128xbf16>
    tpu.vector_store %arg12[%c1_303, %c0_304, %c0_305], %513 {strides = array<i32>} : memref<2x8x256xbf16, #tpu.memory_space<vmem>>, vector<1x8x128xbf16>,
    %c1_306 = arith.constant 1 : index
    %c0_307 = arith.constant 0 : index
    %c0_308 = arith.constant 0 : index
    %514 = vector.load %arg12[%c1_306, %c0_307, %c0_308] : memref<2x8x256xbf16, #tpu.memory_space<vmem>>, vector<1x8x256xbf16>
    %515 = vector.shape_cast %514 : vector<1x8x256xbf16> to vector<8x256xbf16>
    %c1_309 = arith.constant 1 : index
    %c0_310 = arith.constant 0 : index
    %c0_311 = arith.constant 0 : index
    %516 = vector.load %arg3[%c1_309, %c0_310, %c0_311] : memref<2x256x512xbf16, #tpu.memory_space<vmem>>, vector<1x256x512xbf16>
    %517 = vector.shape_cast %516 : vector<1x256x512xbf16> to vector<256x512xbf16>
    %cst_312 = arith.constant dense<0.000000e+00> : vector<8x512xf32>
    %518 = tpu.matmul %515, %517, %cst_312 {dimension_numbers = #tpu.dot_dimension_numbers<[1], [0], [0], [1], [0, 0, 1, 1], [], []>} : vector<8x256xbf16>, vector<256x512xbf16>, vector<8x512xf32> -> vector<8x512xf32>
    %c1_313 = arith.constant 1 : index
    %c0_314 = arith.constant 0 : index
    %c0_315 = arith.constant 0 : index
    %519 = vector.load %arg4[%c1_313, %c0_314, %c0_315] : memref<2x1x512xf32, #tpu.memory_space<vmem>>, vector<1x1x512xf32>
    %520 = vector.shape_cast %519 : vector<1x1x512xf32> to vector<1x512xf32>
    %521 = vector.broadcast %520 : vector<1x512xf32> to vector<8x512xf32>
    %522 = arith.addf %518, %521 : vector<8x512xf32>
    %523 = vector.extract_strided_slice %522 {offsets = [0, 0], sizes = [8, 384], strides = [1, 1]} : vector<8x512xf32> to vector<8x384xf32>
    %cst_316 = arith.constant 0.000000e+00 : f32
    %524 = vector.broadcast %cst_316 : f32 to vector<8x384xf32>
    %525 = arith.subf %524, %523 : vector<8x384xf32>
    %526 = math.exp %525 : vector<8x384xf32>
    %cst_317 = arith.constant 1.000000e+00 : f32
    %527 = vector.broadcast %cst_317 : f32 to vector<8x384xf32>
    %528 = arith.addf %527, %526 : vector<8x384xf32>
    %529 = tpu.reciprocal %528 {approx = true} : vector<8x384xf32> -> vector<8x384xf32>
    %530 = vector.extract_strided_slice %522 {offsets = [0, 384], sizes = [8, 128], strides = [1, 1]} : vector<8x512xf32> to vector<8x128xf32>
    %531 = math.tanh %530 : vector<8x128xf32>
    %532 = vector.extract_strided_slice %529 {offsets = [0, 128], sizes = [8, 128], strides = [1, 1]} : vector<8x384xf32> to vector<8x128xf32>
    %c1_318 = arith.constant 1 : index
    %c0_319 = arith.constant 0 : index
    %c0_320 = arith.constant 0 : index
    %533 = vector.load %arg13[%c1_318, %c0_319, %c0_320] : memref<2x8x128xf32, #tpu.memory_space<vmem>>, vector<1x8x128xf32>
    %534 = vector.shape_cast %533 : vector<1x8x128xf32> to vector<8x128xf32>
    %535 = arith.mulf %532, %534 : vector<8x128xf32>
    %536 = vector.extract_strided_slice %529 {offsets = [0, 0], sizes = [8, 128], strides = [1, 1]} : vector<8x384xf32> to vector<8x128xf32>
    %537 = arith.mulf %536, %531 : vector<8x128xf32>
    %538 = arith.addf %535, %537 : vector<8x128xf32>
    %539 = vector.extract_strided_slice %529 {offsets = [0, 256], sizes = [8, 128], strides = [1, 1]} : vector<8x384xf32> to vector<8x128xf32>
    %540 = math.tanh %538 : vector<8x128xf32>
    %541 = arith.mulf %539, %540 : vector<8x128xf32>
    %c1_321 = arith.constant 1 : index
    %c0_322 = arith.constant 0 : index
    %c0_323 = arith.constant 0 : index
    %542 = vector.load %arg13[%c1_321, %c0_322, %c0_323] : memref<2x8x128xf32, #tpu.memory_space<vmem>>, vector<1x8x128xf32>
    %543 = vector.shape_cast %542 : vector<1x8x128xf32> to vector<8x128xf32>
    %544 = vector.shape_cast %538 : vector<8x128xf32> to vector<1x8x128xf32>
    tpu.vector_store %arg13[%c1_321, %c0_322, %c0_323], %544 {strides = array<i32>} : memref<2x8x128xf32, #tpu.memory_space<vmem>>, vector<1x8x128xf32>,
    %545 = arith.truncf %541 : vector<8x128xf32> to vector<8x128xbf16>
    %c1_324 = arith.constant 1 : index
    %c0_325 = arith.constant 0 : index
    %c128_326 = arith.constant 128 : index
    %546 = vector.load %arg12[%c1_324, %c0_325, %c128_326] : memref<2x8x256xbf16, #tpu.memory_space<vmem>>, vector<1x8x128xbf16>
    %547 = vector.shape_cast %546 : vector<1x8x128xbf16> to vector<8x128xbf16>
    %548 = vector.shape_cast %545 : vector<8x128xbf16> to vector<1x8x128xbf16>
    tpu.vector_store %arg12[%c1_324, %c0_325, %c128_326], %548 {strides = array<i32>} : memref<2x8x256xbf16, #tpu.memory_space<vmem>>, vector<1x8x128xbf16>,
    %c7_i32 = arith.constant 7 : i32
    %549 = arith.index_cast %c7_i32 : i32 to index
    %c0_327 = arith.constant 0 : index
    %c0_328 = arith.constant 0 : index
    %550 = vector.load %arg2[%549, %c0_327, %c0_328] : memref<8x8x512xbf16, #tpu.memory_space<vmem>>, vector<1x8x512xbf16>
    %551 = vector.shape_cast %550 : vector<1x8x512xbf16> to vector<8x512xbf16>
    %552 = arith.extf %551 : vector<8x512xbf16> to vector<8x512xf32>
    %c0_329 = arith.constant 0 : index
    %c0_330 = arith.constant 0 : index
    %c128_331 = arith.constant 128 : index
    %553 = vector.load %arg12[%c0_329, %c0_330, %c128_331] : memref<2x8x256xbf16, #tpu.memory_space<vmem>>, vector<1x8x128xbf16>
    %554 = vector.shape_cast %553 : vector<1x8x128xbf16> to vector<8x128xbf16>
    %c0_332 = arith.constant 0 : index
    %c128_333 = arith.constant 128 : index
    %c0_334 = arith.constant 0 : index
    %555 = vector.load %arg3[%c0_332, %c128_333, %c0_334] : memref<2x256x512xbf16, #tpu.memory_space<vmem>>, vector<1x128x512xbf16>
    %556 = vector.shape_cast %555 : vector<1x128x512xbf16> to vector<128x512xbf16>
    %cst_335 = arith.constant dense<0.000000e+00> : vector<8x512xf32>
    %557 = tpu.matmul %554, %556, %cst_335 {dimension_numbers = #tpu.dot_dimension_numbers<[1], [0], [0], [1], [0, 0, 1, 1], [], []>} : vector<8x128xbf16>, vector<128x512xbf16>, vector<8x512xf32> -> vector<8x512xf32>
    %558 = arith.addf %552, %557 : vector<8x512xf32>
    %c0_336 = arith.constant 0 : index
    %c0_337 = arith.constant 0 : index
    %c0_338 = arith.constant 0 : index
    %559 = vector.load %arg4[%c0_336, %c0_337, %c0_338] : memref<2x1x512xf32, #tpu.memory_space<vmem>>, vector<1x1x512xf32>
    %560 = vector.shape_cast %559 : vector<1x1x512xf32> to vector<1x512xf32>
    %561 = vector.broadcast %560 : vector<1x512xf32> to vector<8x512xf32>
    %562 = arith.addf %558, %561 : vector<8x512xf32>
    %563 = vector.extract_strided_slice %562 {offsets = [0, 0], sizes = [8, 384], strides = [1, 1]} : vector<8x512xf32> to vector<8x384xf32>
    %cst_339 = arith.constant 0.000000e+00 : f32
    %564 = vector.broadcast %cst_339 : f32 to vector<8x384xf32>
    %565 = arith.subf %564, %563 : vector<8x384xf32>
    %566 = math.exp %565 : vector<8x384xf32>
    %cst_340 = arith.constant 1.000000e+00 : f32
    %567 = vector.broadcast %cst_340 : f32 to vector<8x384xf32>
    %568 = arith.addf %567, %566 : vector<8x384xf32>
    %569 = tpu.reciprocal %568 {approx = true} : vector<8x384xf32> -> vector<8x384xf32>
    %570 = vector.extract_strided_slice %562 {offsets = [0, 384], sizes = [8, 128], strides = [1, 1]} : vector<8x512xf32> to vector<8x128xf32>
    %571 = math.tanh %570 : vector<8x128xf32>
    %572 = vector.extract_strided_slice %569 {offsets = [0, 128], sizes = [8, 128], strides = [1, 1]} : vector<8x384xf32> to vector<8x128xf32>
    %c0_341 = arith.constant 0 : index
    %c0_342 = arith.constant 0 : index
    %c0_343 = arith.constant 0 : index
    %573 = vector.load %arg13[%c0_341, %c0_342, %c0_343] : memref<2x8x128xf32, #tpu.memory_space<vmem>>, vector<1x8x128xf32>
    %574 = vector.shape_cast %573 : vector<1x8x128xf32> to vector<8x128xf32>
    %575 = arith.mulf %572, %574 : vector<8x128xf32>
    %576 = vector.extract_strided_slice %569 {offsets = [0, 0], sizes = [8, 128], strides = [1, 1]} : vector<8x384xf32> to vector<8x128xf32>
    %577 = arith.mulf %576, %571 : vector<8x128xf32>
    %578 = arith.addf %575, %577 : vector<8x128xf32>
    %579 = vector.extract_strided_slice %569 {offsets = [0, 256], sizes = [8, 128], strides = [1, 1]} : vector<8x384xf32> to vector<8x128xf32>
    %580 = math.tanh %578 : vector<8x128xf32>
    %581 = arith.mulf %579, %580 : vector<8x128xf32>
    %c0_344 = arith.constant 0 : index
    %c0_345 = arith.constant 0 : index
    %c0_346 = arith.constant 0 : index
    %582 = vector.load %arg13[%c0_344, %c0_345, %c0_346] : memref<2x8x128xf32, #tpu.memory_space<vmem>>, vector<1x8x128xf32>
    %583 = vector.shape_cast %582 : vector<1x8x128xf32> to vector<8x128xf32>
    %584 = vector.shape_cast %578 : vector<8x128xf32> to vector<1x8x128xf32>
    tpu.vector_store %arg13[%c0_344, %c0_345, %c0_346], %584 {strides = array<i32>} : memref<2x8x128xf32, #tpu.memory_space<vmem>>, vector<1x8x128xf32>,
    %585 = arith.truncf %581 : vector<8x128xf32> to vector<8x128xbf16>
    %c0_347 = arith.constant 0 : index
    %c0_348 = arith.constant 0 : index
    %c128_349 = arith.constant 128 : index
    %586 = vector.load %arg12[%c0_347, %c0_348, %c128_349] : memref<2x8x256xbf16, #tpu.memory_space<vmem>>, vector<1x8x128xbf16>
    %587 = vector.shape_cast %586 : vector<1x8x128xbf16> to vector<8x128xbf16>
    %588 = vector.shape_cast %585 : vector<8x128xbf16> to vector<1x8x128xbf16>
    tpu.vector_store %arg12[%c0_347, %c0_348, %c128_349], %588 {strides = array<i32>} : memref<2x8x256xbf16, #tpu.memory_space<vmem>>, vector<1x8x128xbf16>,
    %c1_350 = arith.constant 1 : index
    %c0_351 = arith.constant 0 : index
    %c0_352 = arith.constant 0 : index
    %589 = vector.load %arg12[%c1_350, %c0_351, %c0_352] : memref<2x8x256xbf16, #tpu.memory_space<vmem>>, vector<1x8x128xbf16>
    %590 = vector.shape_cast %589 : vector<1x8x128xbf16> to vector<8x128xbf16>
    %591 = vector.shape_cast %585 : vector<8x128xbf16> to vector<1x8x128xbf16>
    tpu.vector_store %arg12[%c1_350, %c0_351, %c0_352], %591 {strides = array<i32>} : memref<2x8x256xbf16, #tpu.memory_space<vmem>>, vector<1x8x128xbf16>,
    %c1_353 = arith.constant 1 : index
    %c0_354 = arith.constant 0 : index
    %c0_355 = arith.constant 0 : index
    %592 = vector.load %arg12[%c1_353, %c0_354, %c0_355] : memref<2x8x256xbf16, #tpu.memory_space<vmem>>, vector<1x8x256xbf16>
    %593 = vector.shape_cast %592 : vector<1x8x256xbf16> to vector<8x256xbf16>
    %c1_356 = arith.constant 1 : index
    %c0_357 = arith.constant 0 : index
    %c0_358 = arith.constant 0 : index
    %594 = vector.load %arg3[%c1_356, %c0_357, %c0_358] : memref<2x256x512xbf16, #tpu.memory_space<vmem>>, vector<1x256x512xbf16>
    %595 = vector.shape_cast %594 : vector<1x256x512xbf16> to vector<256x512xbf16>
    %cst_359 = arith.constant dense<0.000000e+00> : vector<8x512xf32>
    %596 = tpu.matmul %593, %595, %cst_359 {dimension_numbers = #tpu.dot_dimension_numbers<[1], [0], [0], [1], [0, 0, 1, 1], [], []>} : vector<8x256xbf16>, vector<256x512xbf16>, vector<8x512xf32> -> vector<8x512xf32>
    %c1_360 = arith.constant 1 : index
    %c0_361 = arith.constant 0 : index
    %c0_362 = arith.constant 0 : index
    %597 = vector.load %arg4[%c1_360, %c0_361, %c0_362] : memref<2x1x512xf32, #tpu.memory_space<vmem>>, vector<1x1x512xf32>
    %598 = vector.shape_cast %597 : vector<1x1x512xf32> to vector<1x512xf32>
    %599 = vector.broadcast %598 : vector<1x512xf32> to vector<8x512xf32>
    %600 = arith.addf %596, %599 : vector<8x512xf32>
    %601 = vector.extract_strided_slice %600 {offsets = [0, 0], sizes = [8, 384], strides = [1, 1]} : vector<8x512xf32> to vector<8x384xf32>
    %cst_363 = arith.constant 0.000000e+00 : f32
    %602 = vector.broadcast %cst_363 : f32 to vector<8x384xf32>
    %603 = arith.subf %602, %601 : vector<8x384xf32>
    %604 = math.exp %603 : vector<8x384xf32>
    %cst_364 = arith.constant 1.000000e+00 : f32
    %605 = vector.broadcast %cst_364 : f32 to vector<8x384xf32>
    %606 = arith.addf %605, %604 : vector<8x384xf32>
    %607 = tpu.reciprocal %606 {approx = true} : vector<8x384xf32> -> vector<8x384xf32>
    %608 = vector.extract_strided_slice %600 {offsets = [0, 384], sizes = [8, 128], strides = [1, 1]} : vector<8x512xf32> to vector<8x128xf32>
    %609 = math.tanh %608 : vector<8x128xf32>
    %610 = vector.extract_strided_slice %607 {offsets = [0, 128], sizes = [8, 128], strides = [1, 1]} : vector<8x384xf32> to vector<8x128xf32>
    %c1_365 = arith.constant 1 : index
    %c0_366 = arith.constant 0 : index
    %c0_367 = arith.constant 0 : index
    %611 = vector.load %arg13[%c1_365, %c0_366, %c0_367] : memref<2x8x128xf32, #tpu.memory_space<vmem>>, vector<1x8x128xf32>
    %612 = vector.shape_cast %611 : vector<1x8x128xf32> to vector<8x128xf32>
    %613 = arith.mulf %610, %612 : vector<8x128xf32>
    %614 = vector.extract_strided_slice %607 {offsets = [0, 0], sizes = [8, 128], strides = [1, 1]} : vector<8x384xf32> to vector<8x128xf32>
    %615 = arith.mulf %614, %609 : vector<8x128xf32>
    %616 = arith.addf %613, %615 : vector<8x128xf32>
    %617 = vector.extract_strided_slice %607 {offsets = [0, 256], sizes = [8, 128], strides = [1, 1]} : vector<8x384xf32> to vector<8x128xf32>
    %618 = math.tanh %616 : vector<8x128xf32>
    %619 = arith.mulf %617, %618 : vector<8x128xf32>
    %c1_368 = arith.constant 1 : index
    %c0_369 = arith.constant 0 : index
    %c0_370 = arith.constant 0 : index
    %620 = vector.load %arg13[%c1_368, %c0_369, %c0_370] : memref<2x8x128xf32, #tpu.memory_space<vmem>>, vector<1x8x128xf32>
    %621 = vector.shape_cast %620 : vector<1x8x128xf32> to vector<8x128xf32>
    %622 = vector.shape_cast %616 : vector<8x128xf32> to vector<1x8x128xf32>
    tpu.vector_store %arg13[%c1_368, %c0_369, %c0_370], %622 {strides = array<i32>} : memref<2x8x128xf32, #tpu.memory_space<vmem>>, vector<1x8x128xf32>,
    %623 = arith.truncf %619 : vector<8x128xf32> to vector<8x128xbf16>
    %c1_371 = arith.constant 1 : index
    %c0_372 = arith.constant 0 : index
    %c128_373 = arith.constant 128 : index
    %624 = vector.load %arg12[%c1_371, %c0_372, %c128_373] : memref<2x8x256xbf16, #tpu.memory_space<vmem>>, vector<1x8x128xbf16>
    %625 = vector.shape_cast %624 : vector<1x8x128xbf16> to vector<8x128xbf16>
    %626 = vector.shape_cast %623 : vector<8x128xbf16> to vector<1x8x128xbf16>
    tpu.vector_store %arg12[%c1_371, %c0_372, %c128_373], %626 {strides = array<i32>} : memref<2x8x256xbf16, #tpu.memory_space<vmem>>, vector<1x8x128xbf16>,
    %c8_i32 = arith.constant 8 : i32
    %c0_i32_374 = arith.constant 0 : i32
    %627 = arith.cmpi eq, %arg1, %c0_i32_374 : i32
    %628 = arith.extui %627 : i1 to i32
    %c0_i32_375 = arith.constant 0 : i32
    %629 = arith.cmpi ne, %628, %c0_i32_375 : i32
    scf.if %629 {
      %c1_376 = arith.constant 1 : index
      %c0_377 = arith.constant 0 : index
      %c128_378 = arith.constant 128 : index
      %630 = vector.load %arg12[%c1_376, %c0_377, %c128_378] : memref<2x8x256xbf16, #tpu.memory_space<vmem>>, vector<1x8x128xbf16>
      %631 = vector.shape_cast %630 : vector<1x8x128xbf16> to vector<8x128xbf16>
      %c0_379 = arith.constant 0 : index
      %c0_380 = arith.constant 0 : index
      %632 = vector.load %arg5[%c0_379, %c0_380] : memref<128x128xbf16, #tpu.memory_space<vmem>>, vector<128x128xbf16>
      %cst_381 = arith.constant dense<0.000000e+00> : vector<8x128xf32>
      %633 = tpu.matmul %631, %632, %cst_381 {dimension_numbers = #tpu.dot_dimension_numbers<[1], [0], [0], [1], [0, 0, 1, 1], [], []>} : vector<8x128xbf16>, vector<128x128xbf16>, vector<8x128xf32> -> vector<8x128xf32>
      %c0_382 = arith.constant 0 : index
      %c0_383 = arith.constant 0 : index
      %634 = vector.load %arg6[%c0_382, %c0_383] : memref<1x128xf32, #tpu.memory_space<vmem>>, vector<1x128xf32>
      %635 = vector.broadcast %634 : vector<1x128xf32> to vector<8x128xf32>
      %636 = arith.addf %633, %635 : vector<8x128xf32>
      %c0_384 = arith.constant 0 : index
      %c0_385 = arith.constant 0 : index
      %637 = vector.load %arg9[%c0_384, %c0_385] : memref<8x128xf32, #tpu.memory_space<vmem>>, vector<8x128xf32>
      tpu.vector_store %arg9[%c0_384, %c0_385], %636 {strides = array<i32>} : memref<8x128xf32, #tpu.memory_space<vmem>>, vector<8x128xf32>,
      %c0_386 = arith.constant 0 : index
      %c0_387 = arith.constant 0 : index
      %c128_388 = arith.constant 128 : index
      %638 = vector.load %arg12[%c0_386, %c0_387, %c128_388] : memref<2x8x256xbf16, #tpu.memory_space<vmem>>, vector<1x8x128xbf16>
      %639 = vector.shape_cast %638 : vector<1x8x128xbf16> to vector<8x128xbf16>
      %640 = arith.extf %639 : vector<8x128xbf16> to vector<8x128xf32>
      %c0_389 = arith.constant 0 : index
      %c0_390 = arith.constant 0 : index
      %c0_391 = arith.constant 0 : index
      %641 = vector.load %arg10[%c0_389, %c0_390, %c0_391] : memref<2x8x128xf32, #tpu.memory_space<vmem>>, vector<1x8x128xf32>
      %642 = vector.shape_cast %641 : vector<1x8x128xf32> to vector<8x128xf32>
      %643 = vector.shape_cast %640 : vector<8x128xf32> to vector<1x8x128xf32>
      tpu.vector_store %arg10[%c0_389, %c0_390, %c0_391], %643 {strides = array<i32>} : memref<2x8x128xf32, #tpu.memory_space<vmem>>, vector<1x8x128xf32>,
      %c0_392 = arith.constant 0 : index
      %c0_393 = arith.constant 0 : index
      %c0_394 = arith.constant 0 : index
      %644 = vector.load %arg13[%c0_392, %c0_393, %c0_394] : memref<2x8x128xf32, #tpu.memory_space<vmem>>, vector<1x8x128xf32>
      %645 = vector.shape_cast %644 : vector<1x8x128xf32> to vector<8x128xf32>
      %c0_395 = arith.constant 0 : index
      %c0_396 = arith.constant 0 : index
      %c0_397 = arith.constant 0 : index
      %646 = vector.load %arg11[%c0_395, %c0_396, %c0_397] : memref<2x8x128xf32, #tpu.memory_space<vmem>>, vector<1x8x128xf32>
      %647 = vector.shape_cast %646 : vector<1x8x128xf32> to vector<8x128xf32>
      %648 = vector.shape_cast %645 : vector<8x128xf32> to vector<1x8x128xf32>
      tpu.vector_store %arg11[%c0_395, %c0_396, %c0_397], %648 {strides = array<i32>} : memref<2x8x128xf32, #tpu.memory_space<vmem>>, vector<1x8x128xf32>,
      %c1_398 = arith.constant 1 : index
      %c0_399 = arith.constant 0 : index
      %c128_400 = arith.constant 128 : index
      %649 = vector.load %arg12[%c1_398, %c0_399, %c128_400] : memref<2x8x256xbf16, #tpu.memory_space<vmem>>, vector<1x8x128xbf16>
      %650 = vector.shape_cast %649 : vector<1x8x128xbf16> to vector<8x128xbf16>
      %651 = arith.extf %650 : vector<8x128xbf16> to vector<8x128xf32>
      %c1_401 = arith.constant 1 : index
      %c0_402 = arith.constant 0 : index
      %c0_403 = arith.constant 0 : index
      %652 = vector.load %arg10[%c1_401, %c0_402, %c0_403] : memref<2x8x128xf32, #tpu.memory_space<vmem>>, vector<1x8x128xf32>
      %653 = vector.shape_cast %652 : vector<1x8x128xf32> to vector<8x128xf32>
      %654 = vector.shape_cast %651 : vector<8x128xf32> to vector<1x8x128xf32>
      tpu.vector_store %arg10[%c1_401, %c0_402, %c0_403], %654 {strides = array<i32>} : memref<2x8x128xf32, #tpu.memory_space<vmem>>, vector<1x8x128xf32>,
      %c1_404 = arith.constant 1 : index
      %c0_405 = arith.constant 0 : index
      %c0_406 = arith.constant 0 : index
      %655 = vector.load %arg13[%c1_404, %c0_405, %c0_406] : memref<2x8x128xf32, #tpu.memory_space<vmem>>, vector<1x8x128xf32>
      %656 = vector.shape_cast %655 : vector<1x8x128xf32> to vector<8x128xf32>
      %c1_407 = arith.constant 1 : index
      %c0_408 = arith.constant 0 : index
      %c0_409 = arith.constant 0 : index
      %657 = vector.load %arg11[%c1_407, %c0_408, %c0_409] : memref<2x8x128xf32, #tpu.memory_space<vmem>>, vector<1x8x128xf32>
      %658 = vector.shape_cast %657 : vector<1x8x128xf32> to vector<8x128xf32>
      %659 = vector.shape_cast %656 : vector<8x128xf32> to vector<1x8x128xf32>
      tpu.vector_store %arg11[%c1_407, %c0_408, %c0_409], %659 {strides = array<i32>} : memref<2x8x128xf32, #tpu.memory_space<vmem>>, vector<1x8x128xf32>,
    } else {
    }
    return
  }
  func.func @transform_0(%arg0: i32, %arg1: i32) -> (i32, i32, i32) {
    %c0_i32 = arith.constant 0 : i32
    %c0_i32_0 = arith.constant 0 : i32
    return %arg1, %arg0, %c0_i32 : i32, i32, i32
  }
  func.func @transform_1(%arg0: i32, %arg1: i32) -> (i32, i32, i32) {
    %c0_i32 = arith.constant 0 : i32
    %c0_i32_0 = arith.constant 0 : i32
    %c0_i32_1 = arith.constant 0 : i32
    %c0_i32_2 = arith.constant 0 : i32
    return %c0_i32, %c0_i32_0, %c0_i32_1 : i32, i32, i32
  }
  func.func @transform_2(%arg0: i32, %arg1: i32) -> (i32, i32, i32) {
    %c0_i32 = arith.constant 0 : i32
    %c0_i32_0 = arith.constant 0 : i32
    %c0_i32_1 = arith.constant 0 : i32
    %c0_i32_2 = arith.constant 0 : i32
    return %c0_i32, %c0_i32_0, %c0_i32_1 : i32, i32, i32
  }
  func.func @transform_3(%arg0: i32, %arg1: i32) -> (i32, i32) {
    %c0_i32 = arith.constant 0 : i32
    %c0_i32_0 = arith.constant 0 : i32
    %c0_i32_1 = arith.constant 0 : i32
    return %c0_i32, %c0_i32_0 : i32, i32
  }
  func.func @transform_4(%arg0: i32, %arg1: i32) -> (i32, i32) {
    %c0_i32 = arith.constant 0 : i32
    %c0_i32_0 = arith.constant 0 : i32
    %c0_i32_1 = arith.constant 0 : i32
    return %c0_i32, %c0_i32_0 : i32, i32
  }
  func.func @transform_5(%arg0: i32, %arg1: i32) -> (i32, i32, i32) {
    %c0_i32 = arith.constant 0 : i32
    %c0_i32_0 = arith.constant 0 : i32
    %c0_i32_1 = arith.constant 0 : i32
    return %c0_i32, %arg0, %c0_i32_0 : i32, i32, i32
  }
  func.func @transform_6(%arg0: i32, %arg1: i32) -> (i32, i32, i32) {
    %c0_i32 = arith.constant 0 : i32
    %c0_i32_0 = arith.constant 0 : i32
    %c0_i32_1 = arith.constant 0 : i32
    return %c0_i32, %arg0, %c0_i32_0 : i32, i32, i32
  }
  func.func @transform_7(%arg0: i32, %arg1: i32) -> (i32, i32) {
    %c0_i32 = arith.constant 0 : i32
    %c0_i32_0 = arith.constant 0 : i32
    return %arg0, %c0_i32 : i32, i32
  }
  func.func @transform_8(%arg0: i32, %arg1: i32) -> (i32, i32, i32) {
    %c0_i32 = arith.constant 0 : i32
    %c0_i32_0 = arith.constant 0 : i32
    %c0_i32_1 = arith.constant 0 : i32
    return %c0_i32, %arg0, %c0_i32_0 : i32, i32, i32
  }
  func.func @transform_9(%arg0: i32, %arg1: i32) -> (i32, i32, i32) {
    %c0_i32 = arith.constant 0 : i32
    %c0_i32_0 = arith.constant 0 : i32
    %c0_i32_1 = arith.constant 0 : i32
    return %c0_i32, %arg0, %c0_i32_0 : i32, i32, i32
  }
}

</mosaic_0001>

<llo_original>
// kernel: tpu_custom_call.1
$region0: #{tpu_custom_call.1}
  #allocation0 [shape = 'u32[]', space=smem, size = 0x4, offset = 0x4, fixed_abs, tag = 'smem constant byte address 0x4 - core index']
  #allocation1 [shape = 'u32[144,128]{1,0:T(1,128)}', space=vmem, size = 0x12000, scoped, tag = 'internal scratch']
  #allocation2 [shape = 'bf16[2,8,256]{2,1,0:T(8,128)(2,1)}', space=vmem, size = 0x2000, scoped, tag = 'scratch operand']
  #allocation3 [shape = 'f32[2,8,128]{2,1,0:T(8,128)}', space=vmem, size = 0x2000, scoped, tag = 'scratch operand']
  %s0 = inlined_call_operand.hbm [shape: bf16[8,8,512], index: 0, kind: input, shape index: {}]
  %s1 = inlined_call_operand.hbm [shape: bf16[2,256,512], index: 1, kind: input, shape index: {}]
  %s2 = inlined_call_operand.hbm [shape: f32[2,1,512], index: 2, kind: input, shape index: {}]
  %s3 = inlined_call_operand.hbm [shape: bf16[128,128], index: 3, kind: input, shape index: {}]
  %s4 = inlined_call_operand.vmem [shape: f32[1,128], index: 4, kind: input, shape index: {}]
  %s5 = inlined_call_operand.hbm [shape: bf16[2,8,128], index: 5, kind: input, shape index: {}]
  %s6 = inlined_call_operand.vmem [shape: f32[2,8,128], index: 6, kind: input, shape index: {}]
  %s7 = inlined_call_operand.hbm [shape: f32[8,128], index: 7, kind: output, shape index: {0}]
  %s8 = inlined_call_operand.hbm [shape: f32[2,8,128], index: 8, kind: output, shape index: {1}]
  %s9 = inlined_call_operand.hbm [shape: f32[2,8,128], index: 9, kind: output, shape index: {2}]
  %10 = xla_tuple %s7, %s8, %s9
  %s11 = sld [smem:[#allocation0]]
  $region82: #{tpu_custom_call.1} parent=0
    _
  %s13 = ssub.s32 1, %s11
  %s14 = scalar_select 0, %s13, %s11
  $region1: #{tpu_custom_call.1} parent=0
    #allocation4 [shape = 'u8[65536]{0}', space=vmem, size = 0x10000, scoped, tag = 'input window, operand 0, single buffered']
    #allocation5 [shape = 's32[1]{0}', space=sflag, size = 0x4, scoped, tag = 'scoped memory for tpu_custom_call.1']
    #allocation6 [shape = 's32[1]{0}', space=sflag, size = 0x4, scoped, tag = 'scoped memory for tpu_custom_call.1']
    #allocation7 [shape = 'u8[524288]{0}', space=vmem, size = 0x80000, scoped, tag = 'input window, operand 1, single buffered']
    #allocation8 [shape = 's32[1]{0}', space=sflag, size = 0x4, scoped, tag = 'scoped memory for tpu_custom_call.1']
    #allocation9 [shape = 'u8[4096]{0}', space=vmem, size = 0x1000, scoped, tag = 'input window, operand 2, single buffered']
    #allocation10 [shape = 'u8[32768]{0}', space=vmem, size = 0x8000, scoped, tag = 'input window, operand 3, single buffered']
    #allocation11 [shape = 's32[1]{0}', space=sflag, size = 0x4, scoped, tag = 'scoped memory for tpu_custom_call.1']
    #allocation12 [shape = 'u8[4096]{0}', space=vmem, size = 0x1000, scoped, tag = 'input window, operand 5, single buffered']
    #allocation13 [shape = 'u8[4096]{0}', space=vmem, size = 0x1000, scoped, tag = 'output window, operand 0, single buffered']
    #allocation14 [shape = 'u8[8192]{0}', space=vmem, size = 0x2000, scoped, tag = 'output window, operand 1, single buffered']
    #allocation15 [shape = 's32[1]{0}', space=sflag, size = 0x4, scoped, tag = 'scoped memory for tpu_custom_call.1']
    #allocation16 [shape = 'u8[8192]{0}', space=vmem, size = 0x2000, scoped, tag = 'output window, operand 2, single buffered']
    %15 = vsyncpa [#allocation5], 0
    %16 = vsyncpa [#allocation8], 0
    %17 = vsyncpa [#allocation11], 0
    %18 = vsyncpa [#allocation6], 0
    %19 = vsyncpa [#allocation15], 0
    // Predicated region
    $region2: #{tpu_custom_call.1} parent=1 // pred_check
      _
    $region3: #{tpu_custom_call.1} parent=1 // pred_check_branch
      %21 = sbr.rel (0) target = $region5
    $region4: #{tpu_custom_call.1} parent=1 // pred_region
      %s23 = ssub.s32 2048, 2048
      %24 = vsyncadd [#allocation5], %s23
      %s25 = sshll.u32 [#allocation4], 4
      %s26 = int_to_ptr.vmem [resolvable:$true] %s25
      %31 = dma.hbm_to_vmem [thread:$0]  %s0, 2048, %s26, [#allocation5], 256, 256, 16
    $region5: #{tpu_custom_call.1} parent=1 // pred_fallthru
      _
    // Predicated region
    $region6: #{tpu_custom_call.1} parent=1 // pred_check
      _
    $region7: #{tpu_custom_call.1} parent=1 // pred_check_branch
      %33 = sbr.rel (0) target = $region9
    $region8: #{tpu_custom_call.1} parent=1 // pred_region
      %s35 = ssub.s32 16384, 16384
      %36 = vsyncadd [#allocation8], %s35
      %s37 = sshll.u32 [#allocation7], 4
      %s38 = int_to_ptr.vmem [resolvable:$true] %s37
      %43 = dma.hbm_to_vmem [thread:$0]  %s1, 16384, %s38, [#allocation8], 256, 256, 16
    $region9: #{tpu_custom_call.1} parent=1 // pred_fallthru
      _
    // Predicated region
    $region10: #{tpu_custom_call.1} parent=1 // pred_check
      _
    $region11: #{tpu_custom_call.1} parent=1 // pred_check_branch
      %45 = sbr.rel (0) target = $region13
    $region12: #{tpu_custom_call.1} parent=1 // pred_region
      %s47 = ssub.s32 128, 128
      %48 = vsyncadd [#allocation8], %s47
      %s49 = sshll.u32 [#allocation9], 4
      %s50 = int_to_ptr.vmem [resolvable:$true] %s49
      %55 = dma.hbm_to_vmem [thread:$0]  %s2, 128, %s50, [#allocation8], 64, 64, 4
    $region13: #{tpu_custom_call.1} parent=1 // pred_fallthru
      _
    // Predicated region
    $region14: #{tpu_custom_call.1} parent=1 // pred_check
      _
    $region15: #{tpu_custom_call.1} parent=1 // pred_check_branch
      %57 = sbr.rel (0) target = $region17
    $region16: #{tpu_custom_call.1} parent=1 // pred_region
      %s59 = ssub.s32 1024, 1024
      %60 = vsyncadd [#allocation11], %s59
      %s61 = sshll.u32 [#allocation10], 4
      %s62 = int_to_ptr.vmem [resolvable:$true] %s61
      %67 = dma.hbm_to_vmem [thread:$0]  %s3, 1024, %s62, [#allocation11], 64, 64, 4
    $region17: #{tpu_custom_call.1} parent=1 // pred_fallthru
      _
    // Predicated region
    $region18: #{tpu_custom_call.1} parent=1 // pred_check
      _
    $region19: #{tpu_custom_call.1} parent=1 // pred_check_branch
      %69 = sbr.rel (0) target = $region21
    $region20: #{tpu_custom_call.1} parent=1 // pred_region
      _
    $region21: #{tpu_custom_call.1} parent=1 // pred_fallthru
      _
    // Predicated region
    $region22: #{tpu_custom_call.1} parent=1 // pred_check
      _
    $region23: #{tpu_custom_call.1} parent=1 // pred_check_branch
      %71 = sbr.rel (0) target = $region25
    $region24: #{tpu_custom_call.1} parent=1 // pred_region
      %s73 = ssub.s32 128, 128
      %74 = vsyncadd [#allocation11], %s73
      %s75 = sshll.u32 [#allocation12], 4
      %s76 = int_to_ptr.vmem [resolvable:$true] %s75
      %81 = dma.hbm_to_vmem [thread:$0]  %s5, 128, %s76, [#allocation11], 64, 64, 4
    $region25: #{tpu_custom_call.1} parent=1 // pred_fallthru
      _
    // Predicated region
    $region26: #{tpu_custom_call.1} parent=1 // pred_check
      _
    $region27: #{tpu_custom_call.1} parent=1 // pred_check_branch
      %83 = sbr.rel (0) target = $region29
    $region28: #{tpu_custom_call.1} parent=1 // pred_region
      _
    $region29: #{tpu_custom_call.1} parent=1 // pred_fallthru
      _
    // Predicated region
    $region30: #{tpu_custom_call.1} parent=1 // pred_check
      _
    $region31: #{tpu_custom_call.1} parent=1 // pred_check_branch
      %85 = sbr.rel (0) target = $region33
    $region32: #{tpu_custom_call.1} parent=1 // pred_region
      %86 = dma.done [#allocation5], 2048
    $region33: #{tpu_custom_call.1} parent=1 // pred_fallthru
      _
    // Predicated region
    $region34: #{tpu_custom_call.1} parent=1 // pred_check
      _
    $region35: #{tpu_custom_call.1} parent=1 // pred_check_branch
      %88 = sbr.rel (0) target = $region37
    $region36: #{tpu_custom_call.1} parent=1 // pred_region
      %89 = dma.done [#allocation8], 16384
    $region37: #{tpu_custom_call.1} parent=1 // pred_fallthru
      _
    // Predicated region
    $region38: #{tpu_custom_call.1} parent=1 // pred_check
      _
    $region39: #{tpu_custom_call.1} parent=1 // pred_check_branch
      %91 = sbr.rel (0) target = $region41
    $region40: #{tpu_custom_call.1} parent=1 // pred_region
      %92 = dma.done [#allocation8], 128
    $region41: #{tpu_custom_call.1} parent=1 // pred_fallthru
      _
    // Predicated region
    $region42: #{tpu_custom_call.1} parent=1 // pred_check
      _
    $region43: #{tpu_custom_call.1} parent=1 // pred_check_branch
      %94 = sbr.rel (0) target = $region45
    $region44: #{tpu_custom_call.1} parent=1 // pred_region
      %95 = dma.done [#allocation11], 1024
    $region45: #{tpu_custom_call.1} parent=1 // pred_fallthru
      _
    // Predicated region
    $region46: #{tpu_custom_call.1} parent=1 // pred_check
      _
    $region47: #{tpu_custom_call.1} parent=1 // pred_check_branch
      %97 = sbr.rel (0) target = $region49
    $region48: #{tpu_custom_call.1} parent=1 // pred_region
      %98 = dma.done [#allocation11], 128
    $region49: #{tpu_custom_call.1} parent=1 // pred_fallthru
      _
    %p100 = scmp.eq.s32.totalorder 0, 0
    // Predicated region
    $region50: #{tpu_custom_call.1} parent=1 // pred_check
      %p101 = pneg %p100
    $region51: #{tpu_custom_call.1} parent=1 // pred_check_branch
      %103 = sbr.rel (%p101) target = $region53
    $region52: #{tpu_custom_call.1} parent=1 // pred_region
      %v104 = vld [vmem:[#allocation12] sm:$0xf]
      %105 = vst [vmem:[#allocation2 + $0x4] sm:$0xf] %v104
      %v106 = vld [vmem:[%s6] sm:$0xff]
      %107 = vst [vmem:[#allocation3] sm:$0xff] %v106
      %s108 = scalar_lea.vmem [#allocation12], 4
      %v109 = vld [vmem:[%s108] sm:$0xf]
      %s110 = scalar_lea.vmem [#allocation2], 8
      %111 = vst [vmem:[%s110 + $0x4] sm:$0xf] %v109
      %s112 = scalar_lea.vmem %s6, 8
      %v113 = vld [vmem:[%s112] sm:$0xff]
      %s114 = scalar_lea.vmem [#allocation3], 8
      %115 = vst [vmem:[%s114] sm:$0xff] %v113
    $region53: #{tpu_custom_call.1} parent=1 // pred_fallthru
      _
    %v116 = vld [vmem:[#allocation4] sm:$0xff]
    %v117 = vld [vmem:[#allocation4 + $0x8] sm:$0xff]
    %v118 = vunpack.c.l.bf16 %v116
    %v119 = vunpack.c.h.bf16 %v116
    %v120 = vunpack.c.l.bf16 %v117
    %v121 = vunpack.c.h.bf16 %v117
    %v122 = vld [vmem:[#allocation2 + $0x4] sm:$0xf]
    %v123 = vld [vmem:[#allocation7 + $0x100] sm:$0xff]
    %v124 = vld [vmem:[#allocation7 + $0x108] sm:$0xff]
    %v125 = vld [vmem:[#allocation7 + $0x110] sm:$0xff]
    %v126 = vld [vmem:[#allocation7 + $0x118] sm:$0xff]
    %v127 = vld [vmem:[#allocation7 + $0x120] sm:$0xff]
    %v128 = vld [vmem:[#allocation7 + $0x128] sm:$0xff]
    %v129 = vld [vmem:[#allocation7 + $0x130] sm:$0xff]
    %v130 = vld [vmem:[#allocation7 + $0x138] sm:$0xff]
    %v131 = vld [vmem:[#allocation7 + $0x140] sm:$0xff]
    %v132 = vld [vmem:[#allocation7 + $0x148] sm:$0xff]
    %v133 = vld [vmem:[#allocation7 + $0x150] sm:$0xff]
    %v134 = vld [vmem:[#allocation7 + $0x158] sm:$0xff]
    %v135 = vld [vmem:[#allocation7 + $0x160] sm:$0xff]
    %v136 = vld [vmem:[#allocation7 + $0x168] sm:$0xff]
    %v137 = vld [vmem:[#allocation7 + $0x170] sm:$0xff]
    %v138 = vld [vmem:[#allocation7 + $0x178] sm:$0xff]
    %v139 = vld [vmem:[#allocation7 + $0x180] sm:$0xff]
    %v140 = vld [vmem:[#allocation7 + $0x188] sm:$0xff]
    %v141 = vld [vmem:[#allocation7 + $0x190] sm:$0xff]
    %v142 = vld [vmem:[#allocation7 + $0x198] sm:$0xff]
    %v143 = vld [vmem:[#allocation7 + $0x1a0] sm:$0xff]
    %v144 = vld [vmem:[#allocation7 + $0x1a8] sm:$0xff]
    %v145 = vld [vmem:[#allocation7 + $0x1b0] sm:$0xff]
    %v146 = vld [vmem:[#allocation7 + $0x1b8] sm:$0xff]
    %v147 = vld [vmem:[#allocation7 + $0x1c0] sm:$0xff]
    %v148 = vld [vmem:[#allocation7 + $0x1c8] sm:$0xff]
    %v149 = vld [vmem:[#allocation7 + $0x1d0] sm:$0xff]
    %v150 = vld [vmem:[#allocation7 + $0x1d8] sm:$0xff]
    %v151 = vld [vmem:[#allocation7 + $0x1e0] sm:$0xff]
    %v152 = vld [vmem:[#allocation7 + $0x1e8] sm:$0xff]
    %v153 = vld [vmem:[#allocation7 + $0x1f0] sm:$0xff]
    %v154 = vld [vmem:[#allocation7 + $0x1f8] sm:$0xff]
    %v187 = vunpack.c.l.b16 %v123
    %v188 = vunpack.c.h.b16 %v123
    %v189 = vunpack.c.l.b16 %v124
    %v190 = vunpack.c.h.b16 %v124
    %v191 = vunpack.c.l.b16 %v125
    %v192 = vunpack.c.h.b16 %v125
    %v193 = vunpack.c.l.b16 %v126
    %v194 = vunpack.c.h.b16 %v126
    %v195 = vunpack.c.l.b16 %v127
    %v196 = vunpack.c.h.b16 %v127
    %v197 = vunpack.c.l.b16 %v128
    %v198 = vunpack.c.h.b16 %v128
    %v199 = vunpack.c.l.b16 %v129
    %v200 = vunpack.c.h.b16 %v129
    %v201 = vunpack.c.l.b16 %v130
    %v202 = vunpack.c.h.b16 %v130
    %v203 = vunpack.c.l.b16 %v131
    %v204 = vunpack.c.h.b16 %v131
    %v205 = vunpack.c.l.b16 %v132
    %v206 = vunpack.c.h.b16 %v132
    %v207 = vunpack.c.l.b16 %v133
    %v208 = vunpack.c.h.b16 %v133
    %v209 = vunpack.c.l.b16 %v134
    %v210 = vunpack.c.h.b16 %v134
    %v211 = vunpack.c.l.b16 %v135
    %v212 = vunpack.c.h.b16 %v135
    %v213 = vunpack.c.l.b16 %v136
    %v214 = vunpack.c.h.b16 %v136
    %v215 = vunpack.c.l.b16 %v137
    %v216 = vunpack.c.h.b16 %v137
    %v217 = vunpack.c.l.b16 %v138
    %v218 = vunpack.c.h.b16 %v138
    %v219 = vunpack.c.l.b16 %v139
    %v220 = vunpack.c.h.b16 %v139
    %v221 = vunpack.c.l.b16 %v140
    %v222 = vunpack.c.h.b16 %v140
    %v223 = vunpack.c.l.b16 %v141
    %v224 = vunpack.c.h.b16 %v141
    %v225 = vunpack.c.l.b16 %v142
    %v226 = vunpack.c.h.b16 %v142
    %v227 = vunpack.c.l.b16 %v143
    %v228 = vunpack.c.h.b16 %v143
    %v229 = vunpack.c.l.b16 %v144
    %v230 = vunpack.c.h.b16 %v144
    %v231 = vunpack.c.l.b16 %v145
    %v232 = vunpack.c.h.b16 %v145
    %v233 = vunpack.c.l.b16 %v146
    %v234 = vunpack.c.h.b16 %v146
    %v235 = vunpack.c.l.b16 %v147
    %v236 = vunpack.c.h.b16 %v147
    %v237 = vunpack.c.l.b16 %v148
    %v238 = vunpack.c.h.b16 %v148
    %v239 = vunpack.c.l.b16 %v149
    %v240 = vunpack.c.h.b16 %v149
    %v241 = vunpack.c.l.b16 %v150
    %v242 = vunpack.c.h.b16 %v150
    %v243 = vunpack.c.l.b16 %v151
    %v244 = vunpack.c.h.b16 %v151
    %v245 = vunpack.c.l.b16 %v152
    %v246 = vunpack.c.h.b16 %v152
    %v247 = vunpack.c.l.b16 %v153
    %v248 = vunpack.c.h.b16 %v153
    %v249 = vunpack.c.l.b16 %v154
    %v250 = vunpack.c.h.b16 %v154
    %v251 = vpack.c.b16 %v191, %v187
    %v252 = vpack.c.b16 %v192, %v188
    %v253 = vpack.c.b16 %v193, %v189
    %v254 = vpack.c.b16 %v194, %v190
    %v255 = vpack.c.b16 %v199, %v195
    %v256 = vpack.c.b16 %v200, %v196
    %v257 = vpack.c.b16 %v201, %v197
    %v258 = vpack.c.b16 %v202, %v198
    %v259 = vpack.c.b16 %v207, %v203
    %v260 = vpack.c.b16 %v208, %v204
    %v261 = vpack.c.b16 %v209, %v205
    %v262 = vpack.c.b16 %v210, %v206
    %v263 = vpack.c.b16 %v215, %v211
    %v264 = vpack.c.b16 %v216, %v212
    %v265 = vpack.c.b16 %v217, %v213
    %v266 = vpack.c.b16 %v218, %v214
    %v267 = vpack.c.b16 %v223, %v219
    %v268 = vpack.c.b16 %v224, %v220
    %v269 = vpack.c.b16 %v225, %v221
    %v270 = vpack.c.b16 %v226, %v222
    %v271 = vpack.c.b16 %v231, %v227
    %v272 = vpack.c.b16 %v232, %v228
    %v273 = vpack.c.b16 %v233, %v229
    %v274 = vpack.c.b16 %v234, %v230
    %v275 = vpack.c.b16 %v239, %v235
    %v276 = vpack.c.b16 %v240, %v236
    %v277 = vpack.c.b16 %v241, %v237
    %v278 = vpack.c.b16 %v242, %v238
    %v279 = vpack.c.b16 %v247, %v243
    %v280 = vpack.c.b16 %v248, %v244
    %v281 = vpack.c.b16 %v249, %v245
    %v282 = vpack.c.b16 %v250, %v246
    %315 = vmatprep.subr.bf16.mxu0 %v252
    %316 = vmatpush1.bf16.msra.mxu0 %v251
    %317 = vmatprep.subr.bf16.mxu0 %v256
    %318 = vmatpush1.bf16.msra.mxu0 %v255
    %319 = vmatprep.subr.bf16.mxu0 %v260
    %320 = vmatpush1.bf16.msra.mxu0 %v259
    %321 = vmatprep.subr.bf16.mxu0 %v264
    %322 = vmatpush1.bf16.msra.mxu0 %v263
    %323 = vmatprep.subr.bf16.mxu0 %v268
    %324 = vmatpush1.bf16.msra.mxu0 %v267
    %325 = vmatprep.subr.bf16.mxu0 %v272
    %326 = vmatpush1.bf16.msra.mxu0 %v271
    %327 = vmatprep.subr.bf16.mxu0 %v276
    %328 = vmatpush1.bf16.msra.mxu0 %v275
    %329 = vmatprep.subr.bf16.mxu0 %v280
    %330 = vmatpush1.bf16.msra.mxu0 %v279
    %331 = vmatprep.subr.bf16.mxu0 0
    %332 = vmatpush1.bf16.msra.mxu0 0
    %333 = vmatprep.subr.bf16.mxu0 0
    %334 = vmatpush1.bf16.msra.mxu0 0
    %335 = vmatprep.subr.bf16.mxu0 0
    %336 = vmatpush1.bf16.msra.mxu0 0
    %337 = vmatprep.subr.bf16.mxu0 0
    %338 = vmatpush1.bf16.msra.mxu0 0
    %339 = vmatprep.subr.bf16.mxu0 0
    %340 = vmatpush1.bf16.msra.mxu0 0
    %341 = vmatprep.subr.bf16.mxu0 0
    %342 = vmatpush1.bf16.msra.mxu0 0
    %343 = vmatprep.subr.bf16.mxu0 0
    %344 = vmatpush1.bf16.msra.mxu0 0
    %345 = vmatprep.subr.bf16.mxu0 0
    %346 = vmatpush1.bf16.msra.mxu0 0
    %347 = vmatprep.mubr.bf16.mxu0 0
    %348 = vmatmul.mubr.bf16.gmra.mrb[0].mxu0 %v122
    %v349 = vpop.f32.mrb[0].mxu0
    %v350 = vadd.f32 0.0, %v349
    %v351 = vpop.f32.mrb[0].mxu0
    %v352 = vadd.f32 0.0, %v351
    %v353 = vpop.f32.mrb[0].mxu0
    %v354 = vpop.f32.mrb[0].mxu0
    %355 = vdwg.mxu0
    %356 = vmatprep.subr.bf16.mxu0 %v254
    %357 = vmatpush1.bf16.msra.mxu0 %v253
    %358 = vmatprep.subr.bf16.mxu0 %v258
    %359 = vmatpush1.bf16.msra.mxu0 %v257
    %360 = vmatprep.subr.bf16.mxu0 %v262
    %361 = vmatpush1.bf16.msra.mxu0 %v261
    %362 = vmatprep.subr.bf16.mxu0 %v266
    %363 = vmatpush1.bf16.msra.mxu0 %v265
    %364 = vmatprep.subr.bf16.mxu0 %v270
    %365 = vmatpush1.bf16.msra.mxu0 %v269
    %366 = vmatprep.subr.bf16.mxu0 %v274
    %367 = vmatpush1.bf16.msra.mxu0 %v273
    %368 = vmatprep.subr.bf16.mxu0 %v278
    %369 = vmatpush1.bf16.msra.mxu0 %v277
    %370 = vmatprep.subr.bf16.mxu0 %v282
    %371 = vmatpush1.bf16.msra.mxu0 %v281
    %372 = vmatprep.subr.bf16.mxu0 0
    %373 = vmatpush1.bf16.msra.mxu0 0
    %374 = vmatprep.subr.bf16.mxu0 0
    %375 = vmatpush1.bf16.msra.mxu0 0
    %376 = vmatprep.subr.bf16.mxu0 0
    %377 = vmatpush1.bf16.msra.mxu0 0
    %378 = vmatprep.subr.bf16.mxu0 0
    %379 = vmatpush1.bf16.msra.mxu0 0
    %380 = vmatprep.subr.bf16.mxu0 0
    %381 = vmatpush1.bf16.msra.mxu0 0
    %382 = vmatprep.subr.bf16.mxu0 0
    %383 = vmatpush1.bf16.msra.mxu0 0
    %384 = vmatprep.subr.bf16.mxu0 0
    %385 = vmatpush1.bf16.msra.mxu0 0
    %386 = vmatprep.subr.bf16.mxu0 0
    %387 = vmatpush1.bf16.msra.mxu0 0
    %388 = vmatprep.mubr.bf16.mxu0 0
    %389 = vmatmul.mubr.bf16.gmra.mrb[0].mxu0 %v122
    %v390 = vpop.f32.mrb[0].mxu0
    %v391 = vadd.f32 0.0, %v390
    %v392 = vpop.f32.mrb[0].mxu0
    %v393 = vadd.f32 0.0, %v392
    %v394 = vpop.f32.mrb[0].mxu0
    %v395 = vpop.f32.mrb[0].mxu0
    %396 = vdwg.mxu0
    %v397 = vadd.f32 %v118, %v350
    %v398 = vadd.f32 %v119, %v352
    %v399 = vadd.f32 %v120, %v391
    %v400 = vadd.f32 %v121, %v393
    %v401 = vld [vmem:[#allocation9] sm:$0xf]
    %v403 = vlaneseq
    %v404 = vshrl.u32 %v403, 7
    %v405 = vsub.s32 0, %v404
    %v406 = vrot.slane %v401, %v405
    %v407 = vlaneseq
    %v408 = vshrl.u32 %v407, 7
    %v409 = vsub.s32 1, %v408
    %v410 = vrot.slane %v401, %v409
    %v411 = vlaneseq
    %v412 = vshrl.u32 %v411, 7
    %v413 = vsub.s32 2, %v412
    %v414 = vrot.slane %v401, %v413
    %v415 = vlaneseq
    %v416 = vshrl.u32 %v415, 7
    %v417 = vsub.s32 3, %v416
    %v418 = vrot.slane %v401, %v417
    %v423 = vadd.f32 %v397, %v406
    %v424 = vadd.f32 %v398, %v410
    %v425 = vadd.f32 %v399, %v414
    %v426 = vadd.f32 %v400, %v418
    %v427 = vsub.f32 0.0, %v423
    %v428 = vsub.f32 0.0, %v424
    %v429 = vsub.f32 0.0, %v425
    %v430 = vmul.f32 %v427, 1.442695
    %v431 = vpow.pop %v430
    %v432 = vmul.f32 %v428, 1.442695
    %v433 = vpow.pop %v432
    %v434 = vmul.f32 %v429, 1.442695
    %v435 = vpow.pop %v434
    %v436 = vadd.f32 %v431, 1.0
    %v437 = vadd.f32 %v433, 1.0
    %v438 = vadd.f32 %v435, 1.0
    %v439 = vrcp.pop %v436
    %v440 = vrcp.pop %v437
    %v441 = vrcp.pop %v438
    %v442 = vtanh.pop %v426
    %v443 = vld [vmem:[#allocation3] sm:$0xff]
    %v444 = vmul.f32 %v440, %v443
    %v445 = vmul.f32 %v439, %v442
    %v446 = vadd.f32 %v444, %v445
    %v447 = vtanh.pop %v446
    %v448 = vmul.f32 %v441, %v447
    %449 = vst [vmem:[#allocation3] sm:$0xff] %v446
    %v450 = vpack.c.bf16 %v448, %v448
    %451 = vst [vmem:[#allocation2 + $0x4] sm:$0xf] %v450
    %s452 = scalar_lea.vmem [#allocation2], 8
    %453 = vst [vmem:[%s452] sm:$0xf] %v450
    %v454 = vld [vmem:[%s452] sm:$0xff]
    %s455 = scalar_lea.vmem [#allocation7], 512
    %v456 = vld [vmem:[%s455] sm:$0xff]
    %v457 = vld [vmem:[%s455 + $0x8] sm:$0xff]
    %v458 = vld [vmem:[%s455 + $0x10] sm:$0xff]
    %v459 = vld [vmem:[%s455 + $0x18] sm:$0xff]
    %v460 = vld [vmem:[%s455 + $0x20] sm:$0xff]
    %v461 = vld [vmem:[%s455 + $0x28] sm:$0xff]
    %v462 = vld [vmem:[%s455 + $0x30] sm:$0xff]
    %v463 = vld [vmem:[%s455 + $0x38] sm:$0xff]
    %v464 = vld [vmem:[%s455 + $0x40] sm:$0xff]
    %v465 = vld [vmem:[%s455 + $0x48] sm:$0xff]
    %v466 = vld [vmem:[%s455 + $0x50] sm:$0xff]
    %v467 = vld [vmem:[%s455 + $0x58] sm:$0xff]
    %v468 = vld [vmem:[%s455 + $0x60] sm:$0xff]
    %v469 = vld [vmem:[%s455 + $0x68] sm:$0xff]
    %v470 = vld [vmem:[%s455 + $0x70] sm:$0xff]
    %v471 = vld [vmem:[%s455 + $0x78] sm:$0xff]
    %v472 = vld [vmem:[%s455 + $0x80] sm:$0xff]
    %v473 = vld [vmem:[%s455 + $0x88] sm:$0xff]
    %v474 = vld [vmem:[%s455 + $0x90] sm:$0xff]
    %v475 = vld [vmem:[%s455 + $0x98] sm:$0xff]
    %v476 = vld [vmem:[%s455 + $0xa0] sm:$0xff]
    %v477 = vld [vmem:[%s455 + $0xa8] sm:$0xff]
    %v478 = vld [vmem:[%s455 + $0xb0] sm:$0xff]
    %v479 = vld [vmem:[%s455 + $0xb8] sm:$0xff]
    %v480 = vld [vmem:[%s455 + $0xc0] sm:$0xff]
    %v481 = vld [vmem:[%s455 + $0xc8] sm:$0xff]
    %v482 = vld [vmem:[%s455 + $0xd0] sm:$0xff]
    %v483 = vld [vmem:[%s455 + $0xd8] sm:$0xff]
    %v484 = vld [vmem:[%s455 + $0xe0] sm:$0xff]
    %v485 = vld [vmem:[%s455 + $0xe8] sm:$0xff]
    %v486 = vld [vmem:[%s455 + $0xf0] sm:$0xff]
    %v487 = vld [vmem:[%s455 + $0xf8] sm:$0xff]
    %v488 = vld [vmem:[%s455 + $0x100] sm:$0xff]
    %v489 = vld [vmem:[%s455 + $0x108] sm:$0xff]
    %v490 = vld [vmem:[%s455 + $0x110] sm:$0xff]
    %v491 = vld [vmem:[%s455 + $0x118] sm:$0xff]
    %v492 = vld [vmem:[%s455 + $0x120] sm:$0xff]
    %v493 = vld [vmem:[%s455 + $0x128] sm:$0xff]
    %v494 = vld [vmem:[%s455 + $0x130] sm:$0xff]
    %v495 = vld [vmem:[%s455 + $0x138] sm:$0xff]
    %v496 = vld [vmem:[%s455 + $0x140] sm:$0xff]
    %v497 = vld [vmem:[%s455 + $0x148] sm:$0xff]
    %v498 = vld [vmem:[%s455 + $0x150] sm:$0xff]
    %v499 = vld [vmem:[%s455 + $0x158] sm:$0xff]
    %v500 = vld [vmem:[%s455 + $0x160] sm:$0xff]
    %v501 = vld [vmem:[%s455 + $0x168] sm:$0xff]
    %v502 = vld [vmem:[%s455 + $0x170] sm:$0xff]
    %v503 = vld [vmem:[%s455 + $0x178] sm:$0xff]
    %v504 = vld [vmem:[%s455 + $0x180] sm:$0xff]
    %v505 = vld [vmem:[%s455 + $0x188] sm:$0xff]
    %v506 = vld [vmem:[%s455 + $0x190] sm:$0xff]
    %v507 = vld [vmem:[%s455 + $0x198] sm:$0xff]
    %v508 = vld [vmem:[%s455 + $0x1a0] sm:$0xff]
    %v509 = vld [vmem:[%s455 + $0x1a8] sm:$0xff]
    %v510 = vld [vmem:[%s455 + $0x1b0] sm:$0xff]
    %v511 = vld [vmem:[%s455 + $0x1b8] sm:$0xff]
    %v512 = vld [vmem:[%s455 + $0x1c0] sm:$0xff]
    %v513 = vld [vmem:[%s455 + $0x1c8] sm:$0xff]
    %v514 = vld [vmem:[%s455 + $0x1d0] sm:$0xff]
    %v515 = vld [vmem:[%s455 + $0x1d8] sm:$0xff]
    %v516 = vld [vmem:[%s455 + $0x1e0] sm:$0xff]
    %v517 = vld [vmem:[%s455 + $0x1e8] sm:$0xff]
    %v518 = vld [vmem:[%s455 + $0x1f0] sm:$0xff]
    %v519 = vld [vmem:[%s455 + $0x1f8] sm:$0xff]
    %s520 = scalar_lea.vmem [#allocation9], 4
    %v521 = vld [vmem:[%s520] sm:$0xf]
    %v523 = vlaneseq
    %v524 = vshrl.u32 %v523, 7
    %v525 = vsub.s32 0, %v524
    %v526 = vrot.slane %v521, %v525
    %v527 = vlaneseq
    %v528 = vshrl.u32 %v527, 7
    %v529 = vsub.s32 1, %v528
    %v530 = vrot.slane %v521, %v529
    %v531 = vlaneseq
    %v532 = vshrl.u32 %v531, 7
    %v533 = vsub.s32 2, %v532
    %v534 = vrot.slane %v521, %v533
    %v535 = vlaneseq
    %v536 = vshrl.u32 %v535, 7
    %v537 = vsub.s32 3, %v536
    %v538 = vrot.slane %v521, %v537
    %v544 = vunpack.c.l.b16 %v454
    %v545 = vunpack.c.h.b16 %v454
    %v546 = vpack.c.b16 %v544, %v544
    %v547 = vpack.c.b16 %v545, %v545
    %v614 = vunpack.c.l.b16 %v456
    %v615 = vunpack.c.h.b16 %v456
    %v616 = vunpack.c.l.b16 %v457
    %v617 = vunpack.c.h.b16 %v457
    %v618 = vunpack.c.l.b16 %v458
    %v619 = vunpack.c.h.b16 %v458
    %v620 = vunpack.c.l.b16 %v459
    %v621 = vunpack.c.h.b16 %v459
    %v622 = vunpack.c.l.b16 %v460
    %v623 = vunpack.c.h.b16 %v460
    %v624 = vunpack.c.l.b16 %v461
    %v625 = vunpack.c.h.b16 %v461
    %v626 = vunpack.c.l.b16 %v462
    %v627 = vunpack.c.h.b16 %v462
    %v628 = vunpack.c.l.b16 %v463
    %v629 = vunpack.c.h.b16 %v463
    %v630 = vunpack.c.l.b16 %v464
    %v631 = vunpack.c.h.b16 %v464
    %v632 = vunpack.c.l.b16 %v465
    %v633 = vunpack.c.h.b16 %v465
    %v634 = vunpack.c.l.b16 %v466
    %v635 = vunpack.c.h.b16 %v466
    %v636 = vunpack.c.l.b16 %v467
    %v637 = vunpack.c.h.b16 %v467
    %v638 = vunpack.c.l.b16 %v468
    %v639 = vunpack.c.h.b16 %v468
    %v640 = vunpack.c.l.b16 %v469
    %v641 = vunpack.c.h.b16 %v469
    %v642 = vunpack.c.l.b16 %v470
    %v643 = vunpack.c.h.b16 %v470
    %v644 = vunpack.c.l.b16 %v471
    %v645 = vunpack.c.h.b16 %v471
    %v646 = vunpack.c.l.b16 %v472
    %v647 = vunpack.c.h.b16 %v472
    %v648 = vunpack.c.l.b16 %v473
    %v649 = vunpack.c.h.b16 %v473
    %v650 = vunpack.c.l.b16 %v474
    %v651 = vunpack.c.h.b16 %v474
    %v652 = vunpack.c.l.b16 %v475
    %v653 = vunpack.c.h.b16 %v475
    %v654 = vunpack.c.l.b16 %v476
    %v655 = vunpack.c.h.b16 %v476
    %v656 = vunpack.c.l.b16 %v477
    %v657 = vunpack.c.h.b16 %v477
    %v658 = vunpack.c.l.b16 %v478
    %v659 = vunpack.c.h.b16 %v478
    %v660 = vunpack.c.l.b16 %v479
    %v661 = vunpack.c.h.b16 %v479
    %v662 = vunpack.c.l.b16 %v480
    %v663 = vunpack.c.h.b16 %v480
    %v664 = vunpack.c.l.b16 %v481
    %v665 = vunpack.c.h.b16 %v481
    %v666 = vunpack.c.l.b16 %v482
    %v667 = vunpack.c.h.b16 %v482
    %v668 = vunpack.c.l.b16 %v483
    %v669 = vunpack.c.h.b16 %v483
    %v670 = vunpack.c.l.b16 %v484
    %v671 = vunpack.c.h.b16 %v484
    %v672 = vunpack.c.l.b16 %v485
    %v673 = vunpack.c.h.b16 %v485
    %v674 = vunpack.c.l.b16 %v486
    %v675 = vunpack.c.h.b16 %v486
    %v676 = vunpack.c.l.b16 %v487
    %v677 = vunpack.c.h.b16 %v487
    %v678 = vunpack.c.l.b16 %v488
    %v679 = vunpack.c.h.b16 %v488
    %v680 = vunpack.c.l.b16 %v489
    %v681 = vunpack.c.h.b16 %v489
    %v682 = vunpack.c.l.b16 %v490
    %v683 = vunpack.c.h.b16 %v490
    %v684 = vunpack.c.l.b16 %v491
    %v685 = vunpack.c.h.b16 %v491
    %v686 = vunpack.c.l.b16 %v492
    %v687 = vunpack.c.h.b16 %v492
    %v688 = vunpack.c.l.b16 %v493
    %v689 = vunpack.c.h.b16 %v493
    %v690 = vunpack.c.l.b16 %v494
    %v691 = vunpack.c.h.b16 %v494
    %v692 = vunpack.c.l.b16 %v495
    %v693 = vunpack.c.h.b16 %v495
    %v694 = vunpack.c.l.b16 %v496
    %v695 = vunpack.c.h.b16 %v496
    %v696 = vunpack.c.l.b16 %v497
    %v697 = vunpack.c.h.b16 %v497
    %v698 = vunpack.c.l.b16 %v498
    %v699 = vunpack.c.h.b16 %v498
    %v700 = vunpack.c.l.b16 %v499
    %v701 = vunpack.c.h.b16 %v499
    %v702 = vunpack.c.l.b16 %v500
    %v703 = vunpack.c.h.b16 %v500
    %v704 = vunpack.c.l.b16 %v501
    %v705 = vunpack.c.h.b16 %v501
    %v706 = vunpack.c.l.b16 %v502
    %v707 = vunpack.c.h.b16 %v502
    %v708 = vunpack.c.l.b16 %v503
    %v709 = vunpack.c.h.b16 %v503
    %v710 = vunpack.c.l.b16 %v504
    %v711 = vunpack.c.h.b16 %v504
    %v712 = vunpack.c.l.b16 %v505
    %v713 = vunpack.c.h.b16 %v505
    %v714 = vunpack.c.l.b16 %v506
    %v715 = vunpack.c.h.b16 %v506
    %v716 = vunpack.c.l.b16 %v507
    %v717 = vunpack.c.h.b16 %v507
    %v718 = vunpack.c.l.b16 %v508
    %v719 = vunpack.c.h.b16 %v508
    %v720 = vunpack.c.l.b16 %v509
    %v721 = vunpack.c.h.b16 %v509
    %v722 = vunpack.c.l.b16 %v510
    %v723 = vunpack.c.h.b16 %v510
    %v724 = vunpack.c.l.b16 %v511
    %v725 = vunpack.c.h.b16 %v511
    %v726 = vunpack.c.l.b16 %v512
    %v727 = vunpack.c.h.b16 %v512
    %v728 = vunpack.c.l.b16 %v513
    %v729 = vunpack.c.h.b16 %v513
    %v730 = vunpack.c.l.b16 %v514
    %v731 = vunpack.c.h.b16 %v514
    %v732 = vunpack.c.l.b16 %v515
    %v733 = vunpack.c.h.b16 %v515
    %v734 = vunpack.c.l.b16 %v516
    %v735 = vunpack.c.h.b16 %v516
    %v736 = vunpack.c.l.b16 %v517
    %v737 = vunpack.c.h.b16 %v517
    %v738 = vunpack.c.l.b16 %v518
    %v739 = vunpack.c.h.b16 %v518
    %v740 = vunpack.c.l.b16 %v519
    %v741 = vunpack.c.h.b16 %v519
    %v742 = vpack.c.b16 %v618, %v614
    %v743 = vpack.c.b16 %v619, %v615
    %v744 = vpack.c.b16 %v620, %v616
    %v745 = vpack.c.b16 %v621, %v617
    %v746 = vpack.c.b16 %v626, %v622
    %v747 = vpack.c.b16 %v627, %v623
    %v748 = vpack.c.b16 %v628, %v624
    %v749 = vpack.c.b16 %v629, %v625
    %v750 = vpack.c.b16 %v634, %v630
    %v751 = vpack.c.b16 %v635, %v631
    %v752 = vpack.c.b16 %v636, %v632
    %v753 = vpack.c.b16 %v637, %v633
    %v754 = vpack.c.b16 %v642, %v638
    %v755 = vpack.c.b16 %v643, %v639
    %v756 = vpack.c.b16 %v644, %v640
    %v757 = vpack.c.b16 %v645, %v641
    %v758 = vpack.c.b16 %v650, %v646
    %v759 = vpack.c.b16 %v651, %v647
    %v760 = vpack.c.b16 %v652, %v648
    %v761 = vpack.c.b16 %v653, %v649
    %v762 = vpack.c.b16 %v658, %v654
    %v763 = vpack.c.b16 %v659, %v655
    %v764 = vpack.c.b16 %v660, %v656
    %v765 = vpack.c.b16 %v661, %v657
    %v766 = vpack.c.b16 %v666, %v662
    %v767 = vpack.c.b16 %v667, %v663
    %v768 = vpack.c.b16 %v668, %v664
    %v769 = vpack.c.b16 %v669, %v665
    %v770 = vpack.c.b16 %v674, %v670
    %v771 = vpack.c.b16 %v675, %v671
    %v772 = vpack.c.b16 %v676, %v672
    %v773 = vpack.c.b16 %v677, %v673
    %v774 = vpack.c.b16 %v682, %v678
    %v775 = vpack.c.b16 %v683, %v679
    %v776 = vpack.c.b16 %v684, %v680
    %v777 = vpack.c.b16 %v685, %v681
    %v778 = vpack.c.b16 %v690, %v686
    %v779 = vpack.c.b16 %v691, %v687
    %v780 = vpack.c.b16 %v692, %v688
    %v781 = vpack.c.b16 %v693, %v689
    %v782 = vpack.c.b16 %v698, %v694
    %v783 = vpack.c.b16 %v699, %v695
    %v784 = vpack.c.b16 %v700, %v696
    %v785 = vpack.c.b16 %v701, %v697
    %v786 = vpack.c.b16 %v706, %v702
    %v787 = vpack.c.b16 %v707, %v703
    %v788 = vpack.c.b16 %v708, %v704
    %v789 = vpack.c.b16 %v709, %v705
    %v790 = vpack.c.b16 %v714, %v710
    %v791 = vpack.c.b16 %v715, %v711
    %v792 = vpack.c.b16 %v716, %v712
    %v793 = vpack.c.b16 %v717, %v713
    %v794 = vpack.c.b16 %v722, %v718
    %v795 = vpack.c.b16 %v723, %v719
    %v796 = vpack.c.b16 %v724, %v720
    %v797 = vpack.c.b16 %v725, %v721
    %v798 = vpack.c.b16 %v730, %v726
    %v799 = vpack.c.b16 %v731, %v727
    %v800 = vpack.c.b16 %v732, %v728
    %v801 = vpack.c.b16 %v733, %v729
    %v802 = vpack.c.b16 %v738, %v734
    %v803 = vpack.c.b16 %v739, %v735
    %v804 = vpack.c.b16 %v740, %v736
    %v805 = vpack.c.b16 %v741, %v737
    %870 = vmatprep.subr.bf16.mxu0 %v743
    %871 = vmatpush1.bf16.msra.mxu0 %v742
    %872 = vmatprep.subr.bf16.mxu0 %v747
    %873 = vmatpush1.bf16.msra.mxu0 %v746
    %874 = vmatprep.subr.bf16.mxu0 %v751
    %875 = vmatpush1.bf16.msra.mxu0 %v750
    %876 = vmatprep.subr.bf16.mxu0 %v755
    %877 = vmatpush1.bf16.msra.mxu0 %v754
    %878 = vmatprep.subr.bf16.mxu0 %v759
    %879 = vmatpush1.bf16.msra.mxu0 %v758
    %880 = vmatprep.subr.bf16.mxu0 %v763
    %881 = vmatpush1.bf16.msra.mxu0 %v762
    %882 = vmatprep.subr.bf16.mxu0 %v767
    %883 = vmatpush1.bf16.msra.mxu0 %v766
    %884 = vmatprep.subr.bf16.mxu0 %v771
    %885 = vmatpush1.bf16.msra.mxu0 %v770
    %886 = vmatprep.subr.bf16.mxu0 %v775
    %887 = vmatpush1.bf16.msra.mxu0 %v774
    %888 = vmatprep.subr.bf16.mxu0 %v779
    %889 = vmatpush1.bf16.msra.mxu0 %v778
    %890 = vmatprep.subr.bf16.mxu0 %v783
    %891 = vmatpush1.bf16.msra.mxu0 %v782
    %892 = vmatprep.subr.bf16.mxu0 %v787
    %893 = vmatpush1.bf16.msra.mxu0 %v786
    %894 = vmatprep.subr.bf16.mxu0 %v791
    %895 = vmatpush1.bf16.msra.mxu0 %v790
    %896 = vmatprep.subr.bf16.mxu0 %v795
    %897 = vmatpush1.bf16.msra.mxu0 %v794
    %898 = vmatprep.subr.bf16.mxu0 %v799
    %899 = vmatpush1.bf16.msra.mxu0 %v798
    %900 = vmatprep.subr.bf16.mxu0 %v803
    %901 = vmatpush1.bf16.msra.mxu0 %v802
    %902 = vmatprep.mubr.bf16.mxu0 %v547
    %903 = vmatmul.mubr.bf16.gmra.mrb[0].mxu0 %v546
    %v904 = vpop.f32.mrb[0].mxu0
    %v905 = vadd.f32 %v526, %v904
    %v906 = vpop.f32.mrb[0].mxu0
    %v907 = vadd.f32 %v530, %v906
    %v908 = vpop.f32.mrb[0].mxu0
    %v909 = vpop.f32.mrb[0].mxu0
    %910 = vdwg.mxu0
    %911 = vmatprep.subr.bf16.mxu0 %v745
    %912 = vmatpush1.bf16.msra.mxu0 %v744
    %913 = vmatprep.subr.bf16.mxu0 %v749
    %914 = vmatpush1.bf16.msra.mxu0 %v748
    %915 = vmatprep.subr.bf16.mxu0 %v753
    %916 = vmatpush1.bf16.msra.mxu0 %v752
    %917 = vmatprep.subr.bf16.mxu0 %v757
    %918 = vmatpush1.bf16.msra.mxu0 %v756
    %919 = vmatprep.subr.bf16.mxu0 %v761
    %920 = vmatpush1.bf16.msra.mxu0 %v760
    %921 = vmatprep.subr.bf16.mxu0 %v765
    %922 = vmatpush1.bf16.msra.mxu0 %v764
    %923 = vmatprep.subr.bf16.mxu0 %v769
    %924 = vmatpush1.bf16.msra.mxu0 %v768
    %925 = vmatprep.subr.bf16.mxu0 %v773
    %926 = vmatpush1.bf16.msra.mxu0 %v772
    %927 = vmatprep.subr.bf16.mxu0 %v777
    %928 = vmatpush1.bf16.msra.mxu0 %v776
    %929 = vmatprep.subr.bf16.mxu0 %v781
    %930 = vmatpush1.bf16.msra.mxu0 %v780
    %931 = vmatprep.subr.bf16.mxu0 %v785
    %932 = vmatpush1.bf16.msra.mxu0 %v784
    %933 = vmatprep.subr.bf16.mxu0 %v789
    %934 = vmatpush1.bf16.msra.mxu0 %v788
    %935 = vmatprep.subr.bf16.mxu0 %v793
    %936 = vmatpush1.bf16.msra.mxu0 %v792
    %937 = vmatprep.subr.bf16.mxu0 %v797
    %938 = vmatpush1.bf16.msra.mxu0 %v796
    %939 = vmatprep.subr.bf16.mxu0 %v801
    %940 = vmatpush1.bf16.msra.mxu0 %v800
    %941 = vmatprep.subr.bf16.mxu0 %v805
    %942 = vmatpush1.bf16.msra.mxu0 %v804
    %943 = vmatprep.mubr.bf16.mxu0 %v547
    %944 = vmatmul.mubr.bf16.gmra.mrb[0].mxu0 %v546
    %v945 = vpop.f32.mrb[0].mxu0
    %v946 = vadd.f32 %v534, %v945
    %v947 = vpop.f32.mrb[0].mxu0
    %v948 = vadd.f32 %v538, %v947
    %v949 = vpop.f32.mrb[0].mxu0
    %v950 = vpop.f32.mrb[0].mxu0
    %951 = vdwg.mxu0
    %v952 = vsub.f32 0.0, %v905
    %v953 = vsub.f32 0.0, %v907
    %v954 = vsub.f32 0.0, %v946
    %v955 = vmul.f32 %v952, 1.442695
    %v956 = vpow.pop %v955
    %v957 = vmul.f32 %v953, 1.442695
    %v958 = vpow.pop %v957
    %v959 = vmul.f32 %v954, 1.442695
    %v960 = vpow.pop %v959
    %v961 = vadd.f32 %v956, 1.0
    %v962 = vadd.f32 %v958, 1.0
    %v963 = vadd.f32 %v960, 1.0
    %v964 = vrcp.pop %v961
    %v965 = vrcp.pop %v962
    %v966 = vrcp.pop %v963
    %v967 = vtanh.pop %v948
    %s968 = scalar_lea.vmem [#allocation3], 8
    %v969 = vld [vmem:[%s968] sm:$0xff]
    %v970 = vmul.f32 %v965, %v969
    %v971 = vmul.f32 %v964, %v967
    %v972 = vadd.f32 %v970, %v971
    %v973 = vtanh.pop %v972
    %v974 = vmul.f32 %v966, %v973
    %975 = vst [vmem:[%s968] sm:$0xff] %v972
    %v976 = vpack.c.bf16 %v974, %v974
    %977 = vst [vmem:[%s452 + $0x4] sm:$0xf] %v976
    %s978 = scalar_lea.vmem [#allocation4], 16
    %v979 = vld [vmem:[%s978] sm:$0xff]
    %v980 = vld [vmem:[%s978 + $0x8] sm:$0xff]
    %v981 = vunpack.c.l.bf16 %v979
    %v982 = vunpack.c.h.bf16 %v979
    %v983 = vunpack.c.l.bf16 %v980
    %v984 = vunpack.c.h.bf16 %v980
    %v985 = vld [vmem:[#allocation2 + $0x4] sm:$0xf]
    %v986 = vld [vmem:[#allocation7 + $0x100] sm:$0xff]
    %v987 = vld [vmem:[#allocation7 + $0x108] sm:$0xff]
    %v988 = vld [vmem:[#allocation7 + $0x110] sm:$0xff]
    %v989 = vld [vmem:[#allocation7 + $0x118] sm:$0xff]
    %v990 = vld [vmem:[#allocation7 + $0x120] sm:$0xff]
    %v991 = vld [vmem:[#allocation7 + $0x128] sm:$0xff]
    %v992 = vld [vmem:[#allocation7 + $0x130] sm:$0xff]
    %v993 = vld [vmem:[#allocation7 + $0x138] sm:$0xff]
    %v994 = vld [vmem:[#allocation7 + $0x140] sm:$0xff]
    %v995 = vld [vmem:[#allocation7 + $0x148] sm:$0xff]
    %v996 = vld [vmem:[#allocation7 + $0x150] sm:$0xff]
    %v997 = vld [vmem:[#allocation7 + $0x158] sm:$0xff]
    %v998 = vld [vmem:[#allocation7 + $0x160] sm:$0xff]
    %v999 = vld [vmem:[#allocation7 + $0x168] sm:$0xff]
    %v1000 = vld [vmem:[#allocation7 + $0x170] sm:$0xff]
    %v1001 = vld [vmem:[#allocation7 + $0x178] sm:$0xff]
    %v1002 = vld [vmem:[#allocation7 + $0x180] sm:$0xff]
    %v1003 = vld [vmem:[#allocation7 + $0x188] sm:$0xff]
    %v1004 = vld [vmem:[#allocation7 + $0x190] sm:$0xff]
    %v1005 = vld [vmem:[#allocation7 + $0x198] sm:$0xff]
    %v1006 = vld [vmem:[#allocation7 + $0x1a0] sm:$0xff]
    %v1007 = vld [vmem:[#allocation7 + $0x1a8] sm:$0xff]
    %v1008 = vld [vmem:[#allocation7 + $0x1b0] sm:$0xff]
    %v1009 = vld [vmem:[#allocation7 + $0x1b8] sm:$0xff]
    %v1010 = vld [vmem:[#allocation7 + $0x1c0] sm:$0xff]
    %v1011 = vld [vmem:[#allocation7 + $0x1c8] sm:$0xff]
    %v1012 = vld [vmem:[#allocation7 + $0x1d0] sm:$0xff]
    %v1013 = vld [vmem:[#allocation7 + $0x1d8] sm:$0xff]
    %v1014 = vld [vmem:[#allocation7 + $0x1e0] sm:$0xff]
    %v1015 = vld [vmem:[#allocation7 + $0x1e8] sm:$0xff]
    %v1016 = vld [vmem:[#allocation7 + $0x1f0] sm:$0xff]
    %v1017 = vld [vmem:[#allocation7 + $0x1f8] sm:$0xff]
    %v1050 = vunpack.c.l.b16 %v986
    %v1051 = vunpack.c.h.b16 %v986
    %v1052 = vunpack.c.l.b16 %v987
    %v1053 = vunpack.c.h.b16 %v987
    %v1054 = vunpack.c.l.b16 %v988
    %v1055 = vunpack.c.h.b16 %v988
    %v1056 = vunpack.c.l.b16 %v989
    %v1057 = vunpack.c.h.b16 %v989
    %v1058 = vunpack.c.l.b16 %v990
    %v1059 = vunpack.c.h.b16 %v990
    %v1060 = vunpack.c.l.b16 %v991
    %v1061 = vunpack.c.h.b16 %v991
    %v1062 = vunpack.c.l.b16 %v992
    %v1063 = vunpack.c.h.b16 %v992
    %v1064 = vunpack.c.l.b16 %v993
    %v1065 = vunpack.c.h.b16 %v993
    %v1066 = vunpack.c.l.b16 %v994
    %v1067 = vunpack.c.h.b16 %v994
    %v1068 = vunpack.c.l.b16 %v995
    %v1069 = vunpack.c.h.b16 %v995
    %v1070 = vunpack.c.l.b16 %v996
    %v1071 = vunpack.c.h.b16 %v996
    %v1072 = vunpack.c.l.b16 %v997
    %v1073 = vunpack.c.h.b16 %v997
    %v1074 = vunpack.c.l.b16 %v998
    %v1075 = vunpack.c.h.b16 %v998
    %v1076 = vunpack.c.l.b16 %v999
    %v1077 = vunpack.c.h.b16 %v999
    %v1078 = vunpack.c.l.b16 %v1000
    %v1079 = vunpack.c.h.b16 %v1000
    %v1080 = vunpack.c.l.b16 %v1001
    %v1081 = vunpack.c.h.b16 %v1001
    %v1082 = vunpack.c.l.b16 %v1002
    %v1083 = vunpack.c.h.b16 %v1002
    %v1084 = vunpack.c.l.b16 %v1003
    %v1085 = vunpack.c.h.b16 %v1003
    %v1086 = vunpack.c.l.b16 %v1004
    %v1087 = vunpack.c.h.b16 %v1004
    %v1088 = vunpack.c.l.b16 %v1005
    %v1089 = vunpack.c.h.b16 %v1005
    %v1090 = vunpack.c.l.b16 %v1006
    %v1091 = vunpack.c.h.b16 %v1006
    %v1092 = vunpack.c.l.b16 %v1007
    %v1093 = vunpack.c.h.b16 %v1007
    %v1094 = vunpack.c.l.b16 %v1008
    %v1095 = vunpack.c.h.b16 %v1008
    %v1096 = vunpack.c.l.b16 %v1009
    %v1097 = vunpack.c.h.b16 %v1009
    %v1098 = vunpack.c.l.b16 %v1010
    %v1099 = vunpack.c.h.b16 %v1010
    %v1100 = vunpack.c.l.b16 %v1011
    %v1101 = vunpack.c.h.b16 %v1011
    %v1102 = vunpack.c.l.b16 %v1012
    %v1103 = vunpack.c.h.b16 %v1012
    %v1104 = vunpack.c.l.b16 %v1013
    %v1105 = vunpack.c.h.b16 %v1013
    %v1106 = vunpack.c.l.b16 %v1014
    %v1107 = vunpack.c.h.b16 %v1014
    %v1108 = vunpack.c.l.b16 %v1015
    %v1109 = vunpack.c.h.b16 %v1015
    %v1110 = vunpack.c.l.b16 %v1016
    %v1111 = vunpack.c.h.b16 %v1016
    %v1112 = vunpack.c.l.b16 %v1017
    %v1113 = vunpack.c.h.b16 %v1017
    %v1114 = vpack.c.b16 %v1054, %v1050
    %v1115 = vpack.c.b16 %v1055, %v1051
    %v1116 = vpack.c.b16 %v1056, %v1052
    %v1117 = vpack.c.b16 %v1057, %v1053
    %v1118 = vpack.c.b16 %v1062, %v1058
    %v1119 = vpack.c.b16 %v1063, %v1059
    %v1120 = vpack.c.b16 %v1064, %v1060
    %v1121 = vpack.c.b16 %v1065, %v1061
    %v1122 = vpack.c.b16 %v1070, %v1066
    %v1123 = vpack.c.b16 %v1071, %v1067
    %v1124 = vpack.c.b16 %v1072, %v1068
    %v1125 = vpack.c.b16 %v1073, %v1069
    %v1126 = vpack.c.b16 %v1078, %v1074
    %v1127 = vpack.c.b16 %v1079, %v1075
    %v1128 = vpack.c.b16 %v1080, %v1076
    %v1129 = vpack.c.b16 %v1081, %v1077
    %v1130 = vpack.c.b16 %v1086, %v1082
    %v1131 = vpack.c.b16 %v1087, %v1083
    %v1132 = vpack.c.b16 %v1088, %v1084
    %v1133 = vpack.c.b16 %v1089, %v1085
    %v1134 = vpack.c.b16 %v1094, %v1090
    %v1135 = vpack.c.b16 %v1095, %v1091
    %v1136 = vpack.c.b16 %v1096, %v1092
    %v1137 = vpack.c.b16 %v1097, %v1093
    %v1138 = vpack.c.b16 %v1102, %v1098
    %v1139 = vpack.c.b16 %v1103, %v1099
    %v1140 = vpack.c.b16 %v1104, %v1100
    %v1141 = vpack.c.b16 %v1105, %v1101
    %v1142 = vpack.c.b16 %v1110, %v1106
    %v1143 = vpack.c.b16 %v1111, %v1107
    %v1144 = vpack.c.b16 %v1112, %v1108
    %v1145 = vpack.c.b16 %v1113, %v1109
    %1178 = vmatprep.subr.bf16.mxu0 %v1115
    %1179 = vmatpush1.bf16.msra.mxu0 %v1114
    %1180 = vmatprep.subr.bf16.mxu0 %v1119
    %1181 = vmatpush1.bf16.msra.mxu0 %v1118
    %1182 = vmatprep.subr.bf16.mxu0 %v1123
    %1183 = vmatpush1.bf16.msra.mxu0 %v1122
    %1184 = vmatprep.subr.bf16.mxu0 %v1127
    %1185 = vmatpush1.bf16.msra.mxu0 %v1126
    %1186 = vmatprep.subr.bf16.mxu0 %v1131
    %1187 = vmatpush1.bf16.msra.mxu0 %v1130
    %1188 = vmatprep.subr.bf16.mxu0 %v1135
    %1189 = vmatpush1.bf16.msra.mxu0 %v1134
    %1190 = vmatprep.subr.bf16.mxu0 %v1139
    %1191 = vmatpush1.bf16.msra.mxu0 %v1138
    %1192 = vmatprep.subr.bf16.mxu0 %v1143
    %1193 = vmatpush1.bf16.msra.mxu0 %v1142
    %1194 = vmatprep.subr.bf16.mxu0 0
    %1195 = vmatpush1.bf16.msra.mxu0 0
    %1196 = vmatprep.subr.bf16.mxu0 0
    %1197 = vmatpush1.bf16.msra.mxu0 0
    %1198 = vmatprep.subr.bf16.mxu0 0
    %1199 = vmatpush1.bf16.msra.mxu0 0
    %1200 = vmatprep.subr.bf16.mxu0 0
    %1201 = vmatpush1.bf16.msra.mxu0 0
    %1202 = vmatprep.subr.bf16.mxu0 0
    %1203 = vmatpush1.bf16.msra.mxu0 0
    %1204 = vmatprep.subr.bf16.mxu0 0
    %1205 = vmatpush1.bf16.msra.mxu0 0
    %1206 = vmatprep.subr.bf16.mxu0 0
    %1207 = vmatpush1.bf16.msra.mxu0 0
    %1208 = vmatprep.subr.bf16.mxu0 0
    %1209 = vmatpush1.bf16.msra.mxu0 0
    %1210 = vmatprep.mubr.bf16.mxu0 0
    %1211 = vmatmul.mubr.bf16.gmra.mrb[0].mxu0 %v985
    %v1212 = vpop.f32.mrb[0].mxu0
    %v1213 = vadd.f32 0.0, %v1212
    %v1214 = vpop.f32.mrb[0].mxu0
    %v1215 = vadd.f32 0.0, %v1214
    %v1216 = vpop.f32.mrb[0].mxu0
    %v1217 = vpop.f32.mrb[0].mxu0
    %1218 = vdwg.mxu0
    %1219 = vmatprep.subr.bf16.mxu0 %v1117
    %1220 = vmatpush1.bf16.msra.mxu0 %v1116
    %1221 = vmatprep.subr.bf16.mxu0 %v1121
    %1222 = vmatpush1.bf16.msra.mxu0 %v1120
    %1223 = vmatprep.subr.bf16.mxu0 %v1125
    %1224 = vmatpush1.bf16.msra.mxu0 %v1124
    %1225 = vmatprep.subr.bf16.mxu0 %v1129
    %1226 = vmatpush1.bf16.msra.mxu0 %v1128
    %1227 = vmatprep.subr.bf16.mxu0 %v1133
    %1228 = vmatpush1.bf16.msra.mxu0 %v1132
    %1229 = vmatprep.subr.bf16.mxu0 %v1137
    %1230 = vmatpush1.bf16.msra.mxu0 %v1136
    %1231 = vmatprep.subr.bf16.mxu0 %v1141
    %1232 = vmatpush1.bf16.msra.mxu0 %v1140
    %1233 = vmatprep.subr.bf16.mxu0 %v1145
    %1234 = vmatpush1.bf16.msra.mxu0 %v1144
    %1235 = vmatprep.subr.bf16.mxu0 0
    %1236 = vmatpush1.bf16.msra.mxu0 0
    %1237 = vmatprep.subr.bf16.mxu0 0
    %1238 = vmatpush1.bf16.msra.mxu0 0
    %1239 = vmatprep.subr.bf16.mxu0 0
    %1240 = vmatpush1.bf16.msra.mxu0 0
    %1241 = vmatprep.subr.bf16.mxu0 0
    %1242 = vmatpush1.bf16.msra.mxu0 0
    %1243 = vmatprep.subr.bf16.mxu0 0
    %1244 = vmatpush1.bf16.msra.mxu0 0
    %1245 = vmatprep.subr.bf16.mxu0 0
    %1246 = vmatpush1.bf16.msra.mxu0 0
    %1247 = vmatprep.subr.bf16.mxu0 0
    %1248 = vmatpush1.bf16.msra.mxu0 0
    %1249 = vmatprep.subr.bf16.mxu0 0
    %1250 = vmatpush1.bf16.msra.mxu0 0
    %1251 = vmatprep.mubr.bf16.mxu0 0
    %1252 = vmatmul.mubr.bf16.gmra.mrb[0].mxu0 %v985
    %v1253 = vpop.f32.mrb[0].mxu0
    %v1254 = vadd.f32 0.0, %v1253
    %v1255 = vpop.f32.mrb[0].mxu0
    %v1256 = vadd.f32 0.0, %v1255
    %v1257 = vpop.f32.mrb[0].mxu0
    %v1258 = vpop.f32.mrb[0].mxu0
    %1259 = vdwg.mxu0
    %v1260 = vadd.f32 %v981, %v1213
    %v1261 = vadd.f32 %v982, %v1215
    %v1262 = vadd.f32 %v983, %v1254
    %v1263 = vadd.f32 %v984, %v1256
    %v1264 = vld [vmem:[#allocation9] sm:$0xf]
    %v1266 = vlaneseq
    %v1267 = vshrl.u32 %v1266, 7
    %v1268 = vsub.s32 0, %v1267
    %v1269 = vrot.slane %v1264, %v1268
    %v1270 = vlaneseq
    %v1271 = vshrl.u32 %v1270, 7
    %v1272 = vsub.s32 1, %v1271
    %v1273 = vrot.slane %v1264, %v1272
    %v1274 = vlaneseq
    %v1275 = vshrl.u32 %v1274, 7
    %v1276 = vsub.s32 2, %v1275
    %v1277 = vrot.slane %v1264, %v1276
    %v1278 = vlaneseq
    %v1279 = vshrl.u32 %v1278, 7
    %v1280 = vsub.s32 3, %v1279
    %v1281 = vrot.slane %v1264, %v1280
    %v1286 = vadd.f32 %v1260, %v1269
    %v1287 = vadd.f32 %v1261, %v1273
    %v1288 = vadd.f32 %v1262, %v1277
    %v1289 = vadd.f32 %v1263, %v1281
    %v1290 = vsub.f32 0.0, %v1286
    %v1291 = vsub.f32 0.0, %v1287
    %v1292 = vsub.f32 0.0, %v1288
    %v1293 = vmul.f32 %v1290, 1.442695
    %v1294 = vpow.pop %v1293
    %v1295 = vmul.f32 %v1291, 1.442695
    %v1296 = vpow.pop %v1295
    %v1297 = vmul.f32 %v1292, 1.442695
    %v1298 = vpow.pop %v1297
    %v1299 = vadd.f32 %v1294, 1.0
    %v1300 = vadd.f32 %v1296, 1.0
    %v1301 = vadd.f32 %v1298, 1.0
    %v1302 = vrcp.pop %v1299
    %v1303 = vrcp.pop %v1300
    %v1304 = vrcp.pop %v1301
    %v1305 = vtanh.pop %v1289
    %v1306 = vld [vmem:[#allocation3] sm:$0xff]
    %v1307 = vmul.f32 %v1303, %v1306
    %v1308 = vmul.f32 %v1302, %v1305
    %v1309 = vadd.f32 %v1307, %v1308
    %v1310 = vtanh.pop %v1309
    %v1311 = vmul.f32 %v1304, %v1310
    %1312 = vst [vmem:[#allocation3] sm:$0xff] %v1309
    %v1313 = vpack.c.bf16 %v1311, %v1311
    %1314 = vst [vmem:[#allocation2 + $0x4] sm:$0xf] %v1313
    %1315 = vst [vmem:[%s452] sm:$0xf] %v1313
    %v1316 = vld [vmem:[%s452] sm:$0xff]
    %v1317 = vld [vmem:[%s455] sm:$0xff]
    %v1318 = vld [vmem:[%s455 + $0x8] sm:$0xff]
    %v1319 = vld [vmem:[%s455 + $0x10] sm:$0xff]
    %v1320 = vld [vmem:[%s455 + $0x18] sm:$0xff]
    %v1321 = vld [vmem:[%s455 + $0x20] sm:$0xff]
    %v1322 = vld [vmem:[%s455 + $0x28] sm:$0xff]
    %v1323 = vld [vmem:[%s455 + $0x30] sm:$0xff]
    %v1324 = vld [vmem:[%s455 + $0x38] sm:$0xff]
    %v1325 = vld [vmem:[%s455 + $0x40] sm:$0xff]
    %v1326 = vld [vmem:[%s455 + $0x48] sm:$0xff]
    %v1327 = vld [vmem:[%s455 + $0x50] sm:$0xff]
    %v1328 = vld [vmem:[%s455 + $0x58] sm:$0xff]
    %v1329 = vld [vmem:[%s455 + $0x60] sm:$0xff]
    %v1330 = vld [vmem:[%s455 + $0x68] sm:$0xff]
    %v1331 = vld [vmem:[%s455 + $0x70] sm:$0xff]
    %v1332 = vld [vmem:[%s455 + $0x78] sm:$0xff]
    %v1333 = vld [vmem:[%s455 + $0x80] sm:$0xff]
    %v1334 = vld [vmem:[%s455 + $0x88] sm:$0xff]
    %v1335 = vld [vmem:[%s455 + $0x90] sm:$0xff]
    %v1336 = vld [vmem:[%s455 + $0x98] sm:$0xff]
    %v1337 = vld [vmem:[%s455 + $0xa0] sm:$0xff]
    %v1338 = vld [vmem:[%s455 + $0xa8] sm:$0xff]
    %v1339 = vld [vmem:[%s455 + $0xb0] sm:$0xff]
    %v1340 = vld [vmem:[%s455 + $0xb8] sm:$0xff]
    %v1341 = vld [vmem:[%s455 + $0xc0] sm:$0xff]
    %v1342 = vld [vmem:[%s455 + $0xc8] sm:$0xff]
    %v1343 = vld [vmem:[%s455 + $0xd0] sm:$0xff]
    %v1344 = vld [vmem:[%s455 + $0xd8] sm:$0xff]
    %v1345 = vld [vmem:[%s455 + $0xe0] sm:$0xff]
    %v1346 = vld [vmem:[%s455 + $0xe8] sm:$0xff]
    %v1347 = vld [vmem:[%s455 + $0xf0] sm:$0xff]
    %v1348 = vld [vmem:[%s455 + $0xf8] sm:$0xff]
    %v1349 = vld [vmem:[%s455 + $0x100] sm:$0xff]
    %v1350 = vld [vmem:[%s455 + $0x108] sm:$0xff]
    %v1351 = vld [vmem:[%s455 + $0x110] sm:$0xff]
    %v1352 = vld [vmem:[%s455 + $0x118] sm:$0xff]
    %v1353 = vld [vmem:[%s455 + $0x120] sm:$0xff]
    %v1354 = vld [vmem:[%s455 + $0x128] sm:$0xff]
    %v1355 = vld [vmem:[%s455 + $0x130] sm:$0xff]
    %v1356 = vld [vmem:[%s455 + $0x138] sm:$0xff]
    %v1357 = vld [vmem:[%s455 + $0x140] sm:$0xff]
    %v1358 = vld [vmem:[%s455 + $0x148] sm:$0xff]
    %v1359 = vld [vmem:[%s455 + $0x150] sm:$0xff]
    %v1360 = vld [vmem:[%s455 + $0x158] sm:$0xff]
    %v1361 = vld [vmem:[%s455 + $0x160] sm:$0xff]
    %v1362 = vld [vmem:[%s455 + $0x168] sm:$0xff]
    %v1363 = vld [vmem:[%s455 + $0x170] sm:$0xff]
    %v1364 = vld [vmem:[%s455 + $0x178] sm:$0xff]
    %v1365 = vld [vmem:[%s455 + $0x180] sm:$0xff]
    %v1366 = vld [vmem:[%s455 + $0x188] sm:$0xff]
    %v1367 = vld [vmem:[%s455 + $0x190] sm:$0xff]
    %v1368 = vld [vmem:[%s455 + $0x198] sm:$0xff]
    %v1369 = vld [vmem:[%s455 + $0x1a0] sm:$0xff]
    %v1370 = vld [vmem:[%s455 + $0x1a8] sm:$0xff]
    %v1371 = vld [vmem:[%s455 + $0x1b0] sm:$0xff]
    %v1372 = vld [vmem:[%s455 + $0x1b8] sm:$0xff]
    %v1373 = vld [vmem:[%s455 + $0x1c0] sm:$0xff]
    %v1374 = vld [vmem:[%s455 + $0x1c8] sm:$0xff]
    %v1375 = vld [vmem:[%s455 + $0x1d0] sm:$0xff]
    %v1376 = vld [vmem:[%s455 + $0x1d8] sm:$0xff]
    %v1377 = vld [vmem:[%s455 + $0x1e0] sm:$0xff]
    %v1378 = vld [vmem:[%s455 + $0x1e8] sm:$0xff]
    %v1379 = vld [vmem:[%s455 + $0x1f0] sm:$0xff]
    %v1380 = vld [vmem:[%s455 + $0x1f8] sm:$0xff]
    %v1381 = vld [vmem:[%s520] sm:$0xf]
    %v1383 = vlaneseq
    %v1384 = vshrl.u32 %v1383, 7
    %v1385 = vsub.s32 0, %v1384
    %v1386 = vrot.slane %v1381, %v1385
    %v1387 = vlaneseq
    %v1388 = vshrl.u32 %v1387, 7
    %v1389 = vsub.s32 1, %v1388
    %v1390 = vrot.slane %v1381, %v1389
    %v1391 = vlaneseq
    %v1392 = vshrl.u32 %v1391, 7
    %v1393 = vsub.s32 2, %v1392
    %v1394 = vrot.slane %v1381, %v1393
    %v1395 = vlaneseq
    %v1396 = vshrl.u32 %v1395, 7
    %v1397 = vsub.s32 3, %v1396
    %v1398 = vrot.slane %v1381, %v1397
    %v1404 = vunpack.c.l.b16 %v1316
    %v1405 = vunpack.c.h.b16 %v1316
    %v1406 = vpack.c.b16 %v1404, %v1404
    %v1407 = vpack.c.b16 %v1405, %v1405
    %v1474 = vunpack.c.l.b16 %v1317
    %v1475 = vunpack.c.h.b16 %v1317
    %v1476 = vunpack.c.l.b16 %v1318
    %v1477 = vunpack.c.h.b16 %v1318
    %v1478 = vunpack.c.l.b16 %v1319
    %v1479 = vunpack.c.h.b16 %v1319
    %v1480 = vunpack.c.l.b16 %v1320
    %v1481 = vunpack.c.h.b16 %v1320
    %v1482 = vunpack.c.l.b16 %v1321
    %v1483 = vunpack.c.h.b16 %v1321
    %v1484 = vunpack.c.l.b16 %v1322
    %v1485 = vunpack.c.h.b16 %v1322
    %v1486 = vunpack.c.l.b16 %v1323
    %v1487 = vunpack.c.h.b16 %v1323
    %v1488 = vunpack.c.l.b16 %v1324
    %v1489 = vunpack.c.h.b16 %v1324
    %v1490 = vunpack.c.l.b16 %v1325
    %v1491 = vunpack.c.h.b16 %v1325
    %v1492 = vunpack.c.l.b16 %v1326
    %v1493 = vunpack.c.h.b16 %v1326
    %v1494 = vunpack.c.l.b16 %v1327
    %v1495 = vunpack.c.h.b16 %v1327
    %v1496 = vunpack.c.l.b16 %v1328
    %v1497 = vunpack.c.h.b16 %v1328
    %v1498 = vunpack.c.l.b16 %v1329
    %v1499 = vunpack.c.h.b16 %v1329
    %v1500 = vunpack.c.l.b16 %v1330
    %v1501 = vunpack.c.h.b16 %v1330
    %v1502 = vunpack.c.l.b16 %v1331
    %v1503 = vunpack.c.h.b16 %v1331
    %v1504 = vunpack.c.l.b16 %v1332
    %v1505 = vunpack.c.h.b16 %v1332
    %v1506 = vunpack.c.l.b16 %v1333
    %v1507 = vunpack.c.h.b16 %v1333
    %v1508 = vunpack.c.l.b16 %v1334
    %v1509 = vunpack.c.h.b16 %v1334
    %v1510 = vunpack.c.l.b16 %v1335
    %v1511 = vunpack.c.h.b16 %v1335
    %v1512 = vunpack.c.l.b16 %v1336
    %v1513 = vunpack.c.h.b16 %v1336
    %v1514 = vunpack.c.l.b16 %v1337
    %v1515 = vunpack.c.h.b16 %v1337
    %v1516 = vunpack.c.l.b16 %v1338
    %v1517 = vunpack.c.h.b16 %v1338
    %v1518 = vunpack.c.l.b16 %v1339
    %v1519 = vunpack.c.h.b16 %v1339
    %v1520 = vunpack.c.l.b16 %v1340
    %v1521 = vunpack.c.h.b16 %v1340
    %v1522 = vunpack.c.l.b16 %v1341
    %v1523 = vunpack.c.h.b16 %v1341
    %v1524 = vunpack.c.l.b16 %v1342
    %v1525 = vunpack.c.h.b16 %v1342
    %v1526 = vunpack.c.l.b16 %v1343
    %v1527 = vunpack.c.h.b16 %v1343
    %v1528 = vunpack.c.l.b16 %v1344
    %v1529 = vunpack.c.h.b16 %v1344
    %v1530 = vunpack.c.l.b16 %v1345
    %v1531 = vunpack.c.h.b16 %v1345
    %v1532 = vunpack.c.l.b16 %v1346
    %v1533 = vunpack.c.h.b16 %v1346
    %v1534 = vunpack.c.l.b16 %v1347
    %v1535 = vunpack.c.h.b16 %v1347
    %v1536 = vunpack.c.l.b16 %v1348
    %v1537 = vunpack.c.h.b16 %v1348
    %v1538 = vunpack.c.l.b16 %v1349
    %v1539 = vunpack.c.h.b16 %v1349
    %v1540 = vunpack.c.l.b16 %v1350
    %v1541 = vunpack.c.h.b16 %v1350
    %v1542 = vunpack.c.l.b16 %v1351
    %v1543 = vunpack.c.h.b16 %v1351
    %v1544 = vunpack.c.l.b16 %v1352
    %v1545 = vunpack.c.h.b16 %v1352
    %v1546 = vunpack.c.l.b16 %v1353
    %v1547 = vunpack.c.h.b16 %v1353
    %v1548 = vunpack.c.l.b16 %v1354
    %v1549 = vunpack.c.h.b16 %v1354
    %v1550 = vunpack.c.l.b16 %v1355
    %v1551 = vunpack.c.h.b16 %v1355
    %v1552 = vunpack.c.l.b16 %v1356
    %v1553 = vunpack.c.h.b16 %v1356
    %v1554 = vunpack.c.l.b16 %v1357
    %v1555 = vunpack.c.h.b16 %v1357
    %v1556 = vunpack.c.l.b16 %v1358
    %v1557 = vunpack.c.h.b16 %v1358
    %v1558 = vunpack.c.l.b16 %v1359
    %v1559 = vunpack.c.h.b16 %v1359
    %v1560 = vunpack.c.l.b16 %v1360
    %v1561 = vunpack.c.h.b16 %v1360
    %v1562 = vunpack.c.l.b16 %v1361
    %v1563 = vunpack.c.h.b16 %v1361
    %v1564 = vunpack.c.l.b16 %v1362
    %v1565 = vunpack.c.h.b16 %v1362
    %v1566 = vunpack.c.l.b16 %v1363
    %v1567 = vunpack.c.h.b16 %v1363
    %v1568 = vunpack.c.l.b16 %v1364
    %v1569 = vunpack.c.h.b16 %v1364
    %v1570 = vunpack.c.l.b16 %v1365
    %v1571 = vunpack.c.h.b16 %v1365
    %v1572 = vunpack.c.l.b16 %v1366
    %v1573 = vunpack.c.h.b16 %v1366
    %v1574 = vunpack.c.l.b16 %v1367
    %v1575 = vunpack.c.h.b16 %v1367
    %v1576 = vunpack.c.l.b16 %v1368
    %v1577 = vunpack.c.h.b16 %v1368
    %v1578 = vunpack.c.l.b16 %v1369
    %v1579 = vunpack.c.h.b16 %v1369
    %v1580 = vunpack.c.l.b16 %v1370
    %v1581 = vunpack.c.h.b16 %v1370
    %v1582 = vunpack.c.l.b16 %v1371
    %v1583 = vunpack.c.h.b16 %v1371
    %v1584 = vunpack.c.l.b16 %v1372
    %v1585 = vunpack.c.h.b16 %v1372
    %v1586 = vunpack.c.l.b16 %v1373
    %v1587 = vunpack.c.h.b16 %v1373
    %v1588 = vunpack.c.l.b16 %v1374
    %v1589 = vunpack.c.h.b16 %v1374
    %v1590 = vunpack.c.l.b16 %v1375
    %v1591 = vunpack.c.h.b16 %v1375
    %v1592 = vunpack.c.l.b16 %v1376
    %v1593 = vunpack.c.h.b16 %v1376
    %v1594 = vunpack.c.l.b16 %v1377
    %v1595 = vunpack.c.h.b16 %v1377
    %v1596 = vunpack.c.l.b16 %v1378
    %v1597 = vunpack.c.h.b16 %v1378
    %v1598 = vunpack.c.l.b16 %v1379
    %v1599 = vunpack.c.h.b16 %v1379
    %v1600 = vunpack.c.l.b16 %v1380
    %v1601 = vunpack.c.h.b16 %v1380
    %v1602 = vpack.c.b16 %v1478, %v1474
    %v1603 = vpack.c.b16 %v1479, %v1475
    %v1604 = vpack.c.b16 %v1480, %v1476
    %v1605 = vpack.c.b16 %v1481, %v1477
    %v1606 = vpack.c.b16 %v1486, %v1482
    %v1607 = vpack.c.b16 %v1487, %v1483
    %v1608 = vpack.c.b16 %v1488, %v1484
    %v1609 = vpack.c.b16 %v1489, %v1485
    %v1610 = vpack.c.b16 %v1494, %v1490
    %v1611 = vpack.c.b16 %v1495, %v1491
    %v1612 = vpack.c.b16 %v1496, %v1492
    %v1613 = vpack.c.b16 %v1497, %v1493
    %v1614 = vpack.c.b16 %v1502, %v1498
    %v1615 = vpack.c.b16 %v1503, %v1499
    %v1616 = vpack.c.b16 %v1504, %v1500
    %v1617 = vpack.c.b16 %v1505, %v1501
    %v1618 = vpack.c.b16 %v1510, %v1506
    %v1619 = vpack.c.b16 %v1511, %v1507
    %v1620 = vpack.c.b16 %v1512, %v1508
    %v1621 = vpack.c.b16 %v1513, %v1509
    %v1622 = vpack.c.b16 %v1518, %v1514
    %v1623 = vpack.c.b16 %v1519, %v1515
    %v1624 = vpack.c.b16 %v1520, %v1516
    %v1625 = vpack.c.b16 %v1521, %v1517
    %v1626 = vpack.c.b16 %v1526, %v1522
    %v1627 = vpack.c.b16 %v1527, %v1523
    %v1628 = vpack.c.b16 %v1528, %v1524
    %v1629 = vpack.c.b16 %v1529, %v1525
    %v1630 = vpack.c.b16 %v1534, %v1530
    %v1631 = vpack.c.b16 %v1535, %v1531
    %v1632 = vpack.c.b16 %v1536, %v1532
    %v1633 = vpack.c.b16 %v1537, %v1533
    %v1634 = vpack.c.b16 %v1542, %v1538
    %v1635 = vpack.c.b16 %v1543, %v1539
    %v1636 = vpack.c.b16 %v1544, %v1540
    %v1637 = vpack.c.b16 %v1545, %v1541
    %v1638 = vpack.c.b16 %v1550, %v1546
    %v1639 = vpack.c.b16 %v1551, %v1547
    %v1640 = vpack.c.b16 %v1552, %v1548
    %v1641 = vpack.c.b16 %v1553, %v1549
    %v1642 = vpack.c.b16 %v1558, %v1554
    %v1643 = vpack.c.b16 %v1559, %v1555
    %v1644 = vpack.c.b16 %v1560, %v1556
    %v1645 = vpack.c.b16 %v1561, %v1557
    %v1646 = vpack.c.b16 %v1566, %v1562
    %v1647 = vpack.c.b16 %v1567, %v1563
    %v1648 = vpack.c.b16 %v1568, %v1564
    %v1649 = vpack.c.b16 %v1569, %v1565
    %v1650 = vpack.c.b16 %v1574, %v1570
    %v1651 = vpack.c.b16 %v1575, %v1571
    %v1652 = vpack.c.b16 %v1576, %v1572
    %v1653 = vpack.c.b16 %v1577, %v1573
    %v1654 = vpack.c.b16 %v1582, %v1578
    %v1655 = vpack.c.b16 %v1583, %v1579
    %v1656 = vpack.c.b16 %v1584, %v1580
    %v1657 = vpack.c.b16 %v1585, %v1581
    %v1658 = vpack.c.b16 %v1590, %v1586
    %v1659 = vpack.c.b16 %v1591, %v1587
    %v1660 = vpack.c.b16 %v1592, %v1588
    %v1661 = vpack.c.b16 %v1593, %v1589
    %v1662 = vpack.c.b16 %v1598, %v1594
    %v1663 = vpack.c.b16 %v1599, %v1595
    %v1664 = vpack.c.b16 %v1600, %v1596
    %v1665 = vpack.c.b16 %v1601, %v1597
    %1730 = vmatprep.subr.bf16.mxu0 %v1603
    %1731 = vmatpush1.bf16.msra.mxu0 %v1602
    %1732 = vmatprep.subr.bf16.mxu0 %v1607
    %1733 = vmatpush1.bf16.msra.mxu0 %v1606
    %1734 = vmatprep.subr.bf16.mxu0 %v1611
    %1735 = vmatpush1.bf16.msra.mxu0 %v1610
    %1736 = vmatprep.subr.bf16.mxu0 %v1615
    %1737 = vmatpush1.bf16.msra.mxu0 %v1614
    %1738 = vmatprep.subr.bf16.mxu0 %v1619
    %1739 = vmatpush1.bf16.msra.mxu0 %v1618
    %1740 = vmatprep.subr.bf16.mxu0 %v1623
    %1741 = vmatpush1.bf16.msra.mxu0 %v1622
    %1742 = vmatprep.subr.bf16.mxu0 %v1627
    %1743 = vmatpush1.bf16.msra.mxu0 %v1626
    %1744 = vmatprep.subr.bf16.mxu0 %v1631
    %1745 = vmatpush1.bf16.msra.mxu0 %v1630
    %1746 = vmatprep.subr.bf16.mxu0 %v1635
    %1747 = vmatpush1.bf16.msra.mxu0 %v1634
    %1748 = vmatprep.subr.bf16.mxu0 %v1639
    %1749 = vmatpush1.bf16.msra.mxu0 %v1638
    %1750 = vmatprep.subr.bf16.mxu0 %v1643
    %1751 = vmatpush1.bf16.msra.mxu0 %v1642
    %1752 = vmatprep.subr.bf16.mxu0 %v1647
    %1753 = vmatpush1.bf16.msra.mxu0 %v1646
    %1754 = vmatprep.subr.bf16.mxu0 %v1651
    %1755 = vmatpush1.bf16.msra.mxu0 %v1650
    %1756 = vmatprep.subr.bf16.mxu0 %v1655
    %1757 = vmatpush1.bf16.msra.mxu0 %v1654
    %1758 = vmatprep.subr.bf16.mxu0 %v1659
    %1759 = vmatpush1.bf16.msra.mxu0 %v1658
    %1760 = vmatprep.subr.bf16.mxu0 %v1663
    %1761 = vmatpush1.bf16.msra.mxu0 %v1662
    %1762 = vmatprep.mubr.bf16.mxu0 %v1407
    %1763 = vmatmul.mubr.bf16.gmra.mrb[0].mxu0 %v1406
    %v1764 = vpop.f32.mrb[0].mxu0
    %v1765 = vadd.f32 %v1386, %v1764
    %v1766 = vpop.f32.mrb[0].mxu0
    %v1767 = vadd.f32 %v1390, %v1766
    %v1768 = vpop.f32.mrb[0].mxu0
    %v1769 = vpop.f32.mrb[0].mxu0
    %1770 = vdwg.mxu0
    %1771 = vmatprep.subr.bf16.mxu0 %v1605
    %1772 = vmatpush1.bf16.msra.mxu0 %v1604
    %1773 = vmatprep.subr.bf16.mxu0 %v1609
    %1774 = vmatpush1.bf16.msra.mxu0 %v1608
    %1775 = vmatprep.subr.bf16.mxu0 %v1613
    %1776 = vmatpush1.bf16.msra.mxu0 %v1612
    %1777 = vmatprep.subr.bf16.mxu0 %v1617
    %1778 = vmatpush1.bf16.msra.mxu0 %v1616
    %1779 = vmatprep.subr.bf16.mxu0 %v1621
    %1780 = vmatpush1.bf16.msra.mxu0 %v1620
    %1781 = vmatprep.subr.bf16.mxu0 %v1625
    %1782 = vmatpush1.bf16.msra.mxu0 %v1624
    %1783 = vmatprep.subr.bf16.mxu0 %v1629
    %1784 = vmatpush1.bf16.msra.mxu0 %v1628
    %1785 = vmatprep.subr.bf16.mxu0 %v1633
    %1786 = vmatpush1.bf16.msra.mxu0 %v1632
    %1787 = vmatprep.subr.bf16.mxu0 %v1637
    %1788 = vmatpush1.bf16.msra.mxu0 %v1636
    %1789 = vmatprep.subr.bf16.mxu0 %v1641
    %1790 = vmatpush1.bf16.msra.mxu0 %v1640
    %1791 = vmatprep.subr.bf16.mxu0 %v1645
    %1792 = vmatpush1.bf16.msra.mxu0 %v1644
    %1793 = vmatprep.subr.bf16.mxu0 %v1649
    %1794 = vmatpush1.bf16.msra.mxu0 %v1648
    %1795 = vmatprep.subr.bf16.mxu0 %v1653
    %1796 = vmatpush1.bf16.msra.mxu0 %v1652
    %1797 = vmatprep.subr.bf16.mxu0 %v1657
    %1798 = vmatpush1.bf16.msra.mxu0 %v1656
    %1799 = vmatprep.subr.bf16.mxu0 %v1661
    %1800 = vmatpush1.bf16.msra.mxu0 %v1660
    %1801 = vmatprep.subr.bf16.mxu0 %v1665
    %1802 = vmatpush1.bf16.msra.mxu0 %v1664
    %1803 = vmatprep.mubr.bf16.mxu0 %v1407
    %1804 = vmatmul.mubr.bf16.gmra.mrb[0].mxu0 %v1406
    %v1805 = vpop.f32.mrb[0].mxu0
    %v1806 = vadd.f32 %v1394, %v1805
    %v1807 = vpop.f32.mrb[0].mxu0
    %v1808 = vadd.f32 %v1398, %v1807
    %v1809 = vpop.f32.mrb[0].mxu0
    %v1810 = vpop.f32.mrb[0].mxu0
    %1811 = vdwg.mxu0
    %v1812 = vsub.f32 0.0, %v1765
    %v1813 = vsub.f32 0.0, %v1767
    %v1814 = vsub.f32 0.0, %v1806
    %v1815 = vmul.f32 %v1812, 1.442695
    %v1816 = vpow.pop %v1815
    %v1817 = vmul.f32 %v1813, 1.442695
    %v1818 = vpow.pop %v1817
    %v1819 = vmul.f32 %v1814, 1.442695
    %v1820 = vpow.pop %v1819
    %v1821 = vadd.f32 %v1816, 1.0
    %v1822 = vadd.f32 %v1818, 1.0
    %v1823 = vadd.f32 %v1820, 1.0
    %v1824 = vrcp.pop %v1821
    %v1825 = vrcp.pop %v1822
    %v1826 = vrcp.pop %v1823
    %v1827 = vtanh.pop %v1808
    %v1828 = vld [vmem:[%s968] sm:$0xff]
    %v1829 = vmul.f32 %v1825, %v1828
    %v1830 = vmul.f32 %v1824, %v1827
    %v1831 = vadd.f32 %v1829, %v1830
    %v1832 = vtanh.pop %v1831
    %v1833 = vmul.f32 %v1826, %v1832
    %1834 = vst [vmem:[%s968] sm:$0xff] %v1831
    %v1835 = vpack.c.bf16 %v1833, %v1833
    %1836 = vst [vmem:[%s452 + $0x4] sm:$0xf] %v1835
    %s1837 = scalar_lea.vmem [#allocation4], 32
    %v1838 = vld [vmem:[%s1837] sm:$0xff]
    %v1839 = vld [vmem:[%s1837 + $0x8] sm:$0xff]
    %v1840 = vunpack.c.l.bf16 %v1838
    %v1841 = vunpack.c.h.bf16 %v1838
    %v1842 = vunpack.c.l.bf16 %v1839
    %v1843 = vunpack.c.h.bf16 %v1839
    %v1844 = vld [vmem:[#allocation2 + $0x4] sm:$0xf]
    %v1845 = vld [vmem:[#allocation7 + $0x100] sm:$0xff]
    %v1846 = vld [vmem:[#allocation7 + $0x108] sm:$0xff]
    %v1847 = vld [vmem:[#allocation7 + $0x110] sm:$0xff]
    %v1848 = vld [vmem:[#allocation7 + $0x118] sm:$0xff]
    %v1849 = vld [vmem:[#allocation7 + $0x120] sm:$0xff]
    %v1850 = vld [vmem:[#allocation7 + $0x128] sm:$0xff]
    %v1851 = vld [vmem:[#allocation7 + $0x130] sm:$0xff]
    %v1852 = vld [vmem:[#allocation7 + $0x138] sm:$0xff]
    %v1853 = vld [vmem:[#allocation7 + $0x140] sm:$0xff]
    %v1854 = vld [vmem:[#allocation7 + $0x148] sm:$0xff]
    %v1855 = vld [vmem:[#allocation7 + $0x150] sm:$0xff]
    %v1856 = vld [vmem:[#allocation7 + $0x158] sm:$0xff]
    %v1857 = vld [vmem:[#allocation7 + $0x160] sm:$0xff]
    %v1858 = vld [vmem:[#allocation7 + $0x168] sm:$0xff]
    %v1859 = vld [vmem:[#allocation7 + $0x170] sm:$0xff]
    %v1860 = vld [vmem:[#allocation7 + $0x178] sm:$0xff]
    %v1861 = vld [vmem:[#allocation7 + $0x180] sm:$0xff]
    %v1862 = vld [vmem:[#allocation7 + $0x188] sm:$0xff]
    %v1863 = vld [vmem:[#allocation7 + $0x190] sm:$0xff]
    %v1864 = vld [vmem:[#allocation7 + $0x198] sm:$0xff]
    %v1865 = vld [vmem:[#allocation7 + $0x1a0] sm:$0xff]
    %v1866 = vld [vmem:[#allocation7 + $0x1a8] sm:$0xff]
    %v1867 = vld [vmem:[#allocation7 + $0x1b0] sm:$0xff]
    %v1868 = vld [vmem:[#allocation7 + $0x1b8] sm:$0xff]
    %v1869 = vld [vmem:[#allocation7 + $0x1c0] sm:$0xff]
    %v1870 = vld [vmem:[#allocation7 + $0x1c8] sm:$0xff]
    %v1871 = vld [vmem:[#allocation7 + $0x1d0] sm:$0xff]
    %v1872 = vld [vmem:[#allocation7 + $0x1d8] sm:$0xff]
    %v1873 = vld [vmem:[#allocation7 + $0x1e0] sm:$0xff]
    %v1874 = vld [vmem:[#allocation7 + $0x1e8] sm:$0xff]
    %v1875 = vld [vmem:[#allocation7 + $0x1f0] sm:$0xff]
    %v1876 = vld [vmem:[#allocation7 + $0x1f8] sm:$0xff]
    %v1909 = vunpack.c.l.b16 %v1845
    %v1910 = vunpack.c.h.b16 %v1845
    %v1911 = vunpack.c.l.b16 %v1846
    %v1912 = vunpack.c.h.b16 %v1846
    %v1913 = vunpack.c.l.b16 %v1847
    %v1914 = vunpack.c.h.b16 %v1847
    %v1915 = vunpack.c.l.b16 %v1848
    %v1916 = vunpack.c.h.b16 %v1848
    %v1917 = vunpack.c.l.b16 %v1849
    %v1918 = vunpack.c.h.b16 %v1849
    %v1919 = vunpack.c.l.b16 %v1850
    %v1920 = vunpack.c.h.b16 %v1850
    %v1921 = vunpack.c.l.b16 %v1851
    %v1922 = vunpack.c.h.b16 %v1851
    %v1923 = vunpack.c.l.b16 %v1852
    %v1924 = vunpack.c.h.b16 %v1852
    %v1925 = vunpack.c.l.b16 %v1853
    %v1926 = vunpack.c.h.b16 %v1853
    %v1927 = vunpack.c.l.b16 %v1854
    %v1928 = vunpack.c.h.b16 %v1854
    %v1929 = vunpack.c.l.b16 %v1855
    %v1930 = vunpack.c.h.b16 %v1855
    %v1931 = vunpack.c.l.b16 %v1856
    %v1932 = vunpack.c.h.b16 %v1856
    %v1933 = vunpack.c.l.b16 %v1857
    %v1934 = vunpack.c.h.b16 %v1857
    %v1935 = vunpack.c.l.b16 %v1858
    %v1936 = vunpack.c.h.b16 %v1858
    %v1937 = vunpack.c.l.b16 %v1859
    %v1938 = vunpack.c.h.b16 %v1859
    %v1939 = vunpack.c.l.b16 %v1860
    %v1940 = vunpack.c.h.b16 %v1860
    %v1941 = vunpack.c.l.b16 %v1861
    %v1942 = vunpack.c.h.b16 %v1861
    %v1943 = vunpack.c.l.b16 %v1862
    %v1944 = vunpack.c.h.b16 %v1862
    %v1945 = vunpack.c.l.b16 %v1863
    %v1946 = vunpack.c.h.b16 %v1863
    %v1947 = vunpack.c.l.b16 %v1864
    %v1948 = vunpack.c.h.b16 %v1864
    %v1949 = vunpack.c.l.b16 %v1865
    %v1950 = vunpack.c.h.b16 %v1865
    %v1951 = vunpack.c.l.b16 %v1866
    %v1952 = vunpack.c.h.b16 %v1866
    %v1953 = vunpack.c.l.b16 %v1867
    %v1954 = vunpack.c.h.b16 %v1867
    %v1955 = vunpack.c.l.b16 %v1868
    %v1956 = vunpack.c.h.b16 %v1868
    %v1957 = vunpack.c.l.b16 %v1869
    %v1958 = vunpack.c.h.b16 %v1869
    %v1959 = vunpack.c.l.b16 %v1870
    %v1960 = vunpack.c.h.b16 %v1870
    %v1961 = vunpack.c.l.b16 %v1871
    %v1962 = vunpack.c.h.b16 %v1871
    %v1963 = vunpack.c.l.b16 %v1872
    %v1964 = vunpack.c.h.b16 %v1872
    %v1965 = vunpack.c.l.b16 %v1873
    %v1966 = vunpack.c.h.b16 %v1873
    %v1967 = vunpack.c.l.b16 %v1874
    %v1968 = vunpack.c.h.b16 %v1874
    %v1969 = vunpack.c.l.b16 %v1875
    %v1970 = vunpack.c.h.b16 %v1875
    %v1971 = vunpack.c.l.b16 %v1876
    %v1972 = vunpack.c.h.b16 %v1876
    %v1973 = vpack.c.b16 %v1913, %v1909
    %v1974 = vpack.c.b16 %v1914, %v1910
    %v1975 = vpack.c.b16 %v1915, %v1911
    %v1976 = vpack.c.b16 %v1916, %v1912
    %v1977 = vpack.c.b16 %v1921, %v1917
    %v1978 = vpack.c.b16 %v1922, %v1918
    %v1979 = vpack.c.b16 %v1923, %v1919
    %v1980 = vpack.c.b16 %v1924, %v1920
    %v1981 = vpack.c.b16 %v1929, %v1925
    %v1982 = vpack.c.b16 %v1930, %v1926
    %v1983 = vpack.c.b16 %v1931, %v1927
    %v1984 = vpack.c.b16 %v1932, %v1928
    %v1985 = vpack.c.b16 %v1937, %v1933
    %v1986 = vpack.c.b16 %v1938, %v1934
    %v1987 = vpack.c.b16 %v1939, %v1935
    %v1988 = vpack.c.b16 %v1940, %v1936
    %v1989 = vpack.c.b16 %v1945, %v1941
    %v1990 = vpack.c.b16 %v1946, %v1942
    %v1991 = vpack.c.b16 %v1947, %v1943
    %v1992 = vpack.c.b16 %v1948, %v1944
    %v1993 = vpack.c.b16 %v1953, %v1949
    %v1994 = vpack.c.b16 %v1954, %v1950
    %v1995 = vpack.c.b16 %v1955, %v1951
    %v1996 = vpack.c.b16 %v1956, %v1952
    %v1997 = vpack.c.b16 %v1961, %v1957
    %v1998 = vpack.c.b16 %v1962, %v1958
    %v1999 = vpack.c.b16 %v1963, %v1959
    %v2000 = vpack.c.b16 %v1964, %v1960
    %v2001 = vpack.c.b16 %v1969, %v1965
    %v2002 = vpack.c.b16 %v1970, %v1966
    %v2003 = vpack.c.b16 %v1971, %v1967
    %v2004 = vpack.c.b16 %v1972, %v1968
    %2037 = vmatprep.subr.bf16.mxu0 %v1974
    %2038 = vmatpush1.bf16.msra.mxu0 %v1973
    %2039 = vmatprep.subr.bf16.mxu0 %v1978
    %2040 = vmatpush1.bf16.msra.mxu0 %v1977
    %2041 = vmatprep.subr.bf16.mxu0 %v1982
    %2042 = vmatpush1.bf16.msra.mxu0 %v1981
    %2043 = vmatprep.subr.bf16.mxu0 %v1986
    %2044 = vmatpush1.bf16.msra.mxu0 %v1985
    %2045 = vmatprep.subr.bf16.mxu0 %v1990
    %2046 = vmatpush1.bf16.msra.mxu0 %v1989
    %2047 = vmatprep.subr.bf16.mxu0 %v1994
    %2048 = vmatpush1.bf16.msra.mxu0 %v1993
    %2049 = vmatprep.subr.bf16.mxu0 %v1998
    %2050 = vmatpush1.bf16.msra.mxu0 %v1997
    %2051 = vmatprep.subr.bf16.mxu0 %v2002
    %2052 = vmatpush1.bf16.msra.mxu0 %v2001
    %2053 = vmatprep.subr.bf16.mxu0 0
    %2054 = vmatpush1.bf16.msra.mxu0 0
    %2055 = vmatprep.subr.bf16.mxu0 0
    %2056 = vmatpush1.bf16.msra.mxu0 0
    %2057 = vmatprep.subr.bf16.mxu0 0
    %2058 = vmatpush1.bf16.msra.mxu0 0
    %2059 = vmatprep.subr.bf16.mxu0 0
    %2060 = vmatpush1.bf16.msra.mxu0 0
    %2061 = vmatprep.subr.bf16.mxu0 0
    %2062 = vmatpush1.bf16.msra.mxu0 0
    %2063 = vmatprep.subr.bf16.mxu0 0
    %2064 = vmatpush1.bf16.msra.mxu0 0
    %2065 = vmatprep.subr.bf16.mxu0 0
    %2066 = vmatpush1.bf16.msra.mxu0 0
    %2067 = vmatprep.subr.bf16.mxu0 0
    %2068 = vmatpush1.bf16.msra.mxu0 0
    %2069 = vmatprep.mubr.bf16.mxu0 0
    %2070 = vmatmul.mubr.bf16.gmra.mrb[0].mxu0 %v1844
    %v2071 = vpop.f32.mrb[0].mxu0
    %v2072 = vadd.f32 0.0, %v2071
    %v2073 = vpop.f32.mrb[0].mxu0
    %v2074 = vadd.f32 0.0, %v2073
    %v2075 = vpop.f32.mrb[0].mxu0
    %v2076 = vpop.f32.mrb[0].mxu0
    %2077 = vdwg.mxu0
    %2078 = vmatprep.subr.bf16.mxu0 %v1976
    %2079 = vmatpush1.bf16.msra.mxu0 %v1975
    %2080 = vmatprep.subr.bf16.mxu0 %v1980
    %2081 = vmatpush1.bf16.msra.mxu0 %v1979
    %2082 = vmatprep.subr.bf16.mxu0 %v1984
    %2083 = vmatpush1.bf16.msra.mxu0 %v1983
    %2084 = vmatprep.subr.bf16.mxu0 %v1988
    %2085 = vmatpush1.bf16.msra.mxu0 %v1987
    %2086 = vmatprep.subr.bf16.mxu0 %v1992
    %2087 = vmatpush1.bf16.msra.mxu0 %v1991
    %2088 = vmatprep.subr.bf16.mxu0 %v1996
    %2089 = vmatpush1.bf16.msra.mxu0 %v1995
    %2090 = vmatprep.subr.bf16.mxu0 %v2000
    %2091 = vmatpush1.bf16.msra.mxu0 %v1999
    %2092 = vmatprep.subr.bf16.mxu0 %v2004
    %2093 = vmatpush1.bf16.msra.mxu0 %v2003
    %2094 = vmatprep.subr.bf16.mxu0 0
    %2095 = vmatpush1.bf16.msra.mxu0 0
    %2096 = vmatprep.subr.bf16.mxu0 0
    %2097 = vmatpush1.bf16.msra.mxu0 0
    %2098 = vmatprep.subr.bf16.mxu0 0
    %2099 = vmatpush1.bf16.msra.mxu0 0
    %2100 = vmatprep.subr.bf16.mxu0 0
    %2101 = vmatpush1.bf16.msra.mxu0 0
    %2102 = vmatprep.subr.bf16.mxu0 0
    %2103 = vmatpush1.bf16.msra.mxu0 0
    %2104 = vmatprep.subr.bf16.mxu0 0
    %2105 = vmatpush1.bf16.msra.mxu0 0
    %2106 = vmatprep.subr.bf16.mxu0 0
    %2107 = vmatpush1.bf16.msra.mxu0 0
    %2108 = vmatprep.subr.bf16.mxu0 0
    %2109 = vmatpush1.bf16.msra.mxu0 0
    %2110 = vmatprep.mubr.bf16.mxu0 0
    %2111 = vmatmul.mubr.bf16.gmra.mrb[0].mxu0 %v1844
    %v2112 = vpop.f32.mrb[0].mxu0
    %v2113 = vadd.f32 0.0, %v2112
    %v2114 = vpop.f32.mrb[0].mxu0
    %v2115 = vadd.f32 0.0, %v2114
    %v2116 = vpop.f32.mrb[0].mxu0
    %v2117 = vpop.f32.mrb[0].mxu0
    %2118 = vdwg.mxu0
    %v2119 = vadd.f32 %v1840, %v2072
    %v2120 = vadd.f32 %v1841, %v2074
    %v2121 = vadd.f32 %v1842, %v2113
    %v2122 = vadd.f32 %v1843, %v2115
    %v2123 = vld [vmem:[#allocation9] sm:$0xf]
    %v2125 = vlaneseq
    %v2126 = vshrl.u32 %v2125, 7
    %v2127 = vsub.s32 0, %v2126
    %v2128 = vrot.slane %v2123, %v2127
    %v2129 = vlaneseq
    %v2130 = vshrl.u32 %v2129, 7
    %v2131 = vsub.s32 1, %v2130
    %v2132 = vrot.slane %v2123, %v2131
    %v2133 = vlaneseq
    %v2134 = vshrl.u32 %v2133, 7
    %v2135 = vsub.s32 2, %v2134
    %v2136 = vrot.slane %v2123, %v2135
    %v2137 = vlaneseq
    %v2138 = vshrl.u32 %v2137, 7
    %v2139 = vsub.s32 3, %v2138
    %v2140 = vrot.slane %v2123, %v2139
    %v2145 = vadd.f32 %v2119, %v2128
    %v2146 = vadd.f32 %v2120, %v2132
    %v2147 = vadd.f32 %v2121, %v2136
    %v2148 = vadd.f32 %v2122, %v2140
    %v2149 = vsub.f32 0.0, %v2145
    %v2150 = vsub.f32 0.0, %v2146
    %v2151 = vsub.f32 0.0, %v2147
    %v2152 = vmul.f32 %v2149, 1.442695
    %v2153 = vpow.pop %v2152
    %v2154 = vmul.f32 %v2150, 1.442695
    %v2155 = vpow.pop %v2154
    %v2156 = vmul.f32 %v2151, 1.442695
    %v2157 = vpow.pop %v2156
    %v2158 = vadd.f32 %v2153, 1.0
    %v2159 = vadd.f32 %v2155, 1.0
    %v2160 = vadd.f32 %v2157, 1.0
    %v2161 = vrcp.pop %v2158
    %v2162 = vrcp.pop %v2159
    %v2163 = vrcp.pop %v2160
    %v2164 = vtanh.pop %v2148
    %v2165 = vld [vmem:[#allocation3] sm:$0xff]
    %v2166 = vmul.f32 %v2162, %v2165
    %v2167 = vmul.f32 %v2161, %v2164
    %v2168 = vadd.f32 %v2166, %v2167
    %v2169 = vtanh.pop %v2168
    %v2170 = vmul.f32 %v2163, %v2169
    %2171 = vst [vmem:[#allocation3] sm:$0xff] %v2168
    %v2172 = vpack.c.bf16 %v2170, %v2170
    %2173 = vst [vmem:[#allocation2 + $0x4] sm:$0xf] %v2172
    %2174 = vst [vmem:[%s452] sm:$0xf] %v2172
    %v2175 = vld [vmem:[%s452] sm:$0xff]
    %v2176 = vld [vmem:[%s455] sm:$0xff]
    %v2177 = vld [vmem:[%s455 + $0x8] sm:$0xff]
    %v2178 = vld [vmem:[%s455 + $0x10] sm:$0xff]
    %v2179 = vld [vmem:[%s455 + $0x18] sm:$0xff]
    %v2180 = vld [vmem:[%s455 + $0x20] sm:$0xff]
    %v2181 = vld [vmem:[%s455 + $0x28] sm:$0xff]
    %v2182 = vld [vmem:[%s455 + $0x30] sm:$0xff]
    %v2183 = vld [vmem:[%s455 + $0x38] sm:$0xff]
    %v2184 = vld [vmem:[%s455 + $0x40] sm:$0xff]
    %v2185 = vld [vmem:[%s455 + $0x48] sm:$0xff]
    %v2186 = vld [vmem:[%s455 + $0x50] sm:$0xff]
    %v2187 = vld [vmem:[%s455 + $0x58] sm:$0xff]
    %v2188 = vld [vmem:[%s455 + $0x60] sm:$0xff]
    %v2189 = vld [vmem:[%s455 + $0x68] sm:$0xff]
    %v2190 = vld [vmem:[%s455 + $0x70] sm:$0xff]
    %v2191 = vld [vmem:[%s455 + $0x78] sm:$0xff]
    %v2192 = vld [vmem:[%s455 + $0x80] sm:$0xff]
    %v2193 = vld [vmem:[%s455 + $0x88] sm:$0xff]
    %v2194 = vld [vmem:[%s455 + $0x90] sm:$0xff]
    %v2195 = vld [vmem:[%s455 + $0x98] sm:$0xff]
    %v2196 = vld [vmem:[%s455 + $0xa0] sm:$0xff]
    %v2197 = vld [vmem:[%s455 + $0xa8] sm:$0xff]
    %v2198 = vld [vmem:[%s455 + $0xb0] sm:$0xff]
    %v2199 = vld [vmem:[%s455 + $0xb8] sm:$0xff]
    %v2200 = vld [vmem:[%s455 + $0xc0] sm:$0xff]
    %v2201 = vld [vmem:[%s455 + $0xc8] sm:$0xff]
    %v2202 = vld [vmem:[%s455 + $0xd0] sm:$0xff]
    %v2203 = vld [vmem:[%s455 + $0xd8] sm:$0xff]
    %v2204 = vld [vmem:[%s455 + $0xe0] sm:$0xff]
    %v2205 = vld [vmem:[%s455 + $0xe8] sm:$0xff]
    %v2206 = vld [vmem:[%s455 + $0xf0] sm:$0xff]
    %v2207 = vld [vmem:[%s455 + $0xf8] sm:$0xff]
    %v2208 = vld [vmem:[%s455 + $0x100] sm:$0xff]
    %v2209 = vld [vmem:[%s455 + $0x108] sm:$0xff]
    %v2210 = vld [vmem:[%s455 + $0x110] sm:$0xff]
    %v2211 = vld [vmem:[%s455 + $0x118] sm:$0xff]
    %v2212 = vld [vmem:[%s455 + $0x120] sm:$0xff]
    %v2213 = vld [vmem:[%s455 + $0x128] sm:$0xff]
    %v2214 = vld [vmem:[%s455 + $0x130] sm:$0xff]
    %v2215 = vld [vmem:[%s455 + $0x138] sm:$0xff]
    %v2216 = vld [vmem:[%s455 + $0x140] sm:$0xff]
    %v2217 = vld [vmem:[%s455 + $0x148] sm:$0xff]
    %v2218 = vld [vmem:[%s455 + $0x150] sm:$0xff]
    %v2219 = vld [vmem:[%s455 + $0x158] sm:$0xff]
    %v2220 = vld [vmem:[%s455 + $0x160] sm:$0xff]
    %v2221 = vld [vmem:[%s455 + $0x168] sm:$0xff]
    %v2222 = vld [vmem:[%s455 + $0x170] sm:$0xff]
    %v2223 = vld [vmem:[%s455 + $0x178] sm:$0xff]
    %v2224 = vld [vmem:[%s455 + $0x180] sm:$0xff]
    %v2225 = vld [vmem:[%s455 + $0x188] sm:$0xff]
    %v2226 = vld [vmem:[%s455 + $0x190] sm:$0xff]
    %v2227 = vld [vmem:[%s455 + $0x198] sm:$0xff]
    %v2228 = vld [vmem:[%s455 + $0x1a0] sm:$0xff]
    %v2229 = vld [vmem:[%s455 + $0x1a8] sm:$0xff]
    %v2230 = vld [vmem:[%s455 + $0x1b0] sm:$0xff]
    %v2231 = vld [vmem:[%s455 + $0x1b8] sm:$0xff]
    %v2232 = vld [vmem:[%s455 + $0x1c0] sm:$0xff]
    %v2233 = vld [vmem:[%s455 + $0x1c8] sm:$0xff]
    %v2234 = vld [vmem:[%s455 + $0x1d0] sm:$0xff]
    %v2235 = vld [vmem:[%s455 + $0x1d8] sm:$0xff]
    %v2236 = vld [vmem:[%s455 + $0x1e0] sm:$0xff]
    %v2237 = vld [vmem:[%s455 + $0x1e8] sm:$0xff]
    %v2238 = vld [vmem:[%s455 + $0x1f0] sm:$0xff]
    %v2239 = vld [vmem:[%s455 + $0x1f8] sm:$0xff]
    %v2240 = vld [vmem:[%s520] sm:$0xf]
    %v2242 = vlaneseq
    %v2243 = vshrl.u32 %v2242, 7
    %v2244 = vsub.s32 0, %v2243
    %v2245 = vrot.slane %v2240, %v2244
    %v2246 = vlaneseq
    %v2247 = vshrl.u32 %v2246, 7
    %v2248 = vsub.s32 1, %v2247
    %v2249 = vrot.slane %v2240, %v2248
    %v2250 = vlaneseq
    %v2251 = vshrl.u32 %v2250, 7
    %v2252 = vsub.s32 2, %v2251
    %v2253 = vrot.slane %v2240, %v2252
    %v2254 = vlaneseq
    %v2255 = vshrl.u32 %v2254, 7
    %v2256 = vsub.s32 3, %v2255
    %v2257 = vrot.slane %v2240, %v2256
    %v2263 = vunpack.c.l.b16 %v2175
    %v2264 = vunpack.c.h.b16 %v2175
    %v2265 = vpack.c.b16 %v2263, %v2263
    %v2266 = vpack.c.b16 %v2264, %v2264
    %v2333 = vunpack.c.l.b16 %v2176
    %v2334 = vunpack.c.h.b16 %v2176
    %v2335 = vunpack.c.l.b16 %v2177
    %v2336 = vunpack.c.h.b16 %v2177
    %v2337 = vunpack.c.l.b16 %v2178
    %v2338 = vunpack.c.h.b16 %v2178
    %v2339 = vunpack.c.l.b16 %v2179
    %v2340 = vunpack.c.h.b16 %v2179
    %v2341 = vunpack.c.l.b16 %v2180
    %v2342 = vunpack.c.h.b16 %v2180
    %v2343 = vunpack.c.l.b16 %v2181
    %v2344 = vunpack.c.h.b16 %v2181
    %v2345 = vunpack.c.l.b16 %v2182
    %v2346 = vunpack.c.h.b16 %v2182
    %v2347 = vunpack.c.l.b16 %v2183
    %v2348 = vunpack.c.h.b16 %v2183
    %v2349 = vunpack.c.l.b16 %v2184
    %v2350 = vunpack.c.h.b16 %v2184
    %v2351 = vunpack.c.l.b16 %v2185
    %v2352 = vunpack.c.h.b16 %v2185
    %v2353 = vunpack.c.l.b16 %v2186
    %v2354 = vunpack.c.h.b16 %v2186
    %v2355 = vunpack.c.l.b16 %v2187
    %v2356 = vunpack.c.h.b16 %v2187
    %v2357 = vunpack.c.l.b16 %v2188
    %v2358 = vunpack.c.h.b16 %v2188
    %v2359 = vunpack.c.l.b16 %v2189
    %v2360 = vunpack.c.h.b16 %v2189
    %v2361 = vunpack.c.l.b16 %v2190
    %v2362 = vunpack.c.h.b16 %v2190
    %v2363 = vunpack.c.l.b16 %v2191
    %v2364 = vunpack.c.h.b16 %v2191
    %v2365 = vunpack.c.l.b16 %v2192
    %v2366 = vunpack.c.h.b16 %v2192
    %v2367 = vunpack.c.l.b16 %v2193
    %v2368 = vunpack.c.h.b16 %v2193
    %v2369 = vunpack.c.l.b16 %v2194
    %v2370 = vunpack.c.h.b16 %v2194
    %v2371 = vunpack.c.l.b16 %v2195
    %v2372 = vunpack.c.h.b16 %v2195
    %v2373 = vunpack.c.l.b16 %v2196
    %v2374 = vunpack.c.h.b16 %v2196
    %v2375 = vunpack.c.l.b16 %v2197
    %v2376 = vunpack.c.h.b16 %v2197
    %v2377 = vunpack.c.l.b16 %v2198
    %v2378 = vunpack.c.h.b16 %v2198
    %v2379 = vunpack.c.l.b16 %v2199
    %v2380 = vunpack.c.h.b16 %v2199
    %v2381 = vunpack.c.l.b16 %v2200
    %v2382 = vunpack.c.h.b16 %v2200
    %v2383 = vunpack.c.l.b16 %v2201
    %v2384 = vunpack.c.h.b16 %v2201
    %v2385 = vunpack.c.l.b16 %v2202
    %v2386 = vunpack.c.h.b16 %v2202
    %v2387 = vunpack.c.l.b16 %v2203
    %v2388 = vunpack.c.h.b16 %v2203
    %v2389 = vunpack.c.l.b16 %v2204
    %v2390 = vunpack.c.h.b16 %v2204
    %v2391 = vunpack.c.l.b16 %v2205
    %v2392 = vunpack.c.h.b16 %v2205
    %v2393 = vunpack.c.l.b16 %v2206
    %v2394 = vunpack.c.h.b16 %v2206
    %v2395 = vunpack.c.l.b16 %v2207
    %v2396 = vunpack.c.h.b16 %v2207
    %v2397 = vunpack.c.l.b16 %v2208
    %v2398 = vunpack.c.h.b16 %v2208
    %v2399 = vunpack.c.l.b16 %v2209
    %v2400 = vunpack.c.h.b16 %v2209
    %v2401 = vunpack.c.l.b16 %v2210
    %v2402 = vunpack.c.h.b16 %v2210
    %v2403 = vunpack.c.l.b16 %v2211
    %v2404 = vunpack.c.h.b16 %v2211
    %v2405 = vunpack.c.l.b16 %v2212
    %v2406 = vunpack.c.h.b16 %v2212
    %v2407 = vunpack.c.l.b16 %v2213
    %v2408 = vunpack.c.h.b16 %v2213
    %v2409 = vunpack.c.l.b16 %v2214
    %v2410 = vunpack.c.h.b16 %v2214
    %v2411 = vunpack.c.l.b16 %v2215
    %v2412 = vunpack.c.h.b16 %v2215
    %v2413 = vunpack.c.l.b16 %v2216
    %v2414 = vunpack.c.h.b16 %v2216
    %v2415 = vunpack.c.l.b16 %v2217
    %v2416 = vunpack.c.h.b16 %v2217
    %v2417 = vunpack.c.l.b16 %v2218
    %v2418 = vunpack.c.h.b16 %v2218
    %v2419 = vunpack.c.l.b16 %v2219
    %v2420 = vunpack.c.h.b16 %v2219
    %v2421 = vunpack.c.l.b16 %v2220
    %v2422 = vunpack.c.h.b16 %v2220
    %v2423 = vunpack.c.l.b16 %v2221
    %v2424 = vunpack.c.h.b16 %v2221
    %v2425 = vunpack.c.l.b16 %v2222
    %v2426 = vunpack.c.h.b16 %v2222
    %v2427 = vunpack.c.l.b16 %v2223
    %v2428 = vunpack.c.h.b16 %v2223
    %v2429 = vunpack.c.l.b16 %v2224
    %v2430 = vunpack.c.h.b16 %v2224
    %v2431 = vunpack.c.l.b16 %v2225
    %v2432 = vunpack.c.h.b16 %v2225
    %v2433 = vunpack.c.l.b16 %v2226
    %v2434 = vunpack.c.h.b16 %v2226
    %v2435 = vunpack.c.l.b16 %v2227
    %v2436 = vunpack.c.h.b16 %v2227
    %v2437 = vunpack.c.l.b16 %v2228
    %v2438 = vunpack.c.h.b16 %v2228
    %v2439 = vunpack.c.l.b16 %v2229
    %v2440 = vunpack.c.h.b16 %v2229
    %v2441 = vunpack.c.l.b16 %v2230
    %v2442 = vunpack.c.h.b16 %v2230
    %v2443 = vunpack.c.l.b16 %v2231
    %v2444 = vunpack.c.h.b16 %v2231
    %v2445 = vunpack.c.l.b16 %v2232
    %v2446 = vunpack.c.h.b16 %v2232
    %v2447 = vunpack.c.l.b16 %v2233
    %v2448 = vunpack.c.h.b16 %v2233
    %v2449 = vunpack.c.l.b16 %v2234
    %v2450 = vunpack.c.h.b16 %v2234
    %v2451 = vunpack.c.l.b16 %v2235
    %v2452 = vunpack.c.h.b16 %v2235
    %v2453 = vunpack.c.l.b16 %v2236
    %v2454 = vunpack.c.h.b16 %v2236
    %v2455 = vunpack.c.l.b16 %v2237
    %v2456 = vunpack.c.h.b16 %v2237
    %v2457 = vunpack.c.l.b16 %v2238
    %v2458 = vunpack.c.h.b16 %v2238
    %v2459 = vunpack.c.l.b16 %v2239
    %v2460 = vunpack.c.h.b16 %v2239
    %v2461 = vpack.c.b16 %v2337, %v2333
    %v2462 = vpack.c.b16 %v2338, %v2334
    %v2463 = vpack.c.b16 %v2339, %v2335
    %v2464 = vpack.c.b16 %v2340, %v2336
    %v2465 = vpack.c.b16 %v2345, %v2341
    %v2466 = vpack.c.b16 %v2346, %v2342
    %v2467 = vpack.c.b16 %v2347, %v2343
    %v2468 = vpack.c.b16 %v2348, %v2344
    %v2469 = vpack.c.b16 %v2353, %v2349
    %v2470 = vpack.c.b16 %v2354, %v2350
    %v2471 = vpack.c.b16 %v2355, %v2351
    %v2472 = vpack.c.b16 %v2356, %v2352
    %v2473 = vpack.c.b16 %v2361, %v2357
    %v2474 = vpack.c.b16 %v2362, %v2358
    %v2475 = vpack.c.b16 %v2363, %v2359
    %v2476 = vpack.c.b16 %v2364, %v2360
    %v2477 = vpack.c.b16 %v2369, %v2365
    %v2478 = vpack.c.b16 %v2370, %v2366
    %v2479 = vpack.c.b16 %v2371, %v2367
    %v2480 = vpack.c.b16 %v2372, %v2368
    %v2481 = vpack.c.b16 %v2377, %v2373
    %v2482 = vpack.c.b16 %v2378, %v2374
    %v2483 = vpack.c.b16 %v2379, %v2375
    %v2484 = vpack.c.b16 %v2380, %v2376
    %v2485 = vpack.c.b16 %v2385, %v2381
    %v2486 = vpack.c.b16 %v2386, %v2382
    %v2487 = vpack.c.b16 %v2387, %v2383
    %v2488 = vpack.c.b16 %v2388, %v2384
    %v2489 = vpack.c.b16 %v2393, %v2389
    %v2490 = vpack.c.b16 %v2394, %v2390
    %v2491 = vpack.c.b16 %v2395, %v2391
    %v2492 = vpack.c.b16 %v2396, %v2392
    %v2493 = vpack.c.b16 %v2401, %v2397
    %v2494 = vpack.c.b16 %v2402, %v2398
    %v2495 = vpack.c.b16 %v2403, %v2399
    %v2496 = vpack.c.b16 %v2404, %v2400
    %v2497 = vpack.c.b16 %v2409, %v2405
    %v2498 = vpack.c.b16 %v2410, %v2406
    %v2499 = vpack.c.b16 %v2411, %v2407
    %v2500 = vpack.c.b16 %v2412, %v2408
    %v2501 = vpack.c.b16 %v2417, %v2413
    %v2502 = vpack.c.b16 %v2418, %v2414
    %v2503 = vpack.c.b16 %v2419, %v2415
    %v2504 = vpack.c.b16 %v2420, %v2416
    %v2505 = vpack.c.b16 %v2425, %v2421
    %v2506 = vpack.c.b16 %v2426, %v2422
    %v2507 = vpack.c.b16 %v2427, %v2423
    %v2508 = vpack.c.b16 %v2428, %v2424
    %v2509 = vpack.c.b16 %v2433, %v2429
    %v2510 = vpack.c.b16 %v2434, %v2430
    %v2511 = vpack.c.b16 %v2435, %v2431
    %v2512 = vpack.c.b16 %v2436, %v2432
    %v2513 = vpack.c.b16 %v2441, %v2437
    %v2514 = vpack.c.b16 %v2442, %v2438
    %v2515 = vpack.c.b16 %v2443, %v2439
    %v2516 = vpack.c.b16 %v2444, %v2440
    %v2517 = vpack.c.b16 %v2449, %v2445
    %v2518 = vpack.c.b16 %v2450, %v2446
    %v2519 = vpack.c.b16 %v2451, %v2447
    %v2520 = vpack.c.b16 %v2452, %v2448
    %v2521 = vpack.c.b16 %v2457, %v2453
    %v2522 = vpack.c.b16 %v2458, %v2454
    %v2523 = vpack.c.b16 %v2459, %v2455
    %v2524 = vpack.c.b16 %v2460, %v2456
    %2589 = vmatprep.subr.bf16.mxu0 %v2462
    %2590 = vmatpush1.bf16.msra.mxu0 %v2461
    %2591 = vmatprep.subr.bf16.mxu0 %v2466
    %2592 = vmatpush1.bf16.msra.mxu0 %v2465
    %2593 = vmatprep.subr.bf16.mxu0 %v2470
    %2594 = vmatpush1.bf16.msra.mxu0 %v2469
    %2595 = vmatprep.subr.bf16.mxu0 %v2474
    %2596 = vmatpush1.bf16.msra.mxu0 %v2473
    %2597 = vmatprep.subr.bf16.mxu0 %v2478
    %2598 = vmatpush1.bf16.msra.mxu0 %v2477
    %2599 = vmatprep.subr.bf16.mxu0 %v2482
    %2600 = vmatpush1.bf16.msra.mxu0 %v2481
    %2601 = vmatprep.subr.bf16.mxu0 %v2486
    %2602 = vmatpush1.bf16.msra.mxu0 %v2485
    %2603 = vmatprep.subr.bf16.mxu0 %v2490
    %2604 = vmatpush1.bf16.msra.mxu0 %v2489
    %2605 = vmatprep.subr.bf16.mxu0 %v2494
    %2606 = vmatpush1.bf16.msra.mxu0 %v2493
    %2607 = vmatprep.subr.bf16.mxu0 %v2498
    %2608 = vmatpush1.bf16.msra.mxu0 %v2497
    %2609 = vmatprep.subr.bf16.mxu0 %v2502
    %2610 = vmatpush1.bf16.msra.mxu0 %v2501
    %2611 = vmatprep.subr.bf16.mxu0 %v2506
    %2612 = vmatpush1.bf16.msra.mxu0 %v2505
    %2613 = vmatprep.subr.bf16.mxu0 %v2510
    %2614 = vmatpush1.bf16.msra.mxu0 %v2509
    %2615 = vmatprep.subr.bf16.mxu0 %v2514
    %2616 = vmatpush1.bf16.msra.mxu0 %v2513
    %2617 = vmatprep.subr.bf16.mxu0 %v2518
    %2618 = vmatpush1.bf16.msra.mxu0 %v2517
    %2619 = vmatprep.subr.bf16.mxu0 %v2522
    %2620 = vmatpush1.bf16.msra.mxu0 %v2521
    %2621 = vmatprep.mubr.bf16.mxu0 %v2266
    %2622 = vmatmul.mubr.bf16.gmra.mrb[0].mxu0 %v2265
    %v2623 = vpop.f32.mrb[0].mxu0
    %v2624 = vadd.f32 %v2245, %v2623
    %v2625 = vpop.f32.mrb[0].mxu0
    %v2626 = vadd.f32 %v2249, %v2625
    %v2627 = vpop.f32.mrb[0].mxu0
    %v2628 = vpop.f32.mrb[0].mxu0
    %2629 = vdwg.mxu0
    %2630 = vmatprep.subr.bf16.mxu0 %v2464
    %2631 = vmatpush1.bf16.msra.mxu0 %v2463
    %2632 = vmatprep.subr.bf16.mxu0 %v2468
    %2633 = vmatpush1.bf16.msra.mxu0 %v2467
    %2634 = vmatprep.subr.bf16.mxu0 %v2472
    %2635 = vmatpush1.bf16.msra.mxu0 %v2471
    %2636 = vmatprep.subr.bf16.mxu0 %v2476
    %2637 = vmatpush1.bf16.msra.mxu0 %v2475
    %2638 = vmatprep.subr.bf16.mxu0 %v2480
    %2639 = vmatpush1.bf16.msra.mxu0 %v2479
    %2640 = vmatprep.subr.bf16.mxu0 %v2484
    %2641 = vmatpush1.bf16.msra.mxu0 %v2483
    %2642 = vmatprep.subr.bf16.mxu0 %v2488
    %2643 = vmatpush1.bf16.msra.mxu0 %v2487
    %2644 = vmatprep.subr.bf16.mxu0 %v2492
    %2645 = vmatpush1.bf16.msra.mxu0 %v2491
    %2646 = vmatprep.subr.bf16.mxu0 %v2496
    %2647 = vmatpush1.bf16.msra.mxu0 %v2495
    %2648 = vmatprep.subr.bf16.mxu0 %v2500
    %2649 = vmatpush1.bf16.msra.mxu0 %v2499
    %2650 = vmatprep.subr.bf16.mxu0 %v2504
    %2651 = vmatpush1.bf16.msra.mxu0 %v2503
    %2652 = vmatprep.subr.bf16.mxu0 %v2508
    %2653 = vmatpush1.bf16.msra.mxu0 %v2507
    %2654 = vmatprep.subr.bf16.mxu0 %v2512
    %2655 = vmatpush1.bf16.msra.mxu0 %v2511
    %2656 = vmatprep.subr.bf16.mxu0 %v2516
    %2657 = vmatpush1.bf16.msra.mxu0 %v2515
    %2658 = vmatprep.subr.bf16.mxu0 %v2520
    %2659 = vmatpush1.bf16.msra.mxu0 %v2519
    %2660 = vmatprep.subr.bf16.mxu0 %v2524
    %2661 = vmatpush1.bf16.msra.mxu0 %v2523
    %2662 = vmatprep.mubr.bf16.mxu0 %v2266
    %2663 = vmatmul.mubr.bf16.gmra.mrb[0].mxu0 %v2265
    %v2664 = vpop.f32.mrb[0].mxu0
    %v2665 = vadd.f32 %v2253, %v2664
    %v2666 = vpop.f32.mrb[0].mxu0
    %v2667 = vadd.f32 %v2257, %v2666
    %v2668 = vpop.f32.mrb[0].mxu0
    %v2669 = vpop.f32.mrb[0].mxu0
    %2670 = vdwg.mxu0
    %v2671 = vsub.f32 0.0, %v2624
    %v2672 = vsub.f32 0.0, %v2626
    %v2673 = vsub.f32 0.0, %v2665
    %v2674 = vmul.f32 %v2671, 1.442695
    %v2675 = vpow.pop %v2674
    %v2676 = vmul.f32 %v2672, 1.442695
    %v2677 = vpow.pop %v2676
    %v2678 = vmul.f32 %v2673, 1.442695
    %v2679 = vpow.pop %v2678
    %v2680 = vadd.f32 %v2675, 1.0
    %v2681 = vadd.f32 %v2677, 1.0
    %v2682 = vadd.f32 %v2679, 1.0
    %v2683 = vrcp.pop %v2680
    %v2684 = vrcp.pop %v2681
    %v2685 = vrcp.pop %v2682
    %v2686 = vtanh.pop %v2667
    %v2687 = vld [vmem:[%s968] sm:$0xff]
    %v2688 = vmul.f32 %v2684, %v2687
    %v2689 = vmul.f32 %v2683, %v2686
    %v2690 = vadd.f32 %v2688, %v2689
    %v2691 = vtanh.pop %v2690
    %v2692 = vmul.f32 %v2685, %v2691
    %2693 = vst [vmem:[%s968] sm:$0xff] %v2690
    %v2694 = vpack.c.bf16 %v2692, %v2692
    %2695 = vst [vmem:[%s452 + $0x4] sm:$0xf] %v2694
    %s2696 = scalar_lea.vmem [#allocation4], 48
    %v2697 = vld [vmem:[%s2696] sm:$0xff]
    %v2698 = vld [vmem:[%s2696 + $0x8] sm:$0xff]
    %v2699 = vunpack.c.l.bf16 %v2697
    %v2700 = vunpack.c.h.bf16 %v2697
    %v2701 = vunpack.c.l.bf16 %v2698
    %v2702 = vunpack.c.h.bf16 %v2698
    %v2703 = vld [vmem:[#allocation2 + $0x4] sm:$0xf]
    %v2704 = vld [vmem:[#allocation7 + $0x100] sm:$0xff]
    %v2705 = vld [vmem:[#allocation7 + $0x108] sm:$0xff]
    %v2706 = vld [vmem:[#allocation7 + $0x110] sm:$0xff]
    %v2707 = vld [vmem:[#allocation7 + $0x118] sm:$0xff]
    %v2708 = vld [vmem:[#allocation7 + $0x120] sm:$0xff]
    %v2709 = vld [vmem:[#allocation7 + $0x128] sm:$0xff]
    %v2710 = vld [vmem:[#allocation7 + $0x130] sm:$0xff]
    %v2711 = vld [vmem:[#allocation7 + $0x138] sm:$0xff]
    %v2712 = vld [vmem:[#allocation7 + $0x140] sm:$0xff]
    %v2713 = vld [vmem:[#allocation7 + $0x148] sm:$0xff]
    %v2714 = vld [vmem:[#allocation7 + $0x150] sm:$0xff]
    %v2715 = vld [vmem:[#allocation7 + $0x158] sm:$0xff]
    %v2716 = vld [vmem:[#allocation7 + $0x160] sm:$0xff]
    %v2717 = vld [vmem:[#allocation7 + $0x168] sm:$0xff]
    %v2718 = vld [vmem:[#allocation7 + $0x170] sm:$0xff]
    %v2719 = vld [vmem:[#allocation7 + $0x178] sm:$0xff]
    %v2720 = vld [vmem:[#allocation7 + $0x180] sm:$0xff]
    %v2721 = vld [vmem:[#allocation7 + $0x188] sm:$0xff]
    %v2722 = vld [vmem:[#allocation7 + $0x190] sm:$0xff]
    %v2723 = vld [vmem:[#allocation7 + $0x198] sm:$0xff]
    %v2724 = vld [vmem:[#allocation7 + $0x1a0] sm:$0xff]
    %v2725 = vld [vmem:[#allocation7 + $0x1a8] sm:$0xff]
    %v2726 = vld [vmem:[#allocation7 + $0x1b0] sm:$0xff]
    %v2727 = vld [vmem:[#allocation7 + $0x1b8] sm:$0xff]
    %v2728 = vld [vmem:[#allocation7 + $0x1c0] sm:$0xff]
    %v2729 = vld [vmem:[#allocation7 + $0x1c8] sm:$0xff]
    %v2730 = vld [vmem:[#allocation7 + $0x1d0] sm:$0xff]
    %v2731 = vld [vmem:[#allocation7 + $0x1d8] sm:$0xff]
    %v2732 = vld [vmem:[#allocation7 + $0x1e0] sm:$0xff]
    %v2733 = vld [vmem:[#allocation7 + $0x1e8] sm:$0xff]
    %v2734 = vld [vmem:[#allocation7 + $0x1f0] sm:$0xff]
    %v2735 = vld [vmem:[#allocation7 + $0x1f8] sm:$0xff]
    %v2768 = vunpack.c.l.b16 %v2704
    %v2769 = vunpack.c.h.b16 %v2704
    %v2770 = vunpack.c.l.b16 %v2705
    %v2771 = vunpack.c.h.b16 %v2705
    %v2772 = vunpack.c.l.b16 %v2706
    %v2773 = vunpack.c.h.b16 %v2706
    %v2774 = vunpack.c.l.b16 %v2707
    %v2775 = vunpack.c.h.b16 %v2707
    %v2776 = vunpack.c.l.b16 %v2708
    %v2777 = vunpack.c.h.b16 %v2708
    %v2778 = vunpack.c.l.b16 %v2709
    %v2779 = vunpack.c.h.b16 %v2709
    %v2780 = vunpack.c.l.b16 %v2710
    %v2781 = vunpack.c.h.b16 %v2710
    %v2782 = vunpack.c.l.b16 %v2711
    %v2783 = vunpack.c.h.b16 %v2711
    %v2784 = vunpack.c.l.b16 %v2712
    %v2785 = vunpack.c.h.b16 %v2712
    %v2786 = vunpack.c.l.b16 %v2713
    %v2787 = vunpack.c.h.b16 %v2713
    %v2788 = vunpack.c.l.b16 %v2714
    %v2789 = vunpack.c.h.b16 %v2714
    %v2790 = vunpack.c.l.b16 %v2715
    %v2791 = vunpack.c.h.b16 %v2715
    %v2792 = vunpack.c.l.b16 %v2716
    %v2793 = vunpack.c.h.b16 %v2716
    %v2794 = vunpack.c.l.b16 %v2717
    %v2795 = vunpack.c.h.b16 %v2717
    %v2796 = vunpack.c.l.b16 %v2718
    %v2797 = vunpack.c.h.b16 %v2718
    %v2798 = vunpack.c.l.b16 %v2719
    %v2799 = vunpack.c.h.b16 %v2719
    %v2800 = vunpack.c.l.b16 %v2720
    %v2801 = vunpack.c.h.b16 %v2720
    %v2802 = vunpack.c.l.b16 %v2721
    %v2803 = vunpack.c.h.b16 %v2721
    %v2804 = vunpack.c.l.b16 %v2722
    %v2805 = vunpack.c.h.b16 %v2722
    %v2806 = vunpack.c.l.b16 %v2723
    %v2807 = vunpack.c.h.b16 %v2723
    %v2808 = vunpack.c.l.b16 %v2724
    %v2809 = vunpack.c.h.b16 %v2724
    %v2810 = vunpack.c.l.b16 %v2725
    %v2811 = vunpack.c.h.b16 %v2725
    %v2812 = vunpack.c.l.b16 %v2726
    %v2813 = vunpack.c.h.b16 %v2726
    %v2814 = vunpack.c.l.b16 %v2727
    %v2815 = vunpack.c.h.b16 %v2727
    %v2816 = vunpack.c.l.b16 %v2728
    %v2817 = vunpack.c.h.b16 %v2728
    %v2818 = vunpack.c.l.b16 %v2729
    %v2819 = vunpack.c.h.b16 %v2729
    %v2820 = vunpack.c.l.b16 %v2730
    %v2821 = vunpack.c.h.b16 %v2730
    %v2822 = vunpack.c.l.b16 %v2731
    %v2823 = vunpack.c.h.b16 %v2731
    %v2824 = vunpack.c.l.b16 %v2732
    %v2825 = vunpack.c.h.b16 %v2732
    %v2826 = vunpack.c.l.b16 %v2733
    %v2827 = vunpack.c.h.b16 %v2733
    %v2828 = vunpack.c.l.b16 %v2734
    %v2829 = vunpack.c.h.b16 %v2734
    %v2830 = vunpack.c.l.b16 %v2735
    %v2831 = vunpack.c.h.b16 %v2735
    %v2832 = vpack.c.b16 %v2772, %v2768
    %v2833 = vpack.c.b16 %v2773, %v2769
    %v2834 = vpack.c.b16 %v2774, %v2770
    %v2835 = vpack.c.b16 %v2775, %v2771
    %v2836 = vpack.c.b16 %v2780, %v2776
    %v2837 = vpack.c.b16 %v2781, %v2777
    %v2838 = vpack.c.b16 %v2782, %v2778
    %v2839 = vpack.c.b16 %v2783, %v2779
    %v2840 = vpack.c.b16 %v2788, %v2784
    %v2841 = vpack.c.b16 %v2789, %v2785
    %v2842 = vpack.c.b16 %v2790, %v2786
    %v2843 = vpack.c.b16 %v2791, %v2787
    %v2844 = vpack.c.b16 %v2796, %v2792
    %v2845 = vpack.c.b16 %v2797, %v2793
    %v2846 = vpack.c.b16 %v2798, %v2794
    %v2847 = vpack.c.b16 %v2799, %v2795
    %v2848 = vpack.c.b16 %v2804, %v2800
    %v2849 = vpack.c.b16 %v2805, %v2801
    %v2850 = vpack.c.b16 %v2806, %v2802
    %v2851 = vpack.c.b16 %v2807, %v2803
    %v2852 = vpack.c.b16 %v2812, %v2808
    %v2853 = vpack.c.b16 %v2813, %v2809
    %v2854 = vpack.c.b16 %v2814, %v2810
    %v2855 = vpack.c.b16 %v2815, %v2811
    %v2856 = vpack.c.b16 %v2820, %v2816
    %v2857 = vpack.c.b16 %v2821, %v2817
    %v2858 = vpack.c.b16 %v2822, %v2818
    %v2859 = vpack.c.b16 %v2823, %v2819
    %v2860 = vpack.c.b16 %v2828, %v2824
    %v2861 = vpack.c.b16 %v2829, %v2825
    %v2862 = vpack.c.b16 %v2830, %v2826
    %v2863 = vpack.c.b16 %v2831, %v2827
    %2896 = vmatprep.subr.bf16.mxu0 %v2833
    %2897 = vmatpush1.bf16.msra.mxu0 %v2832
    %2898 = vmatprep.subr.bf16.mxu0 %v2837
    %2899 = vmatpush1.bf16.msra.mxu0 %v2836
    %2900 = vmatprep.subr.bf16.mxu0 %v2841
    %2901 = vmatpush1.bf16.msra.mxu0 %v2840
    %2902 = vmatprep.subr.bf16.mxu0 %v2845
    %2903 = vmatpush1.bf16.msra.mxu0 %v2844
    %2904 = vmatprep.subr.bf16.mxu0 %v2849
    %2905 = vmatpush1.bf16.msra.mxu0 %v2848
    %2906 = vmatprep.subr.bf16.mxu0 %v2853
    %2907 = vmatpush1.bf16.msra.mxu0 %v2852
    %2908 = vmatprep.subr.bf16.mxu0 %v2857
    %2909 = vmatpush1.bf16.msra.mxu0 %v2856
    %2910 = vmatprep.subr.bf16.mxu0 %v2861
    %2911 = vmatpush1.bf16.msra.mxu0 %v2860
    %2912 = vmatprep.subr.bf16.mxu0 0
    %2913 = vmatpush1.bf16.msra.mxu0 0
    %2914 = vmatprep.subr.bf16.mxu0 0
    %2915 = vmatpush1.bf16.msra.mxu0 0
    %2916 = vmatprep.subr.bf16.mxu0 0
    %2917 = vmatpush1.bf16.msra.mxu0 0
    %2918 = vmatprep.subr.bf16.mxu0 0
    %2919 = vmatpush1.bf16.msra.mxu0 0
    %2920 = vmatprep.subr.bf16.mxu0 0
    %2921 = vmatpush1.bf16.msra.mxu0 0
    %2922 = vmatprep.subr.bf16.mxu0 0
    %2923 = vmatpush1.bf16.msra.mxu0 0
    %2924 = vmatprep.subr.bf16.mxu0 0
    %2925 = vmatpush1.bf16.msra.mxu0 0
    %2926 = vmatprep.subr.bf16.mxu0 0
    %2927 = vmatpush1.bf16.msra.mxu0 0
    %2928 = vmatprep.mubr.bf16.mxu0 0
    %2929 = vmatmul.mubr.bf16.gmra.mrb[0].mxu0 %v2703
    %v2930 = vpop.f32.mrb[0].mxu0
    %v2931 = vadd.f32 0.0, %v2930
    %v2932 = vpop.f32.mrb[0].mxu0
    %v2933 = vadd.f32 0.0, %v2932
    %v2934 = vpop.f32.mrb[0].mxu0
    %v2935 = vpop.f32.mrb[0].mxu0
    %2936 = vdwg.mxu0
    %2937 = vmatprep.subr.bf16.mxu0 %v2835
    %2938 = vmatpush1.bf16.msra.mxu0 %v2834
    %2939 = vmatprep.subr.bf16.mxu0 %v2839
    %2940 = vmatpush1.bf16.msra.mxu0 %v2838
    %2941 = vmatprep.subr.bf16.mxu0 %v2843
    %2942 = vmatpush1.bf16.msra.mxu0 %v2842
    %2943 = vmatprep.subr.bf16.mxu0 %v2847
    %2944 = vmatpush1.bf16.msra.mxu0 %v2846
    %2945 = vmatprep.subr.bf16.mxu0 %v2851
    %2946 = vmatpush1.bf16.msra.mxu0 %v2850
    %2947 = vmatprep.subr.bf16.mxu0 %v2855
    %2948 = vmatpush1.bf16.msra.mxu0 %v2854
    %2949 = vmatprep.subr.bf16.mxu0 %v2859
    %2950 = vmatpush1.bf16.msra.mxu0 %v2858
    %2951 = vmatprep.subr.bf16.mxu0 %v2863
    %2952 = vmatpush1.bf16.msra.mxu0 %v2862
    %2953 = vmatprep.subr.bf16.mxu0 0
    %2954 = vmatpush1.bf16.msra.mxu0 0
    %2955 = vmatprep.subr.bf16.mxu0 0
    %2956 = vmatpush1.bf16.msra.mxu0 0
    %2957 = vmatprep.subr.bf16.mxu0 0
    %2958 = vmatpush1.bf16.msra.mxu0 0
    %2959 = vmatprep.subr.bf16.mxu0 0
    %2960 = vmatpush1.bf16.msra.mxu0 0
    %2961 = vmatprep.subr.bf16.mxu0 0
    %2962 = vmatpush1.bf16.msra.mxu0 0
    %2963 = vmatprep.subr.bf16.mxu0 0
    %2964 = vmatpush1.bf16.msra.mxu0 0
    %2965 = vmatprep.subr.bf16.mxu0 0
    %2966 = vmatpush1.bf16.msra.mxu0 0
    %2967 = vmatprep.subr.bf16.mxu0 0
    %2968 = vmatpush1.bf16.msra.mxu0 0
    %2969 = vmatprep.mubr.bf16.mxu0 0
    %2970 = vmatmul.mubr.bf16.gmra.mrb[0].mxu0 %v2703
    %v2971 = vpop.f32.mrb[0].mxu0
    %v2972 = vadd.f32 0.0, %v2971
    %v2973 = vpop.f32.mrb[0].mxu0
    %v2974 = vadd.f32 0.0, %v2973
    %v2975 = vpop.f32.mrb[0].mxu0
    %v2976 = vpop.f32.mrb[0].mxu0
    %2977 = vdwg.mxu0
    %v2978 = vadd.f32 %v2699, %v2931
    %v2979 = vadd.f32 %v2700, %v2933
    %v2980 = vadd.f32 %v2701, %v2972
    %v2981 = vadd.f32 %v2702, %v2974
    %v2982 = vld [vmem:[#allocation9] sm:$0xf]
    %v2984 = vlaneseq
    %v2985 = vshrl.u32 %v2984, 7
    %v2986 = vsub.s32 0, %v2985
    %v2987 = vrot.slane %v2982, %v2986
    %v2988 = vlaneseq
    %v2989 = vshrl.u32 %v2988, 7
    %v2990 = vsub.s32 1, %v2989
    %v2991 = vrot.slane %v2982, %v2990
    %v2992 = vlaneseq
    %v2993 = vshrl.u32 %v2992, 7
    %v2994 = vsub.s32 2, %v2993
    %v2995 = vrot.slane %v2982, %v2994
    %v2996 = vlaneseq
    %v2997 = vshrl.u32 %v2996, 7
    %v2998 = vsub.s32 3, %v2997
    %v2999 = vrot.slane %v2982, %v2998
    %v3004 = vadd.f32 %v2978, %v2987
    %v3005 = vadd.f32 %v2979, %v2991
    %v3006 = vadd.f32 %v2980, %v2995
    %v3007 = vadd.f32 %v2981, %v2999
    %v3008 = vsub.f32 0.0, %v3004
    %v3009 = vsub.f32 0.0, %v3005
    %v3010 = vsub.f32 0.0, %v3006
    %v3011 = vmul.f32 %v3008, 1.442695
    %v3012 = vpow.pop %v3011
    %v3013 = vmul.f32 %v3009, 1.442695
    %v3014 = vpow.pop %v3013
    %v3015 = vmul.f32 %v3010, 1.442695
    %v3016 = vpow.pop %v3015
    %v3017 = vadd.f32 %v3012, 1.0
    %v3018 = vadd.f32 %v3014, 1.0
    %v3019 = vadd.f32 %v3016, 1.0
    %v3020 = vrcp.pop %v3017
    %v3021 = vrcp.pop %v3018
    %v3022 = vrcp.pop %v3019
    %v3023 = vtanh.pop %v3007
    %v3024 = vld [vmem:[#allocation3] sm:$0xff]
    %v3025 = vmul.f32 %v3021, %v3024
    %v3026 = vmul.f32 %v3020, %v3023
    %v3027 = vadd.f32 %v3025, %v3026
    %v3028 = vtanh.pop %v3027
    %v3029 = vmul.f32 %v3022, %v3028
    %3030 = vst [vmem:[#allocation3] sm:$0xff] %v3027
    %v3031 = vpack.c.bf16 %v3029, %v3029
    %3032 = vst [vmem:[#allocation2 + $0x4] sm:$0xf] %v3031
    %3033 = vst [vmem:[%s452] sm:$0xf] %v3031
    %v3034 = vld [vmem:[%s452] sm:$0xff]
    %v3035 = vld [vmem:[%s455] sm:$0xff]
    %v3036 = vld [vmem:[%s455 + $0x8] sm:$0xff]
    %v3037 = vld [vmem:[%s455 + $0x10] sm:$0xff]
    %v3038 = vld [vmem:[%s455 + $0x18] sm:$0xff]
    %v3039 = vld [vmem:[%s455 + $0x20] sm:$0xff]
    %v3040 = vld [vmem:[%s455 + $0x28] sm:$0xff]
    %v3041 = vld [vmem:[%s455 + $0x30] sm:$0xff]
    %v3042 = vld [vmem:[%s455 + $0x38] sm:$0xff]
    %v3043 = vld [vmem:[%s455 + $0x40] sm:$0xff]
    %v3044 = vld [vmem:[%s455 + $0x48] sm:$0xff]
    %v3045 = vld [vmem:[%s455 + $0x50] sm:$0xff]
    %v3046 = vld [vmem:[%s455 + $0x58] sm:$0xff]
    %v3047 = vld [vmem:[%s455 + $0x60] sm:$0xff]
    %v3048 = vld [vmem:[%s455 + $0x68] sm:$0xff]
    %v3049 = vld [vmem:[%s455 + $0x70] sm:$0xff]
    %v3050 = vld [vmem:[%s455 + $0x78] sm:$0xff]
    %v3051 = vld [vmem:[%s455 + $0x80] sm:$0xff]
    %v3052 = vld [vmem:[%s455 + $0x88] sm:$0xff]
    %v3053 = vld [vmem:[%s455 + $0x90] sm:$0xff]
    %v3054 = vld [vmem:[%s455 + $0x98] sm:$0xff]
    %v3055 = vld [vmem:[%s455 + $0xa0] sm:$0xff]
    %v3056 = vld [vmem:[%s455 + $0xa8] sm:$0xff]
    %v3057 = vld [vmem:[%s455 + $0xb0] sm:$0xff]
    %v3058 = vld [vmem:[%s455 + $0xb8] sm:$0xff]
    %v3059 = vld [vmem:[%s455 + $0xc0] sm:$0xff]
    %v3060 = vld [vmem:[%s455 + $0xc8] sm:$0xff]
    %v3061 = vld [vmem:[%s455 + $0xd0] sm:$0xff]
    %v3062 = vld [vmem:[%s455 + $0xd8] sm:$0xff]
    %v3063 = vld [vmem:[%s455 + $0xe0] sm:$0xff]
    %v3064 = vld [vmem:[%s455 + $0xe8] sm:$0xff]
    %v3065 = vld [vmem:[%s455 + $0xf0] sm:$0xff]
    %v3066 = vld [vmem:[%s455 + $0xf8] sm:$0xff]
    %v3067 = vld [vmem:[%s455 + $0x100] sm:$0xff]
    %v3068 = vld [vmem:[%s455 + $0x108] sm:$0xff]
    %v3069 = vld [vmem:[%s455 + $0x110] sm:$0xff]
    %v3070 = vld [vmem:[%s455 + $0x118] sm:$0xff]
    %v3071 = vld [vmem:[%s455 + $0x120] sm:$0xff]
    %v3072 = vld [vmem:[%s455 + $0x128] sm:$0xff]
    %v3073 = vld [vmem:[%s455 + $0x130] sm:$0xff]
    %v3074 = vld [vmem:[%s455 + $0x138] sm:$0xff]
    %v3075 = vld [vmem:[%s455 + $0x140] sm:$0xff]
    %v3076 = vld [vmem:[%s455 + $0x148] sm:$0xff]
    %v3077 = vld [vmem:[%s455 + $0x150] sm:$0xff]
    %v3078 = vld [vmem:[%s455 + $0x158] sm:$0xff]
    %v3079 = vld [vmem:[%s455 + $0x160] sm:$0xff]
    %v3080 = vld [vmem:[%s455 + $0x168] sm:$0xff]
    %v3081 = vld [vmem:[%s455 + $0x170] sm:$0xff]
    %v3082 = vld [vmem:[%s455 + $0x178] sm:$0xff]
    %v3083 = vld [vmem:[%s455 + $0x180] sm:$0xff]
    %v3084 = vld [vmem:[%s455 + $0x188] sm:$0xff]
    %v3085 = vld [vmem:[%s455 + $0x190] sm:$0xff]
    %v3086 = vld [vmem:[%s455 + $0x198] sm:$0xff]
    %v3087 = vld [vmem:[%s455 + $0x1a0] sm:$0xff]
    %v3088 = vld [vmem:[%s455 + $0x1a8] sm:$0xff]
    %v3089 = vld [vmem:[%s455 + $0x1b0] sm:$0xff]
    %v3090 = vld [vmem:[%s455 + $0x1b8] sm:$0xff]
    %v3091 = vld [vmem:[%s455 + $0x1c0] sm:$0xff]
    %v3092 = vld [vmem:[%s455 + $0x1c8] sm:$0xff]
    %v3093 = vld [vmem:[%s455 + $0x1d0] sm:$0xff]
    %v3094 = vld [vmem:[%s455 + $0x1d8] sm:$0xff]
    %v3095 = vld [vmem:[%s455 + $0x1e0] sm:$0xff]
    %v3096 = vld [vmem:[%s455 + $0x1e8] sm:$0xff]
    %v3097 = vld [vmem:[%s455 + $0x1f0] sm:$0xff]
    %v3098 = vld [vmem:[%s455 + $0x1f8] sm:$0xff]
    %v3099 = vld [vmem:[%s520] sm:$0xf]
    %v3101 = vlaneseq
    %v3102 = vshrl.u32 %v3101, 7
    %v3103 = vsub.s32 0, %v3102
    %v3104 = vrot.slane %v3099, %v3103
    %v3105 = vlaneseq
    %v3106 = vshrl.u32 %v3105, 7
    %v3107 = vsub.s32 1, %v3106
    %v3108 = vrot.slane %v3099, %v3107
    %v3109 = vlaneseq
    %v3110 = vshrl.u32 %v3109, 7
    %v3111 = vsub.s32 2, %v3110
    %v3112 = vrot.slane %v3099, %v3111
    %v3113 = vlaneseq
    %v3114 = vshrl.u32 %v3113, 7
    %v3115 = vsub.s32 3, %v3114
    %v3116 = vrot.slane %v3099, %v3115
    %v3122 = vunpack.c.l.b16 %v3034
    %v3123 = vunpack.c.h.b16 %v3034
    %v3124 = vpack.c.b16 %v3122, %v3122
    %v3125 = vpack.c.b16 %v3123, %v3123
    %v3192 = vunpack.c.l.b16 %v3035
    %v3193 = vunpack.c.h.b16 %v3035
    %v3194 = vunpack.c.l.b16 %v3036
    %v3195 = vunpack.c.h.b16 %v3036
    %v3196 = vunpack.c.l.b16 %v3037
    %v3197 = vunpack.c.h.b16 %v3037
    %v3198 = vunpack.c.l.b16 %v3038
    %v3199 = vunpack.c.h.b16 %v3038
    %v3200 = vunpack.c.l.b16 %v3039
    %v3201 = vunpack.c.h.b16 %v3039
    %v3202 = vunpack.c.l.b16 %v3040
    %v3203 = vunpack.c.h.b16 %v3040
    %v3204 = vunpack.c.l.b16 %v3041
    %v3205 = vunpack.c.h.b16 %v3041
    %v3206 = vunpack.c.l.b16 %v3042
    %v3207 = vunpack.c.h.b16 %v3042
    %v3208 = vunpack.c.l.b16 %v3043
    %v3209 = vunpack.c.h.b16 %v3043
    %v3210 = vunpack.c.l.b16 %v3044
    %v3211 = vunpack.c.h.b16 %v3044
    %v3212 = vunpack.c.l.b16 %v3045
    %v3213 = vunpack.c.h.b16 %v3045
    %v3214 = vunpack.c.l.b16 %v3046
    %v3215 = vunpack.c.h.b16 %v3046
    %v3216 = vunpack.c.l.b16 %v3047
    %v3217 = vunpack.c.h.b16 %v3047
    %v3218 = vunpack.c.l.b16 %v3048
    %v3219 = vunpack.c.h.b16 %v3048
    %v3220 = vunpack.c.l.b16 %v3049
    %v3221 = vunpack.c.h.b16 %v3049
    %v3222 = vunpack.c.l.b16 %v3050
    %v3223 = vunpack.c.h.b16 %v3050
    %v3224 = vunpack.c.l.b16 %v3051
    %v3225 = vunpack.c.h.b16 %v3051
    %v3226 = vunpack.c.l.b16 %v3052
    %v3227 = vunpack.c.h.b16 %v3052
    %v3228 = vunpack.c.l.b16 %v3053
    %v3229 = vunpack.c.h.b16 %v3053
    %v3230 = vunpack.c.l.b16 %v3054
    %v3231 = vunpack.c.h.b16 %v3054
    %v3232 = vunpack.c.l.b16 %v3055
    %v3233 = vunpack.c.h.b16 %v3055
    %v3234 = vunpack.c.l.b16 %v3056
    %v3235 = vunpack.c.h.b16 %v3056
    %v3236 = vunpack.c.l.b16 %v3057
    %v3237 = vunpack.c.h.b16 %v3057
    %v3238 = vunpack.c.l.b16 %v3058
    %v3239 = vunpack.c.h.b16 %v3058
    %v3240 = vunpack.c.l.b16 %v3059
    %v3241 = vunpack.c.h.b16 %v3059
    %v3242 = vunpack.c.l.b16 %v3060
    %v3243 = vunpack.c.h.b16 %v3060
    %v3244 = vunpack.c.l.b16 %v3061
    %v3245 = vunpack.c.h.b16 %v3061
    %v3246 = vunpack.c.l.b16 %v3062
    %v3247 = vunpack.c.h.b16 %v3062
    %v3248 = vunpack.c.l.b16 %v3063
    %v3249 = vunpack.c.h.b16 %v3063
    %v3250 = vunpack.c.l.b16 %v3064
    %v3251 = vunpack.c.h.b16 %v3064
    %v3252 = vunpack.c.l.b16 %v3065
    %v3253 = vunpack.c.h.b16 %v3065
    %v3254 = vunpack.c.l.b16 %v3066
    %v3255 = vunpack.c.h.b16 %v3066
    %v3256 = vunpack.c.l.b16 %v3067
    %v3257 = vunpack.c.h.b16 %v3067
    %v3258 = vunpack.c.l.b16 %v3068
    %v3259 = vunpack.c.h.b16 %v3068
    %v3260 = vunpack.c.l.b16 %v3069
    %v3261 = vunpack.c.h.b16 %v3069
    %v3262 = vunpack.c.l.b16 %v3070
    %v3263 = vunpack.c.h.b16 %v3070
    %v3264 = vunpack.c.l.b16 %v3071
    %v3265 = vunpack.c.h.b16 %v3071
    %v3266 = vunpack.c.l.b16 %v3072
    %v3267 = vunpack.c.h.b16 %v3072
    %v3268 = vunpack.c.l.b16 %v3073
    %v3269 = vunpack.c.h.b16 %v3073
    %v3270 = vunpack.c.l.b16 %v3074
    %v3271 = vunpack.c.h.b16 %v3074
    %v3272 = vunpack.c.l.b16 %v3075
    %v3273 = vunpack.c.h.b16 %v3075
    %v3274 = vunpack.c.l.b16 %v3076
    %v3275 = vunpack.c.h.b16 %v3076
    %v3276 = vunpack.c.l.b16 %v3077
    %v3277 = vunpack.c.h.b16 %v3077
    %v3278 = vunpack.c.l.b16 %v3078
    %v3279 = vunpack.c.h.b16 %v3078
    %v3280 = vunpack.c.l.b16 %v3079
    %v3281 = vunpack.c.h.b16 %v3079
    %v3282 = vunpack.c.l.b16 %v3080
    %v3283 = vunpack.c.h.b16 %v3080
    %v3284 = vunpack.c.l.b16 %v3081
    %v3285 = vunpack.c.h.b16 %v3081
    %v3286 = vunpack.c.l.b16 %v3082
    %v3287 = vunpack.c.h.b16 %v3082
    %v3288 = vunpack.c.l.b16 %v3083
    %v3289 = vunpack.c.h.b16 %v3083
    %v3290 = vunpack.c.l.b16 %v3084
    %v3291 = vunpack.c.h.b16 %v3084
    %v3292 = vunpack.c.l.b16 %v3085
    %v3293 = vunpack.c.h.b16 %v3085
    %v3294 = vunpack.c.l.b16 %v3086
    %v3295 = vunpack.c.h.b16 %v3086
    %v3296 = vunpack.c.l.b16 %v3087
    %v3297 = vunpack.c.h.b16 %v3087
    %v3298 = vunpack.c.l.b16 %v3088
    %v3299 = vunpack.c.h.b16 %v3088
    %v3300 = vunpack.c.l.b16 %v3089
    %v3301 = vunpack.c.h.b16 %v3089
    %v3302 = vunpack.c.l.b16 %v3090
    %v3303 = vunpack.c.h.b16 %v3090
    %v3304 = vunpack.c.l.b16 %v3091
    %v3305 = vunpack.c.h.b16 %v3091
    %v3306 = vunpack.c.l.b16 %v3092
    %v3307 = vunpack.c.h.b16 %v3092
    %v3308 = vunpack.c.l.b16 %v3093
    %v3309 = vunpack.c.h.b16 %v3093
    %v3310 = vunpack.c.l.b16 %v3094
    %v3311 = vunpack.c.h.b16 %v3094
    %v3312 = vunpack.c.l.b16 %v3095
    %v3313 = vunpack.c.h.b16 %v3095
    %v3314 = vunpack.c.l.b16 %v3096
    %v3315 = vunpack.c.h.b16 %v3096
    %v3316 = vunpack.c.l.b16 %v3097
    %v3317 = vunpack.c.h.b16 %v3097
    %v3318 = vunpack.c.l.b16 %v3098
    %v3319 = vunpack.c.h.b16 %v3098
    %v3320 = vpack.c.b16 %v3196, %v3192
    %v3321 = vpack.c.b16 %v3197, %v3193
    %v3322 = vpack.c.b16 %v3198, %v3194
    %v3323 = vpack.c.b16 %v3199, %v3195
    %v3324 = vpack.c.b16 %v3204, %v3200
    %v3325 = vpack.c.b16 %v3205, %v3201
    %v3326 = vpack.c.b16 %v3206, %v3202
    %v3327 = vpack.c.b16 %v3207, %v3203
    %v3328 = vpack.c.b16 %v3212, %v3208
    %v3329 = vpack.c.b16 %v3213, %v3209
    %v3330 = vpack.c.b16 %v3214, %v3210
    %v3331 = vpack.c.b16 %v3215, %v3211
    %v3332 = vpack.c.b16 %v3220, %v3216
    %v3333 = vpack.c.b16 %v3221, %v3217
    %v3334 = vpack.c.b16 %v3222, %v3218
    %v3335 = vpack.c.b16 %v3223, %v3219
    %v3336 = vpack.c.b16 %v3228, %v3224
    %v3337 = vpack.c.b16 %v3229, %v3225
    %v3338 = vpack.c.b16 %v3230, %v3226
    %v3339 = vpack.c.b16 %v3231, %v3227
    %v3340 = vpack.c.b16 %v3236, %v3232
    %v3341 = vpack.c.b16 %v3237, %v3233
    %v3342 = vpack.c.b16 %v3238, %v3234
    %v3343 = vpack.c.b16 %v3239, %v3235
    %v3344 = vpack.c.b16 %v3244, %v3240
    %v3345 = vpack.c.b16 %v3245, %v3241
    %v3346 = vpack.c.b16 %v3246, %v3242
    %v3347 = vpack.c.b16 %v3247, %v3243
    %v3348 = vpack.c.b16 %v3252, %v3248
    %v3349 = vpack.c.b16 %v3253, %v3249
    %v3350 = vpack.c.b16 %v3254, %v3250
    %v3351 = vpack.c.b16 %v3255, %v3251
    %v3352 = vpack.c.b16 %v3260, %v3256
    %v3353 = vpack.c.b16 %v3261, %v3257
    %v3354 = vpack.c.b16 %v3262, %v3258
    %v3355 = vpack.c.b16 %v3263, %v3259
    %v3356 = vpack.c.b16 %v3268, %v3264
    %v3357 = vpack.c.b16 %v3269, %v3265
    %v3358 = vpack.c.b16 %v3270, %v3266
    %v3359 = vpack.c.b16 %v3271, %v3267
    %v3360 = vpack.c.b16 %v3276, %v3272
    %v3361 = vpack.c.b16 %v3277, %v3273
    %v3362 = vpack.c.b16 %v3278, %v3274
    %v3363 = vpack.c.b16 %v3279, %v3275
    %v3364 = vpack.c.b16 %v3284, %v3280
    %v3365 = vpack.c.b16 %v3285, %v3281
    %v3366 = vpack.c.b16 %v3286, %v3282
    %v3367 = vpack.c.b16 %v3287, %v3283
    %v3368 = vpack.c.b16 %v3292, %v3288
    %v3369 = vpack.c.b16 %v3293, %v3289
    %v3370 = vpack.c.b16 %v3294, %v3290
    %v3371 = vpack.c.b16 %v3295, %v3291
    %v3372 = vpack.c.b16 %v3300, %v3296
    %v3373 = vpack.c.b16 %v3301, %v3297
    %v3374 = vpack.c.b16 %v3302, %v3298
    %v3375 = vpack.c.b16 %v3303, %v3299
    %v3376 = vpack.c.b16 %v3308, %v3304
    %v3377 = vpack.c.b16 %v3309, %v3305
    %v3378 = vpack.c.b16 %v3310, %v3306
    %v3379 = vpack.c.b16 %v3311, %v3307
    %v3380 = vpack.c.b16 %v3316, %v3312
    %v3381 = vpack.c.b16 %v3317, %v3313
    %v3382 = vpack.c.b16 %v3318, %v3314
    %v3383 = vpack.c.b16 %v3319, %v3315
    %3448 = vmatprep.subr.bf16.mxu0 %v3321
    %3449 = vmatpush1.bf16.msra.mxu0 %v3320
    %3450 = vmatprep.subr.bf16.mxu0 %v3325
    %3451 = vmatpush1.bf16.msra.mxu0 %v3324
    %3452 = vmatprep.subr.bf16.mxu0 %v3329
    %3453 = vmatpush1.bf16.msra.mxu0 %v3328
    %3454 = vmatprep.subr.bf16.mxu0 %v3333
    %3455 = vmatpush1.bf16.msra.mxu0 %v3332
    %3456 = vmatprep.subr.bf16.mxu0 %v3337
    %3457 = vmatpush1.bf16.msra.mxu0 %v3336
    %3458 = vmatprep.subr.bf16.mxu0 %v3341
    %3459 = vmatpush1.bf16.msra.mxu0 %v3340
    %3460 = vmatprep.subr.bf16.mxu0 %v3345
    %3461 = vmatpush1.bf16.msra.mxu0 %v3344
    %3462 = vmatprep.subr.bf16.mxu0 %v3349
    %3463 = vmatpush1.bf16.msra.mxu0 %v3348
    %3464 = vmatprep.subr.bf16.mxu0 %v3353
    %3465 = vmatpush1.bf16.msra.mxu0 %v3352
    %3466 = vmatprep.subr.bf16.mxu0 %v3357
    %3467 = vmatpush1.bf16.msra.mxu0 %v3356
    %3468 = vmatprep.subr.bf16.mxu0 %v3361
    %3469 = vmatpush1.bf16.msra.mxu0 %v3360
    %3470 = vmatprep.subr.bf16.mxu0 %v3365
    %3471 = vmatpush1.bf16.msra.mxu0 %v3364
    %3472 = vmatprep.subr.bf16.mxu0 %v3369
    %3473 = vmatpush1.bf16.msra.mxu0 %v3368
    %3474 = vmatprep.subr.bf16.mxu0 %v3373
    %3475 = vmatpush1.bf16.msra.mxu0 %v3372
    %3476 = vmatprep.subr.bf16.mxu0 %v3377
    %3477 = vmatpush1.bf16.msra.mxu0 %v3376
    %3478 = vmatprep.subr.bf16.mxu0 %v3381
    %3479 = vmatpush1.bf16.msra.mxu0 %v3380
    %3480 = vmatprep.mubr.bf16.mxu0 %v3125
    %3481 = vmatmul.mubr.bf16.gmra.mrb[0].mxu0 %v3124
    %v3482 = vpop.f32.mrb[0].mxu0
    %v3483 = vadd.f32 %v3104, %v3482
    %v3484 = vpop.f32.mrb[0].mxu0
    %v3485 = vadd.f32 %v3108, %v3484
    %v3486 = vpop.f32.mrb[0].mxu0
    %v3487 = vpop.f32.mrb[0].mxu0
    %3488 = vdwg.mxu0
    %3489 = vmatprep.subr.bf16.mxu0 %v3323
    %3490 = vmatpush1.bf16.msra.mxu0 %v3322
    %3491 = vmatprep.subr.bf16.mxu0 %v3327
    %3492 = vmatpush1.bf16.msra.mxu0 %v3326
    %3493 = vmatprep.subr.bf16.mxu0 %v3331
    %3494 = vmatpush1.bf16.msra.mxu0 %v3330
    %3495 = vmatprep.subr.bf16.mxu0 %v3335
    %3496 = vmatpush1.bf16.msra.mxu0 %v3334
    %3497 = vmatprep.subr.bf16.mxu0 %v3339
    %3498 = vmatpush1.bf16.msra.mxu0 %v3338
    %3499 = vmatprep.subr.bf16.mxu0 %v3343
    %3500 = vmatpush1.bf16.msra.mxu0 %v3342
    %3501 = vmatprep.subr.bf16.mxu0 %v3347
    %3502 = vmatpush1.bf16.msra.mxu0 %v3346
    %3503 = vmatprep.subr.bf16.mxu0 %v3351
    %3504 = vmatpush1.bf16.msra.mxu0 %v3350
    %3505 = vmatprep.subr.bf16.mxu0 %v3355
    %3506 = vmatpush1.bf16.msra.mxu0 %v3354
    %3507 = vmatprep.subr.bf16.mxu0 %v3359
    %3508 = vmatpush1.bf16.msra.mxu0 %v3358
    %3509 = vmatprep.subr.bf16.mxu0 %v3363
    %3510 = vmatpush1.bf16.msra.mxu0 %v3362
    %3511 = vmatprep.subr.bf16.mxu0 %v3367
    %3512 = vmatpush1.bf16.msra.mxu0 %v3366
    %3513 = vmatprep.subr.bf16.mxu0 %v3371
    %3514 = vmatpush1.bf16.msra.mxu0 %v3370
    %3515 = vmatprep.subr.bf16.mxu0 %v3375
    %3516 = vmatpush1.bf16.msra.mxu0 %v3374
    %3517 = vmatprep.subr.bf16.mxu0 %v3379
    %3518 = vmatpush1.bf16.msra.mxu0 %v3378
    %3519 = vmatprep.subr.bf16.mxu0 %v3383
    %3520 = vmatpush1.bf16.msra.mxu0 %v3382
    %3521 = vmatprep.mubr.bf16.mxu0 %v3125
    %3522 = vmatmul.mubr.bf16.gmra.mrb[0].mxu0 %v3124
    %v3523 = vpop.f32.mrb[0].mxu0
    %v3524 = vadd.f32 %v3112, %v3523
    %v3525 = vpop.f32.mrb[0].mxu0
    %v3526 = vadd.f32 %v3116, %v3525
    %v3527 = vpop.f32.mrb[0].mxu0
    %v3528 = vpop.f32.mrb[0].mxu0
    %3529 = vdwg.mxu0
    %v3530 = vsub.f32 0.0, %v3483
    %v3531 = vsub.f32 0.0, %v3485
    %v3532 = vsub.f32 0.0, %v3524
    %v3533 = vmul.f32 %v3530, 1.442695
    %v3534 = vpow.pop %v3533
    %v3535 = vmul.f32 %v3531, 1.442695
    %v3536 = vpow.pop %v3535
    %v3537 = vmul.f32 %v3532, 1.442695
    %v3538 = vpow.pop %v3537
    %v3539 = vadd.f32 %v3534, 1.0
    %v3540 = vadd.f32 %v3536, 1.0
    %v3541 = vadd.f32 %v3538, 1.0
    %v3542 = vrcp.pop %v3539
    %v3543 = vrcp.pop %v3540
    %v3544 = vrcp.pop %v3541
    %v3545 = vtanh.pop %v3526
    %v3546 = vld [vmem:[%s968] sm:$0xff]
    %v3547 = vmul.f32 %v3543, %v3546
    %v3548 = vmul.f32 %v3542, %v3545
    %v3549 = vadd.f32 %v3547, %v3548
    %v3550 = vtanh.pop %v3549
    %v3551 = vmul.f32 %v3544, %v3550
    %3552 = vst [vmem:[%s968] sm:$0xff] %v3549
    %v3553 = vpack.c.bf16 %v3551, %v3551
    %3554 = vst [vmem:[%s452 + $0x4] sm:$0xf] %v3553
    %s3555 = scalar_lea.vmem [#allocation4], 64
    %v3556 = vld [vmem:[%s3555] sm:$0xff]
    %v3557 = vld [vmem:[%s3555 + $0x8] sm:$0xff]
    %v3558 = vunpack.c.l.bf16 %v3556
    %v3559 = vunpack.c.h.bf16 %v3556
    %v3560 = vunpack.c.l.bf16 %v3557
    %v3561 = vunpack.c.h.bf16 %v3557
    %v3562 = vld [vmem:[#allocation2 + $0x4] sm:$0xf]
    %v3563 = vld [vmem:[#allocation7 + $0x100] sm:$0xff]
    %v3564 = vld [vmem:[#allocation7 + $0x108] sm:$0xff]
    %v3565 = vld [vmem:[#allocation7 + $0x110] sm:$0xff]
    %v3566 = vld [vmem:[#allocation7 + $0x118] sm:$0xff]
    %v3567 = vld [vmem:[#allocation7 + $0x120] sm:$0xff]
    %v3568 = vld [vmem:[#allocation7 + $0x128] sm:$0xff]
    %v3569 = vld [vmem:[#allocation7 + $0x130] sm:$0xff]
    %v3570 = vld [vmem:[#allocation7 + $0x138] sm:$0xff]
    %v3571 = vld [vmem:[#allocation7 + $0x140] sm:$0xff]
    %v3572 = vld [vmem:[#allocation7 + $0x148] sm:$0xff]
    %v3573 = vld [vmem:[#allocation7 + $0x150] sm:$0xff]
    %v3574 = vld [vmem:[#allocation7 + $0x158] sm:$0xff]
    %v3575 = vld [vmem:[#allocation7 + $0x160] sm:$0xff]
    %v3576 = vld [vmem:[#allocation7 + $0x168] sm:$0xff]
    %v3577 = vld [vmem:[#allocation7 + $0x170] sm:$0xff]
    %v3578 = vld [vmem:[#allocation7 + $0x178] sm:$0xff]
    %v3579 = vld [vmem:[#allocation7 + $0x180] sm:$0xff]
    %v3580 = vld [vmem:[#allocation7 + $0x188] sm:$0xff]
    %v3581 = vld [vmem:[#allocation7 + $0x190] sm:$0xff]
    %v3582 = vld [vmem:[#allocation7 + $0x198] sm:$0xff]
    %v3583 = vld [vmem:[#allocation7 + $0x1a0] sm:$0xff]
    %v3584 = vld [vmem:[#allocation7 + $0x1a8] sm:$0xff]
    %v3585 = vld [vmem:[#allocation7 + $0x1b0] sm:$0xff]
    %v3586 = vld [vmem:[#allocation7 + $0x1b8] sm:$0xff]
    %v3587 = vld [vmem:[#allocation7 + $0x1c0] sm:$0xff]
    %v3588 = vld [vmem:[#allocation7 + $0x1c8] sm:$0xff]
    %v3589 = vld [vmem:[#allocation7 + $0x1d0] sm:$0xff]
    %v3590 = vld [vmem:[#allocation7 + $0x1d8] sm:$0xff]
    %v3591 = vld [vmem:[#allocation7 + $0x1e0] sm:$0xff]
    %v3592 = vld [vmem:[#allocation7 + $0x1e8] sm:$0xff]
    %v3593 = vld [vmem:[#allocation7 + $0x1f0] sm:$0xff]
    %v3594 = vld [vmem:[#allocation7 + $0x1f8] sm:$0xff]
    %v3627 = vunpack.c.l.b16 %v3563
    %v3628 = vunpack.c.h.b16 %v3563
    %v3629 = vunpack.c.l.b16 %v3564
    %v3630 = vunpack.c.h.b16 %v3564
    %v3631 = vunpack.c.l.b16 %v3565
    %v3632 = vunpack.c.h.b16 %v3565
    %v3633 = vunpack.c.l.b16 %v3566
    %v3634 = vunpack.c.h.b16 %v3566
    %v3635 = vunpack.c.l.b16 %v3567
    %v3636 = vunpack.c.h.b16 %v3567
    %v3637 = vunpack.c.l.b16 %v3568
    %v3638 = vunpack.c.h.b16 %v3568
    %v3639 = vunpack.c.l.b16 %v3569
    %v3640 = vunpack.c.h.b16 %v3569
    %v3641 = vunpack.c.l.b16 %v3570
    %v3642 = vunpack.c.h.b16 %v3570
    %v3643 = vunpack.c.l.b16 %v3571
    %v3644 = vunpack.c.h.b16 %v3571
    %v3645 = vunpack.c.l.b16 %v3572
    %v3646 = vunpack.c.h.b16 %v3572
    %v3647 = vunpack.c.l.b16 %v3573
    %v3648 = vunpack.c.h.b16 %v3573
    %v3649 = vunpack.c.l.b16 %v3574
    %v3650 = vunpack.c.h.b16 %v3574
    %v3651 = vunpack.c.l.b16 %v3575
    %v3652 = vunpack.c.h.b16 %v3575
    %v3653 = vunpack.c.l.b16 %v3576
    %v3654 = vunpack.c.h.b16 %v3576
    %v3655 = vunpack.c.l.b16 %v3577
    %v3656 = vunpack.c.h.b16 %v3577
    %v3657 = vunpack.c.l.b16 %v3578
    %v3658 = vunpack.c.h.b16 %v3578
    %v3659 = vunpack.c.l.b16 %v3579
    %v3660 = vunpack.c.h.b16 %v3579
    %v3661 = vunpack.c.l.b16 %v3580
    %v3662 = vunpack.c.h.b16 %v3580
    %v3663 = vunpack.c.l.b16 %v3581
    %v3664 = vunpack.c.h.b16 %v3581
    %v3665 = vunpack.c.l.b16 %v3582
    %v3666 = vunpack.c.h.b16 %v3582
    %v3667 = vunpack.c.l.b16 %v3583
    %v3668 = vunpack.c.h.b16 %v3583
    %v3669 = vunpack.c.l.b16 %v3584
    %v3670 = vunpack.c.h.b16 %v3584
    %v3671 = vunpack.c.l.b16 %v3585
    %v3672 = vunpack.c.h.b16 %v3585
    %v3673 = vunpack.c.l.b16 %v3586
    %v3674 = vunpack.c.h.b16 %v3586
    %v3675 = vunpack.c.l.b16 %v3587
    %v3676 = vunpack.c.h.b16 %v3587
    %v3677 = vunpack.c.l.b16 %v3588
    %v3678 = vunpack.c.h.b16 %v3588
    %v3679 = vunpack.c.l.b16 %v3589
    %v3680 = vunpack.c.h.b16 %v3589
    %v3681 = vunpack.c.l.b16 %v3590
    %v3682 = vunpack.c.h.b16 %v3590
    %v3683 = vunpack.c.l.b16 %v3591
    %v3684 = vunpack.c.h.b16 %v3591
    %v3685 = vunpack.c.l.b16 %v3592
    %v3686 = vunpack.c.h.b16 %v3592
    %v3687 = vunpack.c.l.b16 %v3593
    %v3688 = vunpack.c.h.b16 %v3593
    %v3689 = vunpack.c.l.b16 %v3594
    %v3690 = vunpack.c.h.b16 %v3594
    %v3691 = vpack.c.b16 %v3631, %v3627
    %v3692 = vpack.c.b16 %v3632, %v3628
    %v3693 = vpack.c.b16 %v3633, %v3629
    %v3694 = vpack.c.b16 %v3634, %v3630
    %v3695 = vpack.c.b16 %v3639, %v3635
    %v3696 = vpack.c.b16 %v3640, %v3636
    %v3697 = vpack.c.b16 %v3641, %v3637
    %v3698 = vpack.c.b16 %v3642, %v3638
    %v3699 = vpack.c.b16 %v3647, %v3643
    %v3700 = vpack.c.b16 %v3648, %v3644
    %v3701 = vpack.c.b16 %v3649, %v3645
    %v3702 = vpack.c.b16 %v3650, %v3646
    %v3703 = vpack.c.b16 %v3655, %v3651
    %v3704 = vpack.c.b16 %v3656, %v3652
    %v3705 = vpack.c.b16 %v3657, %v3653
    %v3706 = vpack.c.b16 %v3658, %v3654
    %v3707 = vpack.c.b16 %v3663, %v3659
    %v3708 = vpack.c.b16 %v3664, %v3660
    %v3709 = vpack.c.b16 %v3665, %v3661
    %v3710 = vpack.c.b16 %v3666, %v3662
    %v3711 = vpack.c.b16 %v3671, %v3667
    %v3712 = vpack.c.b16 %v3672, %v3668
    %v3713 = vpack.c.b16 %v3673, %v3669
    %v3714 = vpack.c.b16 %v3674, %v3670
    %v3715 = vpack.c.b16 %v3679, %v3675
    %v3716 = vpack.c.b16 %v3680, %v3676
    %v3717 = vpack.c.b16 %v3681, %v3677
    %v3718 = vpack.c.b16 %v3682, %v3678
    %v3719 = vpack.c.b16 %v3687, %v3683
    %v3720 = vpack.c.b16 %v3688, %v3684
    %v3721 = vpack.c.b16 %v3689, %v3685
    %v3722 = vpack.c.b16 %v3690, %v3686
    %3755 = vmatprep.subr.bf16.mxu0 %v3692
    %3756 = vmatpush1.bf16.msra.mxu0 %v3691
    %3757 = vmatprep.subr.bf16.mxu0 %v3696
    %3758 = vmatpush1.bf16.msra.mxu0 %v3695
    %3759 = vmatprep.subr.bf16.mxu0 %v3700
    %3760 = vmatpush1.bf16.msra.mxu0 %v3699
    %3761 = vmatprep.subr.bf16.mxu0 %v3704
    %3762 = vmatpush1.bf16.msra.mxu0 %v3703
    %3763 = vmatprep.subr.bf16.mxu0 %v3708
    %3764 = vmatpush1.bf16.msra.mxu0 %v3707
    %3765 = vmatprep.subr.bf16.mxu0 %v3712
    %3766 = vmatpush1.bf16.msra.mxu0 %v3711
    %3767 = vmatprep.subr.bf16.mxu0 %v3716
    %3768 = vmatpush1.bf16.msra.mxu0 %v3715
    %3769 = vmatprep.subr.bf16.mxu0 %v3720
    %3770 = vmatpush1.bf16.msra.mxu0 %v3719
    %3771 = vmatprep.subr.bf16.mxu0 0
    %3772 = vmatpush1.bf16.msra.mxu0 0
    %3773 = vmatprep.subr.bf16.mxu0 0
    %3774 = vmatpush1.bf16.msra.mxu0 0
    %3775 = vmatprep.subr.bf16.mxu0 0
    %3776 = vmatpush1.bf16.msra.mxu0 0
    %3777 = vmatprep.subr.bf16.mxu0 0
    %3778 = vmatpush1.bf16.msra.mxu0 0
    %3779 = vmatprep.subr.bf16.mxu0 0
    %3780 = vmatpush1.bf16.msra.mxu0 0
    %3781 = vmatprep.subr.bf16.mxu0 0
    %3782 = vmatpush1.bf16.msra.mxu0 0
    %3783 = vmatprep.subr.bf16.mxu0 0
    %3784 = vmatpush1.bf16.msra.mxu0 0
    %3785 = vmatprep.subr.bf16.mxu0 0
    %3786 = vmatpush1.bf16.msra.mxu0 0
    %3787 = vmatprep.mubr.bf16.mxu0 0
    %3788 = vmatmul.mubr.bf16.gmra.mrb[0].mxu0 %v3562
    %v3789 = vpop.f32.mrb[0].mxu0
    %v3790 = vadd.f32 0.0, %v3789
    %v3791 = vpop.f32.mrb[0].mxu0
    %v3792 = vadd.f32 0.0, %v3791
    %v3793 = vpop.f32.mrb[0].mxu0
    %v3794 = vpop.f32.mrb[0].mxu0
    %3795 = vdwg.mxu0
    %3796 = vmatprep.subr.bf16.mxu0 %v3694
    %3797 = vmatpush1.bf16.msra.mxu0 %v3693
    %3798 = vmatprep.subr.bf16.mxu0 %v3698
    %3799 = vmatpush1.bf16.msra.mxu0 %v3697
    %3800 = vmatprep.subr.bf16.mxu0 %v3702
    %3801 = vmatpush1.bf16.msra.mxu0 %v3701
    %3802 = vmatprep.subr.bf16.mxu0 %v3706
    %3803 = vmatpush1.bf16.msra.mxu0 %v3705
    %3804 = vmatprep.subr.bf16.mxu0 %v3710
    %3805 = vmatpush1.bf16.msra.mxu0 %v3709
    %3806 = vmatprep.subr.bf16.mxu0 %v3714
    %3807 = vmatpush1.bf16.msra.mxu0 %v3713
    %3808 = vmatprep.subr.bf16.mxu0 %v3718
    %3809 = vmatpush1.bf16.msra.mxu0 %v3717
    %3810 = vmatprep.subr.bf16.mxu0 %v3722
    %3811 = vmatpush1.bf16.msra.mxu0 %v3721
    %3812 = vmatprep.subr.bf16.mxu0 0
    %3813 = vmatpush1.bf16.msra.mxu0 0
    %3814 = vmatprep.subr.bf16.mxu0 0
    %3815 = vmatpush1.bf16.msra.mxu0 0
    %3816 = vmatprep.subr.bf16.mxu0 0
    %3817 = vmatpush1.bf16.msra.mxu0 0
    %3818 = vmatprep.subr.bf16.mxu0 0
    %3819 = vmatpush1.bf16.msra.mxu0 0
    %3820 = vmatprep.subr.bf16.mxu0 0
    %3821 = vmatpush1.bf16.msra.mxu0 0
    %3822 = vmatprep.subr.bf16.mxu0 0
    %3823 = vmatpush1.bf16.msra.mxu0 0
    %3824 = vmatprep.subr.bf16.mxu0 0
    %3825 = vmatpush1.bf16.msra.mxu0 0
    %3826 = vmatprep.subr.bf16.mxu0 0
    %3827 = vmatpush1.bf16.msra.mxu0 0
    %3828 = vmatprep.mubr.bf16.mxu0 0
    %3829 = vmatmul.mubr.bf16.gmra.mrb[0].mxu0 %v3562
    %v3830 = vpop.f32.mrb[0].mxu0
    %v3831 = vadd.f32 0.0, %v3830
    %v3832 = vpop.f32.mrb[0].mxu0
    %v3833 = vadd.f32 0.0, %v3832
    %v3834 = vpop.f32.mrb[0].mxu0
    %v3835 = vpop.f32.mrb[0].mxu0
    %3836 = vdwg.mxu0
    %v3837 = vadd.f32 %v3558, %v3790
    %v3838 = vadd.f32 %v3559, %v3792
    %v3839 = vadd.f32 %v3560, %v3831
    %v3840 = vadd.f32 %v3561, %v3833
    %v3841 = vld [vmem:[#allocation9] sm:$0xf]
    %v3843 = vlaneseq
    %v3844 = vshrl.u32 %v3843, 7
    %v3845 = vsub.s32 0, %v3844
    %v3846 = vrot.slane %v3841, %v3845
    %v3847 = vlaneseq
    %v3848 = vshrl.u32 %v3847, 7
    %v3849 = vsub.s32 1, %v3848
    %v3850 = vrot.slane %v3841, %v3849
    %v3851 = vlaneseq
    %v3852 = vshrl.u32 %v3851, 7
    %v3853 = vsub.s32 2, %v3852
    %v3854 = vrot.slane %v3841, %v3853
    %v3855 = vlaneseq
    %v3856 = vshrl.u32 %v3855, 7
    %v3857 = vsub.s32 3, %v3856
    %v3858 = vrot.slane %v3841, %v3857
    %v3863 = vadd.f32 %v3837, %v3846
    %v3864 = vadd.f32 %v3838, %v3850
    %v3865 = vadd.f32 %v3839, %v3854
    %v3866 = vadd.f32 %v3840, %v3858
    %v3867 = vsub.f32 0.0, %v3863
    %v3868 = vsub.f32 0.0, %v3864
    %v3869 = vsub.f32 0.0, %v3865
    %v3870 = vmul.f32 %v3867, 1.442695
    %v3871 = vpow.pop %v3870
    %v3872 = vmul.f32 %v3868, 1.442695
    %v3873 = vpow.pop %v3872
    %v3874 = vmul.f32 %v3869, 1.442695
    %v3875 = vpow.pop %v3874
    %v3876 = vadd.f32 %v3871, 1.0
    %v3877 = vadd.f32 %v3873, 1.0
    %v3878 = vadd.f32 %v3875, 1.0
    %v3879 = vrcp.pop %v3876
    %v3880 = vrcp.pop %v3877
    %v3881 = vrcp.pop %v3878
    %v3882 = vtanh.pop %v3866
    %v3883 = vld [vmem:[#allocation3] sm:$0xff]
    %v3884 = vmul.f32 %v3880, %v3883
    %v3885 = vmul.f32 %v3879, %v3882
    %v3886 = vadd.f32 %v3884, %v3885
    %v3887 = vtanh.pop %v3886
    %v3888 = vmul.f32 %v3881, %v3887
    %3889 = vst [vmem:[#allocation3] sm:$0xff] %v3886
    %v3890 = vpack.c.bf16 %v3888, %v3888
    %3891 = vst [vmem:[#allocation2 + $0x4] sm:$0xf] %v3890
    %3892 = vst [vmem:[%s452] sm:$0xf] %v3890
    %v3893 = vld [vmem:[%s452] sm:$0xff]
    %v3894 = vld [vmem:[%s455] sm:$0xff]
    %v3895 = vld [vmem:[%s455 + $0x8] sm:$0xff]
    %v3896 = vld [vmem:[%s455 + $0x10] sm:$0xff]
    %v3897 = vld [vmem:[%s455 + $0x18] sm:$0xff]
    %v3898 = vld [vmem:[%s455 + $0x20] sm:$0xff]
    %v3899 = vld [vmem:[%s455 + $0x28] sm:$0xff]
    %v3900 = vld [vmem:[%s455 + $0x30] sm:$0xff]
    %v3901 = vld [vmem:[%s455 + $0x38] sm:$0xff]
    %v3902 = vld [vmem:[%s455 + $0x40] sm:$0xff]
    %v3903 = vld [vmem:[%s455 + $0x48] sm:$0xff]
    %v3904 = vld [vmem:[%s455 + $0x50] sm:$0xff]
    %v3905 = vld [vmem:[%s455 + $0x58] sm:$0xff]
    %v3906 = vld [vmem:[%s455 + $0x60] sm:$0xff]
    %v3907 = vld [vmem:[%s455 + $0x68] sm:$0xff]
    %v3908 = vld [vmem:[%s455 + $0x70] sm:$0xff]
    %v3909 = vld [vmem:[%s455 + $0x78] sm:$0xff]
    %v3910 = vld [vmem:[%s455 + $0x80] sm:$0xff]
    %v3911 = vld [vmem:[%s455 + $0x88] sm:$0xff]
    %v3912 = vld [vmem:[%s455 + $0x90] sm:$0xff]
    %v3913 = vld [vmem:[%s455 + $0x98] sm:$0xff]
    %v3914 = vld [vmem:[%s455 + $0xa0] sm:$0xff]
    %v3915 = vld [vmem:[%s455 + $0xa8] sm:$0xff]
    %v3916 = vld [vmem:[%s455 + $0xb0] sm:$0xff]
    %v3917 = vld [vmem:[%s455 + $0xb8] sm:$0xff]
    %v3918 = vld [vmem:[%s455 + $0xc0] sm:$0xff]
    %v3919 = vld [vmem:[%s455 + $0xc8] sm:$0xff]
    %v3920 = vld [vmem:[%s455 + $0xd0] sm:$0xff]
    %v3921 = vld [vmem:[%s455 + $0xd8] sm:$0xff]
    %v3922 = vld [vmem:[%s455 + $0xe0] sm:$0xff]
    %v3923 = vld [vmem:[%s455 + $0xe8] sm:$0xff]
    %v3924 = vld [vmem:[%s455 + $0xf0] sm:$0xff]
    %v3925 = vld [vmem:[%s455 + $0xf8] sm:$0xff]
    %v3926 = vld [vmem:[%s455 + $0x100] sm:$0xff]
    %v3927 = vld [vmem:[%s455 + $0x108] sm:$0xff]
    %v3928 = vld [vmem:[%s455 + $0x110] sm:$0xff]
    %v3929 = vld [vmem:[%s455 + $0x118] sm:$0xff]
    %v3930 = vld [vmem:[%s455 + $0x120] sm:$0xff]
    %v3931 = vld [vmem:[%s455 + $0x128] sm:$0xff]
    %v3932 = vld [vmem:[%s455 + $0x130] sm:$0xff]
    %v3933 = vld [vmem:[%s455 + $0x138] sm:$0xff]
    %v3934 = vld [vmem:[%s455 + $0x140] sm:$0xff]
    %v3935 = vld [vmem:[%s455 + $0x148] sm:$0xff]
    %v3936 = vld [vmem:[%s455 + $0x150] sm:$0xff]
    %v3937 = vld [vmem:[%s455 + $0x158] sm:$0xff]
    %v3938 = vld [vmem:[%s455 + $0x160] sm:$0xff]
    %v3939 = vld [vmem:[%s455 + $0x168] sm:$0xff]
    %v3940 = vld [vmem:[%s455 + $0x170] sm:$0xff]
    %v3941 = vld [vmem:[%s455 + $0x178] sm:$0xff]
    %v3942 = vld [vmem:[%s455 + $0x180] sm:$0xff]
    %v3943 = vld [vmem:[%s455 + $0x188] sm:$0xff]
    %v3944 = vld [vmem:[%s455 + $0x190] sm:$0xff]
    %v3945 = vld [vmem:[%s455 + $0x198] sm:$0xff]
    %v3946 = vld [vmem:[%s455 + $0x1a0] sm:$0xff]
    %v3947 = vld [vmem:[%s455 + $0x1a8] sm:$0xff]
    %v3948 = vld [vmem:[%s455 + $0x1b0] sm:$0xff]
    %v3949 = vld [vmem:[%s455 + $0x1b8] sm:$0xff]
    %v3950 = vld [vmem:[%s455 + $0x1c0] sm:$0xff]
    %v3951 = vld [vmem:[%s455 + $0x1c8] sm:$0xff]
    %v3952 = vld [vmem:[%s455 + $0x1d0] sm:$0xff]
    %v3953 = vld [vmem:[%s455 + $0x1d8] sm:$0xff]
    %v3954 = vld [vmem:[%s455 + $0x1e0] sm:$0xff]
    %v3955 = vld [vmem:[%s455 + $0x1e8] sm:$0xff]
    %v3956 = vld [vmem:[%s455 + $0x1f0] sm:$0xff]
    %v3957 = vld [vmem:[%s455 + $0x1f8] sm:$0xff]
    %v3958 = vld [vmem:[%s520] sm:$0xf]
    %v3960 = vlaneseq
    %v3961 = vshrl.u32 %v3960, 7
    %v3962 = vsub.s32 0, %v3961
    %v3963 = vrot.slane %v3958, %v3962
    %v3964 = vlaneseq
    %v3965 = vshrl.u32 %v3964, 7
    %v3966 = vsub.s32 1, %v3965
    %v3967 = vrot.slane %v3958, %v3966
    %v3968 = vlaneseq
    %v3969 = vshrl.u32 %v3968, 7
    %v3970 = vsub.s32 2, %v3969
    %v3971 = vrot.slane %v3958, %v3970
    %v3972 = vlaneseq
    %v3973 = vshrl.u32 %v3972, 7
    %v3974 = vsub.s32 3, %v3973
    %v3975 = vrot.slane %v3958, %v3974
    %v3981 = vunpack.c.l.b16 %v3893
    %v3982 = vunpack.c.h.b16 %v3893
    %v3983 = vpack.c.b16 %v3981, %v3981
    %v3984 = vpack.c.b16 %v3982, %v3982
    %v4051 = vunpack.c.l.b16 %v3894
    %v4052 = vunpack.c.h.b16 %v3894
    %v4053 = vunpack.c.l.b16 %v3895
    %v4054 = vunpack.c.h.b16 %v3895
    %v4055 = vunpack.c.l.b16 %v3896
    %v4056 = vunpack.c.h.b16 %v3896
    %v4057 = vunpack.c.l.b16 %v3897
    %v4058 = vunpack.c.h.b16 %v3897
    %v4059 = vunpack.c.l.b16 %v3898
    %v4060 = vunpack.c.h.b16 %v3898
    %v4061 = vunpack.c.l.b16 %v3899
    %v4062 = vunpack.c.h.b16 %v3899
    %v4063 = vunpack.c.l.b16 %v3900
    %v4064 = vunpack.c.h.b16 %v3900
    %v4065 = vunpack.c.l.b16 %v3901
    %v4066 = vunpack.c.h.b16 %v3901
    %v4067 = vunpack.c.l.b16 %v3902
    %v4068 = vunpack.c.h.b16 %v3902
    %v4069 = vunpack.c.l.b16 %v3903
    %v4070 = vunpack.c.h.b16 %v3903
    %v4071 = vunpack.c.l.b16 %v3904
    %v4072 = vunpack.c.h.b16 %v3904
    %v4073 = vunpack.c.l.b16 %v3905
    %v4074 = vunpack.c.h.b16 %v3905
    %v4075 = vunpack.c.l.b16 %v3906
    %v4076 = vunpack.c.h.b16 %v3906
    %v4077 = vunpack.c.l.b16 %v3907
    %v4078 = vunpack.c.h.b16 %v3907
    %v4079 = vunpack.c.l.b16 %v3908
    %v4080 = vunpack.c.h.b16 %v3908
    %v4081 = vunpack.c.l.b16 %v3909
    %v4082 = vunpack.c.h.b16 %v3909
    %v4083 = vunpack.c.l.b16 %v3910
    %v4084 = vunpack.c.h.b16 %v3910
    %v4085 = vunpack.c.l.b16 %v3911
    %v4086 = vunpack.c.h.b16 %v3911
    %v4087 = vunpack.c.l.b16 %v3912
    %v4088 = vunpack.c.h.b16 %v3912
    %v4089 = vunpack.c.l.b16 %v3913
    %v4090 = vunpack.c.h.b16 %v3913
    %v4091 = vunpack.c.l.b16 %v3914
    %v4092 = vunpack.c.h.b16 %v3914
    %v4093 = vunpack.c.l.b16 %v3915
    %v4094 = vunpack.c.h.b16 %v3915
    %v4095 = vunpack.c.l.b16 %v3916
    %v4096 = vunpack.c.h.b16 %v3916
    %v4097 = vunpack.c.l.b16 %v3917
    %v4098 = vunpack.c.h.b16 %v3917
    %v4099 = vunpack.c.l.b16 %v3918
    %v4100 = vunpack.c.h.b16 %v3918
    %v4101 = vunpack.c.l.b16 %v3919
    %v4102 = vunpack.c.h.b16 %v3919
    %v4103 = vunpack.c.l.b16 %v3920
    %v4104 = vunpack.c.h.b16 %v3920
    %v4105 = vunpack.c.l.b16 %v3921
    %v4106 = vunpack.c.h.b16 %v3921
    %v4107 = vunpack.c.l.b16 %v3922
    %v4108 = vunpack.c.h.b16 %v3922
    %v4109 = vunpack.c.l.b16 %v3923
    %v4110 = vunpack.c.h.b16 %v3923
    %v4111 = vunpack.c.l.b16 %v3924
    %v4112 = vunpack.c.h.b16 %v3924
    %v4113 = vunpack.c.l.b16 %v3925
    %v4114 = vunpack.c.h.b16 %v3925
    %v4115 = vunpack.c.l.b16 %v3926
    %v4116 = vunpack.c.h.b16 %v3926
    %v4117 = vunpack.c.l.b16 %v3927
    %v4118 = vunpack.c.h.b16 %v3927
    %v4119 = vunpack.c.l.b16 %v3928
    %v4120 = vunpack.c.h.b16 %v3928
    %v4121 = vunpack.c.l.b16 %v3929
    %v4122 = vunpack.c.h.b16 %v3929
    %v4123 = vunpack.c.l.b16 %v3930
    %v4124 = vunpack.c.h.b16 %v3930
    %v4125 = vunpack.c.l.b16 %v3931
    %v4126 = vunpack.c.h.b16 %v3931
    %v4127 = vunpack.c.l.b16 %v3932
    %v4128 = vunpack.c.h.b16 %v3932
    %v4129 = vunpack.c.l.b16 %v3933
    %v4130 = vunpack.c.h.b16 %v3933
    %v4131 = vunpack.c.l.b16 %v3934
    %v4132 = vunpack.c.h.b16 %v3934
    %v4133 = vunpack.c.l.b16 %v3935
    %v4134 = vunpack.c.h.b16 %v3935
    %v4135 = vunpack.c.l.b16 %v3936
    %v4136 = vunpack.c.h.b16 %v3936
    %v4137 = vunpack.c.l.b16 %v3937
    %v4138 = vunpack.c.h.b16 %v3937
    %v4139 = vunpack.c.l.b16 %v3938
    %v4140 = vunpack.c.h.b16 %v3938
    %v4141 = vunpack.c.l.b16 %v3939
    %v4142 = vunpack.c.h.b16 %v3939
    %v4143 = vunpack.c.l.b16 %v3940
    %v4144 = vunpack.c.h.b16 %v3940
    %v4145 = vunpack.c.l.b16 %v3941
    %v4146 = vunpack.c.h.b16 %v3941
    %v4147 = vunpack.c.l.b16 %v3942
    %v4148 = vunpack.c.h.b16 %v3942
    %v4149 = vunpack.c.l.b16 %v3943
    %v4150 = vunpack.c.h.b16 %v3943
    %v4151 = vunpack.c.l.b16 %v3944
    %v4152 = vunpack.c.h.b16 %v3944
    %v4153 = vunpack.c.l.b16 %v3945
    %v4154 = vunpack.c.h.b16 %v3945
    %v4155 = vunpack.c.l.b16 %v3946
    %v4156 = vunpack.c.h.b16 %v3946
    %v4157 = vunpack.c.l.b16 %v3947
    %v4158 = vunpack.c.h.b16 %v3947
    %v4159 = vunpack.c.l.b16 %v3948
    %v4160 = vunpack.c.h.b16 %v3948
    %v4161 = vunpack.c.l.b16 %v3949
    %v4162 = vunpack.c.h.b16 %v3949
    %v4163 = vunpack.c.l.b16 %v3950
    %v4164 = vunpack.c.h.b16 %v3950
    %v4165 = vunpack.c.l.b16 %v3951
    %v4166 = vunpack.c.h.b16 %v3951
    %v4167 = vunpack.c.l.b16 %v3952
    %v4168 = vunpack.c.h.b16 %v3952
    %v4169 = vunpack.c.l.b16 %v3953
    %v4170 = vunpack.c.h.b16 %v3953
    %v4171 = vunpack.c.l.b16 %v3954
    %v4172 = vunpack.c.h.b16 %v3954
    %v4173 = vunpack.c.l.b16 %v3955
    %v4174 = vunpack.c.h.b16 %v3955
    %v4175 = vunpack.c.l.b16 %v3956
    %v4176 = vunpack.c.h.b16 %v3956
    %v4177 = vunpack.c.l.b16 %v3957
    %v4178 = vunpack.c.h.b16 %v3957
    %v4179 = vpack.c.b16 %v4055, %v4051
    %v4180 = vpack.c.b16 %v4056, %v4052
    %v4181 = vpack.c.b16 %v4057, %v4053
    %v4182 = vpack.c.b16 %v4058, %v4054
    %v4183 = vpack.c.b16 %v4063, %v4059
    %v4184 = vpack.c.b16 %v4064, %v4060
    %v4185 = vpack.c.b16 %v4065, %v4061
    %v4186 = vpack.c.b16 %v4066, %v4062
    %v4187 = vpack.c.b16 %v4071, %v4067
    %v4188 = vpack.c.b16 %v4072, %v4068
    %v4189 = vpack.c.b16 %v4073, %v4069
    %v4190 = vpack.c.b16 %v4074, %v4070
    %v4191 = vpack.c.b16 %v4079, %v4075
    %v4192 = vpack.c.b16 %v4080, %v4076
    %v4193 = vpack.c.b16 %v4081, %v4077
    %v4194 = vpack.c.b16 %v4082, %v4078
    %v4195 = vpack.c.b16 %v4087, %v4083
    %v4196 = vpack.c.b16 %v4088, %v4084
    %v4197 = vpack.c.b16 %v4089, %v4085
    %v4198 = vpack.c.b16 %v4090, %v4086
    %v4199 = vpack.c.b16 %v4095, %v4091
    %v4200 = vpack.c.b16 %v4096, %v4092
    %v4201 = vpack.c.b16 %v4097, %v4093
    %v4202 = vpack.c.b16 %v4098, %v4094
    %v4203 = vpack.c.b16 %v4103, %v4099
    %v4204 = vpack.c.b16 %v4104, %v4100
    %v4205 = vpack.c.b16 %v4105, %v4101
    %v4206 = vpack.c.b16 %v4106, %v4102
    %v4207 = vpack.c.b16 %v4111, %v4107
    %v4208 = vpack.c.b16 %v4112, %v4108
    %v4209 = vpack.c.b16 %v4113, %v4109
    %v4210 = vpack.c.b16 %v4114, %v4110
    %v4211 = vpack.c.b16 %v4119, %v4115
    %v4212 = vpack.c.b16 %v4120, %v4116
    %v4213 = vpack.c.b16 %v4121, %v4117
    %v4214 = vpack.c.b16 %v4122, %v4118
    %v4215 = vpack.c.b16 %v4127, %v4123
    %v4216 = vpack.c.b16 %v4128, %v4124
    %v4217 = vpack.c.b16 %v4129, %v4125
    %v4218 = vpack.c.b16 %v4130, %v4126
    %v4219 = vpack.c.b16 %v4135, %v4131
    %v4220 = vpack.c.b16 %v4136, %v4132
    %v4221 = vpack.c.b16 %v4137, %v4133
    %v4222 = vpack.c.b16 %v4138, %v4134
    %v4223 = vpack.c.b16 %v4143, %v4139
    %v4224 = vpack.c.b16 %v4144, %v4140
    %v4225 = vpack.c.b16 %v4145, %v4141
    %v4226 = vpack.c.b16 %v4146, %v4142
    %v4227 = vpack.c.b16 %v4151, %v4147
    %v4228 = vpack.c.b16 %v4152, %v4148
    %v4229 = vpack.c.b16 %v4153, %v4149
    %v4230 = vpack.c.b16 %v4154, %v4150
    %v4231 = vpack.c.b16 %v4159, %v4155
    %v4232 = vpack.c.b16 %v4160, %v4156
    %v4233 = vpack.c.b16 %v4161, %v4157
    %v4234 = vpack.c.b16 %v4162, %v4158
    %v4235 = vpack.c.b16 %v4167, %v4163
    %v4236 = vpack.c.b16 %v4168, %v4164
    %v4237 = vpack.c.b16 %v4169, %v4165
    %v4238 = vpack.c.b16 %v4170, %v4166
    %v4239 = vpack.c.b16 %v4175, %v4171
    %v4240 = vpack.c.b16 %v4176, %v4172
    %v4241 = vpack.c.b16 %v4177, %v4173
    %v4242 = vpack.c.b16 %v4178, %v4174
    %4307 = vmatprep.subr.bf16.mxu0 %v4180
    %4308 = vmatpush1.bf16.msra.mxu0 %v4179
    %4309 = vmatprep.subr.bf16.mxu0 %v4184
    %4310 = vmatpush1.bf16.msra.mxu0 %v4183
    %4311 = vmatprep.subr.bf16.mxu0 %v4188
    %4312 = vmatpush1.bf16.msra.mxu0 %v4187
    %4313 = vmatprep.subr.bf16.mxu0 %v4192
    %4314 = vmatpush1.bf16.msra.mxu0 %v4191
    %4315 = vmatprep.subr.bf16.mxu0 %v4196
    %4316 = vmatpush1.bf16.msra.mxu0 %v4195
    %4317 = vmatprep.subr.bf16.mxu0 %v4200
    %4318 = vmatpush1.bf16.msra.mxu0 %v4199
    %4319 = vmatprep.subr.bf16.mxu0 %v4204
    %4320 = vmatpush1.bf16.msra.mxu0 %v4203
    %4321 = vmatprep.subr.bf16.mxu0 %v4208
    %4322 = vmatpush1.bf16.msra.mxu0 %v4207
    %4323 = vmatprep.subr.bf16.mxu0 %v4212
    %4324 = vmatpush1.bf16.msra.mxu0 %v4211
    %4325 = vmatprep.subr.bf16.mxu0 %v4216
    %4326 = vmatpush1.bf16.msra.mxu0 %v4215
    %4327 = vmatprep.subr.bf16.mxu0 %v4220
    %4328 = vmatpush1.bf16.msra.mxu0 %v4219
    %4329 = vmatprep.subr.bf16.mxu0 %v4224
    %4330 = vmatpush1.bf16.msra.mxu0 %v4223
    %4331 = vmatprep.subr.bf16.mxu0 %v4228
    %4332 = vmatpush1.bf16.msra.mxu0 %v4227
    %4333 = vmatprep.subr.bf16.mxu0 %v4232
    %4334 = vmatpush1.bf16.msra.mxu0 %v4231
    %4335 = vmatprep.subr.bf16.mxu0 %v4236
    %4336 = vmatpush1.bf16.msra.mxu0 %v4235
    %4337 = vmatprep.subr.bf16.mxu0 %v4240
    %4338 = vmatpush1.bf16.msra.mxu0 %v4239
    %4339 = vmatprep.mubr.bf16.mxu0 %v3984
    %4340 = vmatmul.mubr.bf16.gmra.mrb[0].mxu0 %v3983
    %v4341 = vpop.f32.mrb[0].mxu0
    %v4342 = vadd.f32 %v3963, %v4341
    %v4343 = vpop.f32.mrb[0].mxu0
    %v4344 = vadd.f32 %v3967, %v4343
    %v4345 = vpop.f32.mrb[0].mxu0
    %v4346 = vpop.f32.mrb[0].mxu0
    %4347 = vdwg.mxu0
    %4348 = vmatprep.subr.bf16.mxu0 %v4182
    %4349 = vmatpush1.bf16.msra.mxu0 %v4181
    %4350 = vmatprep.subr.bf16.mxu0 %v4186
    %4351 = vmatpush1.bf16.msra.mxu0 %v4185
    %4352 = vmatprep.subr.bf16.mxu0 %v4190
    %4353 = vmatpush1.bf16.msra.mxu0 %v4189
    %4354 = vmatprep.subr.bf16.mxu0 %v4194
    %4355 = vmatpush1.bf16.msra.mxu0 %v4193
    %4356 = vmatprep.subr.bf16.mxu0 %v4198
    %4357 = vmatpush1.bf16.msra.mxu0 %v4197
    %4358 = vmatprep.subr.bf16.mxu0 %v4202
    %4359 = vmatpush1.bf16.msra.mxu0 %v4201
    %4360 = vmatprep.subr.bf16.mxu0 %v4206
    %4361 = vmatpush1.bf16.msra.mxu0 %v4205
    %4362 = vmatprep.subr.bf16.mxu0 %v4210
    %4363 = vmatpush1.bf16.msra.mxu0 %v4209
    %4364 = vmatprep.subr.bf16.mxu0 %v4214
    %4365 = vmatpush1.bf16.msra.mxu0 %v4213
    %4366 = vmatprep.subr.bf16.mxu0 %v4218
    %4367 = vmatpush1.bf16.msra.mxu0 %v4217
    %4368 = vmatprep.subr.bf16.mxu0 %v4222
    %4369 = vmatpush1.bf16.msra.mxu0 %v4221
    %4370 = vmatprep.subr.bf16.mxu0 %v4226
    %4371 = vmatpush1.bf16.msra.mxu0 %v4225
    %4372 = vmatprep.subr.bf16.mxu0 %v4230
    %4373 = vmatpush1.bf16.msra.mxu0 %v4229
    %4374 = vmatprep.subr.bf16.mxu0 %v4234
    %4375 = vmatpush1.bf16.msra.mxu0 %v4233
    %4376 = vmatprep.subr.bf16.mxu0 %v4238
    %4377 = vmatpush1.bf16.msra.mxu0 %v4237
    %4378 = vmatprep.subr.bf16.mxu0 %v4242
    %4379 = vmatpush1.bf16.msra.mxu0 %v4241
    %4380 = vmatprep.mubr.bf16.mxu0 %v3984
    %4381 = vmatmul.mubr.bf16.gmra.mrb[0].mxu0 %v3983
    %v4382 = vpop.f32.mrb[0].mxu0
    %v4383 = vadd.f32 %v3971, %v4382
    %v4384 = vpop.f32.mrb[0].mxu0
    %v4385 = vadd.f32 %v3975, %v4384
    %v4386 = vpop.f32.mrb[0].mxu0
    %v4387 = vpop.f32.mrb[0].mxu0
    %4388 = vdwg.mxu0
    %v4389 = vsub.f32 0.0, %v4342
    %v4390 = vsub.f32 0.0, %v4344
    %v4391 = vsub.f32 0.0, %v4383
    %v4392 = vmul.f32 %v4389, 1.442695
    %v4393 = vpow.pop %v4392
    %v4394 = vmul.f32 %v4390, 1.442695
    %v4395 = vpow.pop %v4394
    %v4396 = vmul.f32 %v4391, 1.442695
    %v4397 = vpow.pop %v4396
    %v4398 = vadd.f32 %v4393, 1.0
    %v4399 = vadd.f32 %v4395, 1.0
    %v4400 = vadd.f32 %v4397, 1.0
    %v4401 = vrcp.pop %v4398
    %v4402 = vrcp.pop %v4399
    %v4403 = vrcp.pop %v4400
    %v4404 = vtanh.pop %v4385
    %v4405 = vld [vmem:[%s968] sm:$0xff]
    %v4406 = vmul.f32 %v4402, %v4405
    %v4407 = vmul.f32 %v4401, %v4404
    %v4408 = vadd.f32 %v4406, %v4407
    %v4409 = vtanh.pop %v4408
    %v4410 = vmul.f32 %v4403, %v4409
    %4411 = vst [vmem:[%s968] sm:$0xff] %v4408
    %v4412 = vpack.c.bf16 %v4410, %v4410
    %4413 = vst [vmem:[%s452 + $0x4] sm:$0xf] %v4412
    %s4414 = scalar_lea.vmem [#allocation4], 80
    %v4415 = vld [vmem:[%s4414] sm:$0xff]
    %v4416 = vld [vmem:[%s4414 + $0x8] sm:$0xff]
    %v4417 = vunpack.c.l.bf16 %v4415
    %v4418 = vunpack.c.h.bf16 %v4415
    %v4419 = vunpack.c.l.bf16 %v4416
    %v4420 = vunpack.c.h.bf16 %v4416
    %v4421 = vld [vmem:[#allocation2 + $0x4] sm:$0xf]
    %v4422 = vld [vmem:[#allocation7 + $0x100] sm:$0xff]
    %v4423 = vld [vmem:[#allocation7 + $0x108] sm:$0xff]
    %v4424 = vld [vmem:[#allocation7 + $0x110] sm:$0xff]
    %v4425 = vld [vmem:[#allocation7 + $0x118] sm:$0xff]
    %v4426 = vld [vmem:[#allocation7 + $0x120] sm:$0xff]
    %v4427 = vld [vmem:[#allocation7 + $0x128] sm:$0xff]
    %v4428 = vld [vmem:[#allocation7 + $0x130] sm:$0xff]
    %v4429 = vld [vmem:[#allocation7 + $0x138] sm:$0xff]
    %v4430 = vld [vmem:[#allocation7 + $0x140] sm:$0xff]
    %v4431 = vld [vmem:[#allocation7 + $0x148] sm:$0xff]
    %v4432 = vld [vmem:[#allocation7 + $0x150] sm:$0xff]
    %v4433 = vld [vmem:[#allocation7 + $0x158] sm:$0xff]
    %v4434 = vld [vmem:[#allocation7 + $0x160] sm:$0xff]
    %v4435 = vld [vmem:[#allocation7 + $0x168] sm:$0xff]
    %v4436 = vld [vmem:[#allocation7 + $0x170] sm:$0xff]
    %v4437 = vld [vmem:[#allocation7 + $0x178] sm:$0xff]
    %v4438 = vld [vmem:[#allocation7 + $0x180] sm:$0xff]
    %v4439 = vld [vmem:[#allocation7 + $0x188] sm:$0xff]
    %v4440 = vld [vmem:[#allocation7 + $0x190] sm:$0xff]
    %v4441 = vld [vmem:[#allocation7 + $0x198] sm:$0xff]
    %v4442 = vld [vmem:[#allocation7 + $0x1a0] sm:$0xff]
    %v4443 = vld [vmem:[#allocation7 + $0x1a8] sm:$0xff]
    %v4444 = vld [vmem:[#allocation7 + $0x1b0] sm:$0xff]
    %v4445 = vld [vmem:[#allocation7 + $0x1b8] sm:$0xff]
    %v4446 = vld [vmem:[#allocation7 + $0x1c0] sm:$0xff]
    %v4447 = vld [vmem:[#allocation7 + $0x1c8] sm:$0xff]
    %v4448 = vld [vmem:[#allocation7 + $0x1d0] sm:$0xff]
    %v4449 = vld [vmem:[#allocation7 + $0x1d8] sm:$0xff]
    %v4450 = vld [vmem:[#allocation7 + $0x1e0] sm:$0xff]
    %v4451 = vld [vmem:[#allocation7 + $0x1e8] sm:$0xff]
    %v4452 = vld [vmem:[#allocation7 + $0x1f0] sm:$0xff]
    %v4453 = vld [vmem:[#allocation7 + $0x1f8] sm:$0xff]
    %v4486 = vunpack.c.l.b16 %v4422
    %v4487 = vunpack.c.h.b16 %v4422
    %v4488 = vunpack.c.l.b16 %v4423
    %v4489 = vunpack.c.h.b16 %v4423
    %v4490 = vunpack.c.l.b16 %v4424
    %v4491 = vunpack.c.h.b16 %v4424
    %v4492 = vunpack.c.l.b16 %v4425
    %v4493 = vunpack.c.h.b16 %v4425
    %v4494 = vunpack.c.l.b16 %v4426
    %v4495 = vunpack.c.h.b16 %v4426
    %v4496 = vunpack.c.l.b16 %v4427
    %v4497 = vunpack.c.h.b16 %v4427
    %v4498 = vunpack.c.l.b16 %v4428
    %v4499 = vunpack.c.h.b16 %v4428
    %v4500 = vunpack.c.l.b16 %v4429
    %v4501 = vunpack.c.h.b16 %v4429
    %v4502 = vunpack.c.l.b16 %v4430
    %v4503 = vunpack.c.h.b16 %v4430
    %v4504 = vunpack.c.l.b16 %v4431
    %v4505 = vunpack.c.h.b16 %v4431
    %v4506 = vunpack.c.l.b16 %v4432
    %v4507 = vunpack.c.h.b16 %v4432
    %v4508 = vunpack.c.l.b16 %v4433
    %v4509 = vunpack.c.h.b16 %v4433
    %v4510 = vunpack.c.l.b16 %v4434
    %v4511 = vunpack.c.h.b16 %v4434
    %v4512 = vunpack.c.l.b16 %v4435
    %v4513 = vunpack.c.h.b16 %v4435
    %v4514 = vunpack.c.l.b16 %v4436
    %v4515 = vunpack.c.h.b16 %v4436
    %v4516 = vunpack.c.l.b16 %v4437
    %v4517 = vunpack.c.h.b16 %v4437
    %v4518 = vunpack.c.l.b16 %v4438
    %v4519 = vunpack.c.h.b16 %v4438
    %v4520 = vunpack.c.l.b16 %v4439
    %v4521 = vunpack.c.h.b16 %v4439
    %v4522 = vunpack.c.l.b16 %v4440
    %v4523 = vunpack.c.h.b16 %v4440
    %v4524 = vunpack.c.l.b16 %v4441
    %v4525 = vunpack.c.h.b16 %v4441
    %v4526 = vunpack.c.l.b16 %v4442
    %v4527 = vunpack.c.h.b16 %v4442
    %v4528 = vunpack.c.l.b16 %v4443
    %v4529 = vunpack.c.h.b16 %v4443
    %v4530 = vunpack.c.l.b16 %v4444
    %v4531 = vunpack.c.h.b16 %v4444
    %v4532 = vunpack.c.l.b16 %v4445
    %v4533 = vunpack.c.h.b16 %v4445
    %v4534 = vunpack.c.l.b16 %v4446
    %v4535 = vunpack.c.h.b16 %v4446
    %v4536 = vunpack.c.l.b16 %v4447
    %v4537 = vunpack.c.h.b16 %v4447
    %v4538 = vunpack.c.l.b16 %v4448
    %v4539 = vunpack.c.h.b16 %v4448
    %v4540 = vunpack.c.l.b16 %v4449
    %v4541 = vunpack.c.h.b16 %v4449
    %v4542 = vunpack.c.l.b16 %v4450
    %v4543 = vunpack.c.h.b16 %v4450
    %v4544 = vunpack.c.l.b16 %v4451
    %v4545 = vunpack.c.h.b16 %v4451
    %v4546 = vunpack.c.l.b16 %v4452
    %v4547 = vunpack.c.h.b16 %v4452
    %v4548 = vunpack.c.l.b16 %v4453
    %v4549 = vunpack.c.h.b16 %v4453
    %v4550 = vpack.c.b16 %v4490, %v4486
    %v4551 = vpack.c.b16 %v4491, %v4487
    %v4552 = vpack.c.b16 %v4492, %v4488
    %v4553 = vpack.c.b16 %v4493, %v4489
    %v4554 = vpack.c.b16 %v4498, %v4494
    %v4555 = vpack.c.b16 %v4499, %v4495
    %v4556 = vpack.c.b16 %v4500, %v4496
    %v4557 = vpack.c.b16 %v4501, %v4497
    %v4558 = vpack.c.b16 %v4506, %v4502
    %v4559 = vpack.c.b16 %v4507, %v4503
    %v4560 = vpack.c.b16 %v4508, %v4504
    %v4561 = vpack.c.b16 %v4509, %v4505
    %v4562 = vpack.c.b16 %v4514, %v4510
    %v4563 = vpack.c.b16 %v4515, %v4511
    %v4564 = vpack.c.b16 %v4516, %v4512
    %v4565 = vpack.c.b16 %v4517, %v4513
    %v4566 = vpack.c.b16 %v4522, %v4518
    %v4567 = vpack.c.b16 %v4523, %v4519
    %v4568 = vpack.c.b16 %v4524, %v4520
    %v4569 = vpack.c.b16 %v4525, %v4521
    %v4570 = vpack.c.b16 %v4530, %v4526
    %v4571 = vpack.c.b16 %v4531, %v4527
    %v4572 = vpack.c.b16 %v4532, %v4528
    %v4573 = vpack.c.b16 %v4533, %v4529
    %v4574 = vpack.c.b16 %v4538, %v4534
    %v4575 = vpack.c.b16 %v4539, %v4535
    %v4576 = vpack.c.b16 %v4540, %v4536
    %v4577 = vpack.c.b16 %v4541, %v4537
    %v4578 = vpack.c.b16 %v4546, %v4542
    %v4579 = vpack.c.b16 %v4547, %v4543
    %v4580 = vpack.c.b16 %v4548, %v4544
    %v4581 = vpack.c.b16 %v4549, %v4545
    %4614 = vmatprep.subr.bf16.mxu0 %v4551
    %4615 = vmatpush1.bf16.msra.mxu0 %v4550
    %4616 = vmatprep.subr.bf16.mxu0 %v4555
    %4617 = vmatpush1.bf16.msra.mxu0 %v4554
    %4618 = vmatprep.subr.bf16.mxu0 %v4559
    %4619 = vmatpush1.bf16.msra.mxu0 %v4558
    %4620 = vmatprep.subr.bf16.mxu0 %v4563
    %4621 = vmatpush1.bf16.msra.mxu0 %v4562
    %4622 = vmatprep.subr.bf16.mxu0 %v4567
    %4623 = vmatpush1.bf16.msra.mxu0 %v4566
    %4624 = vmatprep.subr.bf16.mxu0 %v4571
    %4625 = vmatpush1.bf16.msra.mxu0 %v4570
    %4626 = vmatprep.subr.bf16.mxu0 %v4575
    %4627 = vmatpush1.bf16.msra.mxu0 %v4574
    %4628 = vmatprep.subr.bf16.mxu0 %v4579
    %4629 = vmatpush1.bf16.msra.mxu0 %v4578
    %4630 = vmatprep.subr.bf16.mxu0 0
    %4631 = vmatpush1.bf16.msra.mxu0 0
    %4632 = vmatprep.subr.bf16.mxu0 0
    %4633 = vmatpush1.bf16.msra.mxu0 0
    %4634 = vmatprep.subr.bf16.mxu0 0
    %4635 = vmatpush1.bf16.msra.mxu0 0
    %4636 = vmatprep.subr.bf16.mxu0 0
    %4637 = vmatpush1.bf16.msra.mxu0 0
    %4638 = vmatprep.subr.bf16.mxu0 0
    %4639 = vmatpush1.bf16.msra.mxu0 0
    %4640 = vmatprep.subr.bf16.mxu0 0
    %4641 = vmatpush1.bf16.msra.mxu0 0
    %4642 = vmatprep.subr.bf16.mxu0 0
    %4643 = vmatpush1.bf16.msra.mxu0 0
    %4644 = vmatprep.subr.bf16.mxu0 0
    %4645 = vmatpush1.bf16.msra.mxu0 0
    %4646 = vmatprep.mubr.bf16.mxu0 0
    %4647 = vmatmul.mubr.bf16.gmra.mrb[0].mxu0 %v4421
    %v4648 = vpop.f32.mrb[0].mxu0
    %v4649 = vadd.f32 0.0, %v4648
    %v4650 = vpop.f32.mrb[0].mxu0
    %v4651 = vadd.f32 0.0, %v4650
    %v4652 = vpop.f32.mrb[0].mxu0
    %v4653 = vpop.f32.mrb[0].mxu0
    %4654 = vdwg.mxu0
    %4655 = vmatprep.subr.bf16.mxu0 %v4553
    %4656 = vmatpush1.bf16.msra.mxu0 %v4552
    %4657 = vmatprep.subr.bf16.mxu0 %v4557
    %4658 = vmatpush1.bf16.msra.mxu0 %v4556
    %4659 = vmatprep.subr.bf16.mxu0 %v4561
    %4660 = vmatpush1.bf16.msra.mxu0 %v4560
    %4661 = vmatprep.subr.bf16.mxu0 %v4565
    %4662 = vmatpush1.bf16.msra.mxu0 %v4564
    %4663 = vmatprep.subr.bf16.mxu0 %v4569
    %4664 = vmatpush1.bf16.msra.mxu0 %v4568
    %4665 = vmatprep.subr.bf16.mxu0 %v4573
    %4666 = vmatpush1.bf16.msra.mxu0 %v4572
    %4667 = vmatprep.subr.bf16.mxu0 %v4577
    %4668 = vmatpush1.bf16.msra.mxu0 %v4576
    %4669 = vmatprep.subr.bf16.mxu0 %v4581
    %4670 = vmatpush1.bf16.msra.mxu0 %v4580
    %4671 = vmatprep.subr.bf16.mxu0 0
    %4672 = vmatpush1.bf16.msra.mxu0 0
    %4673 = vmatprep.subr.bf16.mxu0 0
    %4674 = vmatpush1.bf16.msra.mxu0 0
    %4675 = vmatprep.subr.bf16.mxu0 0
    %4676 = vmatpush1.bf16.msra.mxu0 0
    %4677 = vmatprep.subr.bf16.mxu0 0
    %4678 = vmatpush1.bf16.msra.mxu0 0
    %4679 = vmatprep.subr.bf16.mxu0 0
    %4680 = vmatpush1.bf16.msra.mxu0 0
    %4681 = vmatprep.subr.bf16.mxu0 0
    %4682 = vmatpush1.bf16.msra.mxu0 0
    %4683 = vmatprep.subr.bf16.mxu0 0
    %4684 = vmatpush1.bf16.msra.mxu0 0
    %4685 = vmatprep.subr.bf16.mxu0 0
    %4686 = vmatpush1.bf16.msra.mxu0 0
    %4687 = vmatprep.mubr.bf16.mxu0 0
    %4688 = vmatmul.mubr.bf16.gmra.mrb[0].mxu0 %v4421
    %v4689 = vpop.f32.mrb[0].mxu0
    %v4690 = vadd.f32 0.0, %v4689
    %v4691 = vpop.f32.mrb[0].mxu0
    %v4692 = vadd.f32 0.0, %v4691
    %v4693 = vpop.f32.mrb[0].mxu0
    %v4694 = vpop.f32.mrb[0].mxu0
    %4695 = vdwg.mxu0
    %v4696 = vadd.f32 %v4417, %v4649
    %v4697 = vadd.f32 %v4418, %v4651
    %v4698 = vadd.f32 %v4419, %v4690
    %v4699 = vadd.f32 %v4420, %v4692
    %v4700 = vld [vmem:[#allocation9] sm:$0xf]
    %v4702 = vlaneseq
    %v4703 = vshrl.u32 %v4702, 7
    %v4704 = vsub.s32 0, %v4703
    %v4705 = vrot.slane %v4700, %v4704
    %v4706 = vlaneseq
    %v4707 = vshrl.u32 %v4706, 7
    %v4708 = vsub.s32 1, %v4707
    %v4709 = vrot.slane %v4700, %v4708
    %v4710 = vlaneseq
    %v4711 = vshrl.u32 %v4710, 7
    %v4712 = vsub.s32 2, %v4711
    %v4713 = vrot.slane %v4700, %v4712
    %v4714 = vlaneseq
    %v4715 = vshrl.u32 %v4714, 7
    %v4716 = vsub.s32 3, %v4715
    %v4717 = vrot.slane %v4700, %v4716
    %v4722 = vadd.f32 %v4696, %v4705
    %v4723 = vadd.f32 %v4697, %v4709
    %v4724 = vadd.f32 %v4698, %v4713
    %v4725 = vadd.f32 %v4699, %v4717
    %v4726 = vsub.f32 0.0, %v4722
    %v4727 = vsub.f32 0.0, %v4723
    %v4728 = vsub.f32 0.0, %v4724
    %v4729 = vmul.f32 %v4726, 1.442695
    %v4730 = vpow.pop %v4729
    %v4731 = vmul.f32 %v4727, 1.442695
    %v4732 = vpow.pop %v4731
    %v4733 = vmul.f32 %v4728, 1.442695
    %v4734 = vpow.pop %v4733
    %v4735 = vadd.f32 %v4730, 1.0
    %v4736 = vadd.f32 %v4732, 1.0
    %v4737 = vadd.f32 %v4734, 1.0
    %v4738 = vrcp.pop %v4735
    %v4739 = vrcp.pop %v4736
    %v4740 = vrcp.pop %v4737
    %v4741 = vtanh.pop %v4725
    %v4742 = vld [vmem:[#allocation3] sm:$0xff]
    %v4743 = vmul.f32 %v4739, %v4742
    %v4744 = vmul.f32 %v4738, %v4741
    %v4745 = vadd.f32 %v4743, %v4744
    %v4746 = vtanh.pop %v4745
    %v4747 = vmul.f32 %v4740, %v4746
    %4748 = vst [vmem:[#allocation3] sm:$0xff] %v4745
    %v4749 = vpack.c.bf16 %v4747, %v4747
    %4750 = vst [vmem:[#allocation2 + $0x4] sm:$0xf] %v4749
    %4751 = vst [vmem:[%s452] sm:$0xf] %v4749
    %v4752 = vld [vmem:[%s452] sm:$0xff]
    %v4753 = vld [vmem:[%s455] sm:$0xff]
    %v4754 = vld [vmem:[%s455 + $0x8] sm:$0xff]
    %v4755 = vld [vmem:[%s455 + $0x10] sm:$0xff]
    %v4756 = vld [vmem:[%s455 + $0x18] sm:$0xff]
    %v4757 = vld [vmem:[%s455 + $0x20] sm:$0xff]
    %v4758 = vld [vmem:[%s455 + $0x28] sm:$0xff]
    %v4759 = vld [vmem:[%s455 + $0x30] sm:$0xff]
    %v4760 = vld [vmem:[%s455 + $0x38] sm:$0xff]
    %v4761 = vld [vmem:[%s455 + $0x40] sm:$0xff]
    %v4762 = vld [vmem:[%s455 + $0x48] sm:$0xff]
    %v4763 = vld [vmem:[%s455 + $0x50] sm:$0xff]
    %v4764 = vld [vmem:[%s455 + $0x58] sm:$0xff]
    %v4765 = vld [vmem:[%s455 + $0x60] sm:$0xff]
    %v4766 = vld [vmem:[%s455 + $0x68] sm:$0xff]
    %v4767 = vld [vmem:[%s455 + $0x70] sm:$0xff]
    %v4768 = vld [vmem:[%s455 + $0x78] sm:$0xff]
    %v4769 = vld [vmem:[%s455 + $0x80] sm:$0xff]
    %v4770 = vld [vmem:[%s455 + $0x88] sm:$0xff]
    %v4771 = vld [vmem:[%s455 + $0x90] sm:$0xff]
    %v4772 = vld [vmem:[%s455 + $0x98] sm:$0xff]
    %v4773 = vld [vmem:[%s455 + $0xa0] sm:$0xff]
    %v4774 = vld [vmem:[%s455 + $0xa8] sm:$0xff]
    %v4775 = vld [vmem:[%s455 + $0xb0] sm:$0xff]
    %v4776 = vld [vmem:[%s455 + $0xb8] sm:$0xff]
    %v4777 = vld [vmem:[%s455 + $0xc0] sm:$0xff]
    %v4778 = vld [vmem:[%s455 + $0xc8] sm:$0xff]
    %v4779 = vld [vmem:[%s455 + $0xd0] sm:$0xff]
    %v4780 = vld [vmem:[%s455 + $0xd8] sm:$0xff]
    %v4781 = vld [vmem:[%s455 + $0xe0] sm:$0xff]
    %v4782 = vld [vmem:[%s455 + $0xe8] sm:$0xff]
    %v4783 = vld [vmem:[%s455 + $0xf0] sm:$0xff]
    %v4784 = vld [vmem:[%s455 + $0xf8] sm:$0xff]
    %v4785 = vld [vmem:[%s455 + $0x100] sm:$0xff]
    %v4786 = vld [vmem:[%s455 + $0x108] sm:$0xff]
    %v4787 = vld [vmem:[%s455 + $0x110] sm:$0xff]
    %v4788 = vld [vmem:[%s455 + $0x118] sm:$0xff]
    %v4789 = vld [vmem:[%s455 + $0x120] sm:$0xff]
    %v4790 = vld [vmem:[%s455 + $0x128] sm:$0xff]
    %v4791 = vld [vmem:[%s455 + $0x130] sm:$0xff]
    %v4792 = vld [vmem:[%s455 + $0x138] sm:$0xff]
    %v4793 = vld [vmem:[%s455 + $0x140] sm:$0xff]
    %v4794 = vld [vmem:[%s455 + $0x148] sm:$0xff]
    %v4795 = vld [vmem:[%s455 + $0x150] sm:$0xff]
    %v4796 = vld [vmem:[%s455 + $0x158] sm:$0xff]
    %v4797 = vld [vmem:[%s455 + $0x160] sm:$0xff]
    %v4798 = vld [vmem:[%s455 + $0x168] sm:$0xff]
    %v4799 = vld [vmem:[%s455 + $0x170] sm:$0xff]
    %v4800 = vld [vmem:[%s455 + $0x178] sm:$0xff]
    %v4801 = vld [vmem:[%s455 + $0x180] sm:$0xff]
    %v4802 = vld [vmem:[%s455 + $0x188] sm:$0xff]
    %v4803 = vld [vmem:[%s455 + $0x190] sm:$0xff]
    %v4804 = vld [vmem:[%s455 + $0x198] sm:$0xff]
    %v4805 = vld [vmem:[%s455 + $0x1a0] sm:$0xff]
    %v4806 = vld [vmem:[%s455 + $0x1a8] sm:$0xff]
    %v4807 = vld [vmem:[%s455 + $0x1b0] sm:$0xff]
    %v4808 = vld [vmem:[%s455 + $0x1b8] sm:$0xff]
    %v4809 = vld [vmem:[%s455 + $0x1c0] sm:$0xff]
    %v4810 = vld [vmem:[%s455 + $0x1c8] sm:$0xff]
    %v4811 = vld [vmem:[%s455 + $0x1d0] sm:$0xff]
    %v4812 = vld [vmem:[%s455 + $0x1d8] sm:$0xff]
    %v4813 = vld [vmem:[%s455 + $0x1e0] sm:$0xff]
    %v4814 = vld [vmem:[%s455 + $0x1e8] sm:$0xff]
    %v4815 = vld [vmem:[%s455 + $0x1f0] sm:$0xff]
    %v4816 = vld [vmem:[%s455 + $0x1f8] sm:$0xff]
    %v4817 = vld [vmem:[%s520] sm:$0xf]
    %v4819 = vlaneseq
    %v4820 = vshrl.u32 %v4819, 7
    %v4821 = vsub.s32 0, %v4820
    %v4822 = vrot.slane %v4817, %v4821
    %v4823 = vlaneseq
    %v4824 = vshrl.u32 %v4823, 7
    %v4825 = vsub.s32 1, %v4824
    %v4826 = vrot.slane %v4817, %v4825
    %v4827 = vlaneseq
    %v4828 = vshrl.u32 %v4827, 7
    %v4829 = vsub.s32 2, %v4828
    %v4830 = vrot.slane %v4817, %v4829
    %v4831 = vlaneseq
    %v4832 = vshrl.u32 %v4831, 7
    %v4833 = vsub.s32 3, %v4832
    %v4834 = vrot.slane %v4817, %v4833
    %v4840 = vunpack.c.l.b16 %v4752
    %v4841 = vunpack.c.h.b16 %v4752
    %v4842 = vpack.c.b16 %v4840, %v4840
    %v4843 = vpack.c.b16 %v4841, %v4841
    %v4910 = vunpack.c.l.b16 %v4753
    %v4911 = vunpack.c.h.b16 %v4753
    %v4912 = vunpack.c.l.b16 %v4754
    %v4913 = vunpack.c.h.b16 %v4754
    %v4914 = vunpack.c.l.b16 %v4755
    %v4915 = vunpack.c.h.b16 %v4755
    %v4916 = vunpack.c.l.b16 %v4756
    %v4917 = vunpack.c.h.b16 %v4756
    %v4918 = vunpack.c.l.b16 %v4757
    %v4919 = vunpack.c.h.b16 %v4757
    %v4920 = vunpack.c.l.b16 %v4758
    %v4921 = vunpack.c.h.b16 %v4758
    %v4922 = vunpack.c.l.b16 %v4759
    %v4923 = vunpack.c.h.b16 %v4759
    %v4924 = vunpack.c.l.b16 %v4760
    %v4925 = vunpack.c.h.b16 %v4760
    %v4926 = vunpack.c.l.b16 %v4761
    %v4927 = vunpack.c.h.b16 %v4761
    %v4928 = vunpack.c.l.b16 %v4762
    %v4929 = vunpack.c.h.b16 %v4762
    %v4930 = vunpack.c.l.b16 %v4763
    %v4931 = vunpack.c.h.b16 %v4763
    %v4932 = vunpack.c.l.b16 %v4764
    %v4933 = vunpack.c.h.b16 %v4764
    %v4934 = vunpack.c.l.b16 %v4765
    %v4935 = vunpack.c.h.b16 %v4765
    %v4936 = vunpack.c.l.b16 %v4766
    %v4937 = vunpack.c.h.b16 %v4766
    %v4938 = vunpack.c.l.b16 %v4767
    %v4939 = vunpack.c.h.b16 %v4767
    %v4940 = vunpack.c.l.b16 %v4768
    %v4941 = vunpack.c.h.b16 %v4768
    %v4942 = vunpack.c.l.b16 %v4769
    %v4943 = vunpack.c.h.b16 %v4769
    %v4944 = vunpack.c.l.b16 %v4770
    %v4945 = vunpack.c.h.b16 %v4770
    %v4946 = vunpack.c.l.b16 %v4771
    %v4947 = vunpack.c.h.b16 %v4771
    %v4948 = vunpack.c.l.b16 %v4772
    %v4949 = vunpack.c.h.b16 %v4772
    %v4950 = vunpack.c.l.b16 %v4773
    %v4951 = vunpack.c.h.b16 %v4773
    %v4952 = vunpack.c.l.b16 %v4774
    %v4953 = vunpack.c.h.b16 %v4774
    %v4954 = vunpack.c.l.b16 %v4775
    %v4955 = vunpack.c.h.b16 %v4775
    %v4956 = vunpack.c.l.b16 %v4776
    %v4957 = vunpack.c.h.b16 %v4776
    %v4958 = vunpack.c.l.b16 %v4777
    %v4959 = vunpack.c.h.b16 %v4777
    %v4960 = vunpack.c.l.b16 %v4778
    %v4961 = vunpack.c.h.b16 %v4778
    %v4962 = vunpack.c.l.b16 %v4779
    %v4963 = vunpack.c.h.b16 %v4779
    %v4964 = vunpack.c.l.b16 %v4780
    %v4965 = vunpack.c.h.b16 %v4780
    %v4966 = vunpack.c.l.b16 %v4781
    %v4967 = vunpack.c.h.b16 %v4781
    %v4968 = vunpack.c.l.b16 %v4782
    %v4969 = vunpack.c.h.b16 %v4782
    %v4970 = vunpack.c.l.b16 %v4783
    %v4971 = vunpack.c.h.b16 %v4783
    %v4972 = vunpack.c.l.b16 %v4784
    %v4973 = vunpack.c.h.b16 %v4784
    %v4974 = vunpack.c.l.b16 %v4785
    %v4975 = vunpack.c.h.b16 %v4785
    %v4976 = vunpack.c.l.b16 %v4786
    %v4977 = vunpack.c.h.b16 %v4786
    %v4978 = vunpack.c.l.b16 %v4787
    %v4979 = vunpack.c.h.b16 %v4787
    %v4980 = vunpack.c.l.b16 %v4788
    %v4981 = vunpack.c.h.b16 %v4788
    %v4982 = vunpack.c.l.b16 %v4789
    %v4983 = vunpack.c.h.b16 %v4789
    %v4984 = vunpack.c.l.b16 %v4790
    %v4985 = vunpack.c.h.b16 %v4790
    %v4986 = vunpack.c.l.b16 %v4791
    %v4987 = vunpack.c.h.b16 %v4791
    %v4988 = vunpack.c.l.b16 %v4792
    %v4989 = vunpack.c.h.b16 %v4792
    %v4990 = vunpack.c.l.b16 %v4793
    %v4991 = vunpack.c.h.b16 %v4793
    %v4992 = vunpack.c.l.b16 %v4794
    %v4993 = vunpack.c.h.b16 %v4794
    %v4994 = vunpack.c.l.b16 %v4795
    %v4995 = vunpack.c.h.b16 %v4795
    %v4996 = vunpack.c.l.b16 %v4796
    %v4997 = vunpack.c.h.b16 %v4796
    %v4998 = vunpack.c.l.b16 %v4797
    %v4999 = vunpack.c.h.b16 %v4797
    %v5000 = vunpack.c.l.b16 %v4798
    %v5001 = vunpack.c.h.b16 %v4798
    %v5002 = vunpack.c.l.b16 %v4799
    %v5003 = vunpack.c.h.b16 %v4799
    %v5004 = vunpack.c.l.b16 %v4800
    %v5005 = vunpack.c.h.b16 %v4800
    %v5006 = vunpack.c.l.b16 %v4801
    %v5007 = vunpack.c.h.b16 %v4801
    %v5008 = vunpack.c.l.b16 %v4802
    %v5009 = vunpack.c.h.b16 %v4802
    %v5010 = vunpack.c.l.b16 %v4803
    %v5011 = vunpack.c.h.b16 %v4803
    %v5012 = vunpack.c.l.b16 %v4804
    %v5013 = vunpack.c.h.b16 %v4804
    %v5014 = vunpack.c.l.b16 %v4805
    %v5015 = vunpack.c.h.b16 %v4805
    %v5016 = vunpack.c.l.b16 %v4806
    %v5017 = vunpack.c.h.b16 %v4806
    %v5018 = vunpack.c.l.b16 %v4807
    %v5019 = vunpack.c.h.b16 %v4807
    %v5020 = vunpack.c.l.b16 %v4808
    %v5021 = vunpack.c.h.b16 %v4808
    %v5022 = vunpack.c.l.b16 %v4809
    %v5023 = vunpack.c.h.b16 %v4809
    %v5024 = vunpack.c.l.b16 %v4810
    %v5025 = vunpack.c.h.b16 %v4810
    %v5026 = vunpack.c.l.b16 %v4811
    %v5027 = vunpack.c.h.b16 %v4811
    %v5028 = vunpack.c.l.b16 %v4812
    %v5029 = vunpack.c.h.b16 %v4812
    %v5030 = vunpack.c.l.b16 %v4813
    %v5031 = vunpack.c.h.b16 %v4813
    %v5032 = vunpack.c.l.b16 %v4814
    %v5033 = vunpack.c.h.b16 %v4814
    %v5034 = vunpack.c.l.b16 %v4815
    %v5035 = vunpack.c.h.b16 %v4815
    %v5036 = vunpack.c.l.b16 %v4816
    %v5037 = vunpack.c.h.b16 %v4816
    %v5038 = vpack.c.b16 %v4914, %v4910
    %v5039 = vpack.c.b16 %v4915, %v4911
    %v5040 = vpack.c.b16 %v4916, %v4912
    %v5041 = vpack.c.b16 %v4917, %v4913
    %v5042 = vpack.c.b16 %v4922, %v4918
    %v5043 = vpack.c.b16 %v4923, %v4919
    %v5044 = vpack.c.b16 %v4924, %v4920
    %v5045 = vpack.c.b16 %v4925, %v4921
    %v5046 = vpack.c.b16 %v4930, %v4926
    %v5047 = vpack.c.b16 %v4931, %v4927
    %v5048 = vpack.c.b16 %v4932, %v4928
    %v5049 = vpack.c.b16 %v4933, %v4929
    %v5050 = vpack.c.b16 %v4938, %v4934
    %v5051 = vpack.c.b16 %v4939, %v4935
    %v5052 = vpack.c.b16 %v4940, %v4936
    %v5053 = vpack.c.b16 %v4941, %v4937
    %v5054 = vpack.c.b16 %v4946, %v4942
    %v5055 = vpack.c.b16 %v4947, %v4943
    %v5056 = vpack.c.b16 %v4948, %v4944
    %v5057 = vpack.c.b16 %v4949, %v4945
    %v5058 = vpack.c.b16 %v4954, %v4950
    %v5059 = vpack.c.b16 %v4955, %v4951
    %v5060 = vpack.c.b16 %v4956, %v4952
    %v5061 = vpack.c.b16 %v4957, %v4953
    %v5062 = vpack.c.b16 %v4962, %v4958
    %v5063 = vpack.c.b16 %v4963, %v4959
    %v5064 = vpack.c.b16 %v4964, %v4960
    %v5065 = vpack.c.b16 %v4965, %v4961
    %v5066 = vpack.c.b16 %v4970, %v4966
    %v5067 = vpack.c.b16 %v4971, %v4967
    %v5068 = vpack.c.b16 %v4972, %v4968
    %v5069 = vpack.c.b16 %v4973, %v4969
    %v5070 = vpack.c.b16 %v4978, %v4974
    %v5071 = vpack.c.b16 %v4979, %v4975
    %v5072 = vpack.c.b16 %v4980, %v4976
    %v5073 = vpack.c.b16 %v4981, %v4977
    %v5074 = vpack.c.b16 %v4986, %v4982
    %v5075 = vpack.c.b16 %v4987, %v4983
    %v5076 = vpack.c.b16 %v4988, %v4984
    %v5077 = vpack.c.b16 %v4989, %v4985
    %v5078 = vpack.c.b16 %v4994, %v4990
    %v5079 = vpack.c.b16 %v4995, %v4991
    %v5080 = vpack.c.b16 %v4996, %v4992
    %v5081 = vpack.c.b16 %v4997, %v4993
    %v5082 = vpack.c.b16 %v5002, %v4998
    %v5083 = vpack.c.b16 %v5003, %v4999
    %v5084 = vpack.c.b16 %v5004, %v5000
    %v5085 = vpack.c.b16 %v5005, %v5001
    %v5086 = vpack.c.b16 %v5010, %v5006
    %v5087 = vpack.c.b16 %v5011, %v5007
    %v5088 = vpack.c.b16 %v5012, %v5008
    %v5089 = vpack.c.b16 %v5013, %v5009
    %v5090 = vpack.c.b16 %v5018, %v5014
    %v5091 = vpack.c.b16 %v5019, %v5015
    %v5092 = vpack.c.b16 %v5020, %v5016
    %v5093 = vpack.c.b16 %v5021, %v5017
    %v5094 = vpack.c.b16 %v5026, %v5022
    %v5095 = vpack.c.b16 %v5027, %v5023
    %v5096 = vpack.c.b16 %v5028, %v5024
    %v5097 = vpack.c.b16 %v5029, %v5025
    %v5098 = vpack.c.b16 %v5034, %v5030
    %v5099 = vpack.c.b16 %v5035, %v5031
    %v5100 = vpack.c.b16 %v5036, %v5032
    %v5101 = vpack.c.b16 %v5037, %v5033
    %5166 = vmatprep.subr.bf16.mxu0 %v5039
    %5167 = vmatpush1.bf16.msra.mxu0 %v5038
    %5168 = vmatprep.subr.bf16.mxu0 %v5043
    %5169 = vmatpush1.bf16.msra.mxu0 %v5042
    %5170 = vmatprep.subr.bf16.mxu0 %v5047
    %5171 = vmatpush1.bf16.msra.mxu0 %v5046
    %5172 = vmatprep.subr.bf16.mxu0 %v5051
    %5173 = vmatpush1.bf16.msra.mxu0 %v5050
    %5174 = vmatprep.subr.bf16.mxu0 %v5055
    %5175 = vmatpush1.bf16.msra.mxu0 %v5054
    %5176 = vmatprep.subr.bf16.mxu0 %v5059
    %5177 = vmatpush1.bf16.msra.mxu0 %v5058
    %5178 = vmatprep.subr.bf16.mxu0 %v5063
    %5179 = vmatpush1.bf16.msra.mxu0 %v5062
    %5180 = vmatprep.subr.bf16.mxu0 %v5067
    %5181 = vmatpush1.bf16.msra.mxu0 %v5066
    %5182 = vmatprep.subr.bf16.mxu0 %v5071
    %5183 = vmatpush1.bf16.msra.mxu0 %v5070
    %5184 = vmatprep.subr.bf16.mxu0 %v5075
    %5185 = vmatpush1.bf16.msra.mxu0 %v5074
    %5186 = vmatprep.subr.bf16.mxu0 %v5079
    %5187 = vmatpush1.bf16.msra.mxu0 %v5078
    %5188 = vmatprep.subr.bf16.mxu0 %v5083
    %5189 = vmatpush1.bf16.msra.mxu0 %v5082
    %5190 = vmatprep.subr.bf16.mxu0 %v5087
    %5191 = vmatpush1.bf16.msra.mxu0 %v5086
    %5192 = vmatprep.subr.bf16.mxu0 %v5091
    %5193 = vmatpush1.bf16.msra.mxu0 %v5090
    %5194 = vmatprep.subr.bf16.mxu0 %v5095
    %5195 = vmatpush1.bf16.msra.mxu0 %v5094
    %5196 = vmatprep.subr.bf16.mxu0 %v5099
    %5197 = vmatpush1.bf16.msra.mxu0 %v5098
    %5198 = vmatprep.mubr.bf16.mxu0 %v4843
    %5199 = vmatmul.mubr.bf16.gmra.mrb[0].mxu0 %v4842
    %v5200 = vpop.f32.mrb[0].mxu0
    %v5201 = vadd.f32 %v4822, %v5200
    %v5202 = vpop.f32.mrb[0].mxu0
    %v5203 = vadd.f32 %v4826, %v5202
    %v5204 = vpop.f32.mrb[0].mxu0
    %v5205 = vpop.f32.mrb[0].mxu0
    %5206 = vdwg.mxu0
    %5207 = vmatprep.subr.bf16.mxu0 %v5041
    %5208 = vmatpush1.bf16.msra.mxu0 %v5040
    %5209 = vmatprep.subr.bf16.mxu0 %v5045
    %5210 = vmatpush1.bf16.msra.mxu0 %v5044
    %5211 = vmatprep.subr.bf16.mxu0 %v5049
    %5212 = vmatpush1.bf16.msra.mxu0 %v5048
    %5213 = vmatprep.subr.bf16.mxu0 %v5053
    %5214 = vmatpush1.bf16.msra.mxu0 %v5052
    %5215 = vmatprep.subr.bf16.mxu0 %v5057
    %5216 = vmatpush1.bf16.msra.mxu0 %v5056
    %5217 = vmatprep.subr.bf16.mxu0 %v5061
    %5218 = vmatpush1.bf16.msra.mxu0 %v5060
    %5219 = vmatprep.subr.bf16.mxu0 %v5065
    %5220 = vmatpush1.bf16.msra.mxu0 %v5064
    %5221 = vmatprep.subr.bf16.mxu0 %v5069
    %5222 = vmatpush1.bf16.msra.mxu0 %v5068
    %5223 = vmatprep.subr.bf16.mxu0 %v5073
    %5224 = vmatpush1.bf16.msra.mxu0 %v5072
    %5225 = vmatprep.subr.bf16.mxu0 %v5077
    %5226 = vmatpush1.bf16.msra.mxu0 %v5076
    %5227 = vmatprep.subr.bf16.mxu0 %v5081
    %5228 = vmatpush1.bf16.msra.mxu0 %v5080
    %5229 = vmatprep.subr.bf16.mxu0 %v5085
    %5230 = vmatpush1.bf16.msra.mxu0 %v5084
    %5231 = vmatprep.subr.bf16.mxu0 %v5089
    %5232 = vmatpush1.bf16.msra.mxu0 %v5088
    %5233 = vmatprep.subr.bf16.mxu0 %v5093
    %5234 = vmatpush1.bf16.msra.mxu0 %v5092
    %5235 = vmatprep.subr.bf16.mxu0 %v5097
    %5236 = vmatpush1.bf16.msra.mxu0 %v5096
    %5237 = vmatprep.subr.bf16.mxu0 %v5101
    %5238 = vmatpush1.bf16.msra.mxu0 %v5100
    %5239 = vmatprep.mubr.bf16.mxu0 %v4843
    %5240 = vmatmul.mubr.bf16.gmra.mrb[0].mxu0 %v4842
    %v5241 = vpop.f32.mrb[0].mxu0
    %v5242 = vadd.f32 %v4830, %v5241
    %v5243 = vpop.f32.mrb[0].mxu0
    %v5244 = vadd.f32 %v4834, %v5243
    %v5245 = vpop.f32.mrb[0].mxu0
    %v5246 = vpop.f32.mrb[0].mxu0
    %5247 = vdwg.mxu0
    %v5248 = vsub.f32 0.0, %v5201
    %v5249 = vsub.f32 0.0, %v5203
    %v5250 = vsub.f32 0.0, %v5242
    %v5251 = vmul.f32 %v5248, 1.442695
    %v5252 = vpow.pop %v5251
    %v5253 = vmul.f32 %v5249, 1.442695
    %v5254 = vpow.pop %v5253
    %v5255 = vmul.f32 %v5250, 1.442695
    %v5256 = vpow.pop %v5255
    %v5257 = vadd.f32 %v5252, 1.0
    %v5258 = vadd.f32 %v5254, 1.0
    %v5259 = vadd.f32 %v5256, 1.0
    %v5260 = vrcp.pop %v5257
    %v5261 = vrcp.pop %v5258
    %v5262 = vrcp.pop %v5259
    %v5263 = vtanh.pop %v5244
    %v5264 = vld [vmem:[%s968] sm:$0xff]
    %v5265 = vmul.f32 %v5261, %v5264
    %v5266 = vmul.f32 %v5260, %v5263
    %v5267 = vadd.f32 %v5265, %v5266
    %v5268 = vtanh.pop %v5267
    %v5269 = vmul.f32 %v5262, %v5268
    %5270 = vst [vmem:[%s968] sm:$0xff] %v5267
    %v5271 = vpack.c.bf16 %v5269, %v5269
    %5272 = vst [vmem:[%s452 + $0x4] sm:$0xf] %v5271
    %s5273 = scalar_lea.vmem [#allocation4], 96
    %v5274 = vld [vmem:[%s5273] sm:$0xff]
    %v5275 = vld [vmem:[%s5273 + $0x8] sm:$0xff]
    %v5276 = vunpack.c.l.bf16 %v5274
    %v5277 = vunpack.c.h.bf16 %v5274
    %v5278 = vunpack.c.l.bf16 %v5275
    %v5279 = vunpack.c.h.bf16 %v5275
    %v5280 = vld [vmem:[#allocation2 + $0x4] sm:$0xf]
    %v5281 = vld [vmem:[#allocation7 + $0x100] sm:$0xff]
    %v5282 = vld [vmem:[#allocation7 + $0x108] sm:$0xff]
    %v5283 = vld [vmem:[#allocation7 + $0x110] sm:$0xff]
    %v5284 = vld [vmem:[#allocation7 + $0x118] sm:$0xff]
    %v5285 = vld [vmem:[#allocation7 + $0x120] sm:$0xff]
    %v5286 = vld [vmem:[#allocation7 + $0x128] sm:$0xff]
    %v5287 = vld [vmem:[#allocation7 + $0x130] sm:$0xff]
    %v5288 = vld [vmem:[#allocation7 + $0x138] sm:$0xff]
    %v5289 = vld [vmem:[#allocation7 + $0x140] sm:$0xff]
    %v5290 = vld [vmem:[#allocation7 + $0x148] sm:$0xff]
    %v5291 = vld [vmem:[#allocation7 + $0x150] sm:$0xff]
    %v5292 = vld [vmem:[#allocation7 + $0x158] sm:$0xff]
    %v5293 = vld [vmem:[#allocation7 + $0x160] sm:$0xff]
    %v5294 = vld [vmem:[#allocation7 + $0x168] sm:$0xff]
    %v5295 = vld [vmem:[#allocation7 + $0x170] sm:$0xff]
    %v5296 = vld [vmem:[#allocation7 + $0x178] sm:$0xff]
    %v5297 = vld [vmem:[#allocation7 + $0x180] sm:$0xff]
    %v5298 = vld [vmem:[#allocation7 + $0x188] sm:$0xff]
    %v5299 = vld [vmem:[#allocation7 + $0x190] sm:$0xff]
    %v5300 = vld [vmem:[#allocation7 + $0x198] sm:$0xff]
    %v5301 = vld [vmem:[#allocation7 + $0x1a0] sm:$0xff]
    %v5302 = vld [vmem:[#allocation7 + $0x1a8] sm:$0xff]
    %v5303 = vld [vmem:[#allocation7 + $0x1b0] sm:$0xff]
    %v5304 = vld [vmem:[#allocation7 + $0x1b8] sm:$0xff]
    %v5305 = vld [vmem:[#allocation7 + $0x1c0] sm:$0xff]
    %v5306 = vld [vmem:[#allocation7 + $0x1c8] sm:$0xff]
    %v5307 = vld [vmem:[#allocation7 + $0x1d0] sm:$0xff]
    %v5308 = vld [vmem:[#allocation7 + $0x1d8] sm:$0xff]
    %v5309 = vld [vmem:[#allocation7 + $0x1e0] sm:$0xff]
    %v5310 = vld [vmem:[#allocation7 + $0x1e8] sm:$0xff]
    %v5311 = vld [vmem:[#allocation7 + $0x1f0] sm:$0xff]
    %v5312 = vld [vmem:[#allocation7 + $0x1f8] sm:$0xff]
    %v5345 = vunpack.c.l.b16 %v5281
    %v5346 = vunpack.c.h.b16 %v5281
    %v5347 = vunpack.c.l.b16 %v5282
    %v5348 = vunpack.c.h.b16 %v5282
    %v5349 = vunpack.c.l.b16 %v5283
    %v5350 = vunpack.c.h.b16 %v5283
    %v5351 = vunpack.c.l.b16 %v5284
    %v5352 = vunpack.c.h.b16 %v5284
    %v5353 = vunpack.c.l.b16 %v5285
    %v5354 = vunpack.c.h.b16 %v5285
    %v5355 = vunpack.c.l.b16 %v5286
    %v5356 = vunpack.c.h.b16 %v5286
    %v5357 = vunpack.c.l.b16 %v5287
    %v5358 = vunpack.c.h.b16 %v5287
    %v5359 = vunpack.c.l.b16 %v5288
    %v5360 = vunpack.c.h.b16 %v5288
    %v5361 = vunpack.c.l.b16 %v5289
    %v5362 = vunpack.c.h.b16 %v5289
    %v5363 = vunpack.c.l.b16 %v5290
    %v5364 = vunpack.c.h.b16 %v5290
    %v5365 = vunpack.c.l.b16 %v5291
    %v5366 = vunpack.c.h.b16 %v5291
    %v5367 = vunpack.c.l.b16 %v5292
    %v5368 = vunpack.c.h.b16 %v5292
    %v5369 = vunpack.c.l.b16 %v5293
    %v5370 = vunpack.c.h.b16 %v5293
    %v5371 = vunpack.c.l.b16 %v5294
    %v5372 = vunpack.c.h.b16 %v5294
    %v5373 = vunpack.c.l.b16 %v5295
    %v5374 = vunpack.c.h.b16 %v5295
    %v5375 = vunpack.c.l.b16 %v5296
    %v5376 = vunpack.c.h.b16 %v5296
    %v5377 = vunpack.c.l.b16 %v5297
    %v5378 = vunpack.c.h.b16 %v5297
    %v5379 = vunpack.c.l.b16 %v5298
    %v5380 = vunpack.c.h.b16 %v5298
    %v5381 = vunpack.c.l.b16 %v5299
    %v5382 = vunpack.c.h.b16 %v5299
    %v5383 = vunpack.c.l.b16 %v5300
    %v5384 = vunpack.c.h.b16 %v5300
    %v5385 = vunpack.c.l.b16 %v5301
    %v5386 = vunpack.c.h.b16 %v5301
    %v5387 = vunpack.c.l.b16 %v5302
    %v5388 = vunpack.c.h.b16 %v5302
    %v5389 = vunpack.c.l.b16 %v5303
    %v5390 = vunpack.c.h.b16 %v5303
    %v5391 = vunpack.c.l.b16 %v5304
    %v5392 = vunpack.c.h.b16 %v5304
    %v5393 = vunpack.c.l.b16 %v5305
    %v5394 = vunpack.c.h.b16 %v5305
    %v5395 = vunpack.c.l.b16 %v5306
    %v5396 = vunpack.c.h.b16 %v5306
    %v5397 = vunpack.c.l.b16 %v5307
    %v5398 = vunpack.c.h.b16 %v5307
    %v5399 = vunpack.c.l.b16 %v5308
    %v5400 = vunpack.c.h.b16 %v5308
    %v5401 = vunpack.c.l.b16 %v5309
    %v5402 = vunpack.c.h.b16 %v5309
    %v5403 = vunpack.c.l.b16 %v5310
    %v5404 = vunpack.c.h.b16 %v5310
    %v5405 = vunpack.c.l.b16 %v5311
    %v5406 = vunpack.c.h.b16 %v5311
    %v5407 = vunpack.c.l.b16 %v5312
    %v5408 = vunpack.c.h.b16 %v5312
    %v5409 = vpack.c.b16 %v5349, %v5345
    %v5410 = vpack.c.b16 %v5350, %v5346
    %v5411 = vpack.c.b16 %v5351, %v5347
    %v5412 = vpack.c.b16 %v5352, %v5348
    %v5413 = vpack.c.b16 %v5357, %v5353
    %v5414 = vpack.c.b16 %v5358, %v5354
    %v5415 = vpack.c.b16 %v5359, %v5355
    %v5416 = vpack.c.b16 %v5360, %v5356
    %v5417 = vpack.c.b16 %v5365, %v5361
    %v5418 = vpack.c.b16 %v5366, %v5362
    %v5419 = vpack.c.b16 %v5367, %v5363
    %v5420 = vpack.c.b16 %v5368, %v5364
    %v5421 = vpack.c.b16 %v5373, %v5369
    %v5422 = vpack.c.b16 %v5374, %v5370
    %v5423 = vpack.c.b16 %v5375, %v5371
    %v5424 = vpack.c.b16 %v5376, %v5372
    %v5425 = vpack.c.b16 %v5381, %v5377
    %v5426 = vpack.c.b16 %v5382, %v5378
    %v5427 = vpack.c.b16 %v5383, %v5379
    %v5428 = vpack.c.b16 %v5384, %v5380
    %v5429 = vpack.c.b16 %v5389, %v5385
    %v5430 = vpack.c.b16 %v5390, %v5386
    %v5431 = vpack.c.b16 %v5391, %v5387
    %v5432 = vpack.c.b16 %v5392, %v5388
    %v5433 = vpack.c.b16 %v5397, %v5393
    %v5434 = vpack.c.b16 %v5398, %v5394
    %v5435 = vpack.c.b16 %v5399, %v5395
    %v5436 = vpack.c.b16 %v5400, %v5396
    %v5437 = vpack.c.b16 %v5405, %v5401
    %v5438 = vpack.c.b16 %v5406, %v5402
    %v5439 = vpack.c.b16 %v5407, %v5403
    %v5440 = vpack.c.b16 %v5408, %v5404
    %5473 = vmatprep.subr.bf16.mxu0 %v5410
    %5474 = vmatpush1.bf16.msra.mxu0 %v5409
    %5475 = vmatprep.subr.bf16.mxu0 %v5414
    %5476 = vmatpush1.bf16.msra.mxu0 %v5413
    %5477 = vmatprep.subr.bf16.mxu0 %v5418
    %5478 = vmatpush1.bf16.msra.mxu0 %v5417
    %5479 = vmatprep.subr.bf16.mxu0 %v5422
    %5480 = vmatpush1.bf16.msra.mxu0 %v5421
    %5481 = vmatprep.subr.bf16.mxu0 %v5426
    %5482 = vmatpush1.bf16.msra.mxu0 %v5425
    %5483 = vmatprep.subr.bf16.mxu0 %v5430
    %5484 = vmatpush1.bf16.msra.mxu0 %v5429
    %5485 = vmatprep.subr.bf16.mxu0 %v5434
    %5486 = vmatpush1.bf16.msra.mxu0 %v5433
    %5487 = vmatprep.subr.bf16.mxu0 %v5438
    %5488 = vmatpush1.bf16.msra.mxu0 %v5437
    %5489 = vmatprep.subr.bf16.mxu0 0
    %5490 = vmatpush1.bf16.msra.mxu0 0
    %5491 = vmatprep.subr.bf16.mxu0 0
    %5492 = vmatpush1.bf16.msra.mxu0 0
    %5493 = vmatprep.subr.bf16.mxu0 0
    %5494 = vmatpush1.bf16.msra.mxu0 0
    %5495 = vmatprep.subr.bf16.mxu0 0
    %5496 = vmatpush1.bf16.msra.mxu0 0
    %5497 = vmatprep.subr.bf16.mxu0 0
    %5498 = vmatpush1.bf16.msra.mxu0 0
    %5499 = vmatprep.subr.bf16.mxu0 0
    %5500 = vmatpush1.bf16.msra.mxu0 0
    %5501 = vmatprep.subr.bf16.mxu0 0
    %5502 = vmatpush1.bf16.msra.mxu0 0
    %5503 = vmatprep.subr.bf16.mxu0 0
    %5504 = vmatpush1.bf16.msra.mxu0 0
    %5505 = vmatprep.mubr.bf16.mxu0 0
    %5506 = vmatmul.mubr.bf16.gmra.mrb[0].mxu0 %v5280
    %v5507 = vpop.f32.mrb[0].mxu0
    %v5508 = vadd.f32 0.0, %v5507
    %v5509 = vpop.f32.mrb[0].mxu0
    %v5510 = vadd.f32 0.0, %v5509
    %v5511 = vpop.f32.mrb[0].mxu0
    %v5512 = vpop.f32.mrb[0].mxu0
    %5513 = vdwg.mxu0
    %5514 = vmatprep.subr.bf16.mxu0 %v5412
    %5515 = vmatpush1.bf16.msra.mxu0 %v5411
    %5516 = vmatprep.subr.bf16.mxu0 %v5416
    %5517 = vmatpush1.bf16.msra.mxu0 %v5415
    %5518 = vmatprep.subr.bf16.mxu0 %v5420
    %5519 = vmatpush1.bf16.msra.mxu0 %v5419
    %5520 = vmatprep.subr.bf16.mxu0 %v5424
    %5521 = vmatpush1.bf16.msra.mxu0 %v5423
    %5522 = vmatprep.subr.bf16.mxu0 %v5428
    %5523 = vmatpush1.bf16.msra.mxu0 %v5427
    %5524 = vmatprep.subr.bf16.mxu0 %v5432
    %5525 = vmatpush1.bf16.msra.mxu0 %v5431
    %5526 = vmatprep.subr.bf16.mxu0 %v5436
    %5527 = vmatpush1.bf16.msra.mxu0 %v5435
    %5528 = vmatprep.subr.bf16.mxu0 %v5440
    %5529 = vmatpush1.bf16.msra.mxu0 %v5439
    %5530 = vmatprep.subr.bf16.mxu0 0
    %5531 = vmatpush1.bf16.msra.mxu0 0
    %5532 = vmatprep.subr.bf16.mxu0 0
    %5533 = vmatpush1.bf16.msra.mxu0 0
    %5534 = vmatprep.subr.bf16.mxu0 0
    %5535 = vmatpush1.bf16.msra.mxu0 0
    %5536 = vmatprep.subr.bf16.mxu0 0
    %5537 = vmatpush1.bf16.msra.mxu0 0
    %5538 = vmatprep.subr.bf16.mxu0 0
    %5539 = vmatpush1.bf16.msra.mxu0 0
    %5540 = vmatprep.subr.bf16.mxu0 0
    %5541 = vmatpush1.bf16.msra.mxu0 0
    %5542 = vmatprep.subr.bf16.mxu0 0
    %5543 = vmatpush1.bf16.msra.mxu0 0
    %5544 = vmatprep.subr.bf16.mxu0 0
    %5545 = vmatpush1.bf16.msra.mxu0 0
    %5546 = vmatprep.mubr.bf16.mxu0 0
    %5547 = vmatmul.mubr.bf16.gmra.mrb[0].mxu0 %v5280
    %v5548 = vpop.f32.mrb[0].mxu0
    %v5549 = vadd.f32 0.0, %v5548
    %v5550 = vpop.f32.mrb[0].mxu0
    %v5551 = vadd.f32 0.0, %v5550
    %v5552 = vpop.f32.mrb[0].mxu0
    %v5553 = vpop.f32.mrb[0].mxu0
    %5554 = vdwg.mxu0
    %v5555 = vadd.f32 %v5276, %v5508
    %v5556 = vadd.f32 %v5277, %v5510
    %v5557 = vadd.f32 %v5278, %v5549
    %v5558 = vadd.f32 %v5279, %v5551
    %v5559 = vld [vmem:[#allocation9] sm:$0xf]
    %v5561 = vlaneseq
    %v5562 = vshrl.u32 %v5561, 7
    %v5563 = vsub.s32 0, %v5562
    %v5564 = vrot.slane %v5559, %v5563
    %v5565 = vlaneseq
    %v5566 = vshrl.u32 %v5565, 7
    %v5567 = vsub.s32 1, %v5566
    %v5568 = vrot.slane %v5559, %v5567
    %v5569 = vlaneseq
    %v5570 = vshrl.u32 %v5569, 7
    %v5571 = vsub.s32 2, %v5570
    %v5572 = vrot.slane %v5559, %v5571
    %v5573 = vlaneseq
    %v5574 = vshrl.u32 %v5573, 7
    %v5575 = vsub.s32 3, %v5574
    %v5576 = vrot.slane %v5559, %v5575
    %v5581 = vadd.f32 %v5555, %v5564
    %v5582 = vadd.f32 %v5556, %v5568
    %v5583 = vadd.f32 %v5557, %v5572
    %v5584 = vadd.f32 %v5558, %v5576
    %v5585 = vsub.f32 0.0, %v5581
    %v5586 = vsub.f32 0.0, %v5582
    %v5587 = vsub.f32 0.0, %v5583
    %v5588 = vmul.f32 %v5585, 1.442695
    %v5589 = vpow.pop %v5588
    %v5590 = vmul.f32 %v5586, 1.442695
    %v5591 = vpow.pop %v5590
    %v5592 = vmul.f32 %v5587, 1.442695
    %v5593 = vpow.pop %v5592
    %v5594 = vadd.f32 %v5589, 1.0
    %v5595 = vadd.f32 %v5591, 1.0
    %v5596 = vadd.f32 %v5593, 1.0
    %v5597 = vrcp.pop %v5594
    %v5598 = vrcp.pop %v5595
    %v5599 = vrcp.pop %v5596
    %v5600 = vtanh.pop %v5584
    %v5601 = vld [vmem:[#allocation3] sm:$0xff]
    %v5602 = vmul.f32 %v5598, %v5601
    %v5603 = vmul.f32 %v5597, %v5600
    %v5604 = vadd.f32 %v5602, %v5603
    %v5605 = vtanh.pop %v5604
    %v5606 = vmul.f32 %v5599, %v5605
    %5607 = vst [vmem:[#allocation3] sm:$0xff] %v5604
    %v5608 = vpack.c.bf16 %v5606, %v5606
    %5609 = vst [vmem:[#allocation2 + $0x4] sm:$0xf] %v5608
    %5610 = vst [vmem:[%s452] sm:$0xf] %v5608
    %v5611 = vld [vmem:[%s452] sm:$0xff]
    %v5612 = vld [vmem:[%s455] sm:$0xff]
    %v5613 = vld [vmem:[%s455 + $0x8] sm:$0xff]
    %v5614 = vld [vmem:[%s455 + $0x10] sm:$0xff]
    %v5615 = vld [vmem:[%s455 + $0x18] sm:$0xff]
    %v5616 = vld [vmem:[%s455 + $0x20] sm:$0xff]
    %v5617 = vld [vmem:[%s455 + $0x28] sm:$0xff]
    %v5618 = vld [vmem:[%s455 + $0x30] sm:$0xff]
    %v5619 = vld [vmem:[%s455 + $0x38] sm:$0xff]
    %v5620 = vld [vmem:[%s455 + $0x40] sm:$0xff]
    %v5621 = vld [vmem:[%s455 + $0x48] sm:$0xff]
    %v5622 = vld [vmem:[%s455 + $0x50] sm:$0xff]
    %v5623 = vld [vmem:[%s455 + $0x58] sm:$0xff]
    %v5624 = vld [vmem:[%s455 + $0x60] sm:$0xff]
    %v5625 = vld [vmem:[%s455 + $0x68] sm:$0xff]
    %v5626 = vld [vmem:[%s455 + $0x70] sm:$0xff]
    %v5627 = vld [vmem:[%s455 + $0x78] sm:$0xff]
    %v5628 = vld [vmem:[%s455 + $0x80] sm:$0xff]
    %v5629 = vld [vmem:[%s455 + $0x88] sm:$0xff]
    %v5630 = vld [vmem:[%s455 + $0x90] sm:$0xff]
    %v5631 = vld [vmem:[%s455 + $0x98] sm:$0xff]
    %v5632 = vld [vmem:[%s455 + $0xa0] sm:$0xff]
    %v5633 = vld [vmem:[%s455 + $0xa8] sm:$0xff]
    %v5634 = vld [vmem:[%s455 + $0xb0] sm:$0xff]
    %v5635 = vld [vmem:[%s455 + $0xb8] sm:$0xff]
    %v5636 = vld [vmem:[%s455 + $0xc0] sm:$0xff]
    %v5637 = vld [vmem:[%s455 + $0xc8] sm:$0xff]
    %v5638 = vld [vmem:[%s455 + $0xd0] sm:$0xff]
    %v5639 = vld [vmem:[%s455 + $0xd8] sm:$0xff]
    %v5640 = vld [vmem:[%s455 + $0xe0] sm:$0xff]
    %v5641 = vld [vmem:[%s455 + $0xe8] sm:$0xff]
    %v5642 = vld [vmem:[%s455 + $0xf0] sm:$0xff]
    %v5643 = vld [vmem:[%s455 + $0xf8] sm:$0xff]
    %v5644 = vld [vmem:[%s455 + $0x100] sm:$0xff]
    %v5645 = vld [vmem:[%s455 + $0x108] sm:$0xff]
    %v5646 = vld [vmem:[%s455 + $0x110] sm:$0xff]
    %v5647 = vld [vmem:[%s455 + $0x118] sm:$0xff]
    %v5648 = vld [vmem:[%s455 + $0x120] sm:$0xff]
    %v5649 = vld [vmem:[%s455 + $0x128] sm:$0xff]
    %v5650 = vld [vmem:[%s455 + $0x130] sm:$0xff]
    %v5651 = vld [vmem:[%s455 + $0x138] sm:$0xff]
    %v5652 = vld [vmem:[%s455 + $0x140] sm:$0xff]
    %v5653 = vld [vmem:[%s455 + $0x148] sm:$0xff]
    %v5654 = vld [vmem:[%s455 + $0x150] sm:$0xff]
    %v5655 = vld [vmem:[%s455 + $0x158] sm:$0xff]
    %v5656 = vld [vmem:[%s455 + $0x160] sm:$0xff]
    %v5657 = vld [vmem:[%s455 + $0x168] sm:$0xff]
    %v5658 = vld [vmem:[%s455 + $0x170] sm:$0xff]
    %v5659 = vld [vmem:[%s455 + $0x178] sm:$0xff]
    %v5660 = vld [vmem:[%s455 + $0x180] sm:$0xff]
    %v5661 = vld [vmem:[%s455 + $0x188] sm:$0xff]
    %v5662 = vld [vmem:[%s455 + $0x190] sm:$0xff]
    %v5663 = vld [vmem:[%s455 + $0x198] sm:$0xff]
    %v5664 = vld [vmem:[%s455 + $0x1a0] sm:$0xff]
    %v5665 = vld [vmem:[%s455 + $0x1a8] sm:$0xff]
    %v5666 = vld [vmem:[%s455 + $0x1b0] sm:$0xff]
    %v5667 = vld [vmem:[%s455 + $0x1b8] sm:$0xff]
    %v5668 = vld [vmem:[%s455 + $0x1c0] sm:$0xff]
    %v5669 = vld [vmem:[%s455 + $0x1c8] sm:$0xff]
    %v5670 = vld [vmem:[%s455 + $0x1d0] sm:$0xff]
    %v5671 = vld [vmem:[%s455 + $0x1d8] sm:$0xff]
    %v5672 = vld [vmem:[%s455 + $0x1e0] sm:$0xff]
    %v5673 = vld [vmem:[%s455 + $0x1e8] sm:$0xff]
    %v5674 = vld [vmem:[%s455 + $0x1f0] sm:$0xff]
    %v5675 = vld [vmem:[%s455 + $0x1f8] sm:$0xff]
    %v5676 = vld [vmem:[%s520] sm:$0xf]
    %v5678 = vlaneseq
    %v5679 = vshrl.u32 %v5678, 7
    %v5680 = vsub.s32 0, %v5679
    %v5681 = vrot.slane %v5676, %v5680
    %v5682 = vlaneseq
    %v5683 = vshrl.u32 %v5682, 7
    %v5684 = vsub.s32 1, %v5683
    %v5685 = vrot.slane %v5676, %v5684
    %v5686 = vlaneseq
    %v5687 = vshrl.u32 %v5686, 7
    %v5688 = vsub.s32 2, %v5687
    %v5689 = vrot.slane %v5676, %v5688
    %v5690 = vlaneseq
    %v5691 = vshrl.u32 %v5690, 7
    %v5692 = vsub.s32 3, %v5691
    %v5693 = vrot.slane %v5676, %v5692
    %v5699 = vunpack.c.l.b16 %v5611
    %v5700 = vunpack.c.h.b16 %v5611
    %v5701 = vpack.c.b16 %v5699, %v5699
    %v5702 = vpack.c.b16 %v5700, %v5700
    %v5769 = vunpack.c.l.b16 %v5612
    %v5770 = vunpack.c.h.b16 %v5612
    %v5771 = vunpack.c.l.b16 %v5613
    %v5772 = vunpack.c.h.b16 %v5613
    %v5773 = vunpack.c.l.b16 %v5614
    %v5774 = vunpack.c.h.b16 %v5614
    %v5775 = vunpack.c.l.b16 %v5615
    %v5776 = vunpack.c.h.b16 %v5615
    %v5777 = vunpack.c.l.b16 %v5616
    %v5778 = vunpack.c.h.b16 %v5616
    %v5779 = vunpack.c.l.b16 %v5617
    %v5780 = vunpack.c.h.b16 %v5617
    %v5781 = vunpack.c.l.b16 %v5618
    %v5782 = vunpack.c.h.b16 %v5618
    %v5783 = vunpack.c.l.b16 %v5619
    %v5784 = vunpack.c.h.b16 %v5619
    %v5785 = vunpack.c.l.b16 %v5620
    %v5786 = vunpack.c.h.b16 %v5620
    %v5787 = vunpack.c.l.b16 %v5621
    %v5788 = vunpack.c.h.b16 %v5621
    %v5789 = vunpack.c.l.b16 %v5622
    %v5790 = vunpack.c.h.b16 %v5622
    %v5791 = vunpack.c.l.b16 %v5623
    %v5792 = vunpack.c.h.b16 %v5623
    %v5793 = vunpack.c.l.b16 %v5624
    %v5794 = vunpack.c.h.b16 %v5624
    %v5795 = vunpack.c.l.b16 %v5625
    %v5796 = vunpack.c.h.b16 %v5625
    %v5797 = vunpack.c.l.b16 %v5626
    %v5798 = vunpack.c.h.b16 %v5626
    %v5799 = vunpack.c.l.b16 %v5627
    %v5800 = vunpack.c.h.b16 %v5627
    %v5801 = vunpack.c.l.b16 %v5628
    %v5802 = vunpack.c.h.b16 %v5628
    %v5803 = vunpack.c.l.b16 %v5629
    %v5804 = vunpack.c.h.b16 %v5629
    %v5805 = vunpack.c.l.b16 %v5630
    %v5806 = vunpack.c.h.b16 %v5630
    %v5807 = vunpack.c.l.b16 %v5631
    %v5808 = vunpack.c.h.b16 %v5631
    %v5809 = vunpack.c.l.b16 %v5632
    %v5810 = vunpack.c.h.b16 %v5632
    %v5811 = vunpack.c.l.b16 %v5633
    %v5812 = vunpack.c.h.b16 %v5633
    %v5813 = vunpack.c.l.b16 %v5634
    %v5814 = vunpack.c.h.b16 %v5634
    %v5815 = vunpack.c.l.b16 %v5635
    %v5816 = vunpack.c.h.b16 %v5635
    %v5817 = vunpack.c.l.b16 %v5636
    %v5818 = vunpack.c.h.b16 %v5636
    %v5819 = vunpack.c.l.b16 %v5637
    %v5820 = vunpack.c.h.b16 %v5637
    %v5821 = vunpack.c.l.b16 %v5638
    %v5822 = vunpack.c.h.b16 %v5638
    %v5823 = vunpack.c.l.b16 %v5639
    %v5824 = vunpack.c.h.b16 %v5639
    %v5825 = vunpack.c.l.b16 %v5640
    %v5826 = vunpack.c.h.b16 %v5640
    %v5827 = vunpack.c.l.b16 %v5641
    %v5828 = vunpack.c.h.b16 %v5641
    %v5829 = vunpack.c.l.b16 %v5642
    %v5830 = vunpack.c.h.b16 %v5642
    %v5831 = vunpack.c.l.b16 %v5643
    %v5832 = vunpack.c.h.b16 %v5643
    %v5833 = vunpack.c.l.b16 %v5644
    %v5834 = vunpack.c.h.b16 %v5644
    %v5835 = vunpack.c.l.b16 %v5645
    %v5836 = vunpack.c.h.b16 %v5645
    %v5837 = vunpack.c.l.b16 %v5646
    %v5838 = vunpack.c.h.b16 %v5646
    %v5839 = vunpack.c.l.b16 %v5647
    %v5840 = vunpack.c.h.b16 %v5647
    %v5841 = vunpack.c.l.b16 %v5648
    %v5842 = vunpack.c.h.b16 %v5648
    %v5843 = vunpack.c.l.b16 %v5649
    %v5844 = vunpack.c.h.b16 %v5649
    %v5845 = vunpack.c.l.b16 %v5650
    %v5846 = vunpack.c.h.b16 %v5650
    %v5847 = vunpack.c.l.b16 %v5651
    %v5848 = vunpack.c.h.b16 %v5651
    %v5849 = vunpack.c.l.b16 %v5652
    %v5850 = vunpack.c.h.b16 %v5652
    %v5851 = vunpack.c.l.b16 %v5653
    %v5852 = vunpack.c.h.b16 %v5653
    %v5853 = vunpack.c.l.b16 %v5654
    %v5854 = vunpack.c.h.b16 %v5654
    %v5855 = vunpack.c.l.b16 %v5655
    %v5856 = vunpack.c.h.b16 %v5655
    %v5857 = vunpack.c.l.b16 %v5656
    %v5858 = vunpack.c.h.b16 %v5656
    %v5859 = vunpack.c.l.b16 %v5657
    %v5860 = vunpack.c.h.b16 %v5657
    %v5861 = vunpack.c.l.b16 %v5658
    %v5862 = vunpack.c.h.b16 %v5658
    %v5863 = vunpack.c.l.b16 %v5659
    %v5864 = vunpack.c.h.b16 %v5659
    %v5865 = vunpack.c.l.b16 %v5660
    %v5866 = vunpack.c.h.b16 %v5660
    %v5867 = vunpack.c.l.b16 %v5661
    %v5868 = vunpack.c.h.b16 %v5661
    %v5869 = vunpack.c.l.b16 %v5662
    %v5870 = vunpack.c.h.b16 %v5662
    %v5871 = vunpack.c.l.b16 %v5663
    %v5872 = vunpack.c.h.b16 %v5663
    %v5873 = vunpack.c.l.b16 %v5664
    %v5874 = vunpack.c.h.b16 %v5664
    %v5875 = vunpack.c.l.b16 %v5665
    %v5876 = vunpack.c.h.b16 %v5665
    %v5877 = vunpack.c.l.b16 %v5666
    %v5878 = vunpack.c.h.b16 %v5666
    %v5879 = vunpack.c.l.b16 %v5667
    %v5880 = vunpack.c.h.b16 %v5667
    %v5881 = vunpack.c.l.b16 %v5668
    %v5882 = vunpack.c.h.b16 %v5668
    %v5883 = vunpack.c.l.b16 %v5669
    %v5884 = vunpack.c.h.b16 %v5669
    %v5885 = vunpack.c.l.b16 %v5670
    %v5886 = vunpack.c.h.b16 %v5670
    %v5887 = vunpack.c.l.b16 %v5671
    %v5888 = vunpack.c.h.b16 %v5671
    %v5889 = vunpack.c.l.b16 %v5672
    %v5890 = vunpack.c.h.b16 %v5672
    %v5891 = vunpack.c.l.b16 %v5673
    %v5892 = vunpack.c.h.b16 %v5673
    %v5893 = vunpack.c.l.b16 %v5674
    %v5894 = vunpack.c.h.b16 %v5674
    %v5895 = vunpack.c.l.b16 %v5675
    %v5896 = vunpack.c.h.b16 %v5675
    %v5897 = vpack.c.b16 %v5773, %v5769
    %v5898 = vpack.c.b16 %v5774, %v5770
    %v5899 = vpack.c.b16 %v5775, %v5771
    %v5900 = vpack.c.b16 %v5776, %v5772
    %v5901 = vpack.c.b16 %v5781, %v5777
    %v5902 = vpack.c.b16 %v5782, %v5778
    %v5903 = vpack.c.b16 %v5783, %v5779
    %v5904 = vpack.c.b16 %v5784, %v5780
    %v5905 = vpack.c.b16 %v5789, %v5785
    %v5906 = vpack.c.b16 %v5790, %v5786
    %v5907 = vpack.c.b16 %v5791, %v5787
    %v5908 = vpack.c.b16 %v5792, %v5788
    %v5909 = vpack.c.b16 %v5797, %v5793
    %v5910 = vpack.c.b16 %v5798, %v5794
    %v5911 = vpack.c.b16 %v5799, %v5795
    %v5912 = vpack.c.b16 %v5800, %v5796
    %v5913 = vpack.c.b16 %v5805, %v5801
    %v5914 = vpack.c.b16 %v5806, %v5802
    %v5915 = vpack.c.b16 %v5807, %v5803
    %v5916 = vpack.c.b16 %v5808, %v5804
    %v5917 = vpack.c.b16 %v5813, %v5809
    %v5918 = vpack.c.b16 %v5814, %v5810
    %v5919 = vpack.c.b16 %v5815, %v5811
    %v5920 = vpack.c.b16 %v5816, %v5812
    %v5921 = vpack.c.b16 %v5821, %v5817
    %v5922 = vpack.c.b16 %v5822, %v5818
    %v5923 = vpack.c.b16 %v5823, %v5819
    %v5924 = vpack.c.b16 %v5824, %v5820
    %v5925 = vpack.c.b16 %v5829, %v5825
    %v5926 = vpack.c.b16 %v5830, %v5826
    %v5927 = vpack.c.b16 %v5831, %v5827
    %v5928 = vpack.c.b16 %v5832, %v5828
    %v5929 = vpack.c.b16 %v5837, %v5833
    %v5930 = vpack.c.b16 %v5838, %v5834
    %v5931 = vpack.c.b16 %v5839, %v5835
    %v5932 = vpack.c.b16 %v5840, %v5836
    %v5933 = vpack.c.b16 %v5845, %v5841
    %v5934 = vpack.c.b16 %v5846, %v5842
    %v5935 = vpack.c.b16 %v5847, %v5843
    %v5936 = vpack.c.b16 %v5848, %v5844
    %v5937 = vpack.c.b16 %v5853, %v5849
    %v5938 = vpack.c.b16 %v5854, %v5850
    %v5939 = vpack.c.b16 %v5855, %v5851
    %v5940 = vpack.c.b16 %v5856, %v5852
    %v5941 = vpack.c.b16 %v5861, %v5857
    %v5942 = vpack.c.b16 %v5862, %v5858
    %v5943 = vpack.c.b16 %v5863, %v5859
    %v5944 = vpack.c.b16 %v5864, %v5860
    %v5945 = vpack.c.b16 %v5869, %v5865
    %v5946 = vpack.c.b16 %v5870, %v5866
    %v5947 = vpack.c.b16 %v5871, %v5867
    %v5948 = vpack.c.b16 %v5872, %v5868
    %v5949 = vpack.c.b16 %v5877, %v5873
    %v5950 = vpack.c.b16 %v5878, %v5874
    %v5951 = vpack.c.b16 %v5879, %v5875
    %v5952 = vpack.c.b16 %v5880, %v5876
    %v5953 = vpack.c.b16 %v5885, %v5881
    %v5954 = vpack.c.b16 %v5886, %v5882
    %v5955 = vpack.c.b16 %v5887, %v5883
    %v5956 = vpack.c.b16 %v5888, %v5884
    %v5957 = vpack.c.b16 %v5893, %v5889
    %v5958 = vpack.c.b16 %v5894, %v5890
    %v5959 = vpack.c.b16 %v5895, %v5891
    %v5960 = vpack.c.b16 %v5896, %v5892
    %6025 = vmatprep.subr.bf16.mxu0 %v5898
    %6026 = vmatpush1.bf16.msra.mxu0 %v5897
    %6027 = vmatprep.subr.bf16.mxu0 %v5902
    %6028 = vmatpush1.bf16.msra.mxu0 %v5901
    %6029 = vmatprep.subr.bf16.mxu0 %v5906
    %6030 = vmatpush1.bf16.msra.mxu0 %v5905
    %6031 = vmatprep.subr.bf16.mxu0 %v5910
    %6032 = vmatpush1.bf16.msra.mxu0 %v5909
    %6033 = vmatprep.subr.bf16.mxu0 %v5914
    %6034 = vmatpush1.bf16.msra.mxu0 %v5913
    %6035 = vmatprep.subr.bf16.mxu0 %v5918
    %6036 = vmatpush1.bf16.msra.mxu0 %v5917
    %6037 = vmatprep.subr.bf16.mxu0 %v5922
    %6038 = vmatpush1.bf16.msra.mxu0 %v5921
    %6039 = vmatprep.subr.bf16.mxu0 %v5926
    %6040 = vmatpush1.bf16.msra.mxu0 %v5925
    %6041 = vmatprep.subr.bf16.mxu0 %v5930
    %6042 = vmatpush1.bf16.msra.mxu0 %v5929
    %6043 = vmatprep.subr.bf16.mxu0 %v5934
    %6044 = vmatpush1.bf16.msra.mxu0 %v5933
    %6045 = vmatprep.subr.bf16.mxu0 %v5938
    %6046 = vmatpush1.bf16.msra.mxu0 %v5937
    %6047 = vmatprep.subr.bf16.mxu0 %v5942
    %6048 = vmatpush1.bf16.msra.mxu0 %v5941
    %6049 = vmatprep.subr.bf16.mxu0 %v5946
    %6050 = vmatpush1.bf16.msra.mxu0 %v5945
    %6051 = vmatprep.subr.bf16.mxu0 %v5950
    %6052 = vmatpush1.bf16.msra.mxu0 %v5949
    %6053 = vmatprep.subr.bf16.mxu0 %v5954
    %6054 = vmatpush1.bf16.msra.mxu0 %v5953
    %6055 = vmatprep.subr.bf16.mxu0 %v5958
    %6056 = vmatpush1.bf16.msra.mxu0 %v5957
    %6057 = vmatprep.mubr.bf16.mxu0 %v5702
    %6058 = vmatmul.mubr.bf16.gmra.mrb[0].mxu0 %v5701
    %v6059 = vpop.f32.mrb[0].mxu0
    %v6060 = vadd.f32 %v5681, %v6059
    %v6061 = vpop.f32.mrb[0].mxu0
    %v6062 = vadd.f32 %v5685, %v6061
    %v6063 = vpop.f32.mrb[0].mxu0
    %v6064 = vpop.f32.mrb[0].mxu0
    %6065 = vdwg.mxu0
    %6066 = vmatprep.subr.bf16.mxu0 %v5900
    %6067 = vmatpush1.bf16.msra.mxu0 %v5899
    %6068 = vmatprep.subr.bf16.mxu0 %v5904
    %6069 = vmatpush1.bf16.msra.mxu0 %v5903
    %6070 = vmatprep.subr.bf16.mxu0 %v5908
    %6071 = vmatpush1.bf16.msra.mxu0 %v5907
    %6072 = vmatprep.subr.bf16.mxu0 %v5912
    %6073 = vmatpush1.bf16.msra.mxu0 %v5911
    %6074 = vmatprep.subr.bf16.mxu0 %v5916
    %6075 = vmatpush1.bf16.msra.mxu0 %v5915
    %6076 = vmatprep.subr.bf16.mxu0 %v5920
    %6077 = vmatpush1.bf16.msra.mxu0 %v5919
    %6078 = vmatprep.subr.bf16.mxu0 %v5924
    %6079 = vmatpush1.bf16.msra.mxu0 %v5923
    %6080 = vmatprep.subr.bf16.mxu0 %v5928
    %6081 = vmatpush1.bf16.msra.mxu0 %v5927
    %6082 = vmatprep.subr.bf16.mxu0 %v5932
    %6083 = vmatpush1.bf16.msra.mxu0 %v5931
    %6084 = vmatprep.subr.bf16.mxu0 %v5936
    %6085 = vmatpush1.bf16.msra.mxu0 %v5935
    %6086 = vmatprep.subr.bf16.mxu0 %v5940
    %6087 = vmatpush1.bf16.msra.mxu0 %v5939
    %6088 = vmatprep.subr.bf16.mxu0 %v5944
    %6089 = vmatpush1.bf16.msra.mxu0 %v5943
    %6090 = vmatprep.subr.bf16.mxu0 %v5948
    %6091 = vmatpush1.bf16.msra.mxu0 %v5947
    %6092 = vmatprep.subr.bf16.mxu0 %v5952
    %6093 = vmatpush1.bf16.msra.mxu0 %v5951
    %6094 = vmatprep.subr.bf16.mxu0 %v5956
    %6095 = vmatpush1.bf16.msra.mxu0 %v5955
    %6096 = vmatprep.subr.bf16.mxu0 %v5960
    %6097 = vmatpush1.bf16.msra.mxu0 %v5959
    %6098 = vmatprep.mubr.bf16.mxu0 %v5702
    %6099 = vmatmul.mubr.bf16.gmra.mrb[0].mxu0 %v5701
    %v6100 = vpop.f32.mrb[0].mxu0
    %v6101 = vadd.f32 %v5689, %v6100
    %v6102 = vpop.f32.mrb[0].mxu0
    %v6103 = vadd.f32 %v5693, %v6102
    %v6104 = vpop.f32.mrb[0].mxu0
    %v6105 = vpop.f32.mrb[0].mxu0
    %6106 = vdwg.mxu0
    %v6107 = vsub.f32 0.0, %v6060
    %v6108 = vsub.f32 0.0, %v6062
    %v6109 = vsub.f32 0.0, %v6101
    %v6110 = vmul.f32 %v6107, 1.442695
    %v6111 = vpow.pop %v6110
    %v6112 = vmul.f32 %v6108, 1.442695
    %v6113 = vpow.pop %v6112
    %v6114 = vmul.f32 %v6109, 1.442695
    %v6115 = vpow.pop %v6114
    %v6116 = vadd.f32 %v6111, 1.0
    %v6117 = vadd.f32 %v6113, 1.0
    %v6118 = vadd.f32 %v6115, 1.0
    %v6119 = vrcp.pop %v6116
    %v6120 = vrcp.pop %v6117
    %v6121 = vrcp.pop %v6118
    %v6122 = vtanh.pop %v6103
    %v6123 = vld [vmem:[%s968] sm:$0xff]
    %v6124 = vmul.f32 %v6120, %v6123
    %v6125 = vmul.f32 %v6119, %v6122
    %v6126 = vadd.f32 %v6124, %v6125
    %v6127 = vtanh.pop %v6126
    %v6128 = vmul.f32 %v6121, %v6127
    %6129 = vst [vmem:[%s968] sm:$0xff] %v6126
    %v6130 = vpack.c.bf16 %v6128, %v6128
    %6131 = vst [vmem:[%s452 + $0x4] sm:$0xf] %v6130
    %s6132 = scalar_lea.vmem [#allocation4], 112
    %v6133 = vld [vmem:[%s6132] sm:$0xff]
    %v6134 = vld [vmem:[%s6132 + $0x8] sm:$0xff]
    %v6135 = vunpack.c.l.bf16 %v6133
    %v6136 = vunpack.c.h.bf16 %v6133
    %v6137 = vunpack.c.l.bf16 %v6134
    %v6138 = vunpack.c.h.bf16 %v6134
    %v6139 = vld [vmem:[#allocation2 + $0x4] sm:$0xf]
    %v6140 = vld [vmem:[#allocation7 + $0x100] sm:$0xff]
    %v6141 = vld [vmem:[#allocation7 + $0x108] sm:$0xff]
    %v6142 = vld [vmem:[#allocation7 + $0x110] sm:$0xff]
    %v6143 = vld [vmem:[#allocation7 + $0x118] sm:$0xff]
    %v6144 = vld [vmem:[#allocation7 + $0x120] sm:$0xff]
    %v6145 = vld [vmem:[#allocation7 + $0x128] sm:$0xff]
    %v6146 = vld [vmem:[#allocation7 + $0x130] sm:$0xff]
    %v6147 = vld [vmem:[#allocation7 + $0x138] sm:$0xff]
    %v6148 = vld [vmem:[#allocation7 + $0x140] sm:$0xff]
    %v6149 = vld [vmem:[#allocation7 + $0x148] sm:$0xff]
    %v6150 = vld [vmem:[#allocation7 + $0x150] sm:$0xff]
    %v6151 = vld [vmem:[#allocation7 + $0x158] sm:$0xff]
    %v6152 = vld [vmem:[#allocation7 + $0x160] sm:$0xff]
    %v6153 = vld [vmem:[#allocation7 + $0x168] sm:$0xff]
    %v6154 = vld [vmem:[#allocation7 + $0x170] sm:$0xff]
    %v6155 = vld [vmem:[#allocation7 + $0x178] sm:$0xff]
    %v6156 = vld [vmem:[#allocation7 + $0x180] sm:$0xff]
    %v6157 = vld [vmem:[#allocation7 + $0x188] sm:$0xff]
    %v6158 = vld [vmem:[#allocation7 + $0x190] sm:$0xff]
    %v6159 = vld [vmem:[#allocation7 + $0x198] sm:$0xff]
    %v6160 = vld [vmem:[#allocation7 + $0x1a0] sm:$0xff]
    %v6161 = vld [vmem:[#allocation7 + $0x1a8] sm:$0xff]
    %v6162 = vld [vmem:[#allocation7 + $0x1b0] sm:$0xff]
    %v6163 = vld [vmem:[#allocation7 + $0x1b8] sm:$0xff]
    %v6164 = vld [vmem:[#allocation7 + $0x1c0] sm:$0xff]
    %v6165 = vld [vmem:[#allocation7 + $0x1c8] sm:$0xff]
    %v6166 = vld [vmem:[#allocation7 + $0x1d0] sm:$0xff]
    %v6167 = vld [vmem:[#allocation7 + $0x1d8] sm:$0xff]
    %v6168 = vld [vmem:[#allocation7 + $0x1e0] sm:$0xff]
    %v6169 = vld [vmem:[#allocation7 + $0x1e8] sm:$0xff]
    %v6170 = vld [vmem:[#allocation7 + $0x1f0] sm:$0xff]
    %v6171 = vld [vmem:[#allocation7 + $0x1f8] sm:$0xff]
    %v6204 = vunpack.c.l.b16 %v6140
    %v6205 = vunpack.c.h.b16 %v6140
    %v6206 = vunpack.c.l.b16 %v6141
    %v6207 = vunpack.c.h.b16 %v6141
    %v6208 = vunpack.c.l.b16 %v6142
    %v6209 = vunpack.c.h.b16 %v6142
    %v6210 = vunpack.c.l.b16 %v6143
    %v6211 = vunpack.c.h.b16 %v6143
    %v6212 = vunpack.c.l.b16 %v6144
    %v6213 = vunpack.c.h.b16 %v6144
    %v6214 = vunpack.c.l.b16 %v6145
    %v6215 = vunpack.c.h.b16 %v6145
    %v6216 = vunpack.c.l.b16 %v6146
    %v6217 = vunpack.c.h.b16 %v6146
    %v6218 = vunpack.c.l.b16 %v6147
    %v6219 = vunpack.c.h.b16 %v6147
    %v6220 = vunpack.c.l.b16 %v6148
    %v6221 = vunpack.c.h.b16 %v6148
    %v6222 = vunpack.c.l.b16 %v6149
    %v6223 = vunpack.c.h.b16 %v6149
    %v6224 = vunpack.c.l.b16 %v6150
    %v6225 = vunpack.c.h.b16 %v6150
    %v6226 = vunpack.c.l.b16 %v6151
    %v6227 = vunpack.c.h.b16 %v6151
    %v6228 = vunpack.c.l.b16 %v6152
    %v6229 = vunpack.c.h.b16 %v6152
    %v6230 = vunpack.c.l.b16 %v6153
    %v6231 = vunpack.c.h.b16 %v6153
    %v6232 = vunpack.c.l.b16 %v6154
    %v6233 = vunpack.c.h.b16 %v6154
    %v6234 = vunpack.c.l.b16 %v6155
    %v6235 = vunpack.c.h.b16 %v6155
    %v6236 = vunpack.c.l.b16 %v6156
    %v6237 = vunpack.c.h.b16 %v6156
    %v6238 = vunpack.c.l.b16 %v6157
    %v6239 = vunpack.c.h.b16 %v6157
    %v6240 = vunpack.c.l.b16 %v6158
    %v6241 = vunpack.c.h.b16 %v6158
    %v6242 = vunpack.c.l.b16 %v6159
    %v6243 = vunpack.c.h.b16 %v6159
    %v6244 = vunpack.c.l.b16 %v6160
    %v6245 = vunpack.c.h.b16 %v6160
    %v6246 = vunpack.c.l.b16 %v6161
    %v6247 = vunpack.c.h.b16 %v6161
    %v6248 = vunpack.c.l.b16 %v6162
    %v6249 = vunpack.c.h.b16 %v6162
    %v6250 = vunpack.c.l.b16 %v6163
    %v6251 = vunpack.c.h.b16 %v6163
    %v6252 = vunpack.c.l.b16 %v6164
    %v6253 = vunpack.c.h.b16 %v6164
    %v6254 = vunpack.c.l.b16 %v6165
    %v6255 = vunpack.c.h.b16 %v6165
    %v6256 = vunpack.c.l.b16 %v6166
    %v6257 = vunpack.c.h.b16 %v6166
    %v6258 = vunpack.c.l.b16 %v6167
    %v6259 = vunpack.c.h.b16 %v6167
    %v6260 = vunpack.c.l.b16 %v6168
    %v6261 = vunpack.c.h.b16 %v6168
    %v6262 = vunpack.c.l.b16 %v6169
    %v6263 = vunpack.c.h.b16 %v6169
    %v6264 = vunpack.c.l.b16 %v6170
    %v6265 = vunpack.c.h.b16 %v6170
    %v6266 = vunpack.c.l.b16 %v6171
    %v6267 = vunpack.c.h.b16 %v6171
    %v6268 = vpack.c.b16 %v6208, %v6204
    %v6269 = vpack.c.b16 %v6209, %v6205
    %v6270 = vpack.c.b16 %v6210, %v6206
    %v6271 = vpack.c.b16 %v6211, %v6207
    %v6272 = vpack.c.b16 %v6216, %v6212
    %v6273 = vpack.c.b16 %v6217, %v6213
    %v6274 = vpack.c.b16 %v6218, %v6214
    %v6275 = vpack.c.b16 %v6219, %v6215
    %v6276 = vpack.c.b16 %v6224, %v6220
    %v6277 = vpack.c.b16 %v6225, %v6221
    %v6278 = vpack.c.b16 %v6226, %v6222
    %v6279 = vpack.c.b16 %v6227, %v6223
    %v6280 = vpack.c.b16 %v6232, %v6228
    %v6281 = vpack.c.b16 %v6233, %v6229
    %v6282 = vpack.c.b16 %v6234, %v6230
    %v6283 = vpack.c.b16 %v6235, %v6231
    %v6284 = vpack.c.b16 %v6240, %v6236
    %v6285 = vpack.c.b16 %v6241, %v6237
    %v6286 = vpack.c.b16 %v6242, %v6238
    %v6287 = vpack.c.b16 %v6243, %v6239
    %v6288 = vpack.c.b16 %v6248, %v6244
    %v6289 = vpack.c.b16 %v6249, %v6245
    %v6290 = vpack.c.b16 %v6250, %v6246
    %v6291 = vpack.c.b16 %v6251, %v6247
    %v6292 = vpack.c.b16 %v6256, %v6252
    %v6293 = vpack.c.b16 %v6257, %v6253
    %v6294 = vpack.c.b16 %v6258, %v6254
    %v6295 = vpack.c.b16 %v6259, %v6255
    %v6296 = vpack.c.b16 %v6264, %v6260
    %v6297 = vpack.c.b16 %v6265, %v6261
    %v6298 = vpack.c.b16 %v6266, %v6262
    %v6299 = vpack.c.b16 %v6267, %v6263
    %6332 = vmatprep.subr.bf16.mxu0 %v6269
    %6333 = vmatpush1.bf16.msra.mxu0 %v6268
    %6334 = vmatprep.subr.bf16.mxu0 %v6273
    %6335 = vmatpush1.bf16.msra.mxu0 %v6272
    %6336 = vmatprep.subr.bf16.mxu0 %v6277
    %6337 = vmatpush1.bf16.msra.mxu0 %v6276
    %6338 = vmatprep.subr.bf16.mxu0 %v6281
    %6339 = vmatpush1.bf16.msra.mxu0 %v6280
    %6340 = vmatprep.subr.bf16.mxu0 %v6285
    %6341 = vmatpush1.bf16.msra.mxu0 %v6284
    %6342 = vmatprep.subr.bf16.mxu0 %v6289
    %6343 = vmatpush1.bf16.msra.mxu0 %v6288
    %6344 = vmatprep.subr.bf16.mxu0 %v6293
    %6345 = vmatpush1.bf16.msra.mxu0 %v6292
    %6346 = vmatprep.subr.bf16.mxu0 %v6297
    %6347 = vmatpush1.bf16.msra.mxu0 %v6296
    %6348 = vmatprep.subr.bf16.mxu0 0
    %6349 = vmatpush1.bf16.msra.mxu0 0
    %6350 = vmatprep.subr.bf16.mxu0 0
    %6351 = vmatpush1.bf16.msra.mxu0 0
    %6352 = vmatprep.subr.bf16.mxu0 0
    %6353 = vmatpush1.bf16.msra.mxu0 0
    %6354 = vmatprep.subr.bf16.mxu0 0
    %6355 = vmatpush1.bf16.msra.mxu0 0
    %6356 = vmatprep.subr.bf16.mxu0 0
    %6357 = vmatpush1.bf16.msra.mxu0 0
    %6358 = vmatprep.subr.bf16.mxu0 0
    %6359 = vmatpush1.bf16.msra.mxu0 0
    %6360 = vmatprep.subr.bf16.mxu0 0
    %6361 = vmatpush1.bf16.msra.mxu0 0
    %6362 = vmatprep.subr.bf16.mxu0 0
    %6363 = vmatpush1.bf16.msra.mxu0 0
    %6364 = vmatprep.mubr.bf16.mxu0 0
    %6365 = vmatmul.mubr.bf16.gmra.mrb[0].mxu0 %v6139
    %v6366 = vpop.f32.mrb[0].mxu0
    %v6367 = vadd.f32 0.0, %v6366
    %v6368 = vpop.f32.mrb[0].mxu0
    %v6369 = vadd.f32 0.0, %v6368
    %v6370 = vpop.f32.mrb[0].mxu0
    %v6371 = vpop.f32.mrb[0].mxu0
    %6372 = vdwg.mxu0
    %6373 = vmatprep.subr.bf16.mxu0 %v6271
    %6374 = vmatpush1.bf16.msra.mxu0 %v6270
    %6375 = vmatprep.subr.bf16.mxu0 %v6275
    %6376 = vmatpush1.bf16.msra.mxu0 %v6274
    %6377 = vmatprep.subr.bf16.mxu0 %v6279
    %6378 = vmatpush1.bf16.msra.mxu0 %v6278
    %6379 = vmatprep.subr.bf16.mxu0 %v6283
    %6380 = vmatpush1.bf16.msra.mxu0 %v6282
    %6381 = vmatprep.subr.bf16.mxu0 %v6287
    %6382 = vmatpush1.bf16.msra.mxu0 %v6286
    %6383 = vmatprep.subr.bf16.mxu0 %v6291
    %6384 = vmatpush1.bf16.msra.mxu0 %v6290
    %6385 = vmatprep.subr.bf16.mxu0 %v6295
    %6386 = vmatpush1.bf16.msra.mxu0 %v6294
    %6387 = vmatprep.subr.bf16.mxu0 %v6299
    %6388 = vmatpush1.bf16.msra.mxu0 %v6298
    %6389 = vmatprep.subr.bf16.mxu0 0
    %6390 = vmatpush1.bf16.msra.mxu0 0
    %6391 = vmatprep.subr.bf16.mxu0 0
    %6392 = vmatpush1.bf16.msra.mxu0 0
    %6393 = vmatprep.subr.bf16.mxu0 0
    %6394 = vmatpush1.bf16.msra.mxu0 0
    %6395 = vmatprep.subr.bf16.mxu0 0
    %6396 = vmatpush1.bf16.msra.mxu0 0
    %6397 = vmatprep.subr.bf16.mxu0 0
    %6398 = vmatpush1.bf16.msra.mxu0 0
    %6399 = vmatprep.subr.bf16.mxu0 0
    %6400 = vmatpush1.bf16.msra.mxu0 0
    %6401 = vmatprep.subr.bf16.mxu0 0
    %6402 = vmatpush1.bf16.msra.mxu0 0
    %6403 = vmatprep.subr.bf16.mxu0 0
    %6404 = vmatpush1.bf16.msra.mxu0 0
    %6405 = vmatprep.mubr.bf16.mxu0 0
    %6406 = vmatmul.mubr.bf16.gmra.mrb[0].mxu0 %v6139
    %v6407 = vpop.f32.mrb[0].mxu0
    %v6408 = vadd.f32 0.0, %v6407
    %v6409 = vpop.f32.mrb[0].mxu0
    %v6410 = vadd.f32 0.0, %v6409
    %v6411 = vpop.f32.mrb[0].mxu0
    %v6412 = vpop.f32.mrb[0].mxu0
    %6413 = vdwg.mxu0
    %v6414 = vadd.f32 %v6135, %v6367
    %v6415 = vadd.f32 %v6136, %v6369
    %v6416 = vadd.f32 %v6137, %v6408
    %v6417 = vadd.f32 %v6138, %v6410
    %v6418 = vld [vmem:[#allocation9] sm:$0xf]
    %v6420 = vlaneseq
    %v6421 = vshrl.u32 %v6420, 7
    %v6422 = vsub.s32 0, %v6421
    %v6423 = vrot.slane %v6418, %v6422
    %v6424 = vlaneseq
    %v6425 = vshrl.u32 %v6424, 7
    %v6426 = vsub.s32 1, %v6425
    %v6427 = vrot.slane %v6418, %v6426
    %v6428 = vlaneseq
    %v6429 = vshrl.u32 %v6428, 7
    %v6430 = vsub.s32 2, %v6429
    %v6431 = vrot.slane %v6418, %v6430
    %v6432 = vlaneseq
    %v6433 = vshrl.u32 %v6432, 7
    %v6434 = vsub.s32 3, %v6433
    %v6435 = vrot.slane %v6418, %v6434
    %v6440 = vadd.f32 %v6414, %v6423
    %v6441 = vadd.f32 %v6415, %v6427
    %v6442 = vadd.f32 %v6416, %v6431
    %v6443 = vadd.f32 %v6417, %v6435
    %v6444 = vsub.f32 0.0, %v6440
    %v6445 = vsub.f32 0.0, %v6441
    %v6446 = vsub.f32 0.0, %v6442
    %v6447 = vmul.f32 %v6444, 1.442695
    %v6448 = vpow.pop %v6447
    %v6449 = vmul.f32 %v6445, 1.442695
    %v6450 = vpow.pop %v6449
    %v6451 = vmul.f32 %v6446, 1.442695
    %v6452 = vpow.pop %v6451
    %v6453 = vadd.f32 %v6448, 1.0
    %v6454 = vadd.f32 %v6450, 1.0
    %v6455 = vadd.f32 %v6452, 1.0
    %v6456 = vrcp.pop %v6453
    %v6457 = vrcp.pop %v6454
    %v6458 = vrcp.pop %v6455
    %v6459 = vtanh.pop %v6443
    %v6460 = vld [vmem:[#allocation3] sm:$0xff]
    %v6461 = vmul.f32 %v6457, %v6460
    %v6462 = vmul.f32 %v6456, %v6459
    %v6463 = vadd.f32 %v6461, %v6462
    %v6464 = vtanh.pop %v6463
    %v6465 = vmul.f32 %v6458, %v6464
    %6466 = vst [vmem:[#allocation3] sm:$0xff] %v6463
    %v6467 = vpack.c.bf16 %v6465, %v6465
    %6468 = vst [vmem:[#allocation2 + $0x4] sm:$0xf] %v6467
    %6469 = vst [vmem:[%s452] sm:$0xf] %v6467
    %v6470 = vld [vmem:[%s452] sm:$0xff]
    %v6471 = vld [vmem:[%s455] sm:$0xff]
    %v6472 = vld [vmem:[%s455 + $0x8] sm:$0xff]
    %v6473 = vld [vmem:[%s455 + $0x10] sm:$0xff]
    %v6474 = vld [vmem:[%s455 + $0x18] sm:$0xff]
    %v6475 = vld [vmem:[%s455 + $0x20] sm:$0xff]
    %v6476 = vld [vmem:[%s455 + $0x28] sm:$0xff]
    %v6477 = vld [vmem:[%s455 + $0x30] sm:$0xff]
    %v6478 = vld [vmem:[%s455 + $0x38] sm:$0xff]
    %v6479 = vld [vmem:[%s455 + $0x40] sm:$0xff]
    %v6480 = vld [vmem:[%s455 + $0x48] sm:$0xff]
    %v6481 = vld [vmem:[%s455 + $0x50] sm:$0xff]
    %v6482 = vld [vmem:[%s455 + $0x58] sm:$0xff]
    %v6483 = vld [vmem:[%s455 + $0x60] sm:$0xff]
    %v6484 = vld [vmem:[%s455 + $0x68] sm:$0xff]
    %v6485 = vld [vmem:[%s455 + $0x70] sm:$0xff]
    %v6486 = vld [vmem:[%s455 + $0x78] sm:$0xff]
    %v6487 = vld [vmem:[%s455 + $0x80] sm:$0xff]
    %v6488 = vld [vmem:[%s455 + $0x88] sm:$0xff]
    %v6489 = vld [vmem:[%s455 + $0x90] sm:$0xff]
    %v6490 = vld [vmem:[%s455 + $0x98] sm:$0xff]
    %v6491 = vld [vmem:[%s455 + $0xa0] sm:$0xff]
    %v6492 = vld [vmem:[%s455 + $0xa8] sm:$0xff]
    %v6493 = vld [vmem:[%s455 + $0xb0] sm:$0xff]
    %v6494 = vld [vmem:[%s455 + $0xb8] sm:$0xff]
    %v6495 = vld [vmem:[%s455 + $0xc0] sm:$0xff]
    %v6496 = vld [vmem:[%s455 + $0xc8] sm:$0xff]
    %v6497 = vld [vmem:[%s455 + $0xd0] sm:$0xff]
    %v6498 = vld [vmem:[%s455 + $0xd8] sm:$0xff]
    %v6499 = vld [vmem:[%s455 + $0xe0] sm:$0xff]
    %v6500 = vld [vmem:[%s455 + $0xe8] sm:$0xff]
    %v6501 = vld [vmem:[%s455 + $0xf0] sm:$0xff]
    %v6502 = vld [vmem:[%s455 + $0xf8] sm:$0xff]
    %v6503 = vld [vmem:[%s455 + $0x100] sm:$0xff]
    %v6504 = vld [vmem:[%s455 + $0x108] sm:$0xff]
    %v6505 = vld [vmem:[%s455 + $0x110] sm:$0xff]
    %v6506 = vld [vmem:[%s455 + $0x118] sm:$0xff]
    %v6507 = vld [vmem:[%s455 + $0x120] sm:$0xff]
    %v6508 = vld [vmem:[%s455 + $0x128] sm:$0xff]
    %v6509 = vld [vmem:[%s455 + $0x130] sm:$0xff]
    %v6510 = vld [vmem:[%s455 + $0x138] sm:$0xff]
    %v6511 = vld [vmem:[%s455 + $0x140] sm:$0xff]
    %v6512 = vld [vmem:[%s455 + $0x148] sm:$0xff]
    %v6513 = vld [vmem:[%s455 + $0x150] sm:$0xff]
    %v6514 = vld [vmem:[%s455 + $0x158] sm:$0xff]
    %v6515 = vld [vmem:[%s455 + $0x160] sm:$0xff]
    %v6516 = vld [vmem:[%s455 + $0x168] sm:$0xff]
    %v6517 = vld [vmem:[%s455 + $0x170] sm:$0xff]
    %v6518 = vld [vmem:[%s455 + $0x178] sm:$0xff]
    %v6519 = vld [vmem:[%s455 + $0x180] sm:$0xff]
    %v6520 = vld [vmem:[%s455 + $0x188] sm:$0xff]
    %v6521 = vld [vmem:[%s455 + $0x190] sm:$0xff]
    %v6522 = vld [vmem:[%s455 + $0x198] sm:$0xff]
    %v6523 = vld [vmem:[%s455 + $0x1a0] sm:$0xff]
    %v6524 = vld [vmem:[%s455 + $0x1a8] sm:$0xff]
    %v6525 = vld [vmem:[%s455 + $0x1b0] sm:$0xff]
    %v6526 = vld [vmem:[%s455 + $0x1b8] sm:$0xff]
    %v6527 = vld [vmem:[%s455 + $0x1c0] sm:$0xff]
    %v6528 = vld [vmem:[%s455 + $0x1c8] sm:$0xff]
    %v6529 = vld [vmem:[%s455 + $0x1d0] sm:$0xff]
    %v6530 = vld [vmem:[%s455 + $0x1d8] sm:$0xff]
    %v6531 = vld [vmem:[%s455 + $0x1e0] sm:$0xff]
    %v6532 = vld [vmem:[%s455 + $0x1e8] sm:$0xff]
    %v6533 = vld [vmem:[%s455 + $0x1f0] sm:$0xff]
    %v6534 = vld [vmem:[%s455 + $0x1f8] sm:$0xff]
    %v6535 = vld [vmem:[%s520] sm:$0xf]
    %v6537 = vlaneseq
    %v6538 = vshrl.u32 %v6537, 7
    %v6539 = vsub.s32 0, %v6538
    %v6540 = vrot.slane %v6535, %v6539
    %v6541 = vlaneseq
    %v6542 = vshrl.u32 %v6541, 7
    %v6543 = vsub.s32 1, %v6542
    %v6544 = vrot.slane %v6535, %v6543
    %v6545 = vlaneseq
    %v6546 = vshrl.u32 %v6545, 7
    %v6547 = vsub.s32 2, %v6546
    %v6548 = vrot.slane %v6535, %v6547
    %v6549 = vlaneseq
    %v6550 = vshrl.u32 %v6549, 7
    %v6551 = vsub.s32 3, %v6550
    %v6552 = vrot.slane %v6535, %v6551
    %v6558 = vunpack.c.l.b16 %v6470
    %v6559 = vunpack.c.h.b16 %v6470
    %v6560 = vpack.c.b16 %v6558, %v6558
    %v6561 = vpack.c.b16 %v6559, %v6559
    %v6628 = vunpack.c.l.b16 %v6471
    %v6629 = vunpack.c.h.b16 %v6471
    %v6630 = vunpack.c.l.b16 %v6472
    %v6631 = vunpack.c.h.b16 %v6472
    %v6632 = vunpack.c.l.b16 %v6473
    %v6633 = vunpack.c.h.b16 %v6473
    %v6634 = vunpack.c.l.b16 %v6474
    %v6635 = vunpack.c.h.b16 %v6474
    %v6636 = vunpack.c.l.b16 %v6475
    %v6637 = vunpack.c.h.b16 %v6475
    %v6638 = vunpack.c.l.b16 %v6476
    %v6639 = vunpack.c.h.b16 %v6476
    %v6640 = vunpack.c.l.b16 %v6477
    %v6641 = vunpack.c.h.b16 %v6477
    %v6642 = vunpack.c.l.b16 %v6478
    %v6643 = vunpack.c.h.b16 %v6478
    %v6644 = vunpack.c.l.b16 %v6479
    %v6645 = vunpack.c.h.b16 %v6479
    %v6646 = vunpack.c.l.b16 %v6480
    %v6647 = vunpack.c.h.b16 %v6480
    %v6648 = vunpack.c.l.b16 %v6481
    %v6649 = vunpack.c.h.b16 %v6481
    %v6650 = vunpack.c.l.b16 %v6482
    %v6651 = vunpack.c.h.b16 %v6482
    %v6652 = vunpack.c.l.b16 %v6483
    %v6653 = vunpack.c.h.b16 %v6483
    %v6654 = vunpack.c.l.b16 %v6484
    %v6655 = vunpack.c.h.b16 %v6484
    %v6656 = vunpack.c.l.b16 %v6485
    %v6657 = vunpack.c.h.b16 %v6485
    %v6658 = vunpack.c.l.b16 %v6486
    %v6659 = vunpack.c.h.b16 %v6486
    %v6660 = vunpack.c.l.b16 %v6487
    %v6661 = vunpack.c.h.b16 %v6487
    %v6662 = vunpack.c.l.b16 %v6488
    %v6663 = vunpack.c.h.b16 %v6488
    %v6664 = vunpack.c.l.b16 %v6489
    %v6665 = vunpack.c.h.b16 %v6489
    %v6666 = vunpack.c.l.b16 %v6490
    %v6667 = vunpack.c.h.b16 %v6490
    %v6668 = vunpack.c.l.b16 %v6491
    %v6669 = vunpack.c.h.b16 %v6491
    %v6670 = vunpack.c.l.b16 %v6492
    %v6671 = vunpack.c.h.b16 %v6492
    %v6672 = vunpack.c.l.b16 %v6493
    %v6673 = vunpack.c.h.b16 %v6493
    %v6674 = vunpack.c.l.b16 %v6494
    %v6675 = vunpack.c.h.b16 %v6494
    %v6676 = vunpack.c.l.b16 %v6495
    %v6677 = vunpack.c.h.b16 %v6495
    %v6678 = vunpack.c.l.b16 %v6496
    %v6679 = vunpack.c.h.b16 %v6496
    %v6680 = vunpack.c.l.b16 %v6497
    %v6681 = vunpack.c.h.b16 %v6497
    %v6682 = vunpack.c.l.b16 %v6498
    %v6683 = vunpack.c.h.b16 %v6498
    %v6684 = vunpack.c.l.b16 %v6499
    %v6685 = vunpack.c.h.b16 %v6499
    %v6686 = vunpack.c.l.b16 %v6500
    %v6687 = vunpack.c.h.b16 %v6500
    %v6688 = vunpack.c.l.b16 %v6501
    %v6689 = vunpack.c.h.b16 %v6501
    %v6690 = vunpack.c.l.b16 %v6502
    %v6691 = vunpack.c.h.b16 %v6502
    %v6692 = vunpack.c.l.b16 %v6503
    %v6693 = vunpack.c.h.b16 %v6503
    %v6694 = vunpack.c.l.b16 %v6504
    %v6695 = vunpack.c.h.b16 %v6504
    %v6696 = vunpack.c.l.b16 %v6505
    %v6697 = vunpack.c.h.b16 %v6505
    %v6698 = vunpack.c.l.b16 %v6506
    %v6699 = vunpack.c.h.b16 %v6506
    %v6700 = vunpack.c.l.b16 %v6507
    %v6701 = vunpack.c.h.b16 %v6507
    %v6702 = vunpack.c.l.b16 %v6508
    %v6703 = vunpack.c.h.b16 %v6508
    %v6704 = vunpack.c.l.b16 %v6509
    %v6705 = vunpack.c.h.b16 %v6509
    %v6706 = vunpack.c.l.b16 %v6510
    %v6707 = vunpack.c.h.b16 %v6510
    %v6708 = vunpack.c.l.b16 %v6511
    %v6709 = vunpack.c.h.b16 %v6511
    %v6710 = vunpack.c.l.b16 %v6512
    %v6711 = vunpack.c.h.b16 %v6512
    %v6712 = vunpack.c.l.b16 %v6513
    %v6713 = vunpack.c.h.b16 %v6513
    %v6714 = vunpack.c.l.b16 %v6514
    %v6715 = vunpack.c.h.b16 %v6514
    %v6716 = vunpack.c.l.b16 %v6515
    %v6717 = vunpack.c.h.b16 %v6515
    %v6718 = vunpack.c.l.b16 %v6516
    %v6719 = vunpack.c.h.b16 %v6516
    %v6720 = vunpack.c.l.b16 %v6517
    %v6721 = vunpack.c.h.b16 %v6517
    %v6722 = vunpack.c.l.b16 %v6518
    %v6723 = vunpack.c.h.b16 %v6518
    %v6724 = vunpack.c.l.b16 %v6519
    %v6725 = vunpack.c.h.b16 %v6519
    %v6726 = vunpack.c.l.b16 %v6520
    %v6727 = vunpack.c.h.b16 %v6520
    %v6728 = vunpack.c.l.b16 %v6521
    %v6729 = vunpack.c.h.b16 %v6521
    %v6730 = vunpack.c.l.b16 %v6522
    %v6731 = vunpack.c.h.b16 %v6522
    %v6732 = vunpack.c.l.b16 %v6523
    %v6733 = vunpack.c.h.b16 %v6523
    %v6734 = vunpack.c.l.b16 %v6524
    %v6735 = vunpack.c.h.b16 %v6524
    %v6736 = vunpack.c.l.b16 %v6525
    %v6737 = vunpack.c.h.b16 %v6525
    %v6738 = vunpack.c.l.b16 %v6526
    %v6739 = vunpack.c.h.b16 %v6526
    %v6740 = vunpack.c.l.b16 %v6527
    %v6741 = vunpack.c.h.b16 %v6527
    %v6742 = vunpack.c.l.b16 %v6528
    %v6743 = vunpack.c.h.b16 %v6528
    %v6744 = vunpack.c.l.b16 %v6529
    %v6745 = vunpack.c.h.b16 %v6529
    %v6746 = vunpack.c.l.b16 %v6530
    %v6747 = vunpack.c.h.b16 %v6530
    %v6748 = vunpack.c.l.b16 %v6531
    %v6749 = vunpack.c.h.b16 %v6531
    %v6750 = vunpack.c.l.b16 %v6532
    %v6751 = vunpack.c.h.b16 %v6532
    %v6752 = vunpack.c.l.b16 %v6533
    %v6753 = vunpack.c.h.b16 %v6533
    %v6754 = vunpack.c.l.b16 %v6534
    %v6755 = vunpack.c.h.b16 %v6534
    %v6756 = vpack.c.b16 %v6632, %v6628
    %v6757 = vpack.c.b16 %v6633, %v6629
    %v6758 = vpack.c.b16 %v6634, %v6630
    %v6759 = vpack.c.b16 %v6635, %v6631
    %v6760 = vpack.c.b16 %v6640, %v6636
    %v6761 = vpack.c.b16 %v6641, %v6637
    %v6762 = vpack.c.b16 %v6642, %v6638
    %v6763 = vpack.c.b16 %v6643, %v6639
    %v6764 = vpack.c.b16 %v6648, %v6644
    %v6765 = vpack.c.b16 %v6649, %v6645
    %v6766 = vpack.c.b16 %v6650, %v6646
    %v6767 = vpack.c.b16 %v6651, %v6647
    %v6768 = vpack.c.b16 %v6656, %v6652
    %v6769 = vpack.c.b16 %v6657, %v6653
    %v6770 = vpack.c.b16 %v6658, %v6654
    %v6771 = vpack.c.b16 %v6659, %v6655
    %v6772 = vpack.c.b16 %v6664, %v6660
    %v6773 = vpack.c.b16 %v6665, %v6661
    %v6774 = vpack.c.b16 %v6666, %v6662
    %v6775 = vpack.c.b16 %v6667, %v6663
    %v6776 = vpack.c.b16 %v6672, %v6668
    %v6777 = vpack.c.b16 %v6673, %v6669
    %v6778 = vpack.c.b16 %v6674, %v6670
    %v6779 = vpack.c.b16 %v6675, %v6671
    %v6780 = vpack.c.b16 %v6680, %v6676
    %v6781 = vpack.c.b16 %v6681, %v6677
    %v6782 = vpack.c.b16 %v6682, %v6678
    %v6783 = vpack.c.b16 %v6683, %v6679
    %v6784 = vpack.c.b16 %v6688, %v6684
    %v6785 = vpack.c.b16 %v6689, %v6685
    %v6786 = vpack.c.b16 %v6690, %v6686
    %v6787 = vpack.c.b16 %v6691, %v6687
    %v6788 = vpack.c.b16 %v6696, %v6692
    %v6789 = vpack.c.b16 %v6697, %v6693
    %v6790 = vpack.c.b16 %v6698, %v6694
    %v6791 = vpack.c.b16 %v6699, %v6695
    %v6792 = vpack.c.b16 %v6704, %v6700
    %v6793 = vpack.c.b16 %v6705, %v6701
    %v6794 = vpack.c.b16 %v6706, %v6702
    %v6795 = vpack.c.b16 %v6707, %v6703
    %v6796 = vpack.c.b16 %v6712, %v6708
    %v6797 = vpack.c.b16 %v6713, %v6709
    %v6798 = vpack.c.b16 %v6714, %v6710
    %v6799 = vpack.c.b16 %v6715, %v6711
    %v6800 = vpack.c.b16 %v6720, %v6716
    %v6801 = vpack.c.b16 %v6721, %v6717
    %v6802 = vpack.c.b16 %v6722, %v6718
    %v6803 = vpack.c.b16 %v6723, %v6719
    %v6804 = vpack.c.b16 %v6728, %v6724
    %v6805 = vpack.c.b16 %v6729, %v6725
    %v6806 = vpack.c.b16 %v6730, %v6726
    %v6807 = vpack.c.b16 %v6731, %v6727
    %v6808 = vpack.c.b16 %v6736, %v6732
    %v6809 = vpack.c.b16 %v6737, %v6733
    %v6810 = vpack.c.b16 %v6738, %v6734
    %v6811 = vpack.c.b16 %v6739, %v6735
    %v6812 = vpack.c.b16 %v6744, %v6740
    %v6813 = vpack.c.b16 %v6745, %v6741
    %v6814 = vpack.c.b16 %v6746, %v6742
    %v6815 = vpack.c.b16 %v6747, %v6743
    %v6816 = vpack.c.b16 %v6752, %v6748
    %v6817 = vpack.c.b16 %v6753, %v6749
    %v6818 = vpack.c.b16 %v6754, %v6750
    %v6819 = vpack.c.b16 %v6755, %v6751
    %6884 = vmatprep.subr.bf16.mxu0 %v6757
    %6885 = vmatpush1.bf16.msra.mxu0 %v6756
    %6886 = vmatprep.subr.bf16.mxu0 %v6761
    %6887 = vmatpush1.bf16.msra.mxu0 %v6760
    %6888 = vmatprep.subr.bf16.mxu0 %v6765
    %6889 = vmatpush1.bf16.msra.mxu0 %v6764
    %6890 = vmatprep.subr.bf16.mxu0 %v6769
    %6891 = vmatpush1.bf16.msra.mxu0 %v6768
    %6892 = vmatprep.subr.bf16.mxu0 %v6773
    %6893 = vmatpush1.bf16.msra.mxu0 %v6772
    %6894 = vmatprep.subr.bf16.mxu0 %v6777
    %6895 = vmatpush1.bf16.msra.mxu0 %v6776
    %6896 = vmatprep.subr.bf16.mxu0 %v6781
    %6897 = vmatpush1.bf16.msra.mxu0 %v6780
    %6898 = vmatprep.subr.bf16.mxu0 %v6785
    %6899 = vmatpush1.bf16.msra.mxu0 %v6784
    %6900 = vmatprep.subr.bf16.mxu0 %v6789
    %6901 = vmatpush1.bf16.msra.mxu0 %v6788
    %6902 = vmatprep.subr.bf16.mxu0 %v6793
    %6903 = vmatpush1.bf16.msra.mxu0 %v6792
    %6904 = vmatprep.subr.bf16.mxu0 %v6797
    %6905 = vmatpush1.bf16.msra.mxu0 %v6796
    %6906 = vmatprep.subr.bf16.mxu0 %v6801
    %6907 = vmatpush1.bf16.msra.mxu0 %v6800
    %6908 = vmatprep.subr.bf16.mxu0 %v6805
    %6909 = vmatpush1.bf16.msra.mxu0 %v6804
    %6910 = vmatprep.subr.bf16.mxu0 %v6809
    %6911 = vmatpush1.bf16.msra.mxu0 %v6808
    %6912 = vmatprep.subr.bf16.mxu0 %v6813
    %6913 = vmatpush1.bf16.msra.mxu0 %v6812
    %6914 = vmatprep.subr.bf16.mxu0 %v6817
    %6915 = vmatpush1.bf16.msra.mxu0 %v6816
    %6916 = vmatprep.mubr.bf16.mxu0 %v6561
    %6917 = vmatmul.mubr.bf16.gmra.mrb[0].mxu0 %v6560
    %v6918 = vpop.f32.mrb[0].mxu0
    %v6919 = vadd.f32 %v6540, %v6918
    %v6920 = vpop.f32.mrb[0].mxu0
    %v6921 = vadd.f32 %v6544, %v6920
    %v6922 = vpop.f32.mrb[0].mxu0
    %v6923 = vpop.f32.mrb[0].mxu0
    %6924 = vdwg.mxu0
    %6925 = vmatprep.subr.bf16.mxu0 %v6759
    %6926 = vmatpush1.bf16.msra.mxu0 %v6758
    %6927 = vmatprep.subr.bf16.mxu0 %v6763
    %6928 = vmatpush1.bf16.msra.mxu0 %v6762
    %6929 = vmatprep.subr.bf16.mxu0 %v6767
    %6930 = vmatpush1.bf16.msra.mxu0 %v6766
    %6931 = vmatprep.subr.bf16.mxu0 %v6771
    %6932 = vmatpush1.bf16.msra.mxu0 %v6770
    %6933 = vmatprep.subr.bf16.mxu0 %v6775
    %6934 = vmatpush1.bf16.msra.mxu0 %v6774
    %6935 = vmatprep.subr.bf16.mxu0 %v6779
    %6936 = vmatpush1.bf16.msra.mxu0 %v6778
    %6937 = vmatprep.subr.bf16.mxu0 %v6783
    %6938 = vmatpush1.bf16.msra.mxu0 %v6782
    %6939 = vmatprep.subr.bf16.mxu0 %v6787
    %6940 = vmatpush1.bf16.msra.mxu0 %v6786
    %6941 = vmatprep.subr.bf16.mxu0 %v6791
    %6942 = vmatpush1.bf16.msra.mxu0 %v6790
    %6943 = vmatprep.subr.bf16.mxu0 %v6795
    %6944 = vmatpush1.bf16.msra.mxu0 %v6794
    %6945 = vmatprep.subr.bf16.mxu0 %v6799
    %6946 = vmatpush1.bf16.msra.mxu0 %v6798
    %6947 = vmatprep.subr.bf16.mxu0 %v6803
    %6948 = vmatpush1.bf16.msra.mxu0 %v6802
    %6949 = vmatprep.subr.bf16.mxu0 %v6807
    %6950 = vmatpush1.bf16.msra.mxu0 %v6806
    %6951 = vmatprep.subr.bf16.mxu0 %v6811
    %6952 = vmatpush1.bf16.msra.mxu0 %v6810
    %6953 = vmatprep.subr.bf16.mxu0 %v6815
    %6954 = vmatpush1.bf16.msra.mxu0 %v6814
    %6955 = vmatprep.subr.bf16.mxu0 %v6819
    %6956 = vmatpush1.bf16.msra.mxu0 %v6818
    %6957 = vmatprep.mubr.bf16.mxu0 %v6561
    %6958 = vmatmul.mubr.bf16.gmra.mrb[0].mxu0 %v6560
    %v6959 = vpop.f32.mrb[0].mxu0
    %v6960 = vadd.f32 %v6548, %v6959
    %v6961 = vpop.f32.mrb[0].mxu0
    %v6962 = vadd.f32 %v6552, %v6961
    %v6963 = vpop.f32.mrb[0].mxu0
    %v6964 = vpop.f32.mrb[0].mxu0
    %6965 = vdwg.mxu0
    %v6966 = vsub.f32 0.0, %v6919
    %v6967 = vsub.f32 0.0, %v6921
    %v6968 = vsub.f32 0.0, %v6960
    %v6969 = vmul.f32 %v6966, 1.442695
    %v6970 = vpow.pop %v6969
    %v6971 = vmul.f32 %v6967, 1.442695
    %v6972 = vpow.pop %v6971
    %v6973 = vmul.f32 %v6968, 1.442695
    %v6974 = vpow.pop %v6973
    %v6975 = vadd.f32 %v6970, 1.0
    %v6976 = vadd.f32 %v6972, 1.0
    %v6977 = vadd.f32 %v6974, 1.0
    %v6978 = vrcp.pop %v6975
    %v6979 = vrcp.pop %v6976
    %v6980 = vrcp.pop %v6977
    %v6981 = vtanh.pop %v6962
    %v6982 = vld [vmem:[%s968] sm:$0xff]
    %v6983 = vmul.f32 %v6979, %v6982
    %v6984 = vmul.f32 %v6978, %v6981
    %v6985 = vadd.f32 %v6983, %v6984
    %v6986 = vtanh.pop %v6985
    %v6987 = vmul.f32 %v6980, %v6986
    %6988 = vst [vmem:[%s968] sm:$0xff] %v6985
    %v6989 = vpack.c.bf16 %v6987, %v6987
    %6990 = vst [vmem:[%s452 + $0x4] sm:$0xf] %v6989
    // Predicated region
    $region54: #{tpu_custom_call.1} parent=1 // pred_check
      %p6991 = pneg %p100
    $region55: #{tpu_custom_call.1} parent=1 // pred_check_branch
      %6993 = sbr.rel (%p6991) target = $region57
    $region56: #{tpu_custom_call.1} parent=1 // pred_region
      %v6994 = vld [vmem:[%s452 + $0x4] sm:$0xf]
      %v6995 = vld [vmem:[#allocation10] sm:$0xf]
      %v6996 = vld [vmem:[#allocation10 + $0x4] sm:$0xf]
      %v6997 = vld [vmem:[#allocation10 + $0x8] sm:$0xf]
      %v6998 = vld [vmem:[#allocation10 + $0xc] sm:$0xf]
      %v6999 = vld [vmem:[#allocation10 + $0x10] sm:$0xf]
      %v7000 = vld [vmem:[#allocation10 + $0x14] sm:$0xf]
      %v7001 = vld [vmem:[#allocation10 + $0x18] sm:$0xf]
      %v7002 = vld [vmem:[#allocation10 + $0x1c] sm:$0xf]
      %v7003 = vld [vmem:[#allocation10 + $0x20] sm:$0xf]
      %v7004 = vld [vmem:[#allocation10 + $0x24] sm:$0xf]
      %v7005 = vld [vmem:[#allocation10 + $0x28] sm:$0xf]
      %v7006 = vld [vmem:[#allocation10 + $0x2c] sm:$0xf]
      %v7007 = vld [vmem:[#allocation10 + $0x30] sm:$0xf]
      %v7008 = vld [vmem:[#allocation10 + $0x34] sm:$0xf]
      %v7009 = vld [vmem:[#allocation10 + $0x38] sm:$0xf]
      %v7010 = vld [vmem:[#allocation10 + $0x3c] sm:$0xf]
      %v7011 = vld [vmem:[%s4] sm:$0x1]
      %v7013 = vlaneseq
      %v7014 = vshrl.u32 %v7013, 7
      %v7015 = vsub.s32 0, %v7014
      %v7016 = vrot.slane %v7011, %v7015
      %v7034 = vunpack.c.l.b16 %v6995
      %v7035 = vunpack.c.l.b16 %v6996
      %v7036 = vunpack.c.l.b16 %v6997
      %v7037 = vunpack.c.l.b16 %v6998
      %v7038 = vunpack.c.l.b16 %v6999
      %v7039 = vunpack.c.l.b16 %v7000
      %v7040 = vunpack.c.l.b16 %v7001
      %v7041 = vunpack.c.l.b16 %v7002
      %v7042 = vunpack.c.l.b16 %v7003
      %v7043 = vunpack.c.l.b16 %v7004
      %v7044 = vunpack.c.l.b16 %v7005
      %v7045 = vunpack.c.l.b16 %v7006
      %v7046 = vunpack.c.l.b16 %v7007
      %v7047 = vunpack.c.l.b16 %v7008
      %v7048 = vunpack.c.l.b16 %v7009
      %v7049 = vunpack.c.l.b16 %v7010
      %v7050 = vpack.c.b16 %v7035, %v7034
      %v7051 = vpack.c.b16 %v7037, %v7036
      %v7052 = vpack.c.b16 %v7039, %v7038
      %v7053 = vpack.c.b16 %v7041, %v7040
      %v7054 = vpack.c.b16 %v7043, %v7042
      %v7055 = vpack.c.b16 %v7045, %v7044
      %v7056 = vpack.c.b16 %v7047, %v7046
      %v7057 = vpack.c.b16 %v7049, %v7048
      %7066 = vmatprep.subr.bf16.mxu0 0
      %7067 = vmatpush1.bf16.msra.mxu0 %v7050
      %7068 = vmatprep.subr.bf16.mxu0 0
      %7069 = vmatpush1.bf16.msra.mxu0 %v7051
      %7070 = vmatprep.subr.bf16.mxu0 0
      %7071 = vmatpush1.bf16.msra.mxu0 %v7052
      %7072 = vmatprep.subr.bf16.mxu0 0
      %7073 = vmatpush1.bf16.msra.mxu0 %v7053
      %7074 = vmatprep.subr.bf16.mxu0 0
      %7075 = vmatpush1.bf16.msra.mxu0 %v7054
      %7076 = vmatprep.subr.bf16.mxu0 0
      %7077 = vmatpush1.bf16.msra.mxu0 %v7055
      %7078 = vmatprep.subr.bf16.mxu0 0
      %7079 = vmatpush1.bf16.msra.mxu0 %v7056
      %7080 = vmatprep.subr.bf16.mxu0 0
      %7081 = vmatpush1.bf16.msra.mxu0 %v7057
      %7082 = vmatprep.subr.bf16.mxu0 0
      %7083 = vmatpush1.bf16.msra.mxu0 0
      %7084 = vmatprep.subr.bf16.mxu0 0
      %7085 = vmatpush1.bf16.msra.mxu0 0
      %7086 = vmatprep.subr.bf16.mxu0 0
      %7087 = vmatpush1.bf16.msra.mxu0 0
      %7088 = vmatprep.subr.bf16.mxu0 0
      %7089 = vmatpush1.bf16.msra.mxu0 0
      %7090 = vmatprep.subr.bf16.mxu0 0
      %7091 = vmatpush1.bf16.msra.mxu0 0
      %7092 = vmatprep.subr.bf16.mxu0 0
      %7093 = vmatpush1.bf16.msra.mxu0 0
      %7094 = vmatprep.subr.bf16.mxu0 0
      %7095 = vmatpush1.bf16.msra.mxu0 0
      %7096 = vmatprep.subr.bf16.mxu0 0
      %7097 = vmatpush1.bf16.msra.mxu0 0
      %7098 = vmatprep.mubr.bf16.mxu0 0
      %7099 = vmatmul.mubr.bf16.gmra.mrb[0].mxu0 %v6994
      %v7100 = vpop.f32.mrb[0].mxu0
      %v7101 = vadd.f32 %v7016, %v7100
      %v7102 = vpop.f32.mrb[0].mxu0
      %v7103 = vpop.f32.mrb[0].mxu0
      %v7104 = vpop.f32.mrb[0].mxu0
      %7105 = vdwg.mxu0
      %7106 = vst [vmem:[#allocation13] sm:$0xff] %v7101
      %v7107 = vld [vmem:[#allocation2 + $0x4] sm:$0xf]
      %v7108 = vunpack.c.l.bf16 %v7107
      %7109 = vst [vmem:[#allocation14] sm:$0xff] %v7108
      %v7110 = vld [vmem:[#allocation3] sm:$0xff]
      %7111 = vst [vmem:[#allocation16] sm:$0xff] %v7110
      %v7112 = vld [vmem:[%s452 + $0x4] sm:$0xf]
      %v7113 = vunpack.c.l.bf16 %v7112
      %s7114 = scalar_lea.vmem [#allocation14], 8
      %7115 = vst [vmem:[%s7114] sm:$0xff] %v7113
      %v7116 = vld [vmem:[%s968] sm:$0xff]
      %s7117 = scalar_lea.vmem [#allocation16], 8
      %7118 = vst [vmem:[%s7117] sm:$0xff] %v7116
    $region57: #{tpu_custom_call.1} parent=1 // pred_fallthru
      _
    // Predicated region
    $region58: #{tpu_custom_call.1} parent=1 // pred_check
      _
    $region59: #{tpu_custom_call.1} parent=1 // pred_check_branch
      %7120 = sbr.rel (0) target = $region61
    $region60: #{tpu_custom_call.1} parent=1 // pred_region
      %s7122 = ssub.s32 128, 128
      %7123 = vsyncadd [#allocation6], %s7122
      %s7125 = sshll.u32 [#allocation13], 4
      %s7126 = int_to_ptr.vmem [resolvable:$true] %s7125
      %7128 = dma.vmem_to_hbm [thread:$0]  %s7126, 128, %s7, [#allocation6]
    $region61: #{tpu_custom_call.1} parent=1 // pred_fallthru
      _
    // Predicated region
    $region62: #{tpu_custom_call.1} parent=1 // pred_check
      _
    $region63: #{tpu_custom_call.1} parent=1 // pred_check_branch
      %7130 = sbr.rel (0) target = $region65
    $region64: #{tpu_custom_call.1} parent=1 // pred_region
      %s7132 = ssub.s32 256, 256
      %7133 = vsyncadd [#allocation15], %s7132
      %s7134 = sshll.u32 [#allocation14], 4
      %s7135 = int_to_ptr.vmem [resolvable:$true] %s7134
      %7140 = dma.vmem_to_hbm [thread:$0]  %s7135, 256, %s8, [#allocation15], 128, 128, 8
    $region65: #{tpu_custom_call.1} parent=1 // pred_fallthru
      _
    // Predicated region
    $region66: #{tpu_custom_call.1} parent=1 // pred_check
      _
    $region67: #{tpu_custom_call.1} parent=1 // pred_check_branch
      %7142 = sbr.rel (0) target = $region69
    $region68: #{tpu_custom_call.1} parent=1 // pred_region
      %s7144 = ssub.s32 256, 256
      %7145 = vsyncadd [#allocation15], %s7144
      %s7146 = sshll.u32 [#allocation16], 4
      %s7147 = int_to_ptr.vmem [resolvable:$true] %s7146
      %7152 = dma.vmem_to_hbm [thread:$0]  %s7147, 256, %s9, [#allocation15], 128, 128, 8
    $region69: #{tpu_custom_call.1} parent=1 // pred_fallthru
      _
    // Predicated region
    $region70: #{tpu_custom_call.1} parent=1 // pred_check
      _
    $region71: #{tpu_custom_call.1} parent=1 // pred_check_branch
      %7154 = sbr.rel (0) target = $region73
    $region72: #{tpu_custom_call.1} parent=1 // pred_region
      %7155 = dma.done [#allocation6], 128
    $region73: #{tpu_custom_call.1} parent=1 // pred_fallthru
      _
    // Predicated region
    $region74: #{tpu_custom_call.1} parent=1 // pred_check
      _
    $region75: #{tpu_custom_call.1} parent=1 // pred_check_branch
      %7157 = sbr.rel (0) target = $region77
    $region76: #{tpu_custom_call.1} parent=1 // pred_region
      %7158 = dma.done [#allocation15], 256
    $region77: #{tpu_custom_call.1} parent=1 // pred_fallthru
      _
    // Predicated region
    $region78: #{tpu_custom_call.1} parent=1 // pred_check
      _
    $region79: #{tpu_custom_call.1} parent=1 // pred_check_branch
      %7160 = sbr.rel (0) target = $region81
    $region80: #{tpu_custom_call.1} parent=1 // pred_region
      %7161 = dma.done [#allocation15], 256
    $region81: #{tpu_custom_call.1} parent=1 // pred_fallthru
      _
    %7162 = vsyncpa [#allocation5], 1
    %7163 = vsyncpa [#allocation8], 1
    %7164 = vsyncpa [#allocation11], 1
    %7165 = vsyncpa [#allocation6], 1
    %7166 = vsyncpa [#allocation15], 1

</llo_original>
